<compile_context>
chip_gen: v7x
topology: tpu7x:2x2x1
jax: 0.10.0
libtpu: 0.0.40
codegen_flags: <defaults>
</compile_context>

<pallas_src>
import numpy as np
import jax
import jax.numpy as jnp
from jax.experimental import pallas as pl
from jax.experimental.pallas import tpu as pltpu

# ---------------- model dimensions ----------------
B = 2            # batch
L_IN = 72        # input sequence length (see note above)
LAT = 16         # latent_dim
HID = 32         # hidden_dim
C1_OUT = 64      # pconv1 out channels
C2_OUT = 32      # pconv2 out channels
K = 3
STRIDE = 2
L1 = (L_IN - K) // STRIDE + 1      # 35
L2 = (L1 - K) // STRIDE + 1        # 17
ENC_FLAT = 3 * C2_OUT * L2         # 1632
DEC_HID = 2144 * 2                 # 4288
DL0 = 2144 // C2_OUT               # 67  (decoder view(B, 32, -1))
DL1 = DL0 + K - 1                  # 69  (after ConvTranspose1d(32, 64, 3))
DL2 = DL1 + K - 1                  # 71  (after ConvTranspose1d(64, 1, 3))
S2 = 2 * B                         # decoder streams (time/mag x batch)
DEC_W = 128                        # lane-dense decoder tile width


# ---------------- the fused kernel ----------------
def vae_kernel(xt_ref, eps_ref,
               a1_ref, b1f_ref, m1sel_ref, r1_ref, m2sel_ref,
               w2big_ref, r2_ref, b2rep_ref,
               wh1a_ref, wh1b_ref, wh1c_ref, bh1_ref, wmulv_ref, bmulv_ref,
               wd1t_ref, bd1t_ref, wd1m_ref, bd1m_ref,
               wdec1k0_ref, wdec1k1_ref, wdec1k2_ref, bt1full_ref,
               vdec2k0_ref, vdec2k1_ref, vdec2k2_ref, bt2row_ref,
               mulv_ref, dec_ref, din_scr):
    f32 = jnp.float32
    bf16 = jnp.bfloat16

    def mm(a, w_ref):
        # bf16 x bf16 MXU matmul with f32 accumulation.
        return jnp.dot(a.astype(bf16), w_ref[...], preferred_element_type=f32)

    # ---------------- encoder: pconv1 on the 3 channels batched ----------------
    mask = xt_ref[3]                                                     # (B, 72)
    sig6 = jnp.concatenate(
        [xt_ref[0] * mask, xt_ref[1] * mask, xt_ref[2] * mask], axis=0)  # (3B, 72)
    mask6 = jnp.concatenate([mask, mask, mask], axis=0)                  # (3B, 72)

    raw1 = mm(sig6, a1_ref)                          # (3B, 2240) position-major (l1*64 + c)
    msum1 = mm(mask6, m1sel_ref)                     # (3B, 35)  exact small ints
    valid1 = msum1 > 0.0
    # reciprocal at 35-lane granularity, then 0/1 replicate to 2240 lanes (exact f32 matmul)
    inv1 = jnp.where(valid1,
                     pl.reciprocal(jnp.where(valid1, msum1, 1.0), approx=True),
                     0.0)                            # (3B, 35)
    inv1b = jnp.dot(inv1, r1_ref[...], preferred_element_type=f32)       # (3B, 2240)
    h1 = jnp.where(inv1b > 0.0,
                   jnp.maximum(raw1 * inv1b + b1f_ref[...], 0.0), 0.0)   # (3B, 2240)

    # ---------------- pconv2: one banded matmul + 17-lane renormalization ----------------
    newmask1 = valid1.astype(f32)                    # (3B, 35) propagated binary mask
    msum2 = mm(newmask1, m2sel_ref)                  # (3B, 17)  exact small ints
    valid2 = msum2 > 0.0
    inv2 = jnp.where(valid2,
                     pl.reciprocal(jnp.where(valid2, float(C1_OUT) * msum2, 1.0), approx=True),
                     0.0)                            # (3B, 17)
    inv2b = jnp.dot(inv2, r2_ref[...], preferred_element_type=f32)       # (3B, 544)
    raw2 = mm(h1, w2big_ref)                         # (3B, 544) cols (l2*32 + co)
    h2 = jnp.where(inv2b > 0.0,
                   jnp.maximum(raw2 * inv2b + b2rep_ref[...], 0.0), 0.0)  # (3B, 544)

    # ---------------- encoder linears + sampling ----------------
    henc = jnp.tanh(mm(h2[0:B], wh1a_ref) + mm(h2[B:2 * B], wh1b_ref)
                    + mm(h2[2 * B:3 * B], wh1c_ref) + bh1_ref[...])      # (B, 32)
    mulv = mm(henc, wmulv_ref) + bmulv_ref[...]                          # (B, 32) = [mu|logvar]
    mulv_ref[...] = mulv

    mu = mulv[:, 0:LAT]
    logvar = mulv[:, LAT:2 * LAT]
    z = mu + eps_ref[...] * jnp.exp(0.5 * logvar)                        # (B, 16), k = 1

    # ---------------- decoder hidden1 (lane-padded to 128 per channel) ----------------
    hdt = jnp.maximum(mm(z, wd1t_ref) + bd1t_ref[...], 0.0)              # (B, 32*128) time
    hdm = jnp.maximum(mm(z, wd1m_ref) + bd1m_ref[...], 0.0)              # (B, 32*128) mag
    hd2 = jnp.concatenate([hdt, hdm], axis=0)                            # (2B, 4096), lanes>=67/ch are 0

    # fold into channel-major rows (c*S2 + s); channel pairs -> full (8,128) unmasked stores
    for g in range(C2_OUT // 2):
        c0, c1 = 2 * g, 2 * g + 1
        blk = jnp.concatenate([hd2[:, c0 * DEC_W:(c0 + 1) * DEC_W],
                               hd2[:, c1 * DEC_W:(c1 + 1) * DEC_W]], axis=0)   # (8, 128)
        din_scr[g * 8:(g + 1) * 8, :] = blk
    dinb = din_scr[...].astype(bf16)                                      # (128, 128)

    # ---------------- ConvTranspose1d(32->64, 3): per-tap matmul + XLU lane rolls ------------
    acc1 = jnp.dot(wdec1k0_ref[...], dinb, preferred_element_type=f32)            # (256, 128)
    acc1 = acc1 + pltpu.roll(
        jnp.dot(wdec1k1_ref[...], dinb, preferred_element_type=f32), shift=1, axis=1)
    acc1 = acc1 + pltpu.roll(
        jnp.dot(wdec1k2_ref[...], dinb, preferred_element_type=f32), shift=2, axis=1)
    # bias is pre-masked to lanes < 69, and acc1 is exactly 0 at lanes >= 69 (wrap lanes are 0)
    out1 = jnp.maximum(acc1 + bt1full_ref[...], 0.0)                               # (256, 128)
    out1b = out1.astype(bf16)

    # ---------------- ConvTranspose1d(64->1, 3) ----------------
    acc2 = jnp.dot(vdec2k0_ref[...], out1b, preferred_element_type=f32)            # (2B, 128)
    acc2 = acc2 + pltpu.roll(
        jnp.dot(vdec2k1_ref[...], out1b, preferred_element_type=f32), shift=1, axis=1)
    acc2 = acc2 + pltpu.roll(
        jnp.dot(vdec2k2_ref[...], out1b, preferred_element_type=f32), shift=2, axis=1)
    dec_ref[...] = acc2 + bt2row_ref[...]                                          # valid [:71]


# ---------------- parameter init (deterministic, PyTorch-style uniform) ----------------
def init_params(key):
    ks = jax.random.split(key, 16)

    def u(k, shape, fan_in):
        b = 1.0 / np.sqrt(fan_in)
        return jax.random.uniform(k, shape, jnp.float32, minval=-b, maxval=b)

    return {
        'W1': u(ks[0], (C1_OUT, 1, K), 1 * K),        'b1': u(ks[1], (C1_OUT,), 1 * K),
        'W2': u(ks[2], (C2_OUT, C1_OUT, K), C1_OUT * K), 'b2': u(ks[3], (C2_OUT,), C1_OUT * K),
        'Wh1': u(ks[4], (HID, ENC_FLAT), ENC_FLAT),   'bh1': u(ks[5], (HID,), ENC_FLAT),
        'Wmu': u(ks[6], (LAT, HID), HID),             'bmu': u(ks[7], (LAT,), HID),
        'Wlv': u(ks[8], (LAT, HID), HID),             'blv': u(ks[9], (LAT,), HID),
        'Wd1': u(ks[10], (DEC_HID, LAT), LAT),        'bd1': u(ks[11], (DEC_HID,), LAT),
        'Wt1': u(ks[12], (C2_OUT, C1_OUT, K), C2_OUT * K), 'bt1': u(ks[13], (C1_OUT,), C2_OUT * K),
        'Wt2': u(ks[14], (C1_OUT, 1, K), C1_OUT * K), 'bt2': u(ks[15], (1,), C1_OUT * K),
    }


# ---------------- glue: parameter preprocessing (all in numpy, outside the kernel) -------------
def make_consts(params):
    W1 = np.asarray(params['W1'], np.float32); b1 = np.asarray(params['b1'], np.float32)
    W2 = np.asarray(params['W2'], np.float32); b2 = np.asarray(params['b2'], np.float32)
    Wh1 = np.asarray(params['Wh1'], np.float32); bh1 = np.asarray(params['bh1'], np.float32)
    Wmu = np.asarray(params['Wmu'], np.float32); bmu = np.asarray(params['bmu'], np.float32)
    Wlv = np.asarray(params['Wlv'], np.float32); blv = np.asarray(params['blv'], np.float32)
    Wd1 = np.asarray(params['Wd1'], np.float32); bd1 = np.asarray(params['bd1'], np.float32)
    Wt1 = np.asarray(params['Wt1'], np.float32); bt1 = np.asarray(params['bt1'], np.float32)
    Wt2 = np.asarray(params['Wt2'], np.float32); bt2 = np.asarray(params['bt2'], np.float32)

    ls = np.arange(L1); l2s = np.arange(L2)

    # stage-1 conv as dense matmul, POSITION-MAJOR output columns (l1*64 + co)
    A1 = np.zeros((L_IN, L1 * C1_OUT), np.float32)
    for co in range(C1_OUT):
        for k in range(K):
            A1[2 * ls + k, ls * C1_OUT + co] = W1[co, 0, k]
    b1f = np.tile(b1, L1)[None, :]                                        # (1, 2240)

    # mask window-sum matrices + 0/1 replication matrices (exact, kept f32)
    M1sel = np.zeros((L_IN, L1), np.float32)
    M2sel = np.zeros((L1, L2), np.float32)
    for k in range(K):
        M1sel[2 * ls + k, ls] = 1.0
        M2sel[2 * l2s + k, l2s] = 1.0
    R1 = np.kron(np.eye(L1, dtype=np.float32), np.ones((1, C1_OUT), np.float32))   # (35, 2240)
    R2 = np.kron(np.eye(L2, dtype=np.float32), np.ones((1, C2_OUT), np.float32))   # (17, 544)

    # stage-2 conv as ONE banded matmul: rows (l1*64 + ci), cols (l2*32 + co)
    W2big = np.zeros((L1 * C1_OUT, L2 * C2_OUT), np.float32)
    for k in range(K):
        for co in range(C2_OUT):
            for ci in range(C1_OUT):
                W2big[(2 * l2s + k) * C1_OUT + ci, l2s * C2_OUT + co] = W2[co, ci, k]
    b2rep = np.tile(b2, L2)[None, :]                                      # (1, 544)

    # Linear(1632 -> hidden): per-branch chunks, rows permuted torch(co*17+l2) -> ours(l2*32+co)
    Wh1T = Wh1.T                                                          # (1632, 32)
    perm = np.array([co * L2 + l2 for l2 in range(L2) for co in range(C2_OUT)])
    nf = C2_OUT * L2
    Wh1a = Wh1T[0:nf][perm]; Wh1b = Wh1T[nf:2 * nf][perm]; Wh1c = Wh1T[2 * nf:3 * nf][perm]
    bh1r = bh1[None, :]

    Wmulv = np.concatenate([Wmu.T, Wlv.T], axis=1)                        # (32, 32) [mu|logvar]
    bmulv = np.concatenate([bmu, blv])[None, :]                           # (1, 32)

    # decoder hidden, lane-padded to 128 columns per channel (lanes 67..127 are zero)
    Wd1T = Wd1.T                                                          # (16, 4288)

    def pad_half(Wh, bh):                                                 # (16, 2144), (2144,)
        Wp = np.zeros((LAT, C2_OUT * DEC_W), np.float32)
        bp = np.zeros((1, C2_OUT * DEC_W), np.float32)
        for c in range(C2_OUT):
            Wp[:, c * DEC_W:c * DEC_W + DL0] = Wh[:, c * DL0:(c + 1) * DL0]
            bp[0, c * DEC_W:c * DEC_W + DL0] = bh[c * DL0:(c + 1) * DL0]
        return Wp, bp

    Wd1t, bd1t = pad_half(Wd1T[:, :2144], bd1[:2144])
    Wd1m, bd1m = pad_half(Wd1T[:, 2144:], bd1[2144:])

    # decoder conv-transposes: per-tap block-diagonal matmuls over (channel, stream) rows
    eye = np.eye(S2, dtype=np.float32)
    Wdec1_k = [np.kron(Wt1[:, :, k].T, eye) for k in range(K)]            # each (256, 128)
    Vdec2_k = [np.kron(Wt2[:, 0, k][None, :], eye) for k in range(K)]     # each (2B, 256)
    bt1full = (np.repeat(bt1, S2)[:, None]
               * (np.arange(DEC_W) < DL1)[None, :].astype(np.float32))    # (256, 128) pre-masked
    bt2row = np.full((1, DEC_W), bt2[0], np.float32)                      # (1, 128)

    BF, F = jnp.bfloat16, jnp.float32
    spec = [
        (A1, BF), (b1f, F), (M1sel, BF), (R1, F), (M2sel, BF),
        (W2big, BF), (R2, F), (b2rep, F),
        (Wh1a, BF), (Wh1b, BF), (Wh1c, BF), (bh1r, F), (Wmulv, BF), (bmulv, F),
        (Wd1t, BF), (bd1t, F), (Wd1m, BF), (bd1m, F),
        (Wdec1_k[0], BF), (Wdec1_k[1], BF), (Wdec1_k[2], BF), (bt1full, F),
        (Vdec2_k[0], BF), (Vdec2_k[1], BF), (Vdec2_k[2], BF), (bt2row, F),
    ]
    return [jnp.asarray(a, dt) for a, dt in spec]


# ---------------- wrapper ----------------
def make_autoencoder(params):
    consts = make_consts(params)
    vmem = pl.BlockSpec(memory_space=pltpu.MemorySpace.VMEM)
    n_in = 2 + len(consts)

    call = pl.pallas_call(
        vae_kernel,
        out_shape=(jax.ShapeDtypeStruct((B, 2 * LAT), jnp.float32),     # [mu | logvar]
                   jax.ShapeDtypeStruct((S2, DEC_W), jnp.float32)),     # decoder, lane-dense
        in_specs=[vmem] * n_in,
        out_specs=(vmem, vmem),
        scratch_shapes=[pltpu.VMEM((C2_OUT * S2, DEC_W), jnp.float32)],  # decoder fold (128,128)
        compiler_params=pltpu.CompilerParams(vmem_limit_bytes=32 * 1024 * 1024),
    )

    @jax.jit
    def forward(x, eps):
        # x: (B, 4, 72) float32, channels = [time, mag, magErr, mask]; eps: (B, LAT)
        xt = jnp.transpose(x, (1, 0, 2))                                  # (4, B, 72)
        mulv, dec = call(xt, eps, *consts)
        mu = mulv[:, :LAT]
        logvar = mulv[:, LAT:]
        dec_out = jnp.stack([dec[:B, :DL2], dec[B:, :DL2]], axis=1)       # (B, 2, 71)
        return dec_out, mu, logvar

    return forward


if __name__ == "__main__":
    key = jax.random.PRNGKey(0)
    kp, kx, km, ke = jax.random.split(key, 4)
    params = init_params(kp)
    forward = make_autoencoder(params)

    sig = jax.random.normal(kx, (B, 3, L_IN), jnp.float32)
    mask = (jax.random.uniform(km, (B, 1, L_IN)) > 0.3).astype(jnp.float32)  # binary obs mask
    x = jnp.concatenate([sig, mask], axis=1)                                 # (B, 4, 72)
    eps = jax.random.normal(ke, (B, LAT), jnp.float32)                       # sampling noise (k=1)

    dec_out, mu, logvar = forward(x, eps)
    jax.block_until_ready((dec_out, mu, logvar))

    assert dec_out.shape == (B, 2, DL2), dec_out.shape
    assert mu.shape == (B, LAT) and logvar.shape == (B, LAT)
    assert bool(jnp.all(jnp.isfinite(dec_out))) and bool(jnp.all(jnp.isfinite(mu)))
    print("KERNEL_OK")
</pallas_src>

<mosaic_0001>
module attributes {stable_mosaic.version = 11 : i64} {
  func.func @vae_kernel(%arg0: memref<4x2x72xf32, #tpu.memory_space<vmem>>, %arg1: memref<2x16xf32, #tpu.memory_space<vmem>>, %arg2: memref<72x2240xbf16, #tpu.memory_space<vmem>>, %arg3: memref<1x2240xf32, #tpu.memory_space<vmem>>, %arg4: memref<72x35xbf16, #tpu.memory_space<vmem>>, %arg5: memref<35x2240xf32, #tpu.memory_space<vmem>>, %arg6: memref<35x17xbf16, #tpu.memory_space<vmem>>, %arg7: memref<2240x544xbf16, #tpu.memory_space<vmem>>, %arg8: memref<17x544xf32, #tpu.memory_space<vmem>>, %arg9: memref<1x544xf32, #tpu.memory_space<vmem>>, %arg10: memref<544x32xbf16, #tpu.memory_space<vmem>>, %arg11: memref<544x32xbf16, #tpu.memory_space<vmem>>, %arg12: memref<544x32xbf16, #tpu.memory_space<vmem>>, %arg13: memref<1x32xf32, #tpu.memory_space<vmem>>, %arg14: memref<32x32xbf16, #tpu.memory_space<vmem>>, %arg15: memref<1x32xf32, #tpu.memory_space<vmem>>, %arg16: memref<16x4096xbf16, #tpu.memory_space<vmem>>, %arg17: memref<1x4096xf32, #tpu.memory_space<vmem>>, %arg18: memref<16x4096xbf16, #tpu.memory_space<vmem>>, %arg19: memref<1x4096xf32, #tpu.memory_space<vmem>>, %arg20: memref<256x128xbf16, #tpu.memory_space<vmem>>, %arg21: memref<256x128xbf16, #tpu.memory_space<vmem>>, %arg22: memref<256x128xbf16, #tpu.memory_space<vmem>>, %arg23: memref<256x128xf32, #tpu.memory_space<vmem>>, %arg24: memref<4x256xbf16, #tpu.memory_space<vmem>>, %arg25: memref<4x256xbf16, #tpu.memory_space<vmem>>, %arg26: memref<4x256xbf16, #tpu.memory_space<vmem>>, %arg27: memref<1x128xf32, #tpu.memory_space<vmem>>, %arg28: memref<2x32xf32, #tpu.memory_space<vmem>>, %arg29: memref<4x128xf32, #tpu.memory_space<vmem>>, %arg30: memref<128x128xf32, #tpu.memory_space<vmem>>) attributes {dimension_semantics = [], scalar_prefetch = 0 : i64, scratch_operands = 1 : i64, tpu.core_type = #tpu.core_type<tc>} {
    %c3 = arith.constant 3 : index
    %c0 = arith.constant 0 : index
    %c0_0 = arith.constant 0 : index
    %0 = vector.load %arg0[%c3, %c0, %c0_0] : memref<4x2x72xf32, #tpu.memory_space<vmem>>, vector<1x2x72xf32>
    %1 = vector.shape_cast %0 : vector<1x2x72xf32> to vector<2x72xf32>
    %c0_1 = arith.constant 0 : index
    %c0_2 = arith.constant 0 : index
    %c0_3 = arith.constant 0 : index
    %2 = vector.load %arg0[%c0_1, %c0_2, %c0_3] : memref<4x2x72xf32, #tpu.memory_space<vmem>>, vector<1x2x72xf32>
    %3 = vector.shape_cast %2 : vector<1x2x72xf32> to vector<2x72xf32>
    %4 = arith.mulf %3, %1 : vector<2x72xf32>
    %c1 = arith.constant 1 : index
    %c0_4 = arith.constant 0 : index
    %c0_5 = arith.constant 0 : index
    %5 = vector.load %arg0[%c1, %c0_4, %c0_5] : memref<4x2x72xf32, #tpu.memory_space<vmem>>, vector<1x2x72xf32>
    %6 = vector.shape_cast %5 : vector<1x2x72xf32> to vector<2x72xf32>
    %7 = arith.mulf %6, %1 : vector<2x72xf32>
    %c2 = arith.constant 2 : index
    %c0_6 = arith.constant 0 : index
    %c0_7 = arith.constant 0 : index
    %8 = vector.load %arg0[%c2, %c0_6, %c0_7] : memref<4x2x72xf32, #tpu.memory_space<vmem>>, vector<1x2x72xf32>
    %9 = vector.shape_cast %8 : vector<1x2x72xf32> to vector<2x72xf32>
    %10 = arith.mulf %9, %1 : vector<2x72xf32>
    %11 = tpu.concatenate %4, %7, %10 in 0 : vector<2x72xf32>, vector<2x72xf32>, vector<2x72xf32> -> vector<6x72xf32>
    %12 = tpu.concatenate %1, %1, %1 in 0 : vector<2x72xf32>, vector<2x72xf32>, vector<2x72xf32> -> vector<6x72xf32>
    %13 = arith.truncf %11 : vector<6x72xf32> to vector<6x72xbf16>
    %c0_8 = arith.constant 0 : index
    %c0_9 = arith.constant 0 : index
    %14 = vector.load %arg2[%c0_8, %c0_9] : memref<72x2240xbf16, #tpu.memory_space<vmem>>, vector<72x2240xbf16>
    %cst = arith.constant dense<0.000000e+00> : vector<6x2240xf32>
    %15 = tpu.matmul %13, %14, %cst {dimension_numbers = #tpu.dot_dimension_numbers<[1], [0], [0], [1], [0, 0, 1, 1], [], []>} : vector<6x72xbf16>, vector<72x2240xbf16>, vector<6x2240xf32> -> vector<6x2240xf32>
    %16 = arith.truncf %12 : vector<6x72xf32> to vector<6x72xbf16>
    %c0_10 = arith.constant 0 : index
    %c0_11 = arith.constant 0 : index
    %17 = vector.load %arg4[%c0_10, %c0_11] : memref<72x35xbf16, #tpu.memory_space<vmem>>, vector<72x35xbf16>
    %cst_12 = arith.constant dense<0.000000e+00> : vector<6x35xf32>
    %18 = tpu.matmul %16, %17, %cst_12 {dimension_numbers = #tpu.dot_dimension_numbers<[1], [0], [0], [1], [0, 0, 1, 1], [], []>} : vector<6x72xbf16>, vector<72x35xbf16>, vector<6x35xf32> -> vector<6x35xf32>
    %cst_13 = arith.constant 0.000000e+00 : f32
    %19 = vector.broadcast %cst_13 : f32 to vector<6x35xf32>
    %20 = arith.cmpf ogt, %18, %19 : vector<6x35xf32>
    %cst_14 = arith.constant 1.000000e+00 : f32
    %21 = vector.broadcast %cst_14 : f32 to vector<6x35xf32>
    %22 = arith.select %20, %18, %21 : vector<6x35xi1>, vector<6x35xf32>
    %23 = tpu.reciprocal %22 {approx = true} : vector<6x35xf32> -> vector<6x35xf32>
    %cst_15 = arith.constant 0.000000e+00 : f32
    %24 = vector.broadcast %cst_15 : f32 to vector<6x35xf32>
    %25 = arith.select %20, %23, %24 : vector<6x35xi1>, vector<6x35xf32>
    %c0_16 = arith.constant 0 : index
    %c0_17 = arith.constant 0 : index
    %26 = vector.load %arg5[%c0_16, %c0_17] : memref<35x2240xf32, #tpu.memory_space<vmem>>, vector<35x2240xf32>
    %cst_18 = arith.constant dense<0.000000e+00> : vector<6x2240xf32>
    %27 = tpu.matmul %25, %26, %cst_18 {dimension_numbers = #tpu.dot_dimension_numbers<[1], [0], [0], [1], [0, 0, 1, 1], [], []>} : vector<6x35xf32>, vector<35x2240xf32>, vector<6x2240xf32> -> vector<6x2240xf32>
    %cst_19 = arith.constant 0.000000e+00 : f32
    %28 = vector.broadcast %cst_19 : f32 to vector<6x2240xf32>
    %29 = arith.cmpf ogt, %27, %28 : vector<6x2240xf32>
    %30 = arith.mulf %15, %27 : vector<6x2240xf32>
    %c0_20 = arith.constant 0 : index
    %c0_21 = arith.constant 0 : index
    %31 = vector.load %arg3[%c0_20, %c0_21] : memref<1x2240xf32, #tpu.memory_space<vmem>>, vector<1x2240xf32>
    %32 = vector.broadcast %31 : vector<1x2240xf32> to vector<6x2240xf32>
    %33 = arith.addf %30, %32 : vector<6x2240xf32>
    %cst_22 = arith.constant 0.000000e+00 : f32
    %34 = vector.broadcast %cst_22 : f32 to vector<6x2240xf32>
    %35 = arith.maximumf %33, %34 : vector<6x2240xf32>
    %cst_23 = arith.constant 0.000000e+00 : f32
    %36 = vector.broadcast %cst_23 : f32 to vector<6x2240xf32>
    %37 = arith.select %29, %35, %36 : vector<6x2240xi1>, vector<6x2240xf32>
    %38 = arith.extui %20 : vector<6x35xi1> to vector<6x35xi32>
    %39 = arith.sitofp %38 : vector<6x35xi32> to vector<6x35xf32>
    %40 = arith.truncf %39 : vector<6x35xf32> to vector<6x35xbf16>
    %c0_24 = arith.constant 0 : index
    %c0_25 = arith.constant 0 : index
    %41 = vector.load %arg6[%c0_24, %c0_25] : memref<35x17xbf16, #tpu.memory_space<vmem>>, vector<35x17xbf16>
    %cst_26 = arith.constant dense<0.000000e+00> : vector<6x17xf32>
    %42 = tpu.matmul %40, %41, %cst_26 {dimension_numbers = #tpu.dot_dimension_numbers<[1], [0], [0], [1], [0, 0, 1, 1], [], []>} : vector<6x35xbf16>, vector<35x17xbf16>, vector<6x17xf32> -> vector<6x17xf32>
    %cst_27 = arith.constant 0.000000e+00 : f32
    %43 = vector.broadcast %cst_27 : f32 to vector<6x17xf32>
    %44 = arith.cmpf ogt, %42, %43 : vector<6x17xf32>
    %cst_28 = arith.constant 6.400000e+01 : f32
    %45 = vector.broadcast %cst_28 : f32 to vector<6x17xf32>
    %46 = arith.mulf %45, %42 : vector<6x17xf32>
    %cst_29 = arith.constant 1.000000e+00 : f32
    %47 = vector.broadcast %cst_29 : f32 to vector<6x17xf32>
    %48 = arith.select %44, %46, %47 : vector<6x17xi1>, vector<6x17xf32>
    %49 = tpu.reciprocal %48 {approx = true} : vector<6x17xf32> -> vector<6x17xf32>
    %cst_30 = arith.constant 0.000000e+00 : f32
    %50 = vector.broadcast %cst_30 : f32 to vector<6x17xf32>
    %51 = arith.select %44, %49, %50 : vector<6x17xi1>, vector<6x17xf32>
    %c0_31 = arith.constant 0 : index
    %c0_32 = arith.constant 0 : index
    %52 = vector.load %arg8[%c0_31, %c0_32] : memref<17x544xf32, #tpu.memory_space<vmem>>, vector<17x544xf32>
    %cst_33 = arith.constant dense<0.000000e+00> : vector<6x544xf32>
    %53 = tpu.matmul %51, %52, %cst_33 {dimension_numbers = #tpu.dot_dimension_numbers<[1], [0], [0], [1], [0, 0, 1, 1], [], []>} : vector<6x17xf32>, vector<17x544xf32>, vector<6x544xf32> -> vector<6x544xf32>
    %54 = arith.truncf %37 : vector<6x2240xf32> to vector<6x2240xbf16>
    %c0_34 = arith.constant 0 : index
    %c0_35 = arith.constant 0 : index
    %55 = vector.load %arg7[%c0_34, %c0_35] : memref<2240x544xbf16, #tpu.memory_space<vmem>>, vector<2240x544xbf16>
    %cst_36 = arith.constant dense<0.000000e+00> : vector<6x544xf32>
    %56 = tpu.matmul %54, %55, %cst_36 {dimension_numbers = #tpu.dot_dimension_numbers<[1], [0], [0], [1], [0, 0, 1, 1], [], []>} : vector<6x2240xbf16>, vector<2240x544xbf16>, vector<6x544xf32> -> vector<6x544xf32>
    %cst_37 = arith.constant 0.000000e+00 : f32
    %57 = vector.broadcast %cst_37 : f32 to vector<6x544xf32>
    %58 = arith.cmpf ogt, %53, %57 : vector<6x544xf32>
    %59 = arith.mulf %56, %53 : vector<6x544xf32>
    %c0_38 = arith.constant 0 : index
    %c0_39 = arith.constant 0 : index
    %60 = vector.load %arg9[%c0_38, %c0_39] : memref<1x544xf32, #tpu.memory_space<vmem>>, vector<1x544xf32>
    %61 = vector.broadcast %60 : vector<1x544xf32> to vector<6x544xf32>
    %62 = arith.addf %59, %61 : vector<6x544xf32>
    %cst_40 = arith.constant 0.000000e+00 : f32
    %63 = vector.broadcast %cst_40 : f32 to vector<6x544xf32>
    %64 = arith.maximumf %62, %63 : vector<6x544xf32>
    %cst_41 = arith.constant 0.000000e+00 : f32
    %65 = vector.broadcast %cst_41 : f32 to vector<6x544xf32>
    %66 = arith.select %58, %64, %65 : vector<6x544xi1>, vector<6x544xf32>
    %67 = vector.extract_strided_slice %66 {offsets = [0, 0], sizes = [2, 544], strides = [1, 1]} : vector<6x544xf32> to vector<2x544xf32>
    %68 = arith.truncf %67 : vector<2x544xf32> to vector<2x544xbf16>
    %c0_42 = arith.constant 0 : index
    %c0_43 = arith.constant 0 : index
    %69 = vector.load %arg10[%c0_42, %c0_43] : memref<544x32xbf16, #tpu.memory_space<vmem>>, vector<544x32xbf16>
    %cst_44 = arith.constant dense<0.000000e+00> : vector<2x32xf32>
    %70 = tpu.matmul %68, %69, %cst_44 {dimension_numbers = #tpu.dot_dimension_numbers<[1], [0], [0], [1], [0, 0, 1, 1], [], []>} : vector<2x544xbf16>, vector<544x32xbf16>, vector<2x32xf32> -> vector<2x32xf32>
    %71 = vector.extract_strided_slice %66 {offsets = [2, 0], sizes = [2, 544], strides = [1, 1]} : vector<6x544xf32> to vector<2x544xf32>
    %72 = arith.truncf %71 : vector<2x544xf32> to vector<2x544xbf16>
    %c0_45 = arith.constant 0 : index
    %c0_46 = arith.constant 0 : index
    %73 = vector.load %arg11[%c0_45, %c0_46] : memref<544x32xbf16, #tpu.memory_space<vmem>>, vector<544x32xbf16>
    %cst_47 = arith.constant dense<0.000000e+00> : vector<2x32xf32>
    %74 = tpu.matmul %72, %73, %cst_47 {dimension_numbers = #tpu.dot_dimension_numbers<[1], [0], [0], [1], [0, 0, 1, 1], [], []>} : vector<2x544xbf16>, vector<544x32xbf16>, vector<2x32xf32> -> vector<2x32xf32>
    %75 = arith.addf %70, %74 : vector<2x32xf32>
    %76 = vector.extract_strided_slice %66 {offsets = [4, 0], sizes = [2, 544], strides = [1, 1]} : vector<6x544xf32> to vector<2x544xf32>
    %77 = arith.truncf %76 : vector<2x544xf32> to vector<2x544xbf16>
    %c0_48 = arith.constant 0 : index
    %c0_49 = arith.constant 0 : index
    %78 = vector.load %arg12[%c0_48, %c0_49] : memref<544x32xbf16, #tpu.memory_space<vmem>>, vector<544x32xbf16>
    %cst_50 = arith.constant dense<0.000000e+00> : vector<2x32xf32>
    %79 = tpu.matmul %77, %78, %cst_50 {dimension_numbers = #tpu.dot_dimension_numbers<[1], [0], [0], [1], [0, 0, 1, 1], [], []>} : vector<2x544xbf16>, vector<544x32xbf16>, vector<2x32xf32> -> vector<2x32xf32>
    %80 = arith.addf %75, %79 : vector<2x32xf32>
    %c0_51 = arith.constant 0 : index
    %c0_52 = arith.constant 0 : index
    %81 = vector.load %arg13[%c0_51, %c0_52] : memref<1x32xf32, #tpu.memory_space<vmem>>, vector<1x32xf32>
    %82 = vector.broadcast %81 : vector<1x32xf32> to vector<2x32xf32>
    %83 = arith.addf %80, %82 : vector<2x32xf32>
    %84 = math.tanh %83 : vector<2x32xf32>
    %85 = arith.truncf %84 : vector<2x32xf32> to vector<2x32xbf16>
    %c0_53 = arith.constant 0 : index
    %c0_54 = arith.constant 0 : index
    %86 = vector.load %arg14[%c0_53, %c0_54] : memref<32x32xbf16, #tpu.memory_space<vmem>>, vector<32x32xbf16>
    %cst_55 = arith.constant dense<0.000000e+00> : vector<2x32xf32>
    %87 = tpu.matmul %85, %86, %cst_55 {dimension_numbers = #tpu.dot_dimension_numbers<[1], [0], [0], [1], [0, 0, 1, 1], [], []>} : vector<2x32xbf16>, vector<32x32xbf16>, vector<2x32xf32> -> vector<2x32xf32>
    %c0_56 = arith.constant 0 : index
    %c0_57 = arith.constant 0 : index
    %88 = vector.load %arg15[%c0_56, %c0_57] : memref<1x32xf32, #tpu.memory_space<vmem>>, vector<1x32xf32>
    %89 = vector.broadcast %88 : vector<1x32xf32> to vector<2x32xf32>
    %90 = arith.addf %87, %89 : vector<2x32xf32>
    %c0_58 = arith.constant 0 : index
    %c0_59 = arith.constant 0 : index
    %91 = vector.load %arg28[%c0_58, %c0_59] : memref<2x32xf32, #tpu.memory_space<vmem>>, vector<2x32xf32>
    tpu.vector_store %arg28[%c0_58, %c0_59], %90 {strides = array<i32>} : memref<2x32xf32, #tpu.memory_space<vmem>>, vector<2x32xf32>,
    %92 = vector.extract_strided_slice %90 {offsets = [0, 0], sizes = [2, 16], strides = [1, 1]} : vector<2x32xf32> to vector<2x16xf32>
    %93 = vector.extract_strided_slice %90 {offsets = [0, 16], sizes = [2, 16], strides = [1, 1]} : vector<2x32xf32> to vector<2x16xf32>
    %c0_60 = arith.constant 0 : index
    %c0_61 = arith.constant 0 : index
    %94 = vector.load %arg1[%c0_60, %c0_61] : memref<2x16xf32, #tpu.memory_space<vmem>>, vector<2x16xf32>
    %cst_62 = arith.constant 5.000000e-01 : f32
    %95 = vector.broadcast %cst_62 : f32 to vector<2x16xf32>
    %96 = arith.mulf %95, %93 : vector<2x16xf32>
    %97 = math.exp %96 : vector<2x16xf32>
    %98 = arith.mulf %94, %97 : vector<2x16xf32>
    %99 = arith.addf %92, %98 : vector<2x16xf32>
    %100 = arith.truncf %99 : vector<2x16xf32> to vector<2x16xbf16>
    %c0_63 = arith.constant 0 : index
    %c0_64 = arith.constant 0 : index
    %101 = vector.load %arg16[%c0_63, %c0_64] : memref<16x4096xbf16, #tpu.memory_space<vmem>>, vector<16x4096xbf16>
    %cst_65 = arith.constant dense<0.000000e+00> : vector<2x4096xf32>
    %102 = tpu.matmul %100, %101, %cst_65 {dimension_numbers = #tpu.dot_dimension_numbers<[1], [0], [0], [1], [0, 0, 1, 1], [], []>} : vector<2x16xbf16>, vector<16x4096xbf16>, vector<2x4096xf32> -> vector<2x4096xf32>
    %c0_66 = arith.constant 0 : index
    %c0_67 = arith.constant 0 : index
    %103 = vector.load %arg17[%c0_66, %c0_67] : memref<1x4096xf32, #tpu.memory_space<vmem>>, vector<1x4096xf32>
    %104 = vector.broadcast %103 : vector<1x4096xf32> to vector<2x4096xf32>
    %105 = arith.addf %102, %104 : vector<2x4096xf32>
    %cst_68 = arith.constant 0.000000e+00 : f32
    %106 = vector.broadcast %cst_68 : f32 to vector<2x4096xf32>
    %107 = arith.maximumf %105, %106 : vector<2x4096xf32>
    %108 = arith.truncf %99 : vector<2x16xf32> to vector<2x16xbf16>
    %c0_69 = arith.constant 0 : index
    %c0_70 = arith.constant 0 : index
    %109 = vector.load %arg18[%c0_69, %c0_70] : memref<16x4096xbf16, #tpu.memory_space<vmem>>, vector<16x4096xbf16>
    %cst_71 = arith.constant dense<0.000000e+00> : vector<2x4096xf32>
    %110 = tpu.matmul %108, %109, %cst_71 {dimension_numbers = #tpu.dot_dimension_numbers<[1], [0], [0], [1], [0, 0, 1, 1], [], []>} : vector<2x16xbf16>, vector<16x4096xbf16>, vector<2x4096xf32> -> vector<2x4096xf32>
    %c0_72 = arith.constant 0 : index
    %c0_73 = arith.constant 0 : index
    %111 = vector.load %arg19[%c0_72, %c0_73] : memref<1x4096xf32, #tpu.memory_space<vmem>>, vector<1x4096xf32>
    %112 = vector.broadcast %111 : vector<1x4096xf32> to vector<2x4096xf32>
    %113 = arith.addf %110, %112 : vector<2x4096xf32>
    %cst_74 = arith.constant 0.000000e+00 : f32
    %114 = vector.broadcast %cst_74 : f32 to vector<2x4096xf32>
    %115 = arith.maximumf %113, %114 : vector<2x4096xf32>
    %116 = tpu.concatenate %107, %115 in 0 : vector<2x4096xf32>, vector<2x4096xf32> -> vector<4x4096xf32>
    %117 = vector.extract_strided_slice %116 {offsets = [0, 0], sizes = [4, 128], strides = [1, 1]} : vector<4x4096xf32> to vector<4x128xf32>
    %118 = vector.extract_strided_slice %116 {offsets = [0, 128], sizes = [4, 128], strides = [1, 1]} : vector<4x4096xf32> to vector<4x128xf32>
    %119 = tpu.concatenate %117, %118 in 0 : vector<4x128xf32>, vector<4x128xf32> -> vector<8x128xf32>
    %c0_75 = arith.constant 0 : index
    %c0_76 = arith.constant 0 : index
    %120 = vector.load %arg30[%c0_75, %c0_76] : memref<128x128xf32, #tpu.memory_space<vmem>>, vector<8x128xf32>
    tpu.vector_store %arg30[%c0_75, %c0_76], %119 {strides = array<i32>} : memref<128x128xf32, #tpu.memory_space<vmem>>, vector<8x128xf32>,
    %121 = vector.extract_strided_slice %116 {offsets = [0, 256], sizes = [4, 128], strides = [1, 1]} : vector<4x4096xf32> to vector<4x128xf32>
    %122 = vector.extract_strided_slice %116 {offsets = [0, 384], sizes = [4, 128], strides = [1, 1]} : vector<4x4096xf32> to vector<4x128xf32>
    %123 = tpu.concatenate %121, %122 in 0 : vector<4x128xf32>, vector<4x128xf32> -> vector<8x128xf32>
    %c8 = arith.constant 8 : index
    %c0_77 = arith.constant 0 : index
    %124 = vector.load %arg30[%c8, %c0_77] : memref<128x128xf32, #tpu.memory_space<vmem>>, vector<8x128xf32>
    tpu.vector_store %arg30[%c8, %c0_77], %123 {strides = array<i32>} : memref<128x128xf32, #tpu.memory_space<vmem>>, vector<8x128xf32>,
    %125 = vector.extract_strided_slice %116 {offsets = [0, 512], sizes = [4, 128], strides = [1, 1]} : vector<4x4096xf32> to vector<4x128xf32>
    %126 = vector.extract_strided_slice %116 {offsets = [0, 640], sizes = [4, 128], strides = [1, 1]} : vector<4x4096xf32> to vector<4x128xf32>
    %127 = tpu.concatenate %125, %126 in 0 : vector<4x128xf32>, vector<4x128xf32> -> vector<8x128xf32>
    %c16 = arith.constant 16 : index
    %c0_78 = arith.constant 0 : index
    %128 = vector.load %arg30[%c16, %c0_78] : memref<128x128xf32, #tpu.memory_space<vmem>>, vector<8x128xf32>
    tpu.vector_store %arg30[%c16, %c0_78], %127 {strides = array<i32>} : memref<128x128xf32, #tpu.memory_space<vmem>>, vector<8x128xf32>,
    %129 = vector.extract_strided_slice %116 {offsets = [0, 768], sizes = [4, 128], strides = [1, 1]} : vector<4x4096xf32> to vector<4x128xf32>
    %130 = vector.extract_strided_slice %116 {offsets = [0, 896], sizes = [4, 128], strides = [1, 1]} : vector<4x4096xf32> to vector<4x128xf32>
    %131 = tpu.concatenate %129, %130 in 0 : vector<4x128xf32>, vector<4x128xf32> -> vector<8x128xf32>
    %c24 = arith.constant 24 : index
    %c0_79 = arith.constant 0 : index
    %132 = vector.load %arg30[%c24, %c0_79] : memref<128x128xf32, #tpu.memory_space<vmem>>, vector<8x128xf32>
    tpu.vector_store %arg30[%c24, %c0_79], %131 {strides = array<i32>} : memref<128x128xf32, #tpu.memory_space<vmem>>, vector<8x128xf32>,
    %133 = vector.extract_strided_slice %116 {offsets = [0, 1024], sizes = [4, 128], strides = [1, 1]} : vector<4x4096xf32> to vector<4x128xf32>
    %134 = vector.extract_strided_slice %116 {offsets = [0, 1152], sizes = [4, 128], strides = [1, 1]} : vector<4x4096xf32> to vector<4x128xf32>
    %135 = tpu.concatenate %133, %134 in 0 : vector<4x128xf32>, vector<4x128xf32> -> vector<8x128xf32>
    %c32 = arith.constant 32 : index
    %c0_80 = arith.constant 0 : index
    %136 = vector.load %arg30[%c32, %c0_80] : memref<128x128xf32, #tpu.memory_space<vmem>>, vector<8x128xf32>
    tpu.vector_store %arg30[%c32, %c0_80], %135 {strides = array<i32>} : memref<128x128xf32, #tpu.memory_space<vmem>>, vector<8x128xf32>,
    %137 = vector.extract_strided_slice %116 {offsets = [0, 1280], sizes = [4, 128], strides = [1, 1]} : vector<4x4096xf32> to vector<4x128xf32>
    %138 = vector.extract_strided_slice %116 {offsets = [0, 1408], sizes = [4, 128], strides = [1, 1]} : vector<4x4096xf32> to vector<4x128xf32>
    %139 = tpu.concatenate %137, %138 in 0 : vector<4x128xf32>, vector<4x128xf32> -> vector<8x128xf32>
    %c40 = arith.constant 40 : index
    %c0_81 = arith.constant 0 : index
    %140 = vector.load %arg30[%c40, %c0_81] : memref<128x128xf32, #tpu.memory_space<vmem>>, vector<8x128xf32>
    tpu.vector_store %arg30[%c40, %c0_81], %139 {strides = array<i32>} : memref<128x128xf32, #tpu.memory_space<vmem>>, vector<8x128xf32>,
    %141 = vector.extract_strided_slice %116 {offsets = [0, 1536], sizes = [4, 128], strides = [1, 1]} : vector<4x4096xf32> to vector<4x128xf32>
    %142 = vector.extract_strided_slice %116 {offsets = [0, 1664], sizes = [4, 128], strides = [1, 1]} : vector<4x4096xf32> to vector<4x128xf32>
    %143 = tpu.concatenate %141, %142 in 0 : vector<4x128xf32>, vector<4x128xf32> -> vector<8x128xf32>
    %c48 = arith.constant 48 : index
    %c0_82 = arith.constant 0 : index
    %144 = vector.load %arg30[%c48, %c0_82] : memref<128x128xf32, #tpu.memory_space<vmem>>, vector<8x128xf32>
    tpu.vector_store %arg30[%c48, %c0_82], %143 {strides = array<i32>} : memref<128x128xf32, #tpu.memory_space<vmem>>, vector<8x128xf32>,
    %145 = vector.extract_strided_slice %116 {offsets = [0, 1792], sizes = [4, 128], strides = [1, 1]} : vector<4x4096xf32> to vector<4x128xf32>
    %146 = vector.extract_strided_slice %116 {offsets = [0, 1920], sizes = [4, 128], strides = [1, 1]} : vector<4x4096xf32> to vector<4x128xf32>
    %147 = tpu.concatenate %145, %146 in 0 : vector<4x128xf32>, vector<4x128xf32> -> vector<8x128xf32>
    %c56 = arith.constant 56 : index
    %c0_83 = arith.constant 0 : index
    %148 = vector.load %arg30[%c56, %c0_83] : memref<128x128xf32, #tpu.memory_space<vmem>>, vector<8x128xf32>
    tpu.vector_store %arg30[%c56, %c0_83], %147 {strides = array<i32>} : memref<128x128xf32, #tpu.memory_space<vmem>>, vector<8x128xf32>,
    %149 = vector.extract_strided_slice %116 {offsets = [0, 2048], sizes = [4, 128], strides = [1, 1]} : vector<4x4096xf32> to vector<4x128xf32>
    %150 = vector.extract_strided_slice %116 {offsets = [0, 2176], sizes = [4, 128], strides = [1, 1]} : vector<4x4096xf32> to vector<4x128xf32>
    %151 = tpu.concatenate %149, %150 in 0 : vector<4x128xf32>, vector<4x128xf32> -> vector<8x128xf32>
    %c64 = arith.constant 64 : index
    %c0_84 = arith.constant 0 : index
    %152 = vector.load %arg30[%c64, %c0_84] : memref<128x128xf32, #tpu.memory_space<vmem>>, vector<8x128xf32>
    tpu.vector_store %arg30[%c64, %c0_84], %151 {strides = array<i32>} : memref<128x128xf32, #tpu.memory_space<vmem>>, vector<8x128xf32>,
    %153 = vector.extract_strided_slice %116 {offsets = [0, 2304], sizes = [4, 128], strides = [1, 1]} : vector<4x4096xf32> to vector<4x128xf32>
    %154 = vector.extract_strided_slice %116 {offsets = [0, 2432], sizes = [4, 128], strides = [1, 1]} : vector<4x4096xf32> to vector<4x128xf32>
    %155 = tpu.concatenate %153, %154 in 0 : vector<4x128xf32>, vector<4x128xf32> -> vector<8x128xf32>
    %c72 = arith.constant 72 : index
    %c0_85 = arith.constant 0 : index
    %156 = vector.load %arg30[%c72, %c0_85] : memref<128x128xf32, #tpu.memory_space<vmem>>, vector<8x128xf32>
    tpu.vector_store %arg30[%c72, %c0_85], %155 {strides = array<i32>} : memref<128x128xf32, #tpu.memory_space<vmem>>, vector<8x128xf32>,
    %157 = vector.extract_strided_slice %116 {offsets = [0, 2560], sizes = [4, 128], strides = [1, 1]} : vector<4x4096xf32> to vector<4x128xf32>
    %158 = vector.extract_strided_slice %116 {offsets = [0, 2688], sizes = [4, 128], strides = [1, 1]} : vector<4x4096xf32> to vector<4x128xf32>
    %159 = tpu.concatenate %157, %158 in 0 : vector<4x128xf32>, vector<4x128xf32> -> vector<8x128xf32>
    %c80 = arith.constant 80 : index
    %c0_86 = arith.constant 0 : index
    %160 = vector.load %arg30[%c80, %c0_86] : memref<128x128xf32, #tpu.memory_space<vmem>>, vector<8x128xf32>
    tpu.vector_store %arg30[%c80, %c0_86], %159 {strides = array<i32>} : memref<128x128xf32, #tpu.memory_space<vmem>>, vector<8x128xf32>,
    %161 = vector.extract_strided_slice %116 {offsets = [0, 2816], sizes = [4, 128], strides = [1, 1]} : vector<4x4096xf32> to vector<4x128xf32>
    %162 = vector.extract_strided_slice %116 {offsets = [0, 2944], sizes = [4, 128], strides = [1, 1]} : vector<4x4096xf32> to vector<4x128xf32>
    %163 = tpu.concatenate %161, %162 in 0 : vector<4x128xf32>, vector<4x128xf32> -> vector<8x128xf32>
    %c88 = arith.constant 88 : index
    %c0_87 = arith.constant 0 : index
    %164 = vector.load %arg30[%c88, %c0_87] : memref<128x128xf32, #tpu.memory_space<vmem>>, vector<8x128xf32>
    tpu.vector_store %arg30[%c88, %c0_87], %163 {strides = array<i32>} : memref<128x128xf32, #tpu.memory_space<vmem>>, vector<8x128xf32>,
    %165 = vector.extract_strided_slice %116 {offsets = [0, 3072], sizes = [4, 128], strides = [1, 1]} : vector<4x4096xf32> to vector<4x128xf32>
    %166 = vector.extract_strided_slice %116 {offsets = [0, 3200], sizes = [4, 128], strides = [1, 1]} : vector<4x4096xf32> to vector<4x128xf32>
    %167 = tpu.concatenate %165, %166 in 0 : vector<4x128xf32>, vector<4x128xf32> -> vector<8x128xf32>
    %c96 = arith.constant 96 : index
    %c0_88 = arith.constant 0 : index
    %168 = vector.load %arg30[%c96, %c0_88] : memref<128x128xf32, #tpu.memory_space<vmem>>, vector<8x128xf32>
    tpu.vector_store %arg30[%c96, %c0_88], %167 {strides = array<i32>} : memref<128x128xf32, #tpu.memory_space<vmem>>, vector<8x128xf32>,
    %169 = vector.extract_strided_slice %116 {offsets = [0, 3328], sizes = [4, 128], strides = [1, 1]} : vector<4x4096xf32> to vector<4x128xf32>
    %170 = vector.extract_strided_slice %116 {offsets = [0, 3456], sizes = [4, 128], strides = [1, 1]} : vector<4x4096xf32> to vector<4x128xf32>
    %171 = tpu.concatenate %169, %170 in 0 : vector<4x128xf32>, vector<4x128xf32> -> vector<8x128xf32>
    %c104 = arith.constant 104 : index
    %c0_89 = arith.constant 0 : index
    %172 = vector.load %arg30[%c104, %c0_89] : memref<128x128xf32, #tpu.memory_space<vmem>>, vector<8x128xf32>
    tpu.vector_store %arg30[%c104, %c0_89], %171 {strides = array<i32>} : memref<128x128xf32, #tpu.memory_space<vmem>>, vector<8x128xf32>,
    %173 = vector.extract_strided_slice %116 {offsets = [0, 3584], sizes = [4, 128], strides = [1, 1]} : vector<4x4096xf32> to vector<4x128xf32>
    %174 = vector.extract_strided_slice %116 {offsets = [0, 3712], sizes = [4, 128], strides = [1, 1]} : vector<4x4096xf32> to vector<4x128xf32>
    %175 = tpu.concatenate %173, %174 in 0 : vector<4x128xf32>, vector<4x128xf32> -> vector<8x128xf32>
    %c112 = arith.constant 112 : index
    %c0_90 = arith.constant 0 : index
    %176 = vector.load %arg30[%c112, %c0_90] : memref<128x128xf32, #tpu.memory_space<vmem>>, vector<8x128xf32>
    tpu.vector_store %arg30[%c112, %c0_90], %175 {strides = array<i32>} : memref<128x128xf32, #tpu.memory_space<vmem>>, vector<8x128xf32>,
    %177 = vector.extract_strided_slice %116 {offsets = [0, 3840], sizes = [4, 128], strides = [1, 1]} : vector<4x4096xf32> to vector<4x128xf32>
    %178 = vector.extract_strided_slice %116 {offsets = [0, 3968], sizes = [4, 128], strides = [1, 1]} : vector<4x4096xf32> to vector<4x128xf32>
    %179 = tpu.concatenate %177, %178 in 0 : vector<4x128xf32>, vector<4x128xf32> -> vector<8x128xf32>
    %c120 = arith.constant 120 : index
    %c0_91 = arith.constant 0 : index
    %180 = vector.load %arg30[%c120, %c0_91] : memref<128x128xf32, #tpu.memory_space<vmem>>, vector<8x128xf32>
    tpu.vector_store %arg30[%c120, %c0_91], %179 {strides = array<i32>} : memref<128x128xf32, #tpu.memory_space<vmem>>, vector<8x128xf32>,
    %c0_92 = arith.constant 0 : index
    %c0_93 = arith.constant 0 : index
    %181 = vector.load %arg30[%c0_92, %c0_93] : memref<128x128xf32, #tpu.memory_space<vmem>>, vector<128x128xf32>
    %182 = arith.truncf %181 : vector<128x128xf32> to vector<128x128xbf16>
    %c0_94 = arith.constant 0 : index
    %c0_95 = arith.constant 0 : index
    %183 = vector.load %arg20[%c0_94, %c0_95] : memref<256x128xbf16, #tpu.memory_space<vmem>>, vector<256x128xbf16>
    %cst_96 = arith.constant dense<0.000000e+00> : vector<256x128xf32>
    %184 = tpu.matmul %183, %182, %cst_96 {dimension_numbers = #tpu.dot_dimension_numbers<[1], [0], [0], [1], [0, 0, 1, 1], [], []>} : vector<256x128xbf16>, vector<128x128xbf16>, vector<256x128xf32> -> vector<256x128xf32>
    %c0_97 = arith.constant 0 : index
    %c0_98 = arith.constant 0 : index
    %185 = vector.load %arg21[%c0_97, %c0_98] : memref<256x128xbf16, #tpu.memory_space<vmem>>, vector<256x128xbf16>
    %cst_99 = arith.constant dense<0.000000e+00> : vector<256x128xf32>
    %186 = tpu.matmul %185, %182, %cst_99 {dimension_numbers = #tpu.dot_dimension_numbers<[1], [0], [0], [1], [0, 0, 1, 1], [], []>} : vector<256x128xbf16>, vector<128x128xbf16>, vector<256x128xf32> -> vector<256x128xf32>
    %c1_i32 = arith.constant 1 : i32
    %187 = tpu.dynamic_rotate %186 by %c1_i32 dim 1 : vector<256x128xf32>, i32 -> vector<256x128xf32>
    %188 = arith.addf %184, %187 : vector<256x128xf32>
    %c0_100 = arith.constant 0 : index
    %c0_101 = arith.constant 0 : index
    %189 = vector.load %arg22[%c0_100, %c0_101] : memref<256x128xbf16, #tpu.memory_space<vmem>>, vector<256x128xbf16>
    %cst_102 = arith.constant dense<0.000000e+00> : vector<256x128xf32>
    %190 = tpu.matmul %189, %182, %cst_102 {dimension_numbers = #tpu.dot_dimension_numbers<[1], [0], [0], [1], [0, 0, 1, 1], [], []>} : vector<256x128xbf16>, vector<128x128xbf16>, vector<256x128xf32> -> vector<256x128xf32>
    %c2_i32 = arith.constant 2 : i32
    %191 = tpu.dynamic_rotate %190 by %c2_i32 dim 1 : vector<256x128xf32>, i32 -> vector<256x128xf32>
    %192 = arith.addf %188, %191 : vector<256x128xf32>
    %c0_103 = arith.constant 0 : index
    %c0_104 = arith.constant 0 : index
    %193 = vector.load %arg23[%c0_103, %c0_104] : memref<256x128xf32, #tpu.memory_space<vmem>>, vector<256x128xf32>
    %194 = arith.addf %192, %193 : vector<256x128xf32>
    %cst_105 = arith.constant 0.000000e+00 : f32
    %195 = vector.broadcast %cst_105 : f32 to vector<256x128xf32>
    %196 = arith.maximumf %194, %195 : vector<256x128xf32>
    %197 = arith.truncf %196 : vector<256x128xf32> to vector<256x128xbf16>
    %c0_106 = arith.constant 0 : index
    %c0_107 = arith.constant 0 : index
    %198 = vector.load %arg24[%c0_106, %c0_107] : memref<4x256xbf16, #tpu.memory_space<vmem>>, vector<4x256xbf16>
    %cst_108 = arith.constant dense<0.000000e+00> : vector<4x128xf32>
    %199 = tpu.matmul %198, %197, %cst_108 {dimension_numbers = #tpu.dot_dimension_numbers<[1], [0], [0], [1], [0, 0, 1, 1], [], []>} : vector<4x256xbf16>, vector<256x128xbf16>, vector<4x128xf32> -> vector<4x128xf32>
    %c0_109 = arith.constant 0 : index
    %c0_110 = arith.constant 0 : index
    %200 = vector.load %arg25[%c0_109, %c0_110] : memref<4x256xbf16, #tpu.memory_space<vmem>>, vector<4x256xbf16>
    %cst_111 = arith.constant dense<0.000000e+00> : vector<4x128xf32>
    %201 = tpu.matmul %200, %197, %cst_111 {dimension_numbers = #tpu.dot_dimension_numbers<[1], [0], [0], [1], [0, 0, 1, 1], [], []>} : vector<4x256xbf16>, vector<256x128xbf16>, vector<4x128xf32> -> vector<4x128xf32>
    %c1_i32_112 = arith.constant 1 : i32
    %202 = tpu.dynamic_rotate %201 by %c1_i32_112 dim 1 : vector<4x128xf32>, i32 -> vector<4x128xf32>
    %203 = arith.addf %199, %202 : vector<4x128xf32>
    %c0_113 = arith.constant 0 : index
    %c0_114 = arith.constant 0 : index
    %204 = vector.load %arg26[%c0_113, %c0_114] : memref<4x256xbf16, #tpu.memory_space<vmem>>, vector<4x256xbf16>
    %cst_115 = arith.constant dense<0.000000e+00> : vector<4x128xf32>
    %205 = tpu.matmul %204, %197, %cst_115 {dimension_numbers = #tpu.dot_dimension_numbers<[1], [0], [0], [1], [0, 0, 1, 1], [], []>} : vector<4x256xbf16>, vector<256x128xbf16>, vector<4x128xf32> -> vector<4x128xf32>
    %c2_i32_116 = arith.constant 2 : i32
    %206 = tpu.dynamic_rotate %205 by %c2_i32_116 dim 1 : vector<4x128xf32>, i32 -> vector<4x128xf32>
    %207 = arith.addf %203, %206 : vector<4x128xf32>
    %c0_117 = arith.constant 0 : index
    %c0_118 = arith.constant 0 : index
    %208 = vector.load %arg27[%c0_117, %c0_118] : memref<1x128xf32, #tpu.memory_space<vmem>>, vector<1x128xf32>
    %209 = vector.broadcast %208 : vector<1x128xf32> to vector<4x128xf32>
    %210 = arith.addf %207, %209 : vector<4x128xf32>
    %c0_119 = arith.constant 0 : index
    %c0_120 = arith.constant 0 : index
    %211 = vector.load %arg29[%c0_119, %c0_120] : memref<4x128xf32, #tpu.memory_space<vmem>>, vector<4x128xf32>
    tpu.vector_store %arg29[%c0_119, %c0_120], %210 {strides = array<i32>} : memref<4x128xf32, #tpu.memory_space<vmem>>, vector<4x128xf32>,
    return
  }
}

</mosaic_0001>

<llo_original>
// kernel: forward.1
$region0: #{forward.1}
  #allocation0 [shape = 'u32[]', space=smem, size = 0x4, offset = 0x4, fixed_abs, tag = 'smem constant byte address 0x4 - core index']
  #allocation1 [shape = 'u32[144,128]{1,0:T(1,128)}', space=vmem, size = 0x12000, scoped, tag = 'internal scratch']
  #allocation2 [shape = 'f32[128,128]{1,0:T(8,128)}', space=vmem, size = 0x10000, scoped, tag = 'scratch operand']
  %s0 = inlined_call_operand.smem [shape: u32[30], index: -1, kind: input, shape index: {}]
  %s1 = sld [smem:[%s0]]
  %s2 = scalar_lea.smem %s0, 1
  %s3 = sld [smem:[%s2]]
  %s4 = scalar_lea.smem %s0, 2
  %s5 = sld [smem:[%s4]]
  %s6 = scalar_lea.smem %s0, 3
  %s7 = sld [smem:[%s6]]
  %s8 = scalar_lea.smem %s0, 4
  %s9 = sld [smem:[%s8]]
  %s10 = scalar_lea.smem %s0, 5
  %s11 = sld [smem:[%s10]]
  %s12 = scalar_lea.smem %s0, 6
  %s13 = sld [smem:[%s12]]
  %s14 = scalar_lea.smem %s0, 7
  %s15 = sld [smem:[%s14]]
  %s16 = scalar_lea.smem %s0, 8
  %s17 = sld [smem:[%s16]]
  %s18 = scalar_lea.smem %s0, 9
  %s19 = sld [smem:[%s18]]
  %s20 = scalar_lea.smem %s0, 10
  %s21 = sld [smem:[%s20]]
  %s22 = scalar_lea.smem %s0, 11
  %s23 = sld [smem:[%s22]]
  %s24 = scalar_lea.smem %s0, 12
  %s25 = sld [smem:[%s24]]
  %s26 = scalar_lea.smem %s0, 13
  %s27 = sld [smem:[%s26]]
  %s28 = scalar_lea.smem %s0, 14
  %s29 = sld [smem:[%s28]]
  %s30 = scalar_lea.smem %s0, 15
  %s31 = sld [smem:[%s30]]
  %s32 = scalar_lea.smem %s0, 16
  %s33 = sld [smem:[%s32]]
  %s34 = scalar_lea.smem %s0, 17
  %s35 = sld [smem:[%s34]]
  %s36 = scalar_lea.smem %s0, 18
  %s37 = sld [smem:[%s36]]
  %s38 = scalar_lea.smem %s0, 19
  %s39 = sld [smem:[%s38]]
  %s40 = scalar_lea.smem %s0, 20
  %s41 = sld [smem:[%s40]]
  %s42 = scalar_lea.smem %s0, 21
  %s43 = sld [smem:[%s42]]
  %s44 = scalar_lea.smem %s0, 22
  %s45 = sld [smem:[%s44]]
  %s46 = scalar_lea.smem %s0, 23
  %s47 = sld [smem:[%s46]]
  %s48 = scalar_lea.smem %s0, 24
  %s49 = sld [smem:[%s48]]
  %s50 = scalar_lea.smem %s0, 25
  %s51 = sld [smem:[%s50]]
  %s52 = scalar_lea.smem %s0, 26
  %s53 = sld [smem:[%s52]]
  %s54 = scalar_lea.smem %s0, 27
  %s55 = sld [smem:[%s54]]
  %s56 = scalar_lea.smem %s0, 28
  %s57 = sld [smem:[%s56]]
  %s58 = scalar_lea.smem %s0, 29
  %s59 = sld [smem:[%s58]]
  %60 = xla_tuple %s57, %s59
  %s61 = sld [smem:[#allocation0]]
  $region130: #{forward.1} parent=0
    _
  %s63 = ssub.s32 1, %s61
  %s64 = scalar_select 0, %s63, %s61
  // Predicated region
  $region2: #{forward.1} parent=0 // pred_check
    _
  $region3: #{forward.1} parent=0 // pred_check_branch
    %66 = sbr.rel (0) target = $region5
  $region4: #{forward.1} parent=0 // pred_region
    _
  $region5: #{forward.1} parent=0 // pred_fallthru
    _
  // Predicated region
  $region6: #{forward.1} parent=0 // pred_check
    _
  $region7: #{forward.1} parent=0 // pred_check_branch
    %68 = sbr.rel (0) target = $region9
  $region8: #{forward.1} parent=0 // pred_region
    _
  $region9: #{forward.1} parent=0 // pred_fallthru
    _
  // Predicated region
  $region10: #{forward.1} parent=0 // pred_check
    _
  $region11: #{forward.1} parent=0 // pred_check_branch
    %70 = sbr.rel (0) target = $region13
  $region12: #{forward.1} parent=0 // pred_region
    _
  $region13: #{forward.1} parent=0 // pred_fallthru
    _
  // Predicated region
  $region14: #{forward.1} parent=0 // pred_check
    _
  $region15: #{forward.1} parent=0 // pred_check_branch
    %72 = sbr.rel (0) target = $region17
  $region16: #{forward.1} parent=0 // pred_region
    _
  $region17: #{forward.1} parent=0 // pred_fallthru
    _
  // Predicated region
  $region18: #{forward.1} parent=0 // pred_check
    _
  $region19: #{forward.1} parent=0 // pred_check_branch
    %74 = sbr.rel (0) target = $region21
  $region20: #{forward.1} parent=0 // pred_region
    _
  $region21: #{forward.1} parent=0 // pred_fallthru
    _
  // Predicated region
  $region22: #{forward.1} parent=0 // pred_check
    _
  $region23: #{forward.1} parent=0 // pred_check_branch
    %76 = sbr.rel (0) target = $region25
  $region24: #{forward.1} parent=0 // pred_region
    _
  $region25: #{forward.1} parent=0 // pred_fallthru
    _
  // Predicated region
  $region26: #{forward.1} parent=0 // pred_check
    _
  $region27: #{forward.1} parent=0 // pred_check_branch
    %78 = sbr.rel (0) target = $region29
  $region28: #{forward.1} parent=0 // pred_region
    _
  $region29: #{forward.1} parent=0 // pred_fallthru
    _
  // Predicated region
  $region30: #{forward.1} parent=0 // pred_check
    _
  $region31: #{forward.1} parent=0 // pred_check_branch
    %80 = sbr.rel (0) target = $region33
  $region32: #{forward.1} parent=0 // pred_region
    _
  $region33: #{forward.1} parent=0 // pred_fallthru
    _
  // Predicated region
  $region34: #{forward.1} parent=0 // pred_check
    _
  $region35: #{forward.1} parent=0 // pred_check_branch
    %82 = sbr.rel (0) target = $region37
  $region36: #{forward.1} parent=0 // pred_region
    _
  $region37: #{forward.1} parent=0 // pred_fallthru
    _
  // Predicated region
  $region38: #{forward.1} parent=0 // pred_check
    _
  $region39: #{forward.1} parent=0 // pred_check_branch
    %84 = sbr.rel (0) target = $region41
  $region40: #{forward.1} parent=0 // pred_region
    _
  $region41: #{forward.1} parent=0 // pred_fallthru
    _
  // Predicated region
  $region42: #{forward.1} parent=0 // pred_check
    _
  $region43: #{forward.1} parent=0 // pred_check_branch
    %86 = sbr.rel (0) target = $region45
  $region44: #{forward.1} parent=0 // pred_region
    _
  $region45: #{forward.1} parent=0 // pred_fallthru
    _
  // Predicated region
  $region46: #{forward.1} parent=0 // pred_check
    _
  $region47: #{forward.1} parent=0 // pred_check_branch
    %88 = sbr.rel (0) target = $region49
  $region48: #{forward.1} parent=0 // pred_region
    _
  $region49: #{forward.1} parent=0 // pred_fallthru
    _
  // Predicated region
  $region50: #{forward.1} parent=0 // pred_check
    _
  $region51: #{forward.1} parent=0 // pred_check_branch
    %90 = sbr.rel (0) target = $region53
  $region52: #{forward.1} parent=0 // pred_region
    _
  $region53: #{forward.1} parent=0 // pred_fallthru
    _
  // Predicated region
  $region54: #{forward.1} parent=0 // pred_check
    _
  $region55: #{forward.1} parent=0 // pred_check_branch
    %92 = sbr.rel (0) target = $region57
  $region56: #{forward.1} parent=0 // pred_region
    _
  $region57: #{forward.1} parent=0 // pred_fallthru
    _
  // Predicated region
  $region58: #{forward.1} parent=0 // pred_check
    _
  $region59: #{forward.1} parent=0 // pred_check_branch
    %94 = sbr.rel (0) target = $region61
  $region60: #{forward.1} parent=0 // pred_region
    _
  $region61: #{forward.1} parent=0 // pred_fallthru
    _
  // Predicated region
  $region62: #{forward.1} parent=0 // pred_check
    _
  $region63: #{forward.1} parent=0 // pred_check_branch
    %96 = sbr.rel (0) target = $region65
  $region64: #{forward.1} parent=0 // pred_region
    _
  $region65: #{forward.1} parent=0 // pred_fallthru
    _
  // Predicated region
  $region66: #{forward.1} parent=0 // pred_check
    _
  $region67: #{forward.1} parent=0 // pred_check_branch
    %98 = sbr.rel (0) target = $region69
  $region68: #{forward.1} parent=0 // pred_region
    _
  $region69: #{forward.1} parent=0 // pred_fallthru
    _
  // Predicated region
  $region70: #{forward.1} parent=0 // pred_check
    _
  $region71: #{forward.1} parent=0 // pred_check_branch
    %100 = sbr.rel (0) target = $region73
  $region72: #{forward.1} parent=0 // pred_region
    _
  $region73: #{forward.1} parent=0 // pred_fallthru
    _
  // Predicated region
  $region74: #{forward.1} parent=0 // pred_check
    _
  $region75: #{forward.1} parent=0 // pred_check_branch
    %102 = sbr.rel (0) target = $region77
  $region76: #{forward.1} parent=0 // pred_region
    _
  $region77: #{forward.1} parent=0 // pred_fallthru
    _
  // Predicated region
  $region78: #{forward.1} parent=0 // pred_check
    _
  $region79: #{forward.1} parent=0 // pred_check_branch
    %104 = sbr.rel (0) target = $region81
  $region80: #{forward.1} parent=0 // pred_region
    _
  $region81: #{forward.1} parent=0 // pred_fallthru
    _
  // Predicated region
  $region82: #{forward.1} parent=0 // pred_check
    _
  $region83: #{forward.1} parent=0 // pred_check_branch
    %106 = sbr.rel (0) target = $region85
  $region84: #{forward.1} parent=0 // pred_region
    _
  $region85: #{forward.1} parent=0 // pred_fallthru
    _
  // Predicated region
  $region86: #{forward.1} parent=0 // pred_check
    _
  $region87: #{forward.1} parent=0 // pred_check_branch
    %108 = sbr.rel (0) target = $region89
  $region88: #{forward.1} parent=0 // pred_region
    _
  $region89: #{forward.1} parent=0 // pred_fallthru
    _
  // Predicated region
  $region90: #{forward.1} parent=0 // pred_check
    _
  $region91: #{forward.1} parent=0 // pred_check_branch
    %110 = sbr.rel (0) target = $region93
  $region92: #{forward.1} parent=0 // pred_region
    _
  $region93: #{forward.1} parent=0 // pred_fallthru
    _
  // Predicated region
  $region94: #{forward.1} parent=0 // pred_check
    _
  $region95: #{forward.1} parent=0 // pred_check_branch
    %112 = sbr.rel (0) target = $region97
  $region96: #{forward.1} parent=0 // pred_region
    _
  $region97: #{forward.1} parent=0 // pred_fallthru
    _
  // Predicated region
  $region98: #{forward.1} parent=0 // pred_check
    _
  $region99: #{forward.1} parent=0 // pred_check_branch
    %114 = sbr.rel (0) target = $region101
  $region100: #{forward.1} parent=0 // pred_region
    _
  $region101: #{forward.1} parent=0 // pred_fallthru
    _
  // Predicated region
  $region102: #{forward.1} parent=0 // pred_check
    _
  $region103: #{forward.1} parent=0 // pred_check_branch
    %116 = sbr.rel (0) target = $region105
  $region104: #{forward.1} parent=0 // pred_region
    _
  $region105: #{forward.1} parent=0 // pred_fallthru
    _
  // Predicated region
  $region106: #{forward.1} parent=0 // pred_check
    _
  $region107: #{forward.1} parent=0 // pred_check_branch
    %118 = sbr.rel (0) target = $region109
  $region108: #{forward.1} parent=0 // pred_region
    _
  $region109: #{forward.1} parent=0 // pred_fallthru
    _
  // Predicated region
  $region110: #{forward.1} parent=0 // pred_check
    _
  $region111: #{forward.1} parent=0 // pred_check_branch
    %120 = sbr.rel (0) target = $region113
  $region112: #{forward.1} parent=0 // pred_region
    _
  $region113: #{forward.1} parent=0 // pred_fallthru
    _
  %s122 = scalar_lea.vmem %s1, 6
  %v123 = vld [vmem:[%s122] sm:$0x3]
  %v124 = vld [vmem:[%s1] sm:$0x3]
  %v125 = vmul.f32 %v124, %v123
  %s126 = scalar_lea.vmem %s1, 2
  %v127 = vld [vmem:[%s126] sm:$0x3]
  %v128 = vmul.f32 %v127, %v123
  %s129 = scalar_lea.vmem %s1, 4
  %v130 = vld [vmem:[%s129] sm:$0x3]
  %v131 = vmul.f32 %v130, %v123
  %v133 = vrot.slane %v128, 6
  %v136 = vrot.slane %v131, 4
  %vm138 = vcmask 1041408
  %v139 = vsel %vm138, %v125, %v133
  %vm140 = vcmask 1043456
  %v141 = vsel %vm140, %v139, %v136
  %v143 = vrot.slane %v123, 6
  %v145 = vrot.slane %v123, 4
  %v147 = vsel %vm138, %v123, %v143
  %v148 = vsel %vm140, %v147, %v145
  %v149 = vpack.c.bf16 %v141, %v141
  %v150 = vld [vmem:[%s5] sm:$0xff]
  %v151 = vld [vmem:[%s5 + $0x8] sm:$0xff]
  %v152 = vld [vmem:[%s5 + $0x10] sm:$0xff]
  %v153 = vld [vmem:[%s5 + $0x18] sm:$0xff]
  %v154 = vld [vmem:[%s5 + $0x20] sm:$0xff]
  %v155 = vld [vmem:[%s5 + $0x28] sm:$0xff]
  %v156 = vld [vmem:[%s5 + $0x30] sm:$0xff]
  %v157 = vld [vmem:[%s5 + $0x38] sm:$0xff]
  %v158 = vld [vmem:[%s5 + $0x40] sm:$0xff]
  %v159 = vld [vmem:[%s5 + $0x48] sm:$0xff]
  %v160 = vld [vmem:[%s5 + $0x50] sm:$0xff]
  %v161 = vld [vmem:[%s5 + $0x58] sm:$0xff]
  %v162 = vld [vmem:[%s5 + $0x60] sm:$0xff]
  %v163 = vld [vmem:[%s5 + $0x68] sm:$0xff]
  %v164 = vld [vmem:[%s5 + $0x70] sm:$0xff]
  %v165 = vld [vmem:[%s5 + $0x78] sm:$0xff]
  %v166 = vld [vmem:[%s5 + $0x80] sm:$0xff]
  %v167 = vld [vmem:[%s5 + $0x88] sm:$0xff]
  %v168 = vld [vmem:[%s5 + $0x90] sm:$0xff]
  %v169 = vld [vmem:[%s5 + $0x98] sm:$0xff]
  %v170 = vld [vmem:[%s5 + $0xa0] sm:$0xff]
  %v171 = vld [vmem:[%s5 + $0xa8] sm:$0xff]
  %v172 = vld [vmem:[%s5 + $0xb0] sm:$0xff]
  %v173 = vld [vmem:[%s5 + $0xb8] sm:$0xff]
  %v174 = vld [vmem:[%s5 + $0xc0] sm:$0xff]
  %v175 = vld [vmem:[%s5 + $0xc8] sm:$0xff]
  %v176 = vld [vmem:[%s5 + $0xd0] sm:$0xff]
  %v177 = vld [vmem:[%s5 + $0xd8] sm:$0xff]
  %v178 = vld [vmem:[%s5 + $0xe0] sm:$0xff]
  %v179 = vld [vmem:[%s5 + $0xe8] sm:$0xff]
  %v180 = vld [vmem:[%s5 + $0xf0] sm:$0xff]
  %v181 = vld [vmem:[%s5 + $0xf8] sm:$0xff]
  %v182 = vld [vmem:[%s5 + $0x100] sm:$0xff]
  %v183 = vld [vmem:[%s5 + $0x108] sm:$0xff]
  %v184 = vld [vmem:[%s5 + $0x110] sm:$0xff]
  %v185 = vld [vmem:[%s5 + $0x118] sm:$0xff]
  %v186 = vld [vmem:[%s5 + $0x120] sm:$0xff]
  %v187 = vld [vmem:[%s5 + $0x128] sm:$0xff]
  %v188 = vld [vmem:[%s5 + $0x130] sm:$0xff]
  %v189 = vld [vmem:[%s5 + $0x138] sm:$0xff]
  %v190 = vld [vmem:[%s5 + $0x140] sm:$0xff]
  %v191 = vld [vmem:[%s5 + $0x148] sm:$0xff]
  %v192 = vld [vmem:[%s5 + $0x150] sm:$0xff]
  %v193 = vld [vmem:[%s5 + $0x158] sm:$0xff]
  %v194 = vld [vmem:[%s5 + $0x160] sm:$0xff]
  %v195 = vld [vmem:[%s5 + $0x168] sm:$0xff]
  %v196 = vld [vmem:[%s5 + $0x170] sm:$0xff]
  %v197 = vld [vmem:[%s5 + $0x178] sm:$0xff]
  %v198 = vld [vmem:[%s5 + $0x180] sm:$0xff]
  %v199 = vld [vmem:[%s5 + $0x188] sm:$0xff]
  %v200 = vld [vmem:[%s5 + $0x190] sm:$0xff]
  %v201 = vld [vmem:[%s5 + $0x198] sm:$0xff]
  %v202 = vld [vmem:[%s5 + $0x1a0] sm:$0xff]
  %v203 = vld [vmem:[%s5 + $0x1a8] sm:$0xff]
  %v204 = vld [vmem:[%s5 + $0x1b0] sm:$0xff]
  %v205 = vld [vmem:[%s5 + $0x1b8] sm:$0xff]
  %v206 = vld [vmem:[%s5 + $0x1c0] sm:$0xff]
  %v207 = vld [vmem:[%s5 + $0x1c8] sm:$0xff]
  %v208 = vld [vmem:[%s5 + $0x1d0] sm:$0xff]
  %v209 = vld [vmem:[%s5 + $0x1d8] sm:$0xff]
  %v210 = vld [vmem:[%s5 + $0x1e0] sm:$0xff]
  %v211 = vld [vmem:[%s5 + $0x1e8] sm:$0xff]
  %v212 = vld [vmem:[%s5 + $0x1f0] sm:$0xff]
  %v213 = vld [vmem:[%s5 + $0x1f8] sm:$0xff]
  %v214 = vld [vmem:[%s5 + $0x200] sm:$0xff]
  %v215 = vld [vmem:[%s5 + $0x208] sm:$0xff]
  %v216 = vld [vmem:[%s5 + $0x210] sm:$0xff]
  %v217 = vld [vmem:[%s5 + $0x218] sm:$0xff]
  %v218 = vld [vmem:[%s5 + $0x220] sm:$0xff]
  %v219 = vld [vmem:[%s5 + $0x228] sm:$0xff]
  %v220 = vld [vmem:[%s5 + $0x230] sm:$0xff]
  %v221 = vld [vmem:[%s5 + $0x238] sm:$0xff]
  %v222 = vld [vmem:[%s5 + $0x240] sm:$0xff]
  %v223 = vld [vmem:[%s5 + $0x248] sm:$0xff]
  %v224 = vld [vmem:[%s5 + $0x250] sm:$0xff]
  %v225 = vld [vmem:[%s5 + $0x258] sm:$0xff]
  %v226 = vld [vmem:[%s5 + $0x260] sm:$0xff]
  %v227 = vld [vmem:[%s5 + $0x268] sm:$0xff]
  %v228 = vld [vmem:[%s5 + $0x270] sm:$0xff]
  %v229 = vld [vmem:[%s5 + $0x278] sm:$0xff]
  %v230 = vld [vmem:[%s5 + $0x280] sm:$0xff]
  %v312 = vunpack.c.l.b16 %v150
  %v313 = vunpack.c.h.b16 %v150
  %v314 = vunpack.c.l.b16 %v151
  %v315 = vunpack.c.h.b16 %v151
  %v316 = vunpack.c.l.b16 %v152
  %v317 = vunpack.c.h.b16 %v152
  %v318 = vunpack.c.l.b16 %v153
  %v319 = vunpack.c.h.b16 %v153
  %v320 = vunpack.c.l.b16 %v154
  %v321 = vunpack.c.h.b16 %v154
  %v322 = vunpack.c.l.b16 %v155
  %v323 = vunpack.c.h.b16 %v155
  %v324 = vunpack.c.l.b16 %v156
  %v325 = vunpack.c.h.b16 %v156
  %v326 = vunpack.c.l.b16 %v157
  %v327 = vunpack.c.h.b16 %v157
  %v328 = vunpack.c.l.b16 %v158
  %v329 = vunpack.c.h.b16 %v158
  %v330 = vunpack.c.l.b16 %v159
  %v331 = vunpack.c.h.b16 %v159
  %v332 = vunpack.c.l.b16 %v160
  %v333 = vunpack.c.h.b16 %v160
  %v334 = vunpack.c.l.b16 %v161
  %v335 = vunpack.c.h.b16 %v161
  %v336 = vunpack.c.l.b16 %v162
  %v337 = vunpack.c.h.b16 %v162
  %v338 = vunpack.c.l.b16 %v163
  %v339 = vunpack.c.h.b16 %v163
  %v340 = vunpack.c.l.b16 %v164
  %v341 = vunpack.c.h.b16 %v164
  %v342 = vunpack.c.l.b16 %v165
  %v343 = vunpack.c.h.b16 %v165
  %v344 = vunpack.c.l.b16 %v166
  %v345 = vunpack.c.h.b16 %v166
  %v346 = vunpack.c.l.b16 %v167
  %v347 = vunpack.c.h.b16 %v167
  %v348 = vunpack.c.l.b16 %v168
  %v349 = vunpack.c.h.b16 %v168
  %v350 = vunpack.c.l.b16 %v169
  %v351 = vunpack.c.h.b16 %v169
  %v352 = vunpack.c.l.b16 %v170
  %v353 = vunpack.c.h.b16 %v170
  %v354 = vunpack.c.l.b16 %v171
  %v355 = vunpack.c.h.b16 %v171
  %v356 = vunpack.c.l.b16 %v172
  %v357 = vunpack.c.h.b16 %v172
  %v358 = vunpack.c.l.b16 %v173
  %v359 = vunpack.c.h.b16 %v173
  %v360 = vunpack.c.l.b16 %v174
  %v361 = vunpack.c.h.b16 %v174
  %v362 = vunpack.c.l.b16 %v175
  %v363 = vunpack.c.h.b16 %v175
  %v364 = vunpack.c.l.b16 %v176
  %v365 = vunpack.c.h.b16 %v176
  %v366 = vunpack.c.l.b16 %v177
  %v367 = vunpack.c.h.b16 %v177
  %v368 = vunpack.c.l.b16 %v178
  %v369 = vunpack.c.h.b16 %v178
  %v370 = vunpack.c.l.b16 %v179
  %v371 = vunpack.c.h.b16 %v179
  %v372 = vunpack.c.l.b16 %v180
  %v373 = vunpack.c.h.b16 %v180
  %v374 = vunpack.c.l.b16 %v181
  %v375 = vunpack.c.h.b16 %v181
  %v376 = vunpack.c.l.b16 %v182
  %v377 = vunpack.c.h.b16 %v182
  %v378 = vunpack.c.l.b16 %v183
  %v379 = vunpack.c.h.b16 %v183
  %v380 = vunpack.c.l.b16 %v184
  %v381 = vunpack.c.h.b16 %v184
  %v382 = vunpack.c.l.b16 %v185
  %v383 = vunpack.c.h.b16 %v185
  %v384 = vunpack.c.l.b16 %v186
  %v385 = vunpack.c.h.b16 %v186
  %v386 = vunpack.c.l.b16 %v187
  %v387 = vunpack.c.h.b16 %v187
  %v388 = vunpack.c.l.b16 %v188
  %v389 = vunpack.c.h.b16 %v188
  %v390 = vunpack.c.l.b16 %v189
  %v391 = vunpack.c.h.b16 %v189
  %v392 = vunpack.c.l.b16 %v190
  %v393 = vunpack.c.h.b16 %v190
  %v394 = vunpack.c.l.b16 %v191
  %v395 = vunpack.c.h.b16 %v191
  %v396 = vunpack.c.l.b16 %v192
  %v397 = vunpack.c.h.b16 %v192
  %v398 = vunpack.c.l.b16 %v193
  %v399 = vunpack.c.h.b16 %v193
  %v400 = vunpack.c.l.b16 %v194
  %v401 = vunpack.c.h.b16 %v194
  %v402 = vunpack.c.l.b16 %v195
  %v403 = vunpack.c.h.b16 %v195
  %v404 = vunpack.c.l.b16 %v196
  %v405 = vunpack.c.h.b16 %v196
  %v406 = vunpack.c.l.b16 %v197
  %v407 = vunpack.c.h.b16 %v197
  %v408 = vunpack.c.l.b16 %v198
  %v409 = vunpack.c.h.b16 %v198
  %v410 = vunpack.c.l.b16 %v199
  %v411 = vunpack.c.h.b16 %v199
  %v412 = vunpack.c.l.b16 %v200
  %v413 = vunpack.c.h.b16 %v200
  %v414 = vunpack.c.l.b16 %v201
  %v415 = vunpack.c.h.b16 %v201
  %v416 = vunpack.c.l.b16 %v202
  %v417 = vunpack.c.h.b16 %v202
  %v418 = vunpack.c.l.b16 %v203
  %v419 = vunpack.c.h.b16 %v203
  %v420 = vunpack.c.l.b16 %v204
  %v421 = vunpack.c.h.b16 %v204
  %v422 = vunpack.c.l.b16 %v205
  %v423 = vunpack.c.h.b16 %v205
  %v424 = vunpack.c.l.b16 %v206
  %v425 = vunpack.c.h.b16 %v206
  %v426 = vunpack.c.l.b16 %v207
  %v427 = vunpack.c.h.b16 %v207
  %v428 = vunpack.c.l.b16 %v208
  %v429 = vunpack.c.h.b16 %v208
  %v430 = vunpack.c.l.b16 %v209
  %v431 = vunpack.c.h.b16 %v209
  %v432 = vunpack.c.l.b16 %v210
  %v433 = vunpack.c.h.b16 %v210
  %v434 = vunpack.c.l.b16 %v211
  %v435 = vunpack.c.h.b16 %v211
  %v436 = vunpack.c.l.b16 %v212
  %v437 = vunpack.c.h.b16 %v212
  %v438 = vunpack.c.l.b16 %v213
  %v439 = vunpack.c.h.b16 %v213
  %v440 = vunpack.c.l.b16 %v214
  %v441 = vunpack.c.h.b16 %v214
  %v442 = vunpack.c.l.b16 %v215
  %v443 = vunpack.c.h.b16 %v215
  %v444 = vunpack.c.l.b16 %v216
  %v445 = vunpack.c.h.b16 %v216
  %v446 = vunpack.c.l.b16 %v217
  %v447 = vunpack.c.h.b16 %v217
  %v448 = vunpack.c.l.b16 %v218
  %v449 = vunpack.c.h.b16 %v218
  %v450 = vunpack.c.l.b16 %v219
  %v451 = vunpack.c.h.b16 %v219
  %v452 = vunpack.c.l.b16 %v220
  %v453 = vunpack.c.h.b16 %v220
  %v454 = vunpack.c.l.b16 %v221
  %v455 = vunpack.c.h.b16 %v221
  %v456 = vunpack.c.l.b16 %v222
  %v457 = vunpack.c.h.b16 %v222
  %v458 = vunpack.c.l.b16 %v223
  %v459 = vunpack.c.h.b16 %v223
  %v460 = vunpack.c.l.b16 %v224
  %v461 = vunpack.c.h.b16 %v224
  %v462 = vunpack.c.l.b16 %v225
  %v463 = vunpack.c.h.b16 %v225
  %v464 = vunpack.c.l.b16 %v226
  %v465 = vunpack.c.h.b16 %v226
  %v466 = vunpack.c.l.b16 %v227
  %v467 = vunpack.c.h.b16 %v227
  %v468 = vunpack.c.l.b16 %v228
  %v469 = vunpack.c.h.b16 %v228
  %v470 = vunpack.c.l.b16 %v229
  %v471 = vunpack.c.h.b16 %v229
  %v472 = vunpack.c.l.b16 %v230
  %v473 = vunpack.c.h.b16 %v230
  %v474 = vpack.c.b16 %v330, %v312
  %v475 = vpack.c.b16 %v331, %v313
  %v476 = vpack.c.b16 %v332, %v314
  %v477 = vpack.c.b16 %v333, %v315
  %v478 = vpack.c.b16 %v334, %v316
  %v479 = vpack.c.b16 %v335, %v317
  %v480 = vpack.c.b16 %v336, %v318
  %v481 = vpack.c.b16 %v337, %v319
  %v482 = vpack.c.b16 %v338, %v320
  %v483 = vpack.c.b16 %v339, %v321
  %v484 = vpack.c.b16 %v340, %v322
  %v485 = vpack.c.b16 %v341, %v323
  %v486 = vpack.c.b16 %v342, %v324
  %v487 = vpack.c.b16 %v343, %v325
  %v488 = vpack.c.b16 %v344, %v326
  %v489 = vpack.c.b16 %v345, %v327
  %v490 = vpack.c.b16 %v346, %v328
  %v491 = vpack.c.b16 %v347, %v329
  %v492 = vpack.c.b16 %v366, %v348
  %v493 = vpack.c.b16 %v367, %v349
  %v494 = vpack.c.b16 %v368, %v350
  %v495 = vpack.c.b16 %v369, %v351
  %v496 = vpack.c.b16 %v370, %v352
  %v497 = vpack.c.b16 %v371, %v353
  %v498 = vpack.c.b16 %v372, %v354
  %v499 = vpack.c.b16 %v373, %v355
  %v500 = vpack.c.b16 %v374, %v356
  %v501 = vpack.c.b16 %v375, %v357
  %v502 = vpack.c.b16 %v376, %v358
  %v503 = vpack.c.b16 %v377, %v359
  %v504 = vpack.c.b16 %v378, %v360
  %v505 = vpack.c.b16 %v379, %v361
  %v506 = vpack.c.b16 %v380, %v362
  %v507 = vpack.c.b16 %v381, %v363
  %v508 = vpack.c.b16 %v382, %v364
  %v509 = vpack.c.b16 %v383, %v365
  %v510 = vpack.c.b16 %v402, %v384
  %v511 = vpack.c.b16 %v403, %v385
  %v512 = vpack.c.b16 %v404, %v386
  %v513 = vpack.c.b16 %v405, %v387
  %v514 = vpack.c.b16 %v406, %v388
  %v515 = vpack.c.b16 %v407, %v389
  %v516 = vpack.c.b16 %v408, %v390
  %v517 = vpack.c.b16 %v409, %v391
  %v518 = vpack.c.b16 %v410, %v392
  %v519 = vpack.c.b16 %v411, %v393
  %v520 = vpack.c.b16 %v412, %v394
  %v521 = vpack.c.b16 %v413, %v395
  %v522 = vpack.c.b16 %v414, %v396
  %v523 = vpack.c.b16 %v415, %v397
  %v524 = vpack.c.b16 %v416, %v398
  %v525 = vpack.c.b16 %v417, %v399
  %v526 = vpack.c.b16 %v418, %v400
  %v527 = vpack.c.b16 %v419, %v401
  %v528 = vpack.c.b16 %v438, %v420
  %v529 = vpack.c.b16 %v439, %v421
  %v530 = vpack.c.b16 %v440, %v422
  %v531 = vpack.c.b16 %v441, %v423
  %v532 = vpack.c.b16 %v442, %v424
  %v533 = vpack.c.b16 %v443, %v425
  %v534 = vpack.c.b16 %v444, %v426
  %v535 = vpack.c.b16 %v445, %v427
  %v536 = vpack.c.b16 %v446, %v428
  %v537 = vpack.c.b16 %v447, %v429
  %v538 = vpack.c.b16 %v448, %v430
  %v539 = vpack.c.b16 %v449, %v431
  %v540 = vpack.c.b16 %v450, %v432
  %v541 = vpack.c.b16 %v451, %v433
  %v542 = vpack.c.b16 %v452, %v434
  %v543 = vpack.c.b16 %v453, %v435
  %v544 = vpack.c.b16 %v454, %v436
  %v545 = vpack.c.b16 %v455, %v437
  %v546 = vpack.c.b16 %v456, %v456
  %v547 = vpack.c.b16 %v457, %v457
  %v548 = vpack.c.b16 %v458, %v458
  %v549 = vpack.c.b16 %v459, %v459
  %v550 = vpack.c.b16 %v460, %v460
  %v551 = vpack.c.b16 %v461, %v461
  %v552 = vpack.c.b16 %v462, %v462
  %v553 = vpack.c.b16 %v463, %v463
  %v554 = vpack.c.b16 %v464, %v464
  %v555 = vpack.c.b16 %v465, %v465
  %v556 = vpack.c.b16 %v466, %v466
  %v557 = vpack.c.b16 %v467, %v467
  %v558 = vpack.c.b16 %v468, %v468
  %v559 = vpack.c.b16 %v469, %v469
  %v560 = vpack.c.b16 %v470, %v470
  %v561 = vpack.c.b16 %v471, %v471
  %v562 = vpack.c.b16 %v472, %v472
  %v563 = vpack.c.b16 %v473, %v473
  %vm636 = vcmask 588800
  %v638 = vsel %vm636, %v149, 0
  %v641 = vsel %vm140, %v546, 0
  %v644 = vsel %vm140, %v547, 0
  %v647 = vsel %vm140, %v548, 0
  %v650 = vsel %vm140, %v549, 0
  %v653 = vsel %vm140, %v550, 0
  %v656 = vsel %vm140, %v551, 0
  %v659 = vsel %vm140, %v552, 0
  %v662 = vsel %vm140, %v553, 0
  %v665 = vsel %vm140, %v554, 0
  %v668 = vsel %vm140, %v555, 0
  %v671 = vsel %vm140, %v556, 0
  %v674 = vsel %vm140, %v557, 0
  %v677 = vsel %vm140, %v558, 0
  %v680 = vsel %vm140, %v559, 0
  %v683 = vsel %vm140, %v560, 0
  %v686 = vsel %vm140, %v561, 0
  %v689 = vsel %vm140, %v562, 0
  %v692 = vsel %vm140, %v563, 0
  %694 = vmatprep.subr.bf16.mxu0 %v475
  %695 = vmatpush1.bf16.msra.mxu0 %v474
  %696 = vmatprep.subr.bf16.mxu0 %v493
  %697 = vmatpush1.bf16.msra.mxu0 %v492
  %698 = vmatprep.subr.bf16.mxu0 %v511
  %699 = vmatpush1.bf16.msra.mxu0 %v510
  %700 = vmatprep.subr.bf16.mxu0 %v529
  %701 = vmatpush1.bf16.msra.mxu0 %v528
  %702 = vmatprep.subr.bf16.mxu0 %v644
  %703 = vmatpush1.bf16.msra.mxu0 %v641
  %704 = vmatprep.subr.bf16.mxu0 0
  %705 = vmatpush1.bf16.msra.mxu0 0
  %706 = vmatprep.subr.bf16.mxu0 0
  %707 = vmatpush1.bf16.msra.mxu0 0
  %708 = vmatprep.subr.bf16.mxu0 0
  %709 = vmatpush1.bf16.msra.mxu0 0
  %710 = vmatprep.subr.bf16.mxu0 0
  %711 = vmatpush1.bf16.msra.mxu0 0
  %712 = vmatprep.subr.bf16.mxu0 0
  %713 = vmatpush1.bf16.msra.mxu0 0
  %714 = vmatprep.subr.bf16.mxu0 0
  %715 = vmatpush1.bf16.msra.mxu0 0
  %716 = vmatprep.subr.bf16.mxu0 0
  %717 = vmatpush1.bf16.msra.mxu0 0
  %718 = vmatprep.subr.bf16.mxu0 0
  %719 = vmatpush1.bf16.msra.mxu0 0
  %720 = vmatprep.subr.bf16.mxu0 0
  %721 = vmatpush1.bf16.msra.mxu0 0
  %722 = vmatprep.subr.bf16.mxu0 0
  %723 = vmatpush1.bf16.msra.mxu0 0
  %724 = vmatprep.subr.bf16.mxu0 0
  %725 = vmatpush1.bf16.msra.mxu0 0
  %726 = vmatprep.mubr.bf16.mxu0 0
  %727 = vmatmul.mubr.bf16.gmra.mrb[0].mxu0 %v638
  %v728 = vpop.f32.mrb[0].mxu0
  %v729 = vadd.f32 0.0, %v728
  %v730 = vpop.f32.mrb[0].mxu0
  %v731 = vadd.f32 0.0, %v730
  %v732 = vpop.f32.mrb[0].mxu0
  %v733 = vpop.f32.mrb[0].mxu0
  %734 = vdwg.mxu0
  %735 = vmatprep.subr.bf16.mxu0 %v477
  %736 = vmatpush1.bf16.msra.mxu0 %v476
  %737 = vmatprep.subr.bf16.mxu0 %v495
  %738 = vmatpush1.bf16.msra.mxu0 %v494
  %739 = vmatprep.subr.bf16.mxu0 %v513
  %740 = vmatpush1.bf16.msra.mxu0 %v512
  %741 = vmatprep.subr.bf16.mxu0 %v531
  %742 = vmatpush1.bf16.msra.mxu0 %v530
  %743 = vmatprep.subr.bf16.mxu0 %v650
  %744 = vmatpush1.bf16.msra.mxu0 %v647
  %745 = vmatprep.subr.bf16.mxu0 0
  %746 = vmatpush1.bf16.msra.mxu0 0
  %747 = vmatprep.subr.bf16.mxu0 0
  %748 = vmatpush1.bf16.msra.mxu0 0
  %749 = vmatprep.subr.bf16.mxu0 0
  %750 = vmatpush1.bf16.msra.mxu0 0
  %751 = vmatprep.subr.bf16.mxu0 0
  %752 = vmatpush1.bf16.msra.mxu0 0
  %753 = vmatprep.subr.bf16.mxu0 0
  %754 = vmatpush1.bf16.msra.mxu0 0
  %755 = vmatprep.subr.bf16.mxu0 0
  %756 = vmatpush1.bf16.msra.mxu0 0
  %757 = vmatprep.subr.bf16.mxu0 0
  %758 = vmatpush1.bf16.msra.mxu0 0
  %759 = vmatprep.subr.bf16.mxu0 0
  %760 = vmatpush1.bf16.msra.mxu0 0
  %761 = vmatprep.subr.bf16.mxu0 0
  %762 = vmatpush1.bf16.msra.mxu0 0
  %763 = vmatprep.subr.bf16.mxu0 0
  %764 = vmatpush1.bf16.msra.mxu0 0
  %765 = vmatprep.subr.bf16.mxu0 0
  %766 = vmatpush1.bf16.msra.mxu0 0
  %767 = vmatprep.mubr.bf16.mxu0 0
  %768 = vmatmul.mubr.bf16.gmra.mrb[0].mxu0 %v638
  %v769 = vpop.f32.mrb[0].mxu0
  %v770 = vadd.f32 0.0, %v769
  %v771 = vpop.f32.mrb[0].mxu0
  %v772 = vadd.f32 0.0, %v771
  %v773 = vpop.f32.mrb[0].mxu0
  %v774 = vpop.f32.mrb[0].mxu0
  %775 = vdwg.mxu0
  %776 = vmatprep.subr.bf16.mxu0 %v479
  %777 = vmatpush1.bf16.msra.mxu0 %v478
  %778 = vmatprep.subr.bf16.mxu0 %v497
  %779 = vmatpush1.bf16.msra.mxu0 %v496
  %780 = vmatprep.subr.bf16.mxu0 %v515
  %781 = vmatpush1.bf16.msra.mxu0 %v514
  %782 = vmatprep.subr.bf16.mxu0 %v533
  %783 = vmatpush1.bf16.msra.mxu0 %v532
  %784 = vmatprep.subr.bf16.mxu0 %v656
  %785 = vmatpush1.bf16.msra.mxu0 %v653
  %786 = vmatprep.subr.bf16.mxu0 0
  %787 = vmatpush1.bf16.msra.mxu0 0
  %788 = vmatprep.subr.bf16.mxu0 0
  %789 = vmatpush1.bf16.msra.mxu0 0
  %790 = vmatprep.subr.bf16.mxu0 0
  %791 = vmatpush1.bf16.msra.mxu0 0
  %792 = vmatprep.subr.bf16.mxu0 0
  %793 = vmatpush1.bf16.msra.mxu0 0
  %794 = vmatprep.subr.bf16.mxu0 0
  %795 = vmatpush1.bf16.msra.mxu0 0
  %796 = vmatprep.subr.bf16.mxu0 0
  %797 = vmatpush1.bf16.msra.mxu0 0
  %798 = vmatprep.subr.bf16.mxu0 0
  %799 = vmatpush1.bf16.msra.mxu0 0
  %800 = vmatprep.subr.bf16.mxu0 0
  %801 = vmatpush1.bf16.msra.mxu0 0
  %802 = vmatprep.subr.bf16.mxu0 0
  %803 = vmatpush1.bf16.msra.mxu0 0
  %804 = vmatprep.subr.bf16.mxu0 0
  %805 = vmatpush1.bf16.msra.mxu0 0
  %806 = vmatprep.subr.bf16.mxu0 0
  %807 = vmatpush1.bf16.msra.mxu0 0
  %808 = vmatprep.mubr.bf16.mxu0 0
  %809 = vmatmul.mubr.bf16.gmra.mrb[0].mxu0 %v638
  %v810 = vpop.f32.mrb[0].mxu0
  %v811 = vadd.f32 0.0, %v810
  %v812 = vpop.f32.mrb[0].mxu0
  %v813 = vadd.f32 0.0, %v812
  %v814 = vpop.f32.mrb[0].mxu0
  %v815 = vpop.f32.mrb[0].mxu0
  %816 = vdwg.mxu0
  %817 = vmatprep.subr.bf16.mxu0 %v481
  %818 = vmatpush1.bf16.msra.mxu0 %v480
  %819 = vmatprep.subr.bf16.mxu0 %v499
  %820 = vmatpush1.bf16.msra.mxu0 %v498
  %821 = vmatprep.subr.bf16.mxu0 %v517
  %822 = vmatpush1.bf16.msra.mxu0 %v516
  %823 = vmatprep.subr.bf16.mxu0 %v535
  %824 = vmatpush1.bf16.msra.mxu0 %v534
  %825 = vmatprep.subr.bf16.mxu0 %v662
  %826 = vmatpush1.bf16.msra.mxu0 %v659
  %827 = vmatprep.subr.bf16.mxu0 0
  %828 = vmatpush1.bf16.msra.mxu0 0
  %829 = vmatprep.subr.bf16.mxu0 0
  %830 = vmatpush1.bf16.msra.mxu0 0
  %831 = vmatprep.subr.bf16.mxu0 0
  %832 = vmatpush1.bf16.msra.mxu0 0
  %833 = vmatprep.subr.bf16.mxu0 0
  %834 = vmatpush1.bf16.msra.mxu0 0
  %835 = vmatprep.subr.bf16.mxu0 0
  %836 = vmatpush1.bf16.msra.mxu0 0
  %837 = vmatprep.subr.bf16.mxu0 0
  %838 = vmatpush1.bf16.msra.mxu0 0
  %839 = vmatprep.subr.bf16.mxu0 0
  %840 = vmatpush1.bf16.msra.mxu0 0
  %841 = vmatprep.subr.bf16.mxu0 0
  %842 = vmatpush1.bf16.msra.mxu0 0
  %843 = vmatprep.subr.bf16.mxu0 0
  %844 = vmatpush1.bf16.msra.mxu0 0
  %845 = vmatprep.subr.bf16.mxu0 0
  %846 = vmatpush1.bf16.msra.mxu0 0
  %847 = vmatprep.subr.bf16.mxu0 0
  %848 = vmatpush1.bf16.msra.mxu0 0
  %849 = vmatprep.mubr.bf16.mxu0 0
  %850 = vmatmul.mubr.bf16.gmra.mrb[0].mxu0 %v638
  %v851 = vpop.f32.mrb[0].mxu0
  %v852 = vadd.f32 0.0, %v851
  %v853 = vpop.f32.mrb[0].mxu0
  %v854 = vadd.f32 0.0, %v853
  %v855 = vpop.f32.mrb[0].mxu0
  %v856 = vpop.f32.mrb[0].mxu0
  %857 = vdwg.mxu0
  %858 = vmatprep.subr.bf16.mxu0 %v483
  %859 = vmatpush1.bf16.msra.mxu0 %v482
  %860 = vmatprep.subr.bf16.mxu0 %v501
  %861 = vmatpush1.bf16.msra.mxu0 %v500
  %862 = vmatprep.subr.bf16.mxu0 %v519
  %863 = vmatpush1.bf16.msra.mxu0 %v518
  %864 = vmatprep.subr.bf16.mxu0 %v537
  %865 = vmatpush1.bf16.msra.mxu0 %v536
  %866 = vmatprep.subr.bf16.mxu0 %v668
  %867 = vmatpush1.bf16.msra.mxu0 %v665
  %868 = vmatprep.subr.bf16.mxu0 0
  %869 = vmatpush1.bf16.msra.mxu0 0
  %870 = vmatprep.subr.bf16.mxu0 0
  %871 = vmatpush1.bf16.msra.mxu0 0
  %872 = vmatprep.subr.bf16.mxu0 0
  %873 = vmatpush1.bf16.msra.mxu0 0
  %874 = vmatprep.subr.bf16.mxu0 0
  %875 = vmatpush1.bf16.msra.mxu0 0
  %876 = vmatprep.subr.bf16.mxu0 0
  %877 = vmatpush1.bf16.msra.mxu0 0
  %878 = vmatprep.subr.bf16.mxu0 0
  %879 = vmatpush1.bf16.msra.mxu0 0
  %880 = vmatprep.subr.bf16.mxu0 0
  %881 = vmatpush1.bf16.msra.mxu0 0
  %882 = vmatprep.subr.bf16.mxu0 0
  %883 = vmatpush1.bf16.msra.mxu0 0
  %884 = vmatprep.subr.bf16.mxu0 0
  %885 = vmatpush1.bf16.msra.mxu0 0
  %886 = vmatprep.subr.bf16.mxu0 0
  %887 = vmatpush1.bf16.msra.mxu0 0
  %888 = vmatprep.subr.bf16.mxu0 0
  %889 = vmatpush1.bf16.msra.mxu0 0
  %890 = vmatprep.mubr.bf16.mxu0 0
  %891 = vmatmul.mubr.bf16.gmra.mrb[0].mxu0 %v638
  %v892 = vpop.f32.mrb[0].mxu0
  %v893 = vadd.f32 0.0, %v892
  %v894 = vpop.f32.mrb[0].mxu0
  %v895 = vadd.f32 0.0, %v894
  %v896 = vpop.f32.mrb[0].mxu0
  %v897 = vpop.f32.mrb[0].mxu0
  %898 = vdwg.mxu0
  %899 = vmatprep.subr.bf16.mxu0 %v485
  %900 = vmatpush1.bf16.msra.mxu0 %v484
  %901 = vmatprep.subr.bf16.mxu0 %v503
  %902 = vmatpush1.bf16.msra.mxu0 %v502
  %903 = vmatprep.subr.bf16.mxu0 %v521
  %904 = vmatpush1.bf16.msra.mxu0 %v520
  %905 = vmatprep.subr.bf16.mxu0 %v539
  %906 = vmatpush1.bf16.msra.mxu0 %v538
  %907 = vmatprep.subr.bf16.mxu0 %v674
  %908 = vmatpush1.bf16.msra.mxu0 %v671
  %909 = vmatprep.subr.bf16.mxu0 0
  %910 = vmatpush1.bf16.msra.mxu0 0
  %911 = vmatprep.subr.bf16.mxu0 0
  %912 = vmatpush1.bf16.msra.mxu0 0
  %913 = vmatprep.subr.bf16.mxu0 0
  %914 = vmatpush1.bf16.msra.mxu0 0
  %915 = vmatprep.subr.bf16.mxu0 0
  %916 = vmatpush1.bf16.msra.mxu0 0
  %917 = vmatprep.subr.bf16.mxu0 0
  %918 = vmatpush1.bf16.msra.mxu0 0
  %919 = vmatprep.subr.bf16.mxu0 0
  %920 = vmatpush1.bf16.msra.mxu0 0
  %921 = vmatprep.subr.bf16.mxu0 0
  %922 = vmatpush1.bf16.msra.mxu0 0
  %923 = vmatprep.subr.bf16.mxu0 0
  %924 = vmatpush1.bf16.msra.mxu0 0
  %925 = vmatprep.subr.bf16.mxu0 0
  %926 = vmatpush1.bf16.msra.mxu0 0
  %927 = vmatprep.subr.bf16.mxu0 0
  %928 = vmatpush1.bf16.msra.mxu0 0
  %929 = vmatprep.subr.bf16.mxu0 0
  %930 = vmatpush1.bf16.msra.mxu0 0
  %931 = vmatprep.mubr.bf16.mxu0 0
  %932 = vmatmul.mubr.bf16.gmra.mrb[0].mxu0 %v638
  %v933 = vpop.f32.mrb[0].mxu0
  %v934 = vadd.f32 0.0, %v933
  %v935 = vpop.f32.mrb[0].mxu0
  %v936 = vadd.f32 0.0, %v935
  %v937 = vpop.f32.mrb[0].mxu0
  %v938 = vpop.f32.mrb[0].mxu0
  %939 = vdwg.mxu0
  %940 = vmatprep.subr.bf16.mxu0 %v487
  %941 = vmatpush1.bf16.msra.mxu0 %v486
  %942 = vmatprep.subr.bf16.mxu0 %v505
  %943 = vmatpush1.bf16.msra.mxu0 %v504
  %944 = vmatprep.subr.bf16.mxu0 %v523
  %945 = vmatpush1.bf16.msra.mxu0 %v522
  %946 = vmatprep.subr.bf16.mxu0 %v541
  %947 = vmatpush1.bf16.msra.mxu0 %v540
  %948 = vmatprep.subr.bf16.mxu0 %v680
  %949 = vmatpush1.bf16.msra.mxu0 %v677
  %950 = vmatprep.subr.bf16.mxu0 0
  %951 = vmatpush1.bf16.msra.mxu0 0
  %952 = vmatprep.subr.bf16.mxu0 0
  %953 = vmatpush1.bf16.msra.mxu0 0
  %954 = vmatprep.subr.bf16.mxu0 0
  %955 = vmatpush1.bf16.msra.mxu0 0
  %956 = vmatprep.subr.bf16.mxu0 0
  %957 = vmatpush1.bf16.msra.mxu0 0
  %958 = vmatprep.subr.bf16.mxu0 0
  %959 = vmatpush1.bf16.msra.mxu0 0
  %960 = vmatprep.subr.bf16.mxu0 0
  %961 = vmatpush1.bf16.msra.mxu0 0
  %962 = vmatprep.subr.bf16.mxu0 0
  %963 = vmatpush1.bf16.msra.mxu0 0
  %964 = vmatprep.subr.bf16.mxu0 0
  %965 = vmatpush1.bf16.msra.mxu0 0
  %966 = vmatprep.subr.bf16.mxu0 0
  %967 = vmatpush1.bf16.msra.mxu0 0
  %968 = vmatprep.subr.bf16.mxu0 0
  %969 = vmatpush1.bf16.msra.mxu0 0
  %970 = vmatprep.subr.bf16.mxu0 0
  %971 = vmatpush1.bf16.msra.mxu0 0
  %972 = vmatprep.mubr.bf16.mxu0 0
  %973 = vmatmul.mubr.bf16.gmra.mrb[0].mxu0 %v638
  %v974 = vpop.f32.mrb[0].mxu0
  %v975 = vadd.f32 0.0, %v974
  %v976 = vpop.f32.mrb[0].mxu0
  %v977 = vadd.f32 0.0, %v976
  %v978 = vpop.f32.mrb[0].mxu0
  %v979 = vpop.f32.mrb[0].mxu0
  %980 = vdwg.mxu0
  %981 = vmatprep.subr.bf16.mxu0 %v489
  %982 = vmatpush1.bf16.msra.mxu0 %v488
  %983 = vmatprep.subr.bf16.mxu0 %v507
  %984 = vmatpush1.bf16.msra.mxu0 %v506
  %985 = vmatprep.subr.bf16.mxu0 %v525
  %986 = vmatpush1.bf16.msra.mxu0 %v524
  %987 = vmatprep.subr.bf16.mxu0 %v543
  %988 = vmatpush1.bf16.msra.mxu0 %v542
  %989 = vmatprep.subr.bf16.mxu0 %v686
  %990 = vmatpush1.bf16.msra.mxu0 %v683
  %991 = vmatprep.subr.bf16.mxu0 0
  %992 = vmatpush1.bf16.msra.mxu0 0
  %993 = vmatprep.subr.bf16.mxu0 0
  %994 = vmatpush1.bf16.msra.mxu0 0
  %995 = vmatprep.subr.bf16.mxu0 0
  %996 = vmatpush1.bf16.msra.mxu0 0
  %997 = vmatprep.subr.bf16.mxu0 0
  %998 = vmatpush1.bf16.msra.mxu0 0
  %999 = vmatprep.subr.bf16.mxu0 0
  %1000 = vmatpush1.bf16.msra.mxu0 0
  %1001 = vmatprep.subr.bf16.mxu0 0
  %1002 = vmatpush1.bf16.msra.mxu0 0
  %1003 = vmatprep.subr.bf16.mxu0 0
  %1004 = vmatpush1.bf16.msra.mxu0 0
  %1005 = vmatprep.subr.bf16.mxu0 0
  %1006 = vmatpush1.bf16.msra.mxu0 0
  %1007 = vmatprep.subr.bf16.mxu0 0
  %1008 = vmatpush1.bf16.msra.mxu0 0
  %1009 = vmatprep.subr.bf16.mxu0 0
  %1010 = vmatpush1.bf16.msra.mxu0 0
  %1011 = vmatprep.subr.bf16.mxu0 0
  %1012 = vmatpush1.bf16.msra.mxu0 0
  %1013 = vmatprep.mubr.bf16.mxu0 0
  %1014 = vmatmul.mubr.bf16.gmra.mrb[0].mxu0 %v638
  %v1015 = vpop.f32.mrb[0].mxu0
  %v1016 = vadd.f32 0.0, %v1015
  %v1017 = vpop.f32.mrb[0].mxu0
  %v1018 = vadd.f32 0.0, %v1017
  %v1019 = vpop.f32.mrb[0].mxu0
  %v1020 = vpop.f32.mrb[0].mxu0
  %1021 = vdwg.mxu0
  %1022 = vmatprep.subr.bf16.mxu0 %v491
  %1023 = vmatpush1.bf16.msra.mxu0 %v490
  %1024 = vmatprep.subr.bf16.mxu0 %v509
  %1025 = vmatpush1.bf16.msra.mxu0 %v508
  %1026 = vmatprep.subr.bf16.mxu0 %v527
  %1027 = vmatpush1.bf16.msra.mxu0 %v526
  %1028 = vmatprep.subr.bf16.mxu0 %v545
  %1029 = vmatpush1.bf16.msra.mxu0 %v544
  %1030 = vmatprep.subr.bf16.mxu0 %v692
  %1031 = vmatpush1.bf16.msra.mxu0 %v689
  %1032 = vmatprep.subr.bf16.mxu0 0
  %1033 = vmatpush1.bf16.msra.mxu0 0
  %1034 = vmatprep.subr.bf16.mxu0 0
  %1035 = vmatpush1.bf16.msra.mxu0 0
  %1036 = vmatprep.subr.bf16.mxu0 0
  %1037 = vmatpush1.bf16.msra.mxu0 0
  %1038 = vmatprep.subr.bf16.mxu0 0
  %1039 = vmatpush1.bf16.msra.mxu0 0
  %1040 = vmatprep.subr.bf16.mxu0 0
  %1041 = vmatpush1.bf16.msra.mxu0 0
  %1042 = vmatprep.subr.bf16.mxu0 0
  %1043 = vmatpush1.bf16.msra.mxu0 0
  %1044 = vmatprep.subr.bf16.mxu0 0
  %1045 = vmatpush1.bf16.msra.mxu0 0
  %1046 = vmatprep.subr.bf16.mxu0 0
  %1047 = vmatpush1.bf16.msra.mxu0 0
  %1048 = vmatprep.subr.bf16.mxu0 0
  %1049 = vmatpush1.bf16.msra.mxu0 0
  %1050 = vmatprep.subr.bf16.mxu0 0
  %1051 = vmatpush1.bf16.msra.mxu0 0
  %1052 = vmatprep.subr.bf16.mxu0 0
  %1053 = vmatpush1.bf16.msra.mxu0 0
  %1054 = vmatprep.mubr.bf16.mxu0 0
  %1055 = vmatmul.mubr.bf16.gmra.mrb[0].mxu0 %v638
  %v1056 = vpop.f32.mrb[0].mxu0
  %v1057 = vadd.f32 0.0, %v1056
  %v1058 = vpop.f32.mrb[0].mxu0
  %v1059 = vadd.f32 0.0, %v1058
  %v1060 = vpop.f32.mrb[0].mxu0
  %v1061 = vpop.f32.mrb[0].mxu0
  %1062 = vdwg.mxu0
  %v1063 = vpack.c.bf16 %v148, %v148
  %v1064 = vld [vmem:[%s9] sm:$0xf]
  %v1065 = vld [vmem:[%s9 + $0x4] sm:$0xf]
  %v1066 = vld [vmem:[%s9 + $0x8] sm:$0xf]
  %v1067 = vld [vmem:[%s9 + $0xc] sm:$0xf]
  %v1068 = vld [vmem:[%s9 + $0x10] sm:$0xf]
  %v1069 = vld [vmem:[%s9 + $0x14] sm:$0xf]
  %v1070 = vld [vmem:[%s9 + $0x18] sm:$0xf]
  %v1071 = vld [vmem:[%s9 + $0x1c] sm:$0xf]
  %v1072 = vld [vmem:[%s9 + $0x20] sm:$0xf]
  %v1082 = vunpack.c.l.b16 %v1064
  %v1083 = vunpack.c.l.b16 %v1065
  %v1084 = vunpack.c.l.b16 %v1066
  %v1085 = vunpack.c.l.b16 %v1067
  %v1086 = vunpack.c.l.b16 %v1068
  %v1087 = vunpack.c.l.b16 %v1069
  %v1088 = vunpack.c.l.b16 %v1070
  %v1089 = vunpack.c.l.b16 %v1071
  %v1090 = vunpack.c.l.b16 %v1072
  %v1091 = vpack.c.b16 %v1083, %v1082
  %v1092 = vpack.c.b16 %v1085, %v1084
  %v1093 = vpack.c.b16 %v1087, %v1086
  %v1094 = vpack.c.b16 %v1089, %v1088
  %v1095 = vpack.c.b16 %v1090, %v1090
  %v1101 = vsel %vm636, %v1063, 0
  %v1104 = vsel %vm140, %v1095, 0
  %1106 = vmatprep.subr.bf16.mxu0 0
  %1107 = vmatpush1.bf16.msra.mxu0 %v1091
  %1108 = vmatprep.subr.bf16.mxu0 0
  %1109 = vmatpush1.bf16.msra.mxu0 %v1092
  %1110 = vmatprep.subr.bf16.mxu0 0
  %1111 = vmatpush1.bf16.msra.mxu0 %v1093
  %1112 = vmatprep.subr.bf16.mxu0 0
  %1113 = vmatpush1.bf16.msra.mxu0 %v1094
  %1114 = vmatprep.subr.bf16.mxu0 0
  %1115 = vmatpush1.bf16.msra.mxu0 %v1104
  %1116 = vmatprep.subr.bf16.mxu0 0
  %1117 = vmatpush1.bf16.msra.mxu0 0
  %1118 = vmatprep.subr.bf16.mxu0 0
  %1119 = vmatpush1.bf16.msra.mxu0 0
  %1120 = vmatprep.subr.bf16.mxu0 0
  %1121 = vmatpush1.bf16.msra.mxu0 0
  %1122 = vmatprep.subr.bf16.mxu0 0
  %1123 = vmatpush1.bf16.msra.mxu0 0
  %1124 = vmatprep.subr.bf16.mxu0 0
  %1125 = vmatpush1.bf16.msra.mxu0 0
  %1126 = vmatprep.subr.bf16.mxu0 0
  %1127 = vmatpush1.bf16.msra.mxu0 0
  %1128 = vmatprep.subr.bf16.mxu0 0
  %1129 = vmatpush1.bf16.msra.mxu0 0
  %1130 = vmatprep.subr.bf16.mxu0 0
  %1131 = vmatpush1.bf16.msra.mxu0 0
  %1132 = vmatprep.subr.bf16.mxu0 0
  %1133 = vmatpush1.bf16.msra.mxu0 0
  %1134 = vmatprep.subr.bf16.mxu0 0
  %1135 = vmatpush1.bf16.msra.mxu0 0
  %1136 = vmatprep.subr.bf16.mxu0 0
  %1137 = vmatpush1.bf16.msra.mxu0 0
  %1138 = vmatprep.mubr.bf16.mxu0 0
  %1139 = vmatmul.mubr.bf16.gmra.mrb[0].mxu0 %v1101
  %v1140 = vpop.f32.mrb[0].mxu0
  %v1141 = vadd.f32 0.0, %v1140
  %v1142 = vpop.f32.mrb[0].mxu0
  %v1143 = vpop.f32.mrb[0].mxu0
  %v1144 = vpop.f32.mrb[0].mxu0
  %1145 = vdwg.mxu0
  %vm1146 = vcmp.gt.f32.partialorder %v1141, 0.0
  %v1147 = vsel %vm1146, %v1141, 1.0
  %v1148 = vrcp.pop %v1147
  %v1149 = vsel %vm1146, %v1148, 0.0
  %v1150 = vld [vmem:[%s11] sm:$0xff]
  %v1151 = vld [vmem:[%s11 + $0x8] sm:$0xff]
  %v1152 = vld [vmem:[%s11 + $0x10] sm:$0xff]
  %v1153 = vld [vmem:[%s11 + $0x18] sm:$0xff]
  %v1154 = vld [vmem:[%s11 + $0x20] sm:$0xff]
  %v1155 = vld [vmem:[%s11 + $0x28] sm:$0xff]
  %v1156 = vld [vmem:[%s11 + $0x30] sm:$0xff]
  %v1157 = vld [vmem:[%s11 + $0x38] sm:$0xff]
  %v1158 = vld [vmem:[%s11 + $0x40] sm:$0xff]
  %v1159 = vld [vmem:[%s11 + $0x48] sm:$0xff]
  %v1160 = vld [vmem:[%s11 + $0x50] sm:$0xff]
  %v1161 = vld [vmem:[%s11 + $0x58] sm:$0xff]
  %v1162 = vld [vmem:[%s11 + $0x60] sm:$0xff]
  %v1163 = vld [vmem:[%s11 + $0x68] sm:$0xff]
  %v1164 = vld [vmem:[%s11 + $0x70] sm:$0xff]
  %v1165 = vld [vmem:[%s11 + $0x78] sm:$0xff]
  %v1166 = vld [vmem:[%s11 + $0x80] sm:$0xff]
  %v1167 = vld [vmem:[%s11 + $0x88] sm:$0xff]
  %v1168 = vld [vmem:[%s11 + $0x90] sm:$0xff]
  %v1169 = vld [vmem:[%s11 + $0x98] sm:$0xff]
  %v1170 = vld [vmem:[%s11 + $0xa0] sm:$0xff]
  %v1171 = vld [vmem:[%s11 + $0xa8] sm:$0xff]
  %v1172 = vld [vmem:[%s11 + $0xb0] sm:$0xff]
  %v1173 = vld [vmem:[%s11 + $0xb8] sm:$0xff]
  %v1174 = vld [vmem:[%s11 + $0xc0] sm:$0xff]
  %v1175 = vld [vmem:[%s11 + $0xc8] sm:$0xff]
  %v1176 = vld [vmem:[%s11 + $0xd0] sm:$0xff]
  %v1177 = vld [vmem:[%s11 + $0xd8] sm:$0xff]
  %v1178 = vld [vmem:[%s11 + $0xe0] sm:$0xff]
  %v1179 = vld [vmem:[%s11 + $0xe8] sm:$0xff]
  %v1180 = vld [vmem:[%s11 + $0xf0] sm:$0xff]
  %v1181 = vld [vmem:[%s11 + $0xf8] sm:$0xff]
  %v1182 = vld [vmem:[%s11 + $0x100] sm:$0xff]
  %v1183 = vld [vmem:[%s11 + $0x108] sm:$0xff]
  %v1184 = vld [vmem:[%s11 + $0x110] sm:$0xff]
  %v1185 = vld [vmem:[%s11 + $0x118] sm:$0xff]
  %v1186 = vld [vmem:[%s11 + $0x120] sm:$0xff]
  %v1187 = vld [vmem:[%s11 + $0x128] sm:$0xff]
  %v1188 = vld [vmem:[%s11 + $0x130] sm:$0xff]
  %v1189 = vld [vmem:[%s11 + $0x138] sm:$0xff]
  %v1190 = vld [vmem:[%s11 + $0x140] sm:$0xff]
  %v1191 = vld [vmem:[%s11 + $0x148] sm:$0xff]
  %v1192 = vld [vmem:[%s11 + $0x150] sm:$0xff]
  %v1193 = vld [vmem:[%s11 + $0x158] sm:$0xff]
  %v1194 = vld [vmem:[%s11 + $0x160] sm:$0xff]
  %v1195 = vld [vmem:[%s11 + $0x168] sm:$0xff]
  %v1196 = vld [vmem:[%s11 + $0x170] sm:$0xff]
  %v1197 = vld [vmem:[%s11 + $0x178] sm:$0xff]
  %v1198 = vld [vmem:[%s11 + $0x180] sm:$0xff]
  %v1199 = vld [vmem:[%s11 + $0x188] sm:$0xff]
  %v1200 = vld [vmem:[%s11 + $0x190] sm:$0xff]
  %v1201 = vld [vmem:[%s11 + $0x198] sm:$0xff]
  %v1202 = vld [vmem:[%s11 + $0x1a0] sm:$0xff]
  %v1203 = vld [vmem:[%s11 + $0x1a8] sm:$0xff]
  %v1204 = vld [vmem:[%s11 + $0x1b0] sm:$0xff]
  %v1205 = vld [vmem:[%s11 + $0x1b8] sm:$0xff]
  %v1206 = vld [vmem:[%s11 + $0x1c0] sm:$0xff]
  %v1207 = vld [vmem:[%s11 + $0x1c8] sm:$0xff]
  %v1208 = vld [vmem:[%s11 + $0x1d0] sm:$0xff]
  %v1209 = vld [vmem:[%s11 + $0x1d8] sm:$0xff]
  %v1210 = vld [vmem:[%s11 + $0x1e0] sm:$0xff]
  %v1211 = vld [vmem:[%s11 + $0x1e8] sm:$0xff]
  %v1212 = vld [vmem:[%s11 + $0x1f0] sm:$0xff]
  %v1213 = vld [vmem:[%s11 + $0x1f8] sm:$0xff]
  %v1214 = vld [vmem:[%s11 + $0x200] sm:$0xff]
  %v1215 = vld [vmem:[%s11 + $0x208] sm:$0xff]
  %v1216 = vld [vmem:[%s11 + $0x210] sm:$0xff]
  %v1217 = vld [vmem:[%s11 + $0x218] sm:$0xff]
  %v1218 = vld [vmem:[%s11 + $0x220] sm:$0xff]
  %v1219 = vld [vmem:[%s11 + $0x228] sm:$0xff]
  %v1220 = vld [vmem:[%s11 + $0x230] sm:$0xff]
  %v1221 = vld [vmem:[%s11 + $0x238] sm:$0xff]
  %v1222 = vld [vmem:[%s11 + $0x240] sm:$0x7]
  %v1223 = vld [vmem:[%s11 + $0x248] sm:$0x7]
  %v1224 = vld [vmem:[%s11 + $0x250] sm:$0x7]
  %v1225 = vld [vmem:[%s11 + $0x258] sm:$0x7]
  %v1226 = vld [vmem:[%s11 + $0x260] sm:$0x7]
  %v1227 = vld [vmem:[%s11 + $0x268] sm:$0x7]
  %v1228 = vld [vmem:[%s11 + $0x270] sm:$0x7]
  %v1229 = vld [vmem:[%s11 + $0x278] sm:$0x7]
  %v1230 = vld [vmem:[%s11 + $0x280] sm:$0x7]
  %v1231 = vld [vmem:[%s11 + $0x288] sm:$0x7]
  %v1232 = vld [vmem:[%s11 + $0x290] sm:$0x7]
  %v1233 = vld [vmem:[%s11 + $0x298] sm:$0x7]
  %v1234 = vld [vmem:[%s11 + $0x2a0] sm:$0x7]
  %v1235 = vld [vmem:[%s11 + $0x2a8] sm:$0x7]
  %v1236 = vld [vmem:[%s11 + $0x2b0] sm:$0x7]
  %v1237 = vld [vmem:[%s11 + $0x2b8] sm:$0x7]
  %v1238 = vld [vmem:[%s11 + $0x2c0] sm:$0x7]
  %v1239 = vld [vmem:[%s11 + $0x2c8] sm:$0x7]
  %vm1240 = vcmask 285696
  %v1242 = vsel %vm1240, %v1149, 0
  %vm1244 = vcmask 1042432
  %v1246 = vsel %vm1244, %v1222, 0
  %v1249 = vsel %vm1244, %v1223, 0
  %v1252 = vsel %vm1244, %v1224, 0
  %v1255 = vsel %vm1244, %v1225, 0
  %v1258 = vsel %vm1244, %v1226, 0
  %v1261 = vsel %vm1244, %v1227, 0
  %v1264 = vsel %vm1244, %v1228, 0
  %v1267 = vsel %vm1244, %v1229, 0
  %v1270 = vsel %vm1244, %v1230, 0
  %v1273 = vsel %vm1244, %v1231, 0
  %v1276 = vsel %vm1244, %v1232, 0
  %v1279 = vsel %vm1244, %v1233, 0
  %v1282 = vsel %vm1244, %v1234, 0
  %v1285 = vsel %vm1244, %v1235, 0
  %v1288 = vsel %vm1244, %v1236, 0
  %v1291 = vsel %vm1244, %v1237, 0
  %v1294 = vsel %vm1244, %v1238, 0
  %v1297 = vsel %vm1244, %v1239, 0
  %1299 = vmatprep.subr.mxu0 %v1151
  %1300 = vmatpush1.msra.mxu0 %v1150
  %1301 = vmatprep.subr.mxu0 %v1169
  %1302 = vmatpush1.msra.mxu0 %v1168
  %1303 = vmatprep.subr.mxu0 %v1187
  %1304 = vmatpush1.msra.mxu0 %v1186
  %1305 = vmatprep.subr.mxu0 %v1205
  %1306 = vmatpush1.msra.mxu0 %v1204
  %1307 = vmatprep.subr.mxu0 %v1249
  %1308 = vmatpush1.msra.mxu0 %v1246
  %1309 = vmatprep.subr.mxu0 0.0
  %1310 = vmatpush1.msra.mxu0 0.0
  %1311 = vmatprep.subr.mxu0 0.0
  %1312 = vmatpush1.msra.mxu0 0.0
  %1313 = vmatprep.subr.mxu0 0.0
  %1314 = vmatpush1.msra.mxu0 0.0
  %1315 = vmatprep.subr.mxu0 0.0
  %1316 = vmatpush1.msra.mxu0 0.0
  %1317 = vmatprep.subr.mxu0 0.0
  %1318 = vmatpush1.msra.mxu0 0.0
  %1319 = vmatprep.subr.mxu0 0.0
  %1320 = vmatpush1.msra.mxu0 0.0
  %1321 = vmatprep.subr.mxu0 0.0
  %1322 = vmatpush1.msra.mxu0 0.0
  %1323 = vmatprep.subr.mxu0 0.0
  %1324 = vmatpush1.msra.mxu0 0.0
  %1325 = vmatprep.subr.mxu0 0.0
  %1326 = vmatpush1.msra.mxu0 0.0
  %1327 = vmatprep.subr.mxu0 0.0
  %1328 = vmatpush1.msra.mxu0 0.0
  %1329 = vmatprep.subr.mxu0 0.0
  %1330 = vmatpush1.msra.mxu0 0.0
  %1331 = vmatprep.subr.mxu0 0.0
  %1332 = vmatpush1.msra.mxu0 0.0
  %1333 = vmatprep.subr.mxu0 0.0
  %1334 = vmatpush1.msra.mxu0 0.0
  %1335 = vmatprep.subr.mxu0 0.0
  %1336 = vmatpush1.msra.mxu0 0.0
  %1337 = vmatprep.subr.mxu0 0.0
  %1338 = vmatpush1.msra.mxu0 0.0
  %1339 = vmatprep.subr.mxu0 0.0
  %1340 = vmatpush1.msra.mxu0 0.0
  %1341 = vmatprep.subr.mxu0 0.0
  %1342 = vmatpush1.msra.mxu0 0.0
  %1343 = vmatprep.subr.mxu0 0.0
  %1344 = vmatpush1.msra.mxu0 0.0
  %1345 = vmatprep.subr.mxu0 0.0
  %1346 = vmatpush1.msra.mxu0 0.0
  %1347 = vmatprep.subr.mxu0 0.0
  %1348 = vmatpush1.msra.mxu0 0.0
  %1349 = vmatprep.subr.mxu0 0.0
  %1350 = vmatpush1.msra.mxu0 0.0
  %1351 = vmatprep.subr.mxu0 0.0
  %1352 = vmatpush1.msra.mxu0 0.0
  %1353 = vmatprep.subr.mxu0 0.0
  %1354 = vmatpush1.msra.mxu0 0.0
  %1355 = vmatprep.subr.mxu0 0.0
  %1356 = vmatpush1.msra.mxu0 0.0
  %1357 = vmatprep.subr.mxu0 0.0
  %1358 = vmatpush1.msra.mxu0 0.0
  %1359 = vmatprep.subr.mxu0 0.0
  %1360 = vmatpush1.msra.mxu0 0.0
  %1361 = vmatprep.subr.mxu0 0.0
  %1362 = vmatpush1.msra.mxu0 0.0
  %1363 = vmatprep.mubr.f32.mxu0 0.0
  %1364 = vmatmul.mubr.f32.gmra.mrb[0].mxu0 %v1242
  %v1365 = vpop.f32.mrb[0].mxu0
  %v1366 = vadd.f32 0.0, %v1365
  %v1367 = vpop.f32.mrb[0].mxu0
  %v1368 = vadd.f32 0.0, %v1367
  %1369 = vdwg.mxu0
  %1370 = vmatprep.subr.mxu0 %v1153
  %1371 = vmatpush1.msra.mxu0 %v1152
  %1372 = vmatprep.subr.mxu0 %v1171
  %1373 = vmatpush1.msra.mxu0 %v1170
  %1374 = vmatprep.subr.mxu0 %v1189
  %1375 = vmatpush1.msra.mxu0 %v1188
  %1376 = vmatprep.subr.mxu0 %v1207
  %1377 = vmatpush1.msra.mxu0 %v1206
  %1378 = vmatprep.subr.mxu0 %v1255
  %1379 = vmatpush1.msra.mxu0 %v1252
  %1380 = vmatprep.subr.mxu0 0.0
  %1381 = vmatpush1.msra.mxu0 0.0
  %1382 = vmatprep.subr.mxu0 0.0
  %1383 = vmatpush1.msra.mxu0 0.0
  %1384 = vmatprep.subr.mxu0 0.0
  %1385 = vmatpush1.msra.mxu0 0.0
  %1386 = vmatprep.subr.mxu0 0.0
  %1387 = vmatpush1.msra.mxu0 0.0
  %1388 = vmatprep.subr.mxu0 0.0
  %1389 = vmatpush1.msra.mxu0 0.0
  %1390 = vmatprep.subr.mxu0 0.0
  %1391 = vmatpush1.msra.mxu0 0.0
  %1392 = vmatprep.subr.mxu0 0.0
  %1393 = vmatpush1.msra.mxu0 0.0
  %1394 = vmatprep.subr.mxu0 0.0
  %1395 = vmatpush1.msra.mxu0 0.0
  %1396 = vmatprep.subr.mxu0 0.0
  %1397 = vmatpush1.msra.mxu0 0.0
  %1398 = vmatprep.subr.mxu0 0.0
  %1399 = vmatpush1.msra.mxu0 0.0
  %1400 = vmatprep.subr.mxu0 0.0
  %1401 = vmatpush1.msra.mxu0 0.0
  %1402 = vmatprep.subr.mxu0 0.0
  %1403 = vmatpush1.msra.mxu0 0.0
  %1404 = vmatprep.subr.mxu0 0.0
  %1405 = vmatpush1.msra.mxu0 0.0
  %1406 = vmatprep.subr.mxu0 0.0
  %1407 = vmatpush1.msra.mxu0 0.0
  %1408 = vmatprep.subr.mxu0 0.0
  %1409 = vmatpush1.msra.mxu0 0.0
  %1410 = vmatprep.subr.mxu0 0.0
  %1411 = vmatpush1.msra.mxu0 0.0
  %1412 = vmatprep.subr.mxu0 0.0
  %1413 = vmatpush1.msra.mxu0 0.0
  %1414 = vmatprep.subr.mxu0 0.0
  %1415 = vmatpush1.msra.mxu0 0.0
  %1416 = vmatprep.subr.mxu0 0.0
  %1417 = vmatpush1.msra.mxu0 0.0
  %1418 = vmatprep.subr.mxu0 0.0
  %1419 = vmatpush1.msra.mxu0 0.0
  %1420 = vmatprep.subr.mxu0 0.0
  %1421 = vmatpush1.msra.mxu0 0.0
  %1422 = vmatprep.subr.mxu0 0.0
  %1423 = vmatpush1.msra.mxu0 0.0
  %1424 = vmatprep.subr.mxu0 0.0
  %1425 = vmatpush1.msra.mxu0 0.0
  %1426 = vmatprep.subr.mxu0 0.0
  %1427 = vmatpush1.msra.mxu0 0.0
  %1428 = vmatprep.subr.mxu0 0.0
  %1429 = vmatpush1.msra.mxu0 0.0
  %1430 = vmatprep.subr.mxu0 0.0
  %1431 = vmatpush1.msra.mxu0 0.0
  %1432 = vmatprep.subr.mxu0 0.0
  %1433 = vmatpush1.msra.mxu0 0.0
  %1434 = vmatprep.mubr.f32.mxu0 0.0
  %1435 = vmatmul.mubr.f32.gmra.mrb[0].mxu0 %v1242
  %v1436 = vpop.f32.mrb[0].mxu0
  %v1437 = vadd.f32 0.0, %v1436
  %v1438 = vpop.f32.mrb[0].mxu0
  %v1439 = vadd.f32 0.0, %v1438
  %1440 = vdwg.mxu0
  %1441 = vmatprep.subr.mxu0 %v1155
  %1442 = vmatpush1.msra.mxu0 %v1154
  %1443 = vmatprep.subr.mxu0 %v1173
  %1444 = vmatpush1.msra.mxu0 %v1172
  %1445 = vmatprep.subr.mxu0 %v1191
  %1446 = vmatpush1.msra.mxu0 %v1190
  %1447 = vmatprep.subr.mxu0 %v1209
  %1448 = vmatpush1.msra.mxu0 %v1208
  %1449 = vmatprep.subr.mxu0 %v1261
  %1450 = vmatpush1.msra.mxu0 %v1258
  %1451 = vmatprep.subr.mxu0 0.0
  %1452 = vmatpush1.msra.mxu0 0.0
  %1453 = vmatprep.subr.mxu0 0.0
  %1454 = vmatpush1.msra.mxu0 0.0
  %1455 = vmatprep.subr.mxu0 0.0
  %1456 = vmatpush1.msra.mxu0 0.0
  %1457 = vmatprep.subr.mxu0 0.0
  %1458 = vmatpush1.msra.mxu0 0.0
  %1459 = vmatprep.subr.mxu0 0.0
  %1460 = vmatpush1.msra.mxu0 0.0
  %1461 = vmatprep.subr.mxu0 0.0
  %1462 = vmatpush1.msra.mxu0 0.0
  %1463 = vmatprep.subr.mxu0 0.0
  %1464 = vmatpush1.msra.mxu0 0.0
  %1465 = vmatprep.subr.mxu0 0.0
  %1466 = vmatpush1.msra.mxu0 0.0
  %1467 = vmatprep.subr.mxu0 0.0
  %1468 = vmatpush1.msra.mxu0 0.0
  %1469 = vmatprep.subr.mxu0 0.0
  %1470 = vmatpush1.msra.mxu0 0.0
  %1471 = vmatprep.subr.mxu0 0.0
  %1472 = vmatpush1.msra.mxu0 0.0
  %1473 = vmatprep.subr.mxu0 0.0
  %1474 = vmatpush1.msra.mxu0 0.0
  %1475 = vmatprep.subr.mxu0 0.0
  %1476 = vmatpush1.msra.mxu0 0.0
  %1477 = vmatprep.subr.mxu0 0.0
  %1478 = vmatpush1.msra.mxu0 0.0
  %1479 = vmatprep.subr.mxu0 0.0
  %1480 = vmatpush1.msra.mxu0 0.0
  %1481 = vmatprep.subr.mxu0 0.0
  %1482 = vmatpush1.msra.mxu0 0.0
  %1483 = vmatprep.subr.mxu0 0.0
  %1484 = vmatpush1.msra.mxu0 0.0
  %1485 = vmatprep.subr.mxu0 0.0
  %1486 = vmatpush1.msra.mxu0 0.0
  %1487 = vmatprep.subr.mxu0 0.0
  %1488 = vmatpush1.msra.mxu0 0.0
  %1489 = vmatprep.subr.mxu0 0.0
  %1490 = vmatpush1.msra.mxu0 0.0
  %1491 = vmatprep.subr.mxu0 0.0
  %1492 = vmatpush1.msra.mxu0 0.0
  %1493 = vmatprep.subr.mxu0 0.0
  %1494 = vmatpush1.msra.mxu0 0.0
  %1495 = vmatprep.subr.mxu0 0.0
  %1496 = vmatpush1.msra.mxu0 0.0
  %1497 = vmatprep.subr.mxu0 0.0
  %1498 = vmatpush1.msra.mxu0 0.0
  %1499 = vmatprep.subr.mxu0 0.0
  %1500 = vmatpush1.msra.mxu0 0.0
  %1501 = vmatprep.subr.mxu0 0.0
  %1502 = vmatpush1.msra.mxu0 0.0
  %1503 = vmatprep.subr.mxu0 0.0
  %1504 = vmatpush1.msra.mxu0 0.0
  %1505 = vmatprep.mubr.f32.mxu0 0.0
  %1506 = vmatmul.mubr.f32.gmra.mrb[0].mxu0 %v1242
  %v1507 = vpop.f32.mrb[0].mxu0
  %v1508 = vadd.f32 0.0, %v1507
  %v1509 = vpop.f32.mrb[0].mxu0
  %v1510 = vadd.f32 0.0, %v1509
  %1511 = vdwg.mxu0
  %1512 = vmatprep.subr.mxu0 %v1157
  %1513 = vmatpush1.msra.mxu0 %v1156
  %1514 = vmatprep.subr.mxu0 %v1175
  %1515 = vmatpush1.msra.mxu0 %v1174
  %1516 = vmatprep.subr.mxu0 %v1193
  %1517 = vmatpush1.msra.mxu0 %v1192
  %1518 = vmatprep.subr.mxu0 %v1211
  %1519 = vmatpush1.msra.mxu0 %v1210
  %1520 = vmatprep.subr.mxu0 %v1267
  %1521 = vmatpush1.msra.mxu0 %v1264
  %1522 = vmatprep.subr.mxu0 0.0
  %1523 = vmatpush1.msra.mxu0 0.0
  %1524 = vmatprep.subr.mxu0 0.0
  %1525 = vmatpush1.msra.mxu0 0.0
  %1526 = vmatprep.subr.mxu0 0.0
  %1527 = vmatpush1.msra.mxu0 0.0
  %1528 = vmatprep.subr.mxu0 0.0
  %1529 = vmatpush1.msra.mxu0 0.0
  %1530 = vmatprep.subr.mxu0 0.0
  %1531 = vmatpush1.msra.mxu0 0.0
  %1532 = vmatprep.subr.mxu0 0.0
  %1533 = vmatpush1.msra.mxu0 0.0
  %1534 = vmatprep.subr.mxu0 0.0
  %1535 = vmatpush1.msra.mxu0 0.0
  %1536 = vmatprep.subr.mxu0 0.0
  %1537 = vmatpush1.msra.mxu0 0.0
  %1538 = vmatprep.subr.mxu0 0.0
  %1539 = vmatpush1.msra.mxu0 0.0
  %1540 = vmatprep.subr.mxu0 0.0
  %1541 = vmatpush1.msra.mxu0 0.0
  %1542 = vmatprep.subr.mxu0 0.0
  %1543 = vmatpush1.msra.mxu0 0.0
  %1544 = vmatprep.subr.mxu0 0.0
  %1545 = vmatpush1.msra.mxu0 0.0
  %1546 = vmatprep.subr.mxu0 0.0
  %1547 = vmatpush1.msra.mxu0 0.0
  %1548 = vmatprep.subr.mxu0 0.0
  %1549 = vmatpush1.msra.mxu0 0.0
  %1550 = vmatprep.subr.mxu0 0.0
  %1551 = vmatpush1.msra.mxu0 0.0
  %1552 = vmatprep.subr.mxu0 0.0
  %1553 = vmatpush1.msra.mxu0 0.0
  %1554 = vmatprep.subr.mxu0 0.0
  %1555 = vmatpush1.msra.mxu0 0.0
  %1556 = vmatprep.subr.mxu0 0.0
  %1557 = vmatpush1.msra.mxu0 0.0
  %1558 = vmatprep.subr.mxu0 0.0
  %1559 = vmatpush1.msra.mxu0 0.0
  %1560 = vmatprep.subr.mxu0 0.0
  %1561 = vmatpush1.msra.mxu0 0.0
  %1562 = vmatprep.subr.mxu0 0.0
  %1563 = vmatpush1.msra.mxu0 0.0
  %1564 = vmatprep.subr.mxu0 0.0
  %1565 = vmatpush1.msra.mxu0 0.0
  %1566 = vmatprep.subr.mxu0 0.0
  %1567 = vmatpush1.msra.mxu0 0.0
  %1568 = vmatprep.subr.mxu0 0.0
  %1569 = vmatpush1.msra.mxu0 0.0
  %1570 = vmatprep.subr.mxu0 0.0
  %1571 = vmatpush1.msra.mxu0 0.0
  %1572 = vmatprep.subr.mxu0 0.0
  %1573 = vmatpush1.msra.mxu0 0.0
  %1574 = vmatprep.subr.mxu0 0.0
  %1575 = vmatpush1.msra.mxu0 0.0
  %1576 = vmatprep.mubr.f32.mxu0 0.0
  %1577 = vmatmul.mubr.f32.gmra.mrb[0].mxu0 %v1242
  %v1578 = vpop.f32.mrb[0].mxu0
  %v1579 = vadd.f32 0.0, %v1578
  %v1580 = vpop.f32.mrb[0].mxu0
  %v1581 = vadd.f32 0.0, %v1580
  %1582 = vdwg.mxu0
  %1583 = vmatprep.subr.mxu0 %v1159
  %1584 = vmatpush1.msra.mxu0 %v1158
  %1585 = vmatprep.subr.mxu0 %v1177
  %1586 = vmatpush1.msra.mxu0 %v1176
  %1587 = vmatprep.subr.mxu0 %v1195
  %1588 = vmatpush1.msra.mxu0 %v1194
  %1589 = vmatprep.subr.mxu0 %v1213
  %1590 = vmatpush1.msra.mxu0 %v1212
  %1591 = vmatprep.subr.mxu0 %v1273
  %1592 = vmatpush1.msra.mxu0 %v1270
  %1593 = vmatprep.subr.mxu0 0.0
  %1594 = vmatpush1.msra.mxu0 0.0
  %1595 = vmatprep.subr.mxu0 0.0
  %1596 = vmatpush1.msra.mxu0 0.0
  %1597 = vmatprep.subr.mxu0 0.0
  %1598 = vmatpush1.msra.mxu0 0.0
  %1599 = vmatprep.subr.mxu0 0.0
  %1600 = vmatpush1.msra.mxu0 0.0
  %1601 = vmatprep.subr.mxu0 0.0
  %1602 = vmatpush1.msra.mxu0 0.0
  %1603 = vmatprep.subr.mxu0 0.0
  %1604 = vmatpush1.msra.mxu0 0.0
  %1605 = vmatprep.subr.mxu0 0.0
  %1606 = vmatpush1.msra.mxu0 0.0
  %1607 = vmatprep.subr.mxu0 0.0
  %1608 = vmatpush1.msra.mxu0 0.0
  %1609 = vmatprep.subr.mxu0 0.0
  %1610 = vmatpush1.msra.mxu0 0.0
  %1611 = vmatprep.subr.mxu0 0.0
  %1612 = vmatpush1.msra.mxu0 0.0
  %1613 = vmatprep.subr.mxu0 0.0
  %1614 = vmatpush1.msra.mxu0 0.0
  %1615 = vmatprep.subr.mxu0 0.0
  %1616 = vmatpush1.msra.mxu0 0.0
  %1617 = vmatprep.subr.mxu0 0.0
  %1618 = vmatpush1.msra.mxu0 0.0
  %1619 = vmatprep.subr.mxu0 0.0
  %1620 = vmatpush1.msra.mxu0 0.0
  %1621 = vmatprep.subr.mxu0 0.0
  %1622 = vmatpush1.msra.mxu0 0.0
  %1623 = vmatprep.subr.mxu0 0.0
  %1624 = vmatpush1.msra.mxu0 0.0
  %1625 = vmatprep.subr.mxu0 0.0
  %1626 = vmatpush1.msra.mxu0 0.0
  %1627 = vmatprep.subr.mxu0 0.0
  %1628 = vmatpush1.msra.mxu0 0.0
  %1629 = vmatprep.subr.mxu0 0.0
  %1630 = vmatpush1.msra.mxu0 0.0
  %1631 = vmatprep.subr.mxu0 0.0
  %1632 = vmatpush1.msra.mxu0 0.0
  %1633 = vmatprep.subr.mxu0 0.0
  %1634 = vmatpush1.msra.mxu0 0.0
  %1635 = vmatprep.subr.mxu0 0.0
  %1636 = vmatpush1.msra.mxu0 0.0
  %1637 = vmatprep.subr.mxu0 0.0
  %1638 = vmatpush1.msra.mxu0 0.0
  %1639 = vmatprep.subr.mxu0 0.0
  %1640 = vmatpush1.msra.mxu0 0.0
  %1641 = vmatprep.subr.mxu0 0.0
  %1642 = vmatpush1.msra.mxu0 0.0
  %1643 = vmatprep.subr.mxu0 0.0
  %1644 = vmatpush1.msra.mxu0 0.0
  %1645 = vmatprep.subr.mxu0 0.0
  %1646 = vmatpush1.msra.mxu0 0.0
  %1647 = vmatprep.mubr.f32.mxu0 0.0
  %1648 = vmatmul.mubr.f32.gmra.mrb[0].mxu0 %v1242
  %v1649 = vpop.f32.mrb[0].mxu0
  %v1650 = vadd.f32 0.0, %v1649
  %v1651 = vpop.f32.mrb[0].mxu0
  %v1652 = vadd.f32 0.0, %v1651
  %1653 = vdwg.mxu0
  %1654 = vmatprep.subr.mxu0 %v1161
  %1655 = vmatpush1.msra.mxu0 %v1160
  %1656 = vmatprep.subr.mxu0 %v1179
  %1657 = vmatpush1.msra.mxu0 %v1178
  %1658 = vmatprep.subr.mxu0 %v1197
  %1659 = vmatpush1.msra.mxu0 %v1196
  %1660 = vmatprep.subr.mxu0 %v1215
  %1661 = vmatpush1.msra.mxu0 %v1214
  %1662 = vmatprep.subr.mxu0 %v1279
  %1663 = vmatpush1.msra.mxu0 %v1276
  %1664 = vmatprep.subr.mxu0 0.0
  %1665 = vmatpush1.msra.mxu0 0.0
  %1666 = vmatprep.subr.mxu0 0.0
  %1667 = vmatpush1.msra.mxu0 0.0
  %1668 = vmatprep.subr.mxu0 0.0
  %1669 = vmatpush1.msra.mxu0 0.0
  %1670 = vmatprep.subr.mxu0 0.0
  %1671 = vmatpush1.msra.mxu0 0.0
  %1672 = vmatprep.subr.mxu0 0.0
  %1673 = vmatpush1.msra.mxu0 0.0
  %1674 = vmatprep.subr.mxu0 0.0
  %1675 = vmatpush1.msra.mxu0 0.0
  %1676 = vmatprep.subr.mxu0 0.0
  %1677 = vmatpush1.msra.mxu0 0.0
  %1678 = vmatprep.subr.mxu0 0.0
  %1679 = vmatpush1.msra.mxu0 0.0
  %1680 = vmatprep.subr.mxu0 0.0
  %1681 = vmatpush1.msra.mxu0 0.0
  %1682 = vmatprep.subr.mxu0 0.0
  %1683 = vmatpush1.msra.mxu0 0.0
  %1684 = vmatprep.subr.mxu0 0.0
  %1685 = vmatpush1.msra.mxu0 0.0
  %1686 = vmatprep.subr.mxu0 0.0
  %1687 = vmatpush1.msra.mxu0 0.0
  %1688 = vmatprep.subr.mxu0 0.0
  %1689 = vmatpush1.msra.mxu0 0.0
  %1690 = vmatprep.subr.mxu0 0.0
  %1691 = vmatpush1.msra.mxu0 0.0
  %1692 = vmatprep.subr.mxu0 0.0
  %1693 = vmatpush1.msra.mxu0 0.0
  %1694 = vmatprep.subr.mxu0 0.0
  %1695 = vmatpush1.msra.mxu0 0.0
  %1696 = vmatprep.subr.mxu0 0.0
  %1697 = vmatpush1.msra.mxu0 0.0
  %1698 = vmatprep.subr.mxu0 0.0
  %1699 = vmatpush1.msra.mxu0 0.0
  %1700 = vmatprep.subr.mxu0 0.0
  %1701 = vmatpush1.msra.mxu0 0.0
  %1702 = vmatprep.subr.mxu0 0.0
  %1703 = vmatpush1.msra.mxu0 0.0
  %1704 = vmatprep.subr.mxu0 0.0
  %1705 = vmatpush1.msra.mxu0 0.0
  %1706 = vmatprep.subr.mxu0 0.0
  %1707 = vmatpush1.msra.mxu0 0.0
  %1708 = vmatprep.subr.mxu0 0.0
  %1709 = vmatpush1.msra.mxu0 0.0
  %1710 = vmatprep.subr.mxu0 0.0
  %1711 = vmatpush1.msra.mxu0 0.0
  %1712 = vmatprep.subr.mxu0 0.0
  %1713 = vmatpush1.msra.mxu0 0.0
  %1714 = vmatprep.subr.mxu0 0.0
  %1715 = vmatpush1.msra.mxu0 0.0
  %1716 = vmatprep.subr.mxu0 0.0
  %1717 = vmatpush1.msra.mxu0 0.0
  %1718 = vmatprep.mubr.f32.mxu0 0.0
  %1719 = vmatmul.mubr.f32.gmra.mrb[0].mxu0 %v1242
  %v1720 = vpop.f32.mrb[0].mxu0
  %v1721 = vadd.f32 0.0, %v1720
  %v1722 = vpop.f32.mrb[0].mxu0
  %v1723 = vadd.f32 0.0, %v1722
  %1724 = vdwg.mxu0
  %1725 = vmatprep.subr.mxu0 %v1163
  %1726 = vmatpush1.msra.mxu0 %v1162
  %1727 = vmatprep.subr.mxu0 %v1181
  %1728 = vmatpush1.msra.mxu0 %v1180
  %1729 = vmatprep.subr.mxu0 %v1199
  %1730 = vmatpush1.msra.mxu0 %v1198
  %1731 = vmatprep.subr.mxu0 %v1217
  %1732 = vmatpush1.msra.mxu0 %v1216
  %1733 = vmatprep.subr.mxu0 %v1285
  %1734 = vmatpush1.msra.mxu0 %v1282
  %1735 = vmatprep.subr.mxu0 0.0
  %1736 = vmatpush1.msra.mxu0 0.0
  %1737 = vmatprep.subr.mxu0 0.0
  %1738 = vmatpush1.msra.mxu0 0.0
  %1739 = vmatprep.subr.mxu0 0.0
  %1740 = vmatpush1.msra.mxu0 0.0
  %1741 = vmatprep.subr.mxu0 0.0
  %1742 = vmatpush1.msra.mxu0 0.0
  %1743 = vmatprep.subr.mxu0 0.0
  %1744 = vmatpush1.msra.mxu0 0.0
  %1745 = vmatprep.subr.mxu0 0.0
  %1746 = vmatpush1.msra.mxu0 0.0
  %1747 = vmatprep.subr.mxu0 0.0
  %1748 = vmatpush1.msra.mxu0 0.0
  %1749 = vmatprep.subr.mxu0 0.0
  %1750 = vmatpush1.msra.mxu0 0.0
  %1751 = vmatprep.subr.mxu0 0.0
  %1752 = vmatpush1.msra.mxu0 0.0
  %1753 = vmatprep.subr.mxu0 0.0
  %1754 = vmatpush1.msra.mxu0 0.0
  %1755 = vmatprep.subr.mxu0 0.0
  %1756 = vmatpush1.msra.mxu0 0.0
  %1757 = vmatprep.subr.mxu0 0.0
  %1758 = vmatpush1.msra.mxu0 0.0
  %1759 = vmatprep.subr.mxu0 0.0
  %1760 = vmatpush1.msra.mxu0 0.0
  %1761 = vmatprep.subr.mxu0 0.0
  %1762 = vmatpush1.msra.mxu0 0.0
  %1763 = vmatprep.subr.mxu0 0.0
  %1764 = vmatpush1.msra.mxu0 0.0
  %1765 = vmatprep.subr.mxu0 0.0
  %1766 = vmatpush1.msra.mxu0 0.0
  %1767 = vmatprep.subr.mxu0 0.0
  %1768 = vmatpush1.msra.mxu0 0.0
  %1769 = vmatprep.subr.mxu0 0.0
  %1770 = vmatpush1.msra.mxu0 0.0
  %1771 = vmatprep.subr.mxu0 0.0
  %1772 = vmatpush1.msra.mxu0 0.0
  %1773 = vmatprep.subr.mxu0 0.0
  %1774 = vmatpush1.msra.mxu0 0.0
  %1775 = vmatprep.subr.mxu0 0.0
  %1776 = vmatpush1.msra.mxu0 0.0
  %1777 = vmatprep.subr.mxu0 0.0
  %1778 = vmatpush1.msra.mxu0 0.0
  %1779 = vmatprep.subr.mxu0 0.0
  %1780 = vmatpush1.msra.mxu0 0.0
  %1781 = vmatprep.subr.mxu0 0.0
  %1782 = vmatpush1.msra.mxu0 0.0
  %1783 = vmatprep.subr.mxu0 0.0
  %1784 = vmatpush1.msra.mxu0 0.0
  %1785 = vmatprep.subr.mxu0 0.0
  %1786 = vmatpush1.msra.mxu0 0.0
  %1787 = vmatprep.subr.mxu0 0.0
  %1788 = vmatpush1.msra.mxu0 0.0
  %1789 = vmatprep.mubr.f32.mxu0 0.0
  %1790 = vmatmul.mubr.f32.gmra.mrb[0].mxu0 %v1242
  %v1791 = vpop.f32.mrb[0].mxu0
  %v1792 = vadd.f32 0.0, %v1791
  %v1793 = vpop.f32.mrb[0].mxu0
  %v1794 = vadd.f32 0.0, %v1793
  %1795 = vdwg.mxu0
  %1796 = vmatprep.subr.mxu0 %v1165
  %1797 = vmatpush1.msra.mxu0 %v1164
  %1798 = vmatprep.subr.mxu0 %v1183
  %1799 = vmatpush1.msra.mxu0 %v1182
  %1800 = vmatprep.subr.mxu0 %v1201
  %1801 = vmatpush1.msra.mxu0 %v1200
  %1802 = vmatprep.subr.mxu0 %v1219
  %1803 = vmatpush1.msra.mxu0 %v1218
  %1804 = vmatprep.subr.mxu0 %v1291
  %1805 = vmatpush1.msra.mxu0 %v1288
  %1806 = vmatprep.subr.mxu0 0.0
  %1807 = vmatpush1.msra.mxu0 0.0
  %1808 = vmatprep.subr.mxu0 0.0
  %1809 = vmatpush1.msra.mxu0 0.0
  %1810 = vmatprep.subr.mxu0 0.0
  %1811 = vmatpush1.msra.mxu0 0.0
  %1812 = vmatprep.subr.mxu0 0.0
  %1813 = vmatpush1.msra.mxu0 0.0
  %1814 = vmatprep.subr.mxu0 0.0
  %1815 = vmatpush1.msra.mxu0 0.0
  %1816 = vmatprep.subr.mxu0 0.0
  %1817 = vmatpush1.msra.mxu0 0.0
  %1818 = vmatprep.subr.mxu0 0.0
  %1819 = vmatpush1.msra.mxu0 0.0
  %1820 = vmatprep.subr.mxu0 0.0
  %1821 = vmatpush1.msra.mxu0 0.0
  %1822 = vmatprep.subr.mxu0 0.0
  %1823 = vmatpush1.msra.mxu0 0.0
  %1824 = vmatprep.subr.mxu0 0.0
  %1825 = vmatpush1.msra.mxu0 0.0
  %1826 = vmatprep.subr.mxu0 0.0
  %1827 = vmatpush1.msra.mxu0 0.0
  %1828 = vmatprep.subr.mxu0 0.0
  %1829 = vmatpush1.msra.mxu0 0.0
  %1830 = vmatprep.subr.mxu0 0.0
  %1831 = vmatpush1.msra.mxu0 0.0
  %1832 = vmatprep.subr.mxu0 0.0
  %1833 = vmatpush1.msra.mxu0 0.0
  %1834 = vmatprep.subr.mxu0 0.0
  %1835 = vmatpush1.msra.mxu0 0.0
  %1836 = vmatprep.subr.mxu0 0.0
  %1837 = vmatpush1.msra.mxu0 0.0
  %1838 = vmatprep.subr.mxu0 0.0
  %1839 = vmatpush1.msra.mxu0 0.0
  %1840 = vmatprep.subr.mxu0 0.0
  %1841 = vmatpush1.msra.mxu0 0.0
  %1842 = vmatprep.subr.mxu0 0.0
  %1843 = vmatpush1.msra.mxu0 0.0
  %1844 = vmatprep.subr.mxu0 0.0
  %1845 = vmatpush1.msra.mxu0 0.0
  %1846 = vmatprep.subr.mxu0 0.0
  %1847 = vmatpush1.msra.mxu0 0.0
  %1848 = vmatprep.subr.mxu0 0.0
  %1849 = vmatpush1.msra.mxu0 0.0
  %1850 = vmatprep.subr.mxu0 0.0
  %1851 = vmatpush1.msra.mxu0 0.0
  %1852 = vmatprep.subr.mxu0 0.0
  %1853 = vmatpush1.msra.mxu0 0.0
  %1854 = vmatprep.subr.mxu0 0.0
  %1855 = vmatpush1.msra.mxu0 0.0
  %1856 = vmatprep.subr.mxu0 0.0
  %1857 = vmatpush1.msra.mxu0 0.0
  %1858 = vmatprep.subr.mxu0 0.0
  %1859 = vmatpush1.msra.mxu0 0.0
  %1860 = vmatprep.mubr.f32.mxu0 0.0
  %1861 = vmatmul.mubr.f32.gmra.mrb[0].mxu0 %v1242
  %v1862 = vpop.f32.mrb[0].mxu0
  %v1863 = vadd.f32 0.0, %v1862
  %v1864 = vpop.f32.mrb[0].mxu0
  %v1865 = vadd.f32 0.0, %v1864
  %1866 = vdwg.mxu0
  %1867 = vmatprep.subr.mxu0 %v1167
  %1868 = vmatpush1.msra.mxu0 %v1166
  %1869 = vmatprep.subr.mxu0 %v1185
  %1870 = vmatpush1.msra.mxu0 %v1184
  %1871 = vmatprep.subr.mxu0 %v1203
  %1872 = vmatpush1.msra.mxu0 %v1202
  %1873 = vmatprep.subr.mxu0 %v1221
  %1874 = vmatpush1.msra.mxu0 %v1220
  %1875 = vmatprep.subr.mxu0 %v1297
  %1876 = vmatpush1.msra.mxu0 %v1294
  %1877 = vmatprep.subr.mxu0 0.0
  %1878 = vmatpush1.msra.mxu0 0.0
  %1879 = vmatprep.subr.mxu0 0.0
  %1880 = vmatpush1.msra.mxu0 0.0
  %1881 = vmatprep.subr.mxu0 0.0
  %1882 = vmatpush1.msra.mxu0 0.0
  %1883 = vmatprep.subr.mxu0 0.0
  %1884 = vmatpush1.msra.mxu0 0.0
  %1885 = vmatprep.subr.mxu0 0.0
  %1886 = vmatpush1.msra.mxu0 0.0
  %1887 = vmatprep.subr.mxu0 0.0
  %1888 = vmatpush1.msra.mxu0 0.0
  %1889 = vmatprep.subr.mxu0 0.0
  %1890 = vmatpush1.msra.mxu0 0.0
  %1891 = vmatprep.subr.mxu0 0.0
  %1892 = vmatpush1.msra.mxu0 0.0
  %1893 = vmatprep.subr.mxu0 0.0
  %1894 = vmatpush1.msra.mxu0 0.0
  %1895 = vmatprep.subr.mxu0 0.0
  %1896 = vmatpush1.msra.mxu0 0.0
  %1897 = vmatprep.subr.mxu0 0.0
  %1898 = vmatpush1.msra.mxu0 0.0
  %1899 = vmatprep.subr.mxu0 0.0
  %1900 = vmatpush1.msra.mxu0 0.0
  %1901 = vmatprep.subr.mxu0 0.0
  %1902 = vmatpush1.msra.mxu0 0.0
  %1903 = vmatprep.subr.mxu0 0.0
  %1904 = vmatpush1.msra.mxu0 0.0
  %1905 = vmatprep.subr.mxu0 0.0
  %1906 = vmatpush1.msra.mxu0 0.0
  %1907 = vmatprep.subr.mxu0 0.0
  %1908 = vmatpush1.msra.mxu0 0.0
  %1909 = vmatprep.subr.mxu0 0.0
  %1910 = vmatpush1.msra.mxu0 0.0
  %1911 = vmatprep.subr.mxu0 0.0
  %1912 = vmatpush1.msra.mxu0 0.0
  %1913 = vmatprep.subr.mxu0 0.0
  %1914 = vmatpush1.msra.mxu0 0.0
  %1915 = vmatprep.subr.mxu0 0.0
  %1916 = vmatpush1.msra.mxu0 0.0
  %1917 = vmatprep.subr.mxu0 0.0
  %1918 = vmatpush1.msra.mxu0 0.0
  %1919 = vmatprep.subr.mxu0 0.0
  %1920 = vmatpush1.msra.mxu0 0.0
  %1921 = vmatprep.subr.mxu0 0.0
  %1922 = vmatpush1.msra.mxu0 0.0
  %1923 = vmatprep.subr.mxu0 0.0
  %1924 = vmatpush1.msra.mxu0 0.0
  %1925 = vmatprep.subr.mxu0 0.0
  %1926 = vmatpush1.msra.mxu0 0.0
  %1927 = vmatprep.subr.mxu0 0.0
  %1928 = vmatpush1.msra.mxu0 0.0
  %1929 = vmatprep.subr.mxu0 0.0
  %1930 = vmatpush1.msra.mxu0 0.0
  %1931 = vmatprep.mubr.f32.mxu0 0.0
  %1932 = vmatmul.mubr.f32.gmra.mrb[0].mxu0 %v1242
  %v1933 = vpop.f32.mrb[0].mxu0
  %v1934 = vadd.f32 0.0, %v1933
  %v1935 = vpop.f32.mrb[0].mxu0
  %v1936 = vadd.f32 0.0, %v1935
  %1937 = vdwg.mxu0
  %vm1938 = vcmp.gt.f32.partialorder %v1366, 0.0
  %vm1939 = vcmp.gt.f32.partialorder %v1368, 0.0
  %vm1940 = vcmp.gt.f32.partialorder %v1437, 0.0
  %vm1941 = vcmp.gt.f32.partialorder %v1439, 0.0
  %vm1942 = vcmp.gt.f32.partialorder %v1508, 0.0
  %vm1943 = vcmp.gt.f32.partialorder %v1510, 0.0
  %vm1944 = vcmp.gt.f32.partialorder %v1579, 0.0
  %vm1945 = vcmp.gt.f32.partialorder %v1581, 0.0
  %vm1946 = vcmp.gt.f32.partialorder %v1650, 0.0
  %vm1947 = vcmp.gt.f32.partialorder %v1652, 0.0
  %vm1948 = vcmp.gt.f32.partialorder %v1721, 0.0
  %vm1949 = vcmp.gt.f32.partialorder %v1723, 0.0
  %vm1950 = vcmp.gt.f32.partialorder %v1792, 0.0
  %vm1951 = vcmp.gt.f32.partialorder %v1794, 0.0
  %vm1952 = vcmp.gt.f32.partialorder %v1863, 0.0
  %vm1953 = vcmp.gt.f32.partialorder %v1865, 0.0
  %vm1954 = vcmp.gt.f32.partialorder %v1934, 0.0
  %vm1955 = vcmp.gt.f32.partialorder %v1936, 0.0
  %v1956 = vmul.f32 %v729, %v1366
  %v1957 = vmul.f32 %v731, %v1368
  %v1958 = vmul.f32 %v770, %v1437
  %v1959 = vmul.f32 %v772, %v1439
  %v1960 = vmul.f32 %v811, %v1508
  %v1961 = vmul.f32 %v813, %v1510
  %v1962 = vmul.f32 %v852, %v1579
  %v1963 = vmul.f32 %v854, %v1581
  %v1964 = vmul.f32 %v893, %v1650
  %v1965 = vmul.f32 %v895, %v1652
  %v1966 = vmul.f32 %v934, %v1721
  %v1967 = vmul.f32 %v936, %v1723
  %v1968 = vmul.f32 %v975, %v1792
  %v1969 = vmul.f32 %v977, %v1794
  %v1970 = vmul.f32 %v1016, %v1863
  %v1971 = vmul.f32 %v1018, %v1865
  %v1972 = vmul.f32 %v1057, %v1934
  %v1973 = vmul.f32 %v1059, %v1936
  %v1974 = vld [vmem:[%s7] sm:$0xff]
  %v1975 = vld [vmem:[%s7 + $0x8] sm:$0xff]
  %v1976 = vld [vmem:[%s7 + $0x10] sm:$0x3]
  %v1980 = vlaneseq
  %v1981 = vshrl.u32 %v1980, 7
  %v1982 = vsub.s32 0, %v1981
  %v1983 = vrot.slane %v1974, %v1982
  %v1984 = vlaneseq
  %v1985 = vshrl.u32 %v1984, 7
  %v1986 = vsub.s32 1, %v1985
  %v1987 = vrot.slane %v1974, %v1986
  %v1988 = vlaneseq
  %v1989 = vshrl.u32 %v1988, 7
  %v1990 = vsub.s32 2, %v1989
  %v1991 = vrot.slane %v1974, %v1990
  %v1992 = vlaneseq
  %v1993 = vshrl.u32 %v1992, 7
  %v1994 = vsub.s32 3, %v1993
  %v1995 = vrot.slane %v1974, %v1994
  %v1996 = vlaneseq
  %v1997 = vshrl.u32 %v1996, 7
  %v1998 = vsub.s32 4, %v1997
  %v1999 = vrot.slane %v1974, %v1998
  %v2000 = vlaneseq
  %v2001 = vshrl.u32 %v2000, 7
  %v2002 = vsub.s32 5, %v2001
  %v2003 = vrot.slane %v1974, %v2002
  %v2004 = vlaneseq
  %v2005 = vshrl.u32 %v2004, 7
  %v2006 = vsub.s32 6, %v2005
  %v2007 = vrot.slane %v1974, %v2006
  %v2008 = vlaneseq
  %v2009 = vshrl.u32 %v2008, 7
  %v2010 = vsub.s32 7, %v2009
  %v2011 = vrot.slane %v1974, %v2010
  %v2012 = vlaneseq
  %v2013 = vshrl.u32 %v2012, 7
  %v2014 = vsub.s32 0, %v2013
  %v2015 = vrot.slane %v1975, %v2014
  %v2016 = vlaneseq
  %v2017 = vshrl.u32 %v2016, 7
  %v2018 = vsub.s32 1, %v2017
  %v2019 = vrot.slane %v1975, %v2018
  %v2020 = vlaneseq
  %v2021 = vshrl.u32 %v2020, 7
  %v2022 = vsub.s32 2, %v2021
  %v2023 = vrot.slane %v1975, %v2022
  %v2024 = vlaneseq
  %v2025 = vshrl.u32 %v2024, 7
  %v2026 = vsub.s32 3, %v2025
  %v2027 = vrot.slane %v1975, %v2026
  %v2028 = vlaneseq
  %v2029 = vshrl.u32 %v2028, 7
  %v2030 = vsub.s32 4, %v2029
  %v2031 = vrot.slane %v1975, %v2030
  %v2032 = vlaneseq
  %v2033 = vshrl.u32 %v2032, 7
  %v2034 = vsub.s32 5, %v2033
  %v2035 = vrot.slane %v1975, %v2034
  %v2036 = vlaneseq
  %v2037 = vshrl.u32 %v2036, 7
  %v2038 = vsub.s32 6, %v2037
  %v2039 = vrot.slane %v1975, %v2038
  %v2040 = vlaneseq
  %v2041 = vshrl.u32 %v2040, 7
  %v2042 = vsub.s32 7, %v2041
  %v2043 = vrot.slane %v1975, %v2042
  %v2044 = vlaneseq
  %v2045 = vshrl.u32 %v2044, 7
  %v2046 = vsub.s32 0, %v2045
  %v2047 = vrot.slane %v1976, %v2046
  %v2048 = vlaneseq
  %v2049 = vshrl.u32 %v2048, 7
  %v2050 = vsub.s32 1, %v2049
  %v2051 = vrot.slane %v1976, %v2050
  %v2070 = vadd.f32 %v1956, %v1983
  %v2071 = vadd.f32 %v1957, %v1987
  %v2072 = vadd.f32 %v1958, %v1991
  %v2073 = vadd.f32 %v1959, %v1995
  %v2074 = vadd.f32 %v1960, %v1999
  %v2075 = vadd.f32 %v1961, %v2003
  %v2076 = vadd.f32 %v1962, %v2007
  %v2077 = vadd.f32 %v1963, %v2011
  %v2078 = vadd.f32 %v1964, %v2015
  %v2079 = vadd.f32 %v1965, %v2019
  %v2080 = vadd.f32 %v1966, %v2023
  %v2081 = vadd.f32 %v1967, %v2027
  %v2082 = vadd.f32 %v1968, %v2031
  %v2083 = vadd.f32 %v1969, %v2035
  %v2084 = vadd.f32 %v1970, %v2039
  %v2085 = vadd.f32 %v1971, %v2043
  %v2086 = vadd.f32 %v1972, %v2047
  %v2087 = vadd.f32 %v1973, %v2051
  %v2088 = vmax.f32 %v2070, 0.0
  %v2089 = vmax.f32 %v2071, 0.0
  %v2090 = vmax.f32 %v2072, 0.0
  %v2091 = vmax.f32 %v2073, 0.0
  %v2092 = vmax.f32 %v2074, 0.0
  %v2093 = vmax.f32 %v2075, 0.0
  %v2094 = vmax.f32 %v2076, 0.0
  %v2095 = vmax.f32 %v2077, 0.0
  %v2096 = vmax.f32 %v2078, 0.0
  %v2097 = vmax.f32 %v2079, 0.0
  %v2098 = vmax.f32 %v2080, 0.0
  %v2099 = vmax.f32 %v2081, 0.0
  %v2100 = vmax.f32 %v2082, 0.0
  %v2101 = vmax.f32 %v2083, 0.0
  %v2102 = vmax.f32 %v2084, 0.0
  %v2103 = vmax.f32 %v2085, 0.0
  %v2104 = vmax.f32 %v2086, 0.0
  %v2105 = vmax.f32 %v2087, 0.0
  %v2106 = vsel %vm1938, %v2088, 0.0
  %v2107 = vsel %vm1939, %v2089, 0.0
  %v2108 = vsel %vm1940, %v2090, 0.0
  %v2109 = vsel %vm1941, %v2091, 0.0
  %v2110 = vsel %vm1942, %v2092, 0.0
  %v2111 = vsel %vm1943, %v2093, 0.0
  %v2112 = vsel %vm1944, %v2094, 0.0
  %v2113 = vsel %vm1945, %v2095, 0.0
  %v2114 = vsel %vm1946, %v2096, 0.0
  %v2115 = vsel %vm1947, %v2097, 0.0
  %v2116 = vsel %vm1948, %v2098, 0.0
  %v2117 = vsel %vm1949, %v2099, 0.0
  %v2118 = vsel %vm1950, %v2100, 0.0
  %v2119 = vsel %vm1951, %v2101, 0.0
  %v2120 = vsel %vm1952, %v2102, 0.0
  %v2121 = vsel %vm1953, %v2103, 0.0
  %v2122 = vsel %vm1954, %v2104, 0.0
  %v2123 = vsel %vm1955, %v2105, 0.0
  %v2124 = vsel %vm1146, 1, 0
  %v2125 = vcvt.s32.f32 %v2124
  %v2126 = vpack.c.bf16 %v2125, %v2125
  %v2127 = vld [vmem:[%s13] sm:$0xf]
  %v2128 = vld [vmem:[%s13 + $0x4] sm:$0xf]
  %v2129 = vld [vmem:[%s13 + $0x8] sm:$0xf]
  %v2130 = vld [vmem:[%s13 + $0xc] sm:$0xf]
  %v2131 = vld [vmem:[%s13 + $0x10] sm:$0x3]
  %v2137 = vunpack.c.l.b16 %v2127
  %v2138 = vunpack.c.l.b16 %v2128
  %v2139 = vunpack.c.l.b16 %v2129
  %v2140 = vunpack.c.l.b16 %v2130
  %v2141 = vunpack.c.l.b16 %v2131
  %v2142 = vpack.c.b16 %v2138, %v2137
  %v2143 = vpack.c.b16 %v2140, %v2139
  %v2144 = vpack.c.b16 %v2141, %v2141
  %v2148 = vsel %vm1240, %v2126, 0
  %vm2150 = vcmask 1040384
  %v2151 = vsel %vm2150, 4294967295, 65535
  %v2152 = vsel %vm138, %v2151, 0
  %v2154 = vand.u32 %v2144, %v2152
  %2156 = vmatprep.subr.bf16.mxu0 0
  %2157 = vmatpush1.bf16.msra.mxu0 %v2142
  %2158 = vmatprep.subr.bf16.mxu0 0
  %2159 = vmatpush1.bf16.msra.mxu0 %v2143
  %2160 = vmatprep.subr.bf16.mxu0 0
  %2161 = vmatpush1.bf16.msra.mxu0 %v2154
  %2162 = vmatprep.subr.bf16.mxu0 0
  %2163 = vmatpush1.bf16.msra.mxu0 0
  %2164 = vmatprep.subr.bf16.mxu0 0
  %2165 = vmatpush1.bf16.msra.mxu0 0
  %2166 = vmatprep.subr.bf16.mxu0 0
  %2167 = vmatpush1.bf16.msra.mxu0 0
  %2168 = vmatprep.subr.bf16.mxu0 0
  %2169 = vmatpush1.bf16.msra.mxu0 0
  %2170 = vmatprep.subr.bf16.mxu0 0
  %2171 = vmatpush1.bf16.msra.mxu0 0
  %2172 = vmatprep.subr.bf16.mxu0 0
  %2173 = vmatpush1.bf16.msra.mxu0 0
  %2174 = vmatprep.subr.bf16.mxu0 0
  %2175 = vmatpush1.bf16.msra.mxu0 0
  %2176 = vmatprep.subr.bf16.mxu0 0
  %2177 = vmatpush1.bf16.msra.mxu0 0
  %2178 = vmatprep.subr.bf16.mxu0 0
  %2179 = vmatpush1.bf16.msra.mxu0 0
  %2180 = vmatprep.subr.bf16.mxu0 0
  %2181 = vmatpush1.bf16.msra.mxu0 0
  %2182 = vmatprep.subr.bf16.mxu0 0
  %2183 = vmatpush1.bf16.msra.mxu0 0
  %2184 = vmatprep.subr.bf16.mxu0 0
  %2185 = vmatpush1.bf16.msra.mxu0 0
  %2186 = vmatprep.subr.bf16.mxu0 0
  %2187 = vmatpush1.bf16.msra.mxu0 0
  %2188 = vmatprep.mubr.bf16.mxu0 0
  %2189 = vmatmul.mubr.bf16.gmra.mrb[0].mxu0 %v2148
  %v2190 = vpop.f32.mrb[0].mxu0
  %v2191 = vadd.f32 0.0, %v2190
  %v2192 = vpop.f32.mrb[0].mxu0
  %v2193 = vpop.f32.mrb[0].mxu0
  %v2194 = vpop.f32.mrb[0].mxu0
  %2195 = vdwg.mxu0
  %vm2196 = vcmp.gt.f32.partialorder %v2191, 0.0
  %v2197 = vmul.f32 %v2191, 64.0
  %v2198 = vsel %vm2196, %v2197, 1.0
  %v2199 = vrcp.pop %v2198
  %v2200 = vsel %vm2196, %v2199, 0.0
  %v2201 = vld [vmem:[%s17] sm:$0xff]
  %v2202 = vld [vmem:[%s17 + $0x8] sm:$0xff]
  %v2203 = vld [vmem:[%s17 + $0x10] sm:$0xff]
  %v2204 = vld [vmem:[%s17 + $0x18] sm:$0xff]
  %v2205 = vld [vmem:[%s17 + $0x20] sm:$0xff]
  %v2206 = vld [vmem:[%s17 + $0x28] sm:$0xff]
  %v2207 = vld [vmem:[%s17 + $0x30] sm:$0xff]
  %v2208 = vld [vmem:[%s17 + $0x38] sm:$0xff]
  %v2209 = vld [vmem:[%s17 + $0x40] sm:$0xff]
  %v2210 = vld [vmem:[%s17 + $0x48] sm:$0xff]
  %v2211 = vld [vmem:[%s17 + $0x50] sm:$0x1]
  %v2212 = vld [vmem:[%s17 + $0x58] sm:$0x1]
  %v2213 = vld [vmem:[%s17 + $0x60] sm:$0x1]
  %v2214 = vld [vmem:[%s17 + $0x68] sm:$0x1]
  %v2215 = vld [vmem:[%s17 + $0x70] sm:$0x1]
  %vm2216 = vcmask 138240
  %v2218 = vsel %vm2216, %v2200, 0
  %v2221 = vsel %vm2150, %v2211, 0
  %v2224 = vsel %vm2150, %v2212, 0
  %v2227 = vsel %vm2150, %v2213, 0
  %v2230 = vsel %vm2150, %v2214, 0
  %v2233 = vsel %vm2150, %v2215, 0
  %2235 = vmatprep.subr.mxu0 %v2202
  %2236 = vmatpush1.msra.mxu0 %v2201
  %2237 = vmatprep.subr.mxu0 %v2207
  %2238 = vmatpush1.msra.mxu0 %v2206
  %2239 = vmatprep.subr.mxu0 %v2224
  %2240 = vmatpush1.msra.mxu0 %v2221
  %2241 = vmatprep.subr.mxu0 0.0
  %2242 = vmatpush1.msra.mxu0 0.0
  %2243 = vmatprep.subr.mxu0 0.0
  %2244 = vmatpush1.msra.mxu0 0.0
  %2245 = vmatprep.subr.mxu0 0.0
  %2246 = vmatpush1.msra.mxu0 0.0
  %2247 = vmatprep.subr.mxu0 0.0
  %2248 = vmatpush1.msra.mxu0 0.0
  %2249 = vmatprep.subr.mxu0 0.0
  %2250 = vmatpush1.msra.mxu0 0.0
  %2251 = vmatprep.subr.mxu0 0.0
  %2252 = vmatpush1.msra.mxu0 0.0
  %2253 = vmatprep.subr.mxu0 0.0
  %2254 = vmatpush1.msra.mxu0 0.0
  %2255 = vmatprep.subr.mxu0 0.0
  %2256 = vmatpush1.msra.mxu0 0.0
  %2257 = vmatprep.subr.mxu0 0.0
  %2258 = vmatpush1.msra.mxu0 0.0
  %2259 = vmatprep.subr.mxu0 0.0
  %2260 = vmatpush1.msra.mxu0 0.0
  %2261 = vmatprep.subr.mxu0 0.0
  %2262 = vmatpush1.msra.mxu0 0.0
  %2263 = vmatprep.subr.mxu0 0.0
  %2264 = vmatpush1.msra.mxu0 0.0
  %2265 = vmatprep.subr.mxu0 0.0
  %2266 = vmatpush1.msra.mxu0 0.0
  %2267 = vmatprep.subr.mxu0 0.0
  %2268 = vmatpush1.msra.mxu0 0.0
  %2269 = vmatprep.subr.mxu0 0.0
  %2270 = vmatpush1.msra.mxu0 0.0
  %2271 = vmatprep.subr.mxu0 0.0
  %2272 = vmatpush1.msra.mxu0 0.0
  %2273 = vmatprep.subr.mxu0 0.0
  %2274 = vmatpush1.msra.mxu0 0.0
  %2275 = vmatprep.subr.mxu0 0.0
  %2276 = vmatpush1.msra.mxu0 0.0
  %2277 = vmatprep.subr.mxu0 0.0
  %2278 = vmatpush1.msra.mxu0 0.0
  %2279 = vmatprep.subr.mxu0 0.0
  %2280 = vmatpush1.msra.mxu0 0.0
  %2281 = vmatprep.subr.mxu0 0.0
  %2282 = vmatpush1.msra.mxu0 0.0
  %2283 = vmatprep.subr.mxu0 0.0
  %2284 = vmatpush1.msra.mxu0 0.0
  %2285 = vmatprep.subr.mxu0 0.0
  %2286 = vmatpush1.msra.mxu0 0.0
  %2287 = vmatprep.subr.mxu0 0.0
  %2288 = vmatpush1.msra.mxu0 0.0
  %2289 = vmatprep.subr.mxu0 0.0
  %2290 = vmatpush1.msra.mxu0 0.0
  %2291 = vmatprep.subr.mxu0 0.0
  %2292 = vmatpush1.msra.mxu0 0.0
  %2293 = vmatprep.subr.mxu0 0.0
  %2294 = vmatpush1.msra.mxu0 0.0
  %2295 = vmatprep.subr.mxu0 0.0
  %2296 = vmatpush1.msra.mxu0 0.0
  %2297 = vmatprep.subr.mxu0 0.0
  %2298 = vmatpush1.msra.mxu0 0.0
  %2299 = vmatprep.mubr.f32.mxu0 0.0
  %2300 = vmatmul.mubr.f32.gmra.mrb[0].mxu0 %v2218
  %v2301 = vpop.f32.mrb[0].mxu0
  %v2302 = vadd.f32 0.0, %v2301
  %v2303 = vpop.f32.mrb[0].mxu0
  %v2304 = vadd.f32 0.0, %v2303
  %2305 = vdwg.mxu0
  %2306 = vmatprep.subr.mxu0 %v2204
  %2307 = vmatpush1.msra.mxu0 %v2203
  %2308 = vmatprep.subr.mxu0 %v2209
  %2309 = vmatpush1.msra.mxu0 %v2208
  %2310 = vmatprep.subr.mxu0 %v2230
  %2311 = vmatpush1.msra.mxu0 %v2227
  %2312 = vmatprep.subr.mxu0 0.0
  %2313 = vmatpush1.msra.mxu0 0.0
  %2314 = vmatprep.subr.mxu0 0.0
  %2315 = vmatpush1.msra.mxu0 0.0
  %2316 = vmatprep.subr.mxu0 0.0
  %2317 = vmatpush1.msra.mxu0 0.0
  %2318 = vmatprep.subr.mxu0 0.0
  %2319 = vmatpush1.msra.mxu0 0.0
  %2320 = vmatprep.subr.mxu0 0.0
  %2321 = vmatpush1.msra.mxu0 0.0
  %2322 = vmatprep.subr.mxu0 0.0
  %2323 = vmatpush1.msra.mxu0 0.0
  %2324 = vmatprep.subr.mxu0 0.0
  %2325 = vmatpush1.msra.mxu0 0.0
  %2326 = vmatprep.subr.mxu0 0.0
  %2327 = vmatpush1.msra.mxu0 0.0
  %2328 = vmatprep.subr.mxu0 0.0
  %2329 = vmatpush1.msra.mxu0 0.0
  %2330 = vmatprep.subr.mxu0 0.0
  %2331 = vmatpush1.msra.mxu0 0.0
  %2332 = vmatprep.subr.mxu0 0.0
  %2333 = vmatpush1.msra.mxu0 0.0
  %2334 = vmatprep.subr.mxu0 0.0
  %2335 = vmatpush1.msra.mxu0 0.0
  %2336 = vmatprep.subr.mxu0 0.0
  %2337 = vmatpush1.msra.mxu0 0.0
  %2338 = vmatprep.subr.mxu0 0.0
  %2339 = vmatpush1.msra.mxu0 0.0
  %2340 = vmatprep.subr.mxu0 0.0
  %2341 = vmatpush1.msra.mxu0 0.0
  %2342 = vmatprep.subr.mxu0 0.0
  %2343 = vmatpush1.msra.mxu0 0.0
  %2344 = vmatprep.subr.mxu0 0.0
  %2345 = vmatpush1.msra.mxu0 0.0
  %2346 = vmatprep.subr.mxu0 0.0
  %2347 = vmatpush1.msra.mxu0 0.0
  %2348 = vmatprep.subr.mxu0 0.0
  %2349 = vmatpush1.msra.mxu0 0.0
  %2350 = vmatprep.subr.mxu0 0.0
  %2351 = vmatpush1.msra.mxu0 0.0
  %2352 = vmatprep.subr.mxu0 0.0
  %2353 = vmatpush1.msra.mxu0 0.0
  %2354 = vmatprep.subr.mxu0 0.0
  %2355 = vmatpush1.msra.mxu0 0.0
  %2356 = vmatprep.subr.mxu0 0.0
  %2357 = vmatpush1.msra.mxu0 0.0
  %2358 = vmatprep.subr.mxu0 0.0
  %2359 = vmatpush1.msra.mxu0 0.0
  %2360 = vmatprep.subr.mxu0 0.0
  %2361 = vmatpush1.msra.mxu0 0.0
  %2362 = vmatprep.subr.mxu0 0.0
  %2363 = vmatpush1.msra.mxu0 0.0
  %2364 = vmatprep.subr.mxu0 0.0
  %2365 = vmatpush1.msra.mxu0 0.0
  %2366 = vmatprep.subr.mxu0 0.0
  %2367 = vmatpush1.msra.mxu0 0.0
  %2368 = vmatprep.subr.mxu0 0.0
  %2369 = vmatpush1.msra.mxu0 0.0
  %2370 = vmatprep.mubr.f32.mxu0 0.0
  %2371 = vmatmul.mubr.f32.gmra.mrb[0].mxu0 %v2218
  %v2372 = vpop.f32.mrb[0].mxu0
  %v2373 = vadd.f32 0.0, %v2372
  %v2374 = vpop.f32.mrb[0].mxu0
  %v2375 = vadd.f32 0.0, %v2374
  %2376 = vdwg.mxu0
  %2377 = vmatprep.subr.mxu0 0.0
  %2378 = vmatpush1.msra.mxu0 %v2205
  %2379 = vmatprep.subr.mxu0 0.0
  %2380 = vmatpush1.msra.mxu0 %v2210
  %2381 = vmatprep.subr.mxu0 0.0
  %2382 = vmatpush1.msra.mxu0 %v2233
  %2383 = vmatprep.subr.mxu0 0.0
  %2384 = vmatpush1.msra.mxu0 0.0
  %2385 = vmatprep.subr.mxu0 0.0
  %2386 = vmatpush1.msra.mxu0 0.0
  %2387 = vmatprep.subr.mxu0 0.0
  %2388 = vmatpush1.msra.mxu0 0.0
  %2389 = vmatprep.subr.mxu0 0.0
  %2390 = vmatpush1.msra.mxu0 0.0
  %2391 = vmatprep.subr.mxu0 0.0
  %2392 = vmatpush1.msra.mxu0 0.0
  %2393 = vmatprep.subr.mxu0 0.0
  %2394 = vmatpush1.msra.mxu0 0.0
  %2395 = vmatprep.subr.mxu0 0.0
  %2396 = vmatpush1.msra.mxu0 0.0
  %2397 = vmatprep.subr.mxu0 0.0
  %2398 = vmatpush1.msra.mxu0 0.0
  %2399 = vmatprep.subr.mxu0 0.0
  %2400 = vmatpush1.msra.mxu0 0.0
  %2401 = vmatprep.subr.mxu0 0.0
  %2402 = vmatpush1.msra.mxu0 0.0
  %2403 = vmatprep.subr.mxu0 0.0
  %2404 = vmatpush1.msra.mxu0 0.0
  %2405 = vmatprep.subr.mxu0 0.0
  %2406 = vmatpush1.msra.mxu0 0.0
  %2407 = vmatprep.subr.mxu0 0.0
  %2408 = vmatpush1.msra.mxu0 0.0
  %2409 = vmatprep.subr.mxu0 0.0
  %2410 = vmatpush1.msra.mxu0 0.0
  %2411 = vmatprep.subr.mxu0 0.0
  %2412 = vmatpush1.msra.mxu0 0.0
  %2413 = vmatprep.subr.mxu0 0.0
  %2414 = vmatpush1.msra.mxu0 0.0
  %2415 = vmatprep.subr.mxu0 0.0
  %2416 = vmatpush1.msra.mxu0 0.0
  %2417 = vmatprep.subr.mxu0 0.0
  %2418 = vmatpush1.msra.mxu0 0.0
  %2419 = vmatprep.subr.mxu0 0.0
  %2420 = vmatpush1.msra.mxu0 0.0
  %2421 = vmatprep.subr.mxu0 0.0
  %2422 = vmatpush1.msra.mxu0 0.0
  %2423 = vmatprep.subr.mxu0 0.0
  %2424 = vmatpush1.msra.mxu0 0.0
  %2425 = vmatprep.subr.mxu0 0.0
  %2426 = vmatpush1.msra.mxu0 0.0
  %2427 = vmatprep.subr.mxu0 0.0
  %2428 = vmatpush1.msra.mxu0 0.0
  %2429 = vmatprep.subr.mxu0 0.0
  %2430 = vmatpush1.msra.mxu0 0.0
  %2431 = vmatprep.subr.mxu0 0.0
  %2432 = vmatpush1.msra.mxu0 0.0
  %2433 = vmatprep.subr.mxu0 0.0
  %2434 = vmatpush1.msra.mxu0 0.0
  %2435 = vmatprep.subr.mxu0 0.0
  %2436 = vmatpush1.msra.mxu0 0.0
  %2437 = vmatprep.subr.mxu0 0.0
  %2438 = vmatpush1.msra.mxu0 0.0
  %2439 = vmatprep.subr.mxu0 0.0
  %2440 = vmatpush1.msra.mxu0 0.0
  %2441 = vmatprep.mubr.f32.mxu0 0.0
  %2442 = vmatmul.mubr.f32.gmra.mrb[0].mxu0 %v2218
  %v2443 = vpop.f32.mrb[0].mxu0
  %v2444 = vadd.f32 0.0, %v2443
  %v2445 = vpop.f32.mrb[0].mxu0
  %2446 = vdwg.mxu0
  %v2447 = vpack.c.bf16 %v2106, %v2106
  %v2448 = vpack.c.bf16 %v2107, %v2107
  %v2449 = vpack.c.bf16 %v2108, %v2108
  %v2450 = vpack.c.bf16 %v2109, %v2109
  %v2451 = vpack.c.bf16 %v2110, %v2110
  %v2452 = vpack.c.bf16 %v2111, %v2111
  %v2453 = vpack.c.bf16 %v2112, %v2112
  %v2454 = vpack.c.bf16 %v2113, %v2113
  %v2455 = vpack.c.bf16 %v2114, %v2114
  %v2456 = vpack.c.bf16 %v2115, %v2115
  %v2457 = vpack.c.bf16 %v2116, %v2116
  %v2458 = vpack.c.bf16 %v2117, %v2117
  %v2459 = vpack.c.bf16 %v2118, %v2118
  %v2460 = vpack.c.bf16 %v2119, %v2119
  %v2461 = vpack.c.bf16 %v2120, %v2120
  %v2462 = vpack.c.bf16 %v2121, %v2121
  %v2463 = vpack.c.bf16 %v2122, %v2122
  %v2464 = vpack.c.bf16 %v2123, %v2123
  %v2465 = vld [vmem:[%s15] sm:$0xff]
  %v2466 = vld [vmem:[%s15 + $0x8] sm:$0xff]
  %v2467 = vld [vmem:[%s15 + $0x10] sm:$0xf]
  %v2468 = vld [vmem:[%s15 + $0x14] sm:$0xff]
  %v2469 = vld [vmem:[%s15 + $0x1c] sm:$0xff]
  %v2470 = vld [vmem:[%s15 + $0x24] sm:$0xf]
  %v2471 = vld [vmem:[%s15 + $0x28] sm:$0xff]
  %v2472 = vld [vmem:[%s15 + $0x30] sm:$0xff]
  %v2473 = vld [vmem:[%s15 + $0x38] sm:$0xf]
  %v2474 = vld [vmem:[%s15 + $0x3c] sm:$0xff]
  %v2475 = vld [vmem:[%s15 + $0x44] sm:$0xff]
  %v2476 = vld [vmem:[%s15 + $0x4c] sm:$0xf]
  %v2477 = vld [vmem:[%s15 + $0x50] sm:$0xff]
  %v2478 = vld [vmem:[%s15 + $0x58] sm:$0xff]
  %v2479 = vld [vmem:[%s15 + $0x60] sm:$0xf]
  %v2480 = vld [vmem:[%s15 + $0x64] sm:$0xff]
  %v2481 = vld [vmem:[%s15 + $0x6c] sm:$0xff]
  %v2482 = vld [vmem:[%s15 + $0x74] sm:$0xf]
  %v2483 = vld [vmem:[%s15 + $0x78] sm:$0xff]
  %v2484 = vld [vmem:[%s15 + $0x80] sm:$0xff]
  %v2485 = vld [vmem:[%s15 + $0x88] sm:$0xf]
  %v2486 = vld [vmem:[%s15 + $0x8c] sm:$0xff]
  %v2487 = vld [vmem:[%s15 + $0x94] sm:$0xff]
  %v2488 = vld [vmem:[%s15 + $0x9c] sm:$0xf]
  %v2489 = vld [vmem:[%s15 + $0xa0] sm:$0xff]
  %v2490 = vld [vmem:[%s15 + $0xa8] sm:$0xff]
  %v2491 = vld [vmem:[%s15 + $0xb0] sm:$0xf]
  %v2492 = vld [vmem:[%s15 + $0xb4] sm:$0xff]
  %v2493 = vld [vmem:[%s15 + $0xbc] sm:$0xff]
  %v2494 = vld [vmem:[%s15 + $0xc4] sm:$0xf]
  %v2495 = vld [vmem:[%s15 + $0xc8] sm:$0xff]
  %v2496 = vld [vmem:[%s15 + $0xd0] sm:$0xff]
  %v2497 = vld [vmem:[%s15 + $0xd8] sm:$0xf]
  %v2498 = vld [vmem:[%s15 + $0xdc] sm:$0xff]
  %v2499 = vld [vmem:[%s15 + $0xe4] sm:$0xff]
  %v2500 = vld [vmem:[%s15 + $0xec] sm:$0xf]
  %v2501 = vld [vmem:[%s15 + $0xf0] sm:$0xff]
  %v2502 = vld [vmem:[%s15 + $0xf8] sm:$0xff]
  %v2503 = vld [vmem:[%s15 + $0x100] sm:$0xf]
  %v2504 = vld [vmem:[%s15 + $0x104] sm:$0xff]
  %v2505 = vld [vmem:[%s15 + $0x10c] sm:$0xff]
  %v2506 = vld [vmem:[%s15 + $0x114] sm:$0xf]
  %v2507 = vld [vmem:[%s15 + $0x118] sm:$0xff]
  %v2508 = vld [vmem:[%s15 + $0x120] sm:$0xff]
  %v2509 = vld [vmem:[%s15 + $0x128] sm:$0xf]
  %v2510 = vld [vmem:[%s15 + $0x12c] sm:$0xff]
  %v2511 = vld [vmem:[%s15 + $0x134] sm:$0xff]
  %v2512 = vld [vmem:[%s15 + $0x13c] sm:$0xf]
  %v2513 = vld [vmem:[%s15 + $0x140] sm:$0xff]
  %v2514 = vld [vmem:[%s15 + $0x148] sm:$0xff]
  %v2515 = vld [vmem:[%s15 + $0x150] sm:$0xf]
  %v2516 = vld [vmem:[%s15 + $0x154] sm:$0xff]
  %v2517 = vld [vmem:[%s15 + $0x15c] sm:$0xff]
  %v2518 = vld [vmem:[%s15 + $0x164] sm:$0xf]
  %v2519 = vld [vmem:[%s15 + $0x168] sm:$0xff]
  %v2520 = vld [vmem:[%s15 + $0x170] sm:$0xff]
  %v2521 = vld [vmem:[%s15 + $0x178] sm:$0xf]
  %v2522 = vld [vmem:[%s15 + $0x17c] sm:$0xff]
  %v2523 = vld [vmem:[%s15 + $0x184] sm:$0xff]
  %v2524 = vld [vmem:[%s15 + $0x18c] sm:$0xf]
  %v2525 = vld [vmem:[%s15 + $0x190] sm:$0xff]
  %v2526 = vld [vmem:[%s15 + $0x198] sm:$0xff]
  %v2527 = vld [vmem:[%s15 + $0x1a0] sm:$0xf]
  %v2528 = vld [vmem:[%s15 + $0x1a4] sm:$0xff]
  %v2529 = vld [vmem:[%s15 + $0x1ac] sm:$0xff]
  %v2530 = vld [vmem:[%s15 + $0x1b4] sm:$0xf]
  %v2531 = vld [vmem:[%s15 + $0x1b8] sm:$0xff]
  %v2532 = vld [vmem:[%s15 + $0x1c0] sm:$0xff]
  %v2533 = vld [vmem:[%s15 + $0x1c8] sm:$0xf]
  %v2534 = vld [vmem:[%s15 + $0x1cc] sm:$0xff]
  %v2535 = vld [vmem:[%s15 + $0x1d4] sm:$0xff]
  %v2536 = vld [vmem:[%s15 + $0x1dc] sm:$0xf]
  %v2537 = vld [vmem:[%s15 + $0x1e0] sm:$0xff]
  %v2538 = vld [vmem:[%s15 + $0x1e8] sm:$0xff]
  %v2539 = vld [vmem:[%s15 + $0x1f0] sm:$0xf]
  %v2540 = vld [vmem:[%s15 + $0x1f4] sm:$0xff]
  %v2541 = vld [vmem:[%s15 + $0x1fc] sm:$0xff]
  %v2542 = vld [vmem:[%s15 + $0x204] sm:$0xf]
  %v2543 = vld [vmem:[%s15 + $0x208] sm:$0xff]
  %v2544 = vld [vmem:[%s15 + $0x210] sm:$0xff]
  %v2545 = vld [vmem:[%s15 + $0x218] sm:$0xf]
  %v2546 = vld [vmem:[%s15 + $0x21c] sm:$0xff]
  %v2547 = vld [vmem:[%s15 + $0x224] sm:$0xff]
  %v2548 = vld [vmem:[%s15 + $0x22c] sm:$0xf]
  %v2549 = vld [vmem:[%s15 + $0x230] sm:$0xff]
  %v2550 = vld [vmem:[%s15 + $0x238] sm:$0xff]
  %v2551 = vld [vmem:[%s15 + $0x240] sm:$0xf]
  %v2552 = vld [vmem:[%s15 + $0x244] sm:$0xff]
  %v2553 = vld [vmem:[%s15 + $0x24c] sm:$0xff]
  %v2554 = vld [vmem:[%s15 + $0x254] sm:$0xf]
  %v2555 = vld [vmem:[%s15 + $0x258] sm:$0xff]
  %v2556 = vld [vmem:[%s15 + $0x260] sm:$0xff]
  %v2557 = vld [vmem:[%s15 + $0x268] sm:$0xf]
  %v2558 = vld [vmem:[%s15 + $0x26c] sm:$0xff]
  %v2559 = vld [vmem:[%s15 + $0x274] sm:$0xff]
  %v2560 = vld [vmem:[%s15 + $0x27c] sm:$0xf]
  %v2561 = vld [vmem:[%s15 + $0x280] sm:$0xff]
  %v2562 = vld [vmem:[%s15 + $0x288] sm:$0xff]
  %v2563 = vld [vmem:[%s15 + $0x290] sm:$0xf]
  %v2564 = vld [vmem:[%s15 + $0x294] sm:$0xff]
  %v2565 = vld [vmem:[%s15 + $0x29c] sm:$0xff]
  %v2566 = vld [vmem:[%s15 + $0x2a4] sm:$0xf]
  %v2567 = vld [vmem:[%s15 + $0x2a8] sm:$0xff]
  %v2568 = vld [vmem:[%s15 + $0x2b0] sm:$0xff]
  %v2569 = vld [vmem:[%s15 + $0x2b8] sm:$0xf]
  %v2570 = vld [vmem:[%s15 + $0x2bc] sm:$0xff]
  %v2571 = vld [vmem:[%s15 + $0x2c4] sm:$0xff]
  %v2572 = vld [vmem:[%s15 + $0x2cc] sm:$0xf]
  %v2573 = vld [vmem:[%s15 + $0x2d0] sm:$0xff]
  %v2574 = vld [vmem:[%s15 + $0x2d8] sm:$0xff]
  %v2575 = vld [vmem:[%s15 + $0x2e0] sm:$0xf]
  %v2576 = vld [vmem:[%s15 + $0x2e4] sm:$0xff]
  %v2577 = vld [vmem:[%s15 + $0x2ec] sm:$0xff]
  %v2578 = vld [vmem:[%s15 + $0x2f4] sm:$0xf]
  %v2579 = vld [vmem:[%s15 + $0x2f8] sm:$0xff]
  %v2580 = vld [vmem:[%s15 + $0x300] sm:$0xff]
  %v2581 = vld [vmem:[%s15 + $0x308] sm:$0xf]
  %v2582 = vld [vmem:[%s15 + $0x30c] sm:$0xff]
  %v2583 = vld [vmem:[%s15 + $0x314] sm:$0xff]
  %v2584 = vld [vmem:[%s15 + $0x31c] sm:$0xf]
  %v2585 = vld [vmem:[%s15 + $0x320] sm:$0xff]
  %v2586 = vld [vmem:[%s15 + $0x328] sm:$0xff]
  %v2587 = vld [vmem:[%s15 + $0x330] sm:$0xf]
  %v2588 = vld [vmem:[%s15 + $0x334] sm:$0xff]
  %v2589 = vld [vmem:[%s15 + $0x33c] sm:$0xff]
  %v2590 = vld [vmem:[%s15 + $0x344] sm:$0xf]
  %v2591 = vld [vmem:[%s15 + $0x348] sm:$0xff]
  %v2592 = vld [vmem:[%s15 + $0x350] sm:$0xff]
  %v2593 = vld [vmem:[%s15 + $0x358] sm:$0xf]
  %v2594 = vld [vmem:[%s15 + $0x35c] sm:$0xff]
  %v2595 = vld [vmem:[%s15 + $0x364] sm:$0xff]
  %v2596 = vld [vmem:[%s15 + $0x36c] sm:$0xf]
  %v2597 = vld [vmem:[%s15 + $0x370] sm:$0xff]
  %v2598 = vld [vmem:[%s15 + $0x378] sm:$0xff]
  %v2599 = vld [vmem:[%s15 + $0x380] sm:$0xf]
  %v2600 = vld [vmem:[%s15 + $0x384] sm:$0xff]
  %v2601 = vld [vmem:[%s15 + $0x38c] sm:$0xff]
  %v2602 = vld [vmem:[%s15 + $0x394] sm:$0xf]
  %v2603 = vld [vmem:[%s15 + $0x398] sm:$0xff]
  %v2604 = vld [vmem:[%s15 + $0x3a0] sm:$0xff]
  %v2605 = vld [vmem:[%s15 + $0x3a8] sm:$0xf]
  %v2606 = vld [vmem:[%s15 + $0x3ac] sm:$0xff]
  %v2607 = vld [vmem:[%s15 + $0x3b4] sm:$0xff]
  %v2608 = vld [vmem:[%s15 + $0x3bc] sm:$0xf]
  %v2609 = vld [vmem:[%s15 + $0x3c0] sm:$0xff]
  %v2610 = vld [vmem:[%s15 + $0x3c8] sm:$0xff]
  %v2611 = vld [vmem:[%s15 + $0x3d0] sm:$0xf]
  %v2612 = vld [vmem:[%s15 + $0x3d4] sm:$0xff]
  %v2613 = vld [vmem:[%s15 + $0x3dc] sm:$0xff]
  %v2614 = vld [vmem:[%s15 + $0x3e4] sm:$0xf]
  %v2615 = vld [vmem:[%s15 + $0x3e8] sm:$0xff]
  %v2616 = vld [vmem:[%s15 + $0x3f0] sm:$0xff]
  %v2617 = vld [vmem:[%s15 + $0x3f8] sm:$0xf]
  %v2618 = vld [vmem:[%s15 + $0x3fc] sm:$0xff]
  %v2619 = vld [vmem:[%s15 + $0x404] sm:$0xff]
  %v2620 = vld [vmem:[%s15 + $0x40c] sm:$0xf]
  %v2621 = vld [vmem:[%s15 + $0x410] sm:$0xff]
  %v2622 = vld [vmem:[%s15 + $0x418] sm:$0xff]
  %v2623 = vld [vmem:[%s15 + $0x420] sm:$0xf]
  %v2624 = vld [vmem:[%s15 + $0x424] sm:$0xff]
  %v2625 = vld [vmem:[%s15 + $0x42c] sm:$0xff]
  %v2626 = vld [vmem:[%s15 + $0x434] sm:$0xf]
  %v2627 = vld [vmem:[%s15 + $0x438] sm:$0xff]
  %v2628 = vld [vmem:[%s15 + $0x440] sm:$0xff]
  %v2629 = vld [vmem:[%s15 + $0x448] sm:$0xf]
  %v2630 = vld [vmem:[%s15 + $0x44c] sm:$0xff]
  %v2631 = vld [vmem:[%s15 + $0x454] sm:$0xff]
  %v2632 = vld [vmem:[%s15 + $0x45c] sm:$0xf]
  %v2633 = vld [vmem:[%s15 + $0x460] sm:$0xff]
  %v2634 = vld [vmem:[%s15 + $0x468] sm:$0xff]
  %v2635 = vld [vmem:[%s15 + $0x470] sm:$0xf]
  %v2636 = vld [vmem:[%s15 + $0x474] sm:$0xff]
  %v2637 = vld [vmem:[%s15 + $0x47c] sm:$0xff]
  %v2638 = vld [vmem:[%s15 + $0x484] sm:$0xf]
  %v2639 = vld [vmem:[%s15 + $0x488] sm:$0xff]
  %v2640 = vld [vmem:[%s15 + $0x490] sm:$0xff]
  %v2641 = vld [vmem:[%s15 + $0x498] sm:$0xf]
  %v2642 = vld [vmem:[%s15 + $0x49c] sm:$0xff]
  %v2643 = vld [vmem:[%s15 + $0x4a4] sm:$0xff]
  %v2644 = vld [vmem:[%s15 + $0x4ac] sm:$0xf]
  %v2645 = vld [vmem:[%s15 + $0x4b0] sm:$0xff]
  %v2646 = vld [vmem:[%s15 + $0x4b8] sm:$0xff]
  %v2647 = vld [vmem:[%s15 + $0x4c0] sm:$0xf]
  %v2648 = vld [vmem:[%s15 + $0x4c4] sm:$0xff]
  %v2649 = vld [vmem:[%s15 + $0x4cc] sm:$0xff]
  %v2650 = vld [vmem:[%s15 + $0x4d4] sm:$0xf]
  %v2651 = vld [vmem:[%s15 + $0x4d8] sm:$0xff]
  %v2652 = vld [vmem:[%s15 + $0x4e0] sm:$0xff]
  %v2653 = vld [vmem:[%s15 + $0x4e8] sm:$0xf]
  %v2654 = vld [vmem:[%s15 + $0x4ec] sm:$0xff]
  %v2655 = vld [vmem:[%s15 + $0x4f4] sm:$0xff]
  %v2656 = vld [vmem:[%s15 + $0x4fc] sm:$0xf]
  %v2657 = vld [vmem:[%s15 + $0x500] sm:$0xff]
  %v2658 = vld [vmem:[%s15 + $0x508] sm:$0xff]
  %v2659 = vld [vmem:[%s15 + $0x510] sm:$0xf]
  %v2660 = vld [vmem:[%s15 + $0x514] sm:$0xff]
  %v2661 = vld [vmem:[%s15 + $0x51c] sm:$0xff]
  %v2662 = vld [vmem:[%s15 + $0x524] sm:$0xf]
  %v2663 = vld [vmem:[%s15 + $0x528] sm:$0xff]
  %v2664 = vld [vmem:[%s15 + $0x530] sm:$0xff]
  %v2665 = vld [vmem:[%s15 + $0x538] sm:$0xf]
  %v2666 = vld [vmem:[%s15 + $0x53c] sm:$0xff]
  %v2667 = vld [vmem:[%s15 + $0x544] sm:$0xff]
  %v2668 = vld [vmem:[%s15 + $0x54c] sm:$0xf]
  %v2669 = vld [vmem:[%s15 + $0x550] sm:$0xff]
  %v2670 = vld [vmem:[%s15 + $0x558] sm:$0xff]
  %v2671 = vld [vmem:[%s15 + $0x560] sm:$0xf]
  %v2672 = vld [vmem:[%s15 + $0x564] sm:$0xff]
  %v2673 = vld [vmem:[%s15 + $0x56c] sm:$0xff]
  %v2674 = vld [vmem:[%s15 + $0x574] sm:$0xf]
  %v2675 = vld [vmem:[%s15 + $0x578] sm:$0xff]
  %v2676 = vld [vmem:[%s15 + $0x580] sm:$0xff]
  %v2677 = vld [vmem:[%s15 + $0x588] sm:$0xf]
  %v2678 = vld [vmem:[%s15 + $0x58c] sm:$0xff]
  %v2679 = vld [vmem:[%s15 + $0x594] sm:$0xff]
  %v2680 = vld [vmem:[%s15 + $0x59c] sm:$0xf]
  %v2681 = vld [vmem:[%s15 + $0x5a0] sm:$0xff]
  %v2682 = vld [vmem:[%s15 + $0x5a8] sm:$0xff]
  %v2683 = vld [vmem:[%s15 + $0x5b0] sm:$0xf]
  %v2684 = vld [vmem:[%s15 + $0x5b4] sm:$0xff]
  %v2685 = vld [vmem:[%s15 + $0x5bc] sm:$0xff]
  %v2686 = vld [vmem:[%s15 + $0x5c4] sm:$0xf]
  %v2687 = vld [vmem:[%s15 + $0x5c8] sm:$0xff]
  %v2688 = vld [vmem:[%s15 + $0x5d0] sm:$0xff]
  %v2689 = vld [vmem:[%s15 + $0x5d8] sm:$0xf]
  %v2690 = vld [vmem:[%s15 + $0x5dc] sm:$0xff]
  %v2691 = vld [vmem:[%s15 + $0x5e4] sm:$0xff]
  %v2692 = vld [vmem:[%s15 + $0x5ec] sm:$0xf]
  %v2693 = vld [vmem:[%s15 + $0x5f0] sm:$0xff]
  %v2694 = vld [vmem:[%s15 + $0x5f8] sm:$0xff]
  %v2695 = vld [vmem:[%s15 + $0x600] sm:$0xf]
  %v2696 = vld [vmem:[%s15 + $0x604] sm:$0xff]
  %v2697 = vld [vmem:[%s15 + $0x60c] sm:$0xff]
  %v2698 = vld [vmem:[%s15 + $0x614] sm:$0xf]
  %v2699 = vld [vmem:[%s15 + $0x618] sm:$0xff]
  %v2700 = vld [vmem:[%s15 + $0x620] sm:$0xff]
  %v2701 = vld [vmem:[%s15 + $0x628] sm:$0xf]
  %v2702 = vld [vmem:[%s15 + $0x62c] sm:$0xff]
  %v2703 = vld [vmem:[%s15 + $0x634] sm:$0xff]
  %v2704 = vld [vmem:[%s15 + $0x63c] sm:$0xf]
  %v2705 = vld [vmem:[%s15 + $0x640] sm:$0xff]
  %v2706 = vld [vmem:[%s15 + $0x648] sm:$0xff]
  %v2707 = vld [vmem:[%s15 + $0x650] sm:$0xf]
  %v2708 = vld [vmem:[%s15 + $0x654] sm:$0xff]
  %v2709 = vld [vmem:[%s15 + $0x65c] sm:$0xff]
  %v2710 = vld [vmem:[%s15 + $0x664] sm:$0xf]
  %v2711 = vld [vmem:[%s15 + $0x668] sm:$0xff]
  %v2712 = vld [vmem:[%s15 + $0x670] sm:$0xff]
  %v2713 = vld [vmem:[%s15 + $0x678] sm:$0xf]
  %v2714 = vld [vmem:[%s15 + $0x67c] sm:$0xff]
  %v2715 = vld [vmem:[%s15 + $0x684] sm:$0xff]
  %v2716 = vld [vmem:[%s15 + $0x68c] sm:$0xf]
  %v2717 = vld [vmem:[%s15 + $0x690] sm:$0xff]
  %v2718 = vld [vmem:[%s15 + $0x698] sm:$0xff]
  %v2719 = vld [vmem:[%s15 + $0x6a0] sm:$0xf]
  %v2720 = vld [vmem:[%s15 + $0x6a4] sm:$0xff]
  %v2721 = vld [vmem:[%s15 + $0x6ac] sm:$0xff]
  %v2722 = vld [vmem:[%s15 + $0x6b4] sm:$0xf]
  %v2723 = vld [vmem:[%s15 + $0x6b8] sm:$0xff]
  %v2724 = vld [vmem:[%s15 + $0x6c0] sm:$0xff]
  %v2725 = vld [vmem:[%s15 + $0x6c8] sm:$0xf]
  %v2726 = vld [vmem:[%s15 + $0x6cc] sm:$0xff]
  %v2727 = vld [vmem:[%s15 + $0x6d4] sm:$0xff]
  %v2728 = vld [vmem:[%s15 + $0x6dc] sm:$0xf]
  %v2729 = vld [vmem:[%s15 + $0x6e0] sm:$0xff]
  %v2730 = vld [vmem:[%s15 + $0x6e8] sm:$0xff]
  %v2731 = vld [vmem:[%s15 + $0x6f0] sm:$0xf]
  %v2732 = vld [vmem:[%s15 + $0x6f4] sm:$0xff]
  %v2733 = vld [vmem:[%s15 + $0x6fc] sm:$0xff]
  %v2734 = vld [vmem:[%s15 + $0x704] sm:$0xf]
  %v2735 = vld [vmem:[%s15 + $0x708] sm:$0xff]
  %v2736 = vld [vmem:[%s15 + $0x710] sm:$0xff]
  %v2737 = vld [vmem:[%s15 + $0x718] sm:$0xf]
  %v2738 = vld [vmem:[%s15 + $0x71c] sm:$0xff]
  %v2739 = vld [vmem:[%s15 + $0x724] sm:$0xff]
  %v2740 = vld [vmem:[%s15 + $0x72c] sm:$0xf]
  %v2741 = vld [vmem:[%s15 + $0x730] sm:$0xff]
  %v2742 = vld [vmem:[%s15 + $0x738] sm:$0xff]
  %v2743 = vld [vmem:[%s15 + $0x740] sm:$0xf]
  %v2744 = vld [vmem:[%s15 + $0x744] sm:$0xff]
  %v2745 = vld [vmem:[%s15 + $0x74c] sm:$0xff]
  %v2746 = vld [vmem:[%s15 + $0x754] sm:$0xf]
  %v2747 = vld [vmem:[%s15 + $0x758] sm:$0xff]
  %v2748 = vld [vmem:[%s15 + $0x760] sm:$0xff]
  %v2749 = vld [vmem:[%s15 + $0x768] sm:$0xf]
  %v2750 = vld [vmem:[%s15 + $0x76c] sm:$0xff]
  %v2751 = vld [vmem:[%s15 + $0x774] sm:$0xff]
  %v2752 = vld [vmem:[%s15 + $0x77c] sm:$0xf]
  %v2753 = vld [vmem:[%s15 + $0x780] sm:$0xff]
  %v2754 = vld [vmem:[%s15 + $0x788] sm:$0xff]
  %v2755 = vld [vmem:[%s15 + $0x790] sm:$0xf]
  %v2756 = vld [vmem:[%s15 + $0x794] sm:$0xff]
  %v2757 = vld [vmem:[%s15 + $0x79c] sm:$0xff]
  %v2758 = vld [vmem:[%s15 + $0x7a4] sm:$0xf]
  %v2759 = vld [vmem:[%s15 + $0x7a8] sm:$0xff]
  %v2760 = vld [vmem:[%s15 + $0x7b0] sm:$0xff]
  %v2761 = vld [vmem:[%s15 + $0x7b8] sm:$0xf]
  %v2762 = vld [vmem:[%s15 + $0x7bc] sm:$0xff]
  %v2763 = vld [vmem:[%s15 + $0x7c4] sm:$0xff]
  %v2764 = vld [vmem:[%s15 + $0x7cc] sm:$0xf]
  %v2765 = vld [vmem:[%s15 + $0x7d0] sm:$0xff]
  %v2766 = vld [vmem:[%s15 + $0x7d8] sm:$0xff]
  %v2767 = vld [vmem:[%s15 + $0x7e0] sm:$0xf]
  %v2768 = vld [vmem:[%s15 + $0x7e4] sm:$0xff]
  %v2769 = vld [vmem:[%s15 + $0x7ec] sm:$0xff]
  %v2770 = vld [vmem:[%s15 + $0x7f4] sm:$0xf]
  %v2771 = vld [vmem:[%s15 + $0x7f8] sm:$0xff]
  %v2772 = vld [vmem:[%s15 + $0x800] sm:$0xff]
  %v2773 = vld [vmem:[%s15 + $0x808] sm:$0xf]
  %v2774 = vld [vmem:[%s15 + $0x80c] sm:$0xff]
  %v2775 = vld [vmem:[%s15 + $0x814] sm:$0xff]
  %v2776 = vld [vmem:[%s15 + $0x81c] sm:$0xf]
  %v2777 = vld [vmem:[%s15 + $0x820] sm:$0xff]
  %v2778 = vld [vmem:[%s15 + $0x828] sm:$0xff]
  %v2779 = vld [vmem:[%s15 + $0x830] sm:$0xf]
  %v2780 = vld [vmem:[%s15 + $0x834] sm:$0xff]
  %v2781 = vld [vmem:[%s15 + $0x83c] sm:$0xff]
  %v2782 = vld [vmem:[%s15 + $0x844] sm:$0xf]
  %v2783 = vld [vmem:[%s15 + $0x848] sm:$0xff]
  %v2784 = vld [vmem:[%s15 + $0x850] sm:$0xff]
  %v2785 = vld [vmem:[%s15 + $0x858] sm:$0xf]
  %v2786 = vld [vmem:[%s15 + $0x85c] sm:$0xff]
  %v2787 = vld [vmem:[%s15 + $0x864] sm:$0xff]
  %v2788 = vld [vmem:[%s15 + $0x86c] sm:$0xf]
  %v2789 = vld [vmem:[%s15 + $0x870] sm:$0xff]
  %v2790 = vld [vmem:[%s15 + $0x878] sm:$0xff]
  %v2791 = vld [vmem:[%s15 + $0x880] sm:$0xf]
  %v2792 = vld [vmem:[%s15 + $0x884] sm:$0xff]
  %v2793 = vld [vmem:[%s15 + $0x88c] sm:$0xff]
  %v2794 = vld [vmem:[%s15 + $0x894] sm:$0xf]
  %v2795 = vld [vmem:[%s15 + $0x898] sm:$0xff]
  %v2796 = vld [vmem:[%s15 + $0x8a0] sm:$0xff]
  %v2797 = vld [vmem:[%s15 + $0x8a8] sm:$0xf]
  %v2798 = vld [vmem:[%s15 + $0x8ac] sm:$0xff]
  %v2799 = vld [vmem:[%s15 + $0x8b4] sm:$0xff]
  %v2800 = vld [vmem:[%s15 + $0x8bc] sm:$0xf]
  %v2801 = vld [vmem:[%s15 + $0x8c0] sm:$0xff]
  %v2802 = vld [vmem:[%s15 + $0x8c8] sm:$0xff]
  %v2803 = vld [vmem:[%s15 + $0x8d0] sm:$0xf]
  %v2804 = vld [vmem:[%s15 + $0x8d4] sm:$0xff]
  %v2805 = vld [vmem:[%s15 + $0x8dc] sm:$0xff]
  %v2806 = vld [vmem:[%s15 + $0x8e4] sm:$0xf]
  %v2807 = vld [vmem:[%s15 + $0x8e8] sm:$0xff]
  %v2808 = vld [vmem:[%s15 + $0x8f0] sm:$0xff]
  %v2809 = vld [vmem:[%s15 + $0x8f8] sm:$0xf]
  %v2810 = vld [vmem:[%s15 + $0x8fc] sm:$0xff]
  %v2811 = vld [vmem:[%s15 + $0x904] sm:$0xff]
  %v2812 = vld [vmem:[%s15 + $0x90c] sm:$0xf]
  %v2813 = vld [vmem:[%s15 + $0x910] sm:$0xff]
  %v2814 = vld [vmem:[%s15 + $0x918] sm:$0xff]
  %v2815 = vld [vmem:[%s15 + $0x920] sm:$0xf]
  %v2816 = vld [vmem:[%s15 + $0x924] sm:$0xff]
  %v2817 = vld [vmem:[%s15 + $0x92c] sm:$0xff]
  %v2818 = vld [vmem:[%s15 + $0x934] sm:$0xf]
  %v2819 = vld [vmem:[%s15 + $0x938] sm:$0xff]
  %v2820 = vld [vmem:[%s15 + $0x940] sm:$0xff]
  %v2821 = vld [vmem:[%s15 + $0x948] sm:$0xf]
  %v2822 = vld [vmem:[%s15 + $0x94c] sm:$0xff]
  %v2823 = vld [vmem:[%s15 + $0x954] sm:$0xff]
  %v2824 = vld [vmem:[%s15 + $0x95c] sm:$0xf]
  %v2825 = vld [vmem:[%s15 + $0x960] sm:$0xff]
  %v2826 = vld [vmem:[%s15 + $0x968] sm:$0xff]
  %v2827 = vld [vmem:[%s15 + $0x970] sm:$0xf]
  %v2828 = vld [vmem:[%s15 + $0x974] sm:$0xff]
  %v2829 = vld [vmem:[%s15 + $0x97c] sm:$0xff]
  %v2830 = vld [vmem:[%s15 + $0x984] sm:$0xf]
  %v2831 = vld [vmem:[%s15 + $0x988] sm:$0xff]
  %v2832 = vld [vmem:[%s15 + $0x990] sm:$0xff]
  %v2833 = vld [vmem:[%s15 + $0x998] sm:$0xf]
  %v2834 = vld [vmem:[%s15 + $0x99c] sm:$0xff]
  %v2835 = vld [vmem:[%s15 + $0x9a4] sm:$0xff]
  %v2836 = vld [vmem:[%s15 + $0x9ac] sm:$0xf]
  %v2837 = vld [vmem:[%s15 + $0x9b0] sm:$0xff]
  %v2838 = vld [vmem:[%s15 + $0x9b8] sm:$0xff]
  %v2839 = vld [vmem:[%s15 + $0x9c0] sm:$0xf]
  %v2840 = vld [vmem:[%s15 + $0x9c4] sm:$0xff]
  %v2841 = vld [vmem:[%s15 + $0x9cc] sm:$0xff]
  %v2842 = vld [vmem:[%s15 + $0x9d4] sm:$0xf]
  %v2843 = vld [vmem:[%s15 + $0x9d8] sm:$0xff]
  %v2844 = vld [vmem:[%s15 + $0x9e0] sm:$0xff]
  %v2845 = vld [vmem:[%s15 + $0x9e8] sm:$0xf]
  %v2846 = vld [vmem:[%s15 + $0x9ec] sm:$0xff]
  %v2847 = vld [vmem:[%s15 + $0x9f4] sm:$0xff]
  %v2848 = vld [vmem:[%s15 + $0x9fc] sm:$0xf]
  %v2849 = vld [vmem:[%s15 + $0xa00] sm:$0xff]
  %v2850 = vld [vmem:[%s15 + $0xa08] sm:$0xff]
  %v2851 = vld [vmem:[%s15 + $0xa10] sm:$0xf]
  %v2852 = vld [vmem:[%s15 + $0xa14] sm:$0xff]
  %v2853 = vld [vmem:[%s15 + $0xa1c] sm:$0xff]
  %v2854 = vld [vmem:[%s15 + $0xa24] sm:$0xf]
  %v2855 = vld [vmem:[%s15 + $0xa28] sm:$0xff]
  %v2856 = vld [vmem:[%s15 + $0xa30] sm:$0xff]
  %v2857 = vld [vmem:[%s15 + $0xa38] sm:$0xf]
  %v2858 = vld [vmem:[%s15 + $0xa3c] sm:$0xff]
  %v2859 = vld [vmem:[%s15 + $0xa44] sm:$0xff]
  %v2860 = vld [vmem:[%s15 + $0xa4c] sm:$0xf]
  %v2861 = vld [vmem:[%s15 + $0xa50] sm:$0xff]
  %v2862 = vld [vmem:[%s15 + $0xa58] sm:$0xff]
  %v2863 = vld [vmem:[%s15 + $0xa60] sm:$0xf]
  %v2864 = vld [vmem:[%s15 + $0xa64] sm:$0xff]
  %v2865 = vld [vmem:[%s15 + $0xa6c] sm:$0xff]
  %v2866 = vld [vmem:[%s15 + $0xa74] sm:$0xf]
  %v2867 = vld [vmem:[%s15 + $0xa78] sm:$0xff]
  %v2868 = vld [vmem:[%s15 + $0xa80] sm:$0xff]
  %v2869 = vld [vmem:[%s15 + $0xa88] sm:$0xf]
  %v2870 = vld [vmem:[%s15 + $0xa8c] sm:$0xff]
  %v2871 = vld [vmem:[%s15 + $0xa94] sm:$0xff]
  %v2872 = vld [vmem:[%s15 + $0xa9c] sm:$0xf]
  %v2873 = vld [vmem:[%s15 + $0xaa0] sm:$0xff]
  %v2874 = vld [vmem:[%s15 + $0xaa8] sm:$0xff]
  %v2875 = vld [vmem:[%s15 + $0xab0] sm:$0xf]
  %v2876 = vld [vmem:[%s15 + $0xab4] sm:$0xff]
  %v2877 = vld [vmem:[%s15 + $0xabc] sm:$0xff]
  %v2878 = vld [vmem:[%s15 + $0xac4] sm:$0xf]
  %v2879 = vld [vmem:[%s15 + $0xac8] sm:$0xff]
  %v2880 = vld [vmem:[%s15 + $0xad0] sm:$0xff]
  %v2881 = vld [vmem:[%s15 + $0xad8] sm:$0xf]
  %v2882 = vld [vmem:[%s15 + $0xadc] sm:$0xff]
  %v2883 = vld [vmem:[%s15 + $0xae4] sm:$0xff]
  %v2884 = vld [vmem:[%s15 + $0xaec] sm:$0xf]
  %v2885 = vld [vmem:[%s15 + $0xaf0] sm:$0xff]
  %v2886 = vld [vmem:[%s15 + $0xaf8] sm:$0xff]
  %v2887 = vld [vmem:[%s15 + $0xb00] sm:$0xf]
  %v2888 = vld [vmem:[%s15 + $0xb04] sm:$0xff]
  %v2889 = vld [vmem:[%s15 + $0xb0c] sm:$0xff]
  %v2890 = vld [vmem:[%s15 + $0xb14] sm:$0xf]
  %v2891 = vld [vmem:[%s15 + $0xb18] sm:$0xff]
  %v2892 = vld [vmem:[%s15 + $0xb20] sm:$0xff]
  %v2893 = vld [vmem:[%s15 + $0xb28] sm:$0xf]
  %v2894 = vld [vmem:[%s15 + $0xb2c] sm:$0xff]
  %v2895 = vld [vmem:[%s15 + $0xb34] sm:$0xff]
  %v2896 = vld [vmem:[%s15 + $0xb3c] sm:$0xf]
  %v2897 = vld [vmem:[%s15 + $0xb40] sm:$0xff]
  %v2898 = vld [vmem:[%s15 + $0xb48] sm:$0xff]
  %v2899 = vld [vmem:[%s15 + $0xb50] sm:$0xf]
  %v2900 = vld [vmem:[%s15 + $0xb54] sm:$0xff]
  %v2901 = vld [vmem:[%s15 + $0xb5c] sm:$0xff]
  %v2902 = vld [vmem:[%s15 + $0xb64] sm:$0xf]
  %v2903 = vld [vmem:[%s15 + $0xb68] sm:$0xff]
  %v2904 = vld [vmem:[%s15 + $0xb70] sm:$0xff]
  %v2905 = vld [vmem:[%s15 + $0xb78] sm:$0xf]
  %v2906 = vld [vmem:[%s15 + $0xb7c] sm:$0xff]
  %v2907 = vld [vmem:[%s15 + $0xb84] sm:$0xff]
  %v2908 = vld [vmem:[%s15 + $0xb8c] sm:$0xf]
  %v2909 = vld [vmem:[%s15 + $0xb90] sm:$0xff]
  %v2910 = vld [vmem:[%s15 + $0xb98] sm:$0xff]
  %v2911 = vld [vmem:[%s15 + $0xba0] sm:$0xf]
  %v2912 = vld [vmem:[%s15 + $0xba4] sm:$0xff]
  %v2913 = vld [vmem:[%s15 + $0xbac] sm:$0xff]
  %v2914 = vld [vmem:[%s15 + $0xbb4] sm:$0xf]
  %v2915 = vld [vmem:[%s15 + $0xbb8] sm:$0xff]
  %v2916 = vld [vmem:[%s15 + $0xbc0] sm:$0xff]
  %v2917 = vld [vmem:[%s15 + $0xbc8] sm:$0xf]
  %v2918 = vld [vmem:[%s15 + $0xbcc] sm:$0xff]
  %v2919 = vld [vmem:[%s15 + $0xbd4] sm:$0xff]
  %v2920 = vld [vmem:[%s15 + $0xbdc] sm:$0xf]
  %v2921 = vld [vmem:[%s15 + $0xbe0] sm:$0xff]
  %v2922 = vld [vmem:[%s15 + $0xbe8] sm:$0xff]
  %v2923 = vld [vmem:[%s15 + $0xbf0] sm:$0xf]
  %v2924 = vld [vmem:[%s15 + $0xbf4] sm:$0xff]
  %v2925 = vld [vmem:[%s15 + $0xbfc] sm:$0xff]
  %v2926 = vld [vmem:[%s15 + $0xc04] sm:$0xf]
  %v2927 = vld [vmem:[%s15 + $0xc08] sm:$0xff]
  %v2928 = vld [vmem:[%s15 + $0xc10] sm:$0xff]
  %v2929 = vld [vmem:[%s15 + $0xc18] sm:$0xf]
  %v2930 = vld [vmem:[%s15 + $0xc1c] sm:$0xff]
  %v2931 = vld [vmem:[%s15 + $0xc24] sm:$0xff]
  %v2932 = vld [vmem:[%s15 + $0xc2c] sm:$0xf]
  %v2933 = vld [vmem:[%s15 + $0xc30] sm:$0xff]
  %v2934 = vld [vmem:[%s15 + $0xc38] sm:$0xff]
  %v2935 = vld [vmem:[%s15 + $0xc40] sm:$0xf]
  %v2936 = vld [vmem:[%s15 + $0xc44] sm:$0xff]
  %v2937 = vld [vmem:[%s15 + $0xc4c] sm:$0xff]
  %v2938 = vld [vmem:[%s15 + $0xc54] sm:$0xf]
  %v2939 = vld [vmem:[%s15 + $0xc58] sm:$0xff]
  %v2940 = vld [vmem:[%s15 + $0xc60] sm:$0xff]
  %v2941 = vld [vmem:[%s15 + $0xc68] sm:$0xf]
  %v2942 = vld [vmem:[%s15 + $0xc6c] sm:$0xff]
  %v2943 = vld [vmem:[%s15 + $0xc74] sm:$0xff]
  %v2944 = vld [vmem:[%s15 + $0xc7c] sm:$0xf]
  %v2945 = vld [vmem:[%s15 + $0xc80] sm:$0xff]
  %v2946 = vld [vmem:[%s15 + $0xc88] sm:$0xff]
  %v2947 = vld [vmem:[%s15 + $0xc90] sm:$0xf]
  %v2948 = vld [vmem:[%s15 + $0xc94] sm:$0xff]
  %v2949 = vld [vmem:[%s15 + $0xc9c] sm:$0xff]
  %v2950 = vld [vmem:[%s15 + $0xca4] sm:$0xf]
  %v2951 = vld [vmem:[%s15 + $0xca8] sm:$0xff]
  %v2952 = vld [vmem:[%s15 + $0xcb0] sm:$0xff]
  %v2953 = vld [vmem:[%s15 + $0xcb8] sm:$0xf]
  %v2954 = vld [vmem:[%s15 + $0xcbc] sm:$0xff]
  %v2955 = vld [vmem:[%s15 + $0xcc4] sm:$0xff]
  %v2956 = vld [vmem:[%s15 + $0xccc] sm:$0xf]
  %v2957 = vld [vmem:[%s15 + $0xcd0] sm:$0xff]
  %v2958 = vld [vmem:[%s15 + $0xcd8] sm:$0xff]
  %v2959 = vld [vmem:[%s15 + $0xce0] sm:$0xf]
  %v2960 = vld [vmem:[%s15 + $0xce4] sm:$0xff]
  %v2961 = vld [vmem:[%s15 + $0xcec] sm:$0xff]
  %v2962 = vld [vmem:[%s15 + $0xcf4] sm:$0xf]
  %v2963 = vld [vmem:[%s15 + $0xcf8] sm:$0xff]
  %v2964 = vld [vmem:[%s15 + $0xd00] sm:$0xff]
  %v2965 = vld [vmem:[%s15 + $0xd08] sm:$0xf]
  %v2966 = vld [vmem:[%s15 + $0xd0c] sm:$0xff]
  %v2967 = vld [vmem:[%s15 + $0xd14] sm:$0xff]
  %v2968 = vld [vmem:[%s15 + $0xd1c] sm:$0xf]
  %v2969 = vld [vmem:[%s15 + $0xd20] sm:$0xff]
  %v2970 = vld [vmem:[%s15 + $0xd28] sm:$0xff]
  %v2971 = vld [vmem:[%s15 + $0xd30] sm:$0xf]
  %v2972 = vld [vmem:[%s15 + $0xd34] sm:$0xff]
  %v2973 = vld [vmem:[%s15 + $0xd3c] sm:$0xff]
  %v2974 = vld [vmem:[%s15 + $0xd44] sm:$0xf]
  %v2975 = vld [vmem:[%s15 + $0xd48] sm:$0xff]
  %v2976 = vld [vmem:[%s15 + $0xd50] sm:$0xff]
  %v2977 = vld [vmem:[%s15 + $0xd58] sm:$0xf]
  %v2978 = vld [vmem:[%s15 + $0xd5c] sm:$0xff]
  %v2979 = vld [vmem:[%s15 + $0xd64] sm:$0xff]
  %v2980 = vld [vmem:[%s15 + $0xd6c] sm:$0xf]
  %v2981 = vld [vmem:[%s15 + $0xd70] sm:$0xff]
  %v2982 = vld [vmem:[%s15 + $0xd78] sm:$0xff]
  %v2983 = vld [vmem:[%s15 + $0xd80] sm:$0xf]
  %v2984 = vld [vmem:[%s15 + $0xd84] sm:$0xff]
  %v2985 = vld [vmem:[%s15 + $0xd8c] sm:$0xff]
  %v2986 = vld [vmem:[%s15 + $0xd94] sm:$0xf]
  %v2987 = vld [vmem:[%s15 + $0xd98] sm:$0xff]
  %v2988 = vld [vmem:[%s15 + $0xda0] sm:$0xff]
  %v2989 = vld [vmem:[%s15 + $0xda8] sm:$0xf]
  %v2990 = vld [vmem:[%s15 + $0xdac] sm:$0xff]
  %v2991 = vld [vmem:[%s15 + $0xdb4] sm:$0xff]
  %v2992 = vld [vmem:[%s15 + $0xdbc] sm:$0xf]
  %v2993 = vld [vmem:[%s15 + $0xdc0] sm:$0xff]
  %v2994 = vld [vmem:[%s15 + $0xdc8] sm:$0xff]
  %v2995 = vld [vmem:[%s15 + $0xdd0] sm:$0xf]
  %v2996 = vld [vmem:[%s15 + $0xdd4] sm:$0xff]
  %v2997 = vld [vmem:[%s15 + $0xddc] sm:$0xff]
  %v2998 = vld [vmem:[%s15 + $0xde4] sm:$0xf]
  %v2999 = vld [vmem:[%s15 + $0xde8] sm:$0xff]
  %v3000 = vld [vmem:[%s15 + $0xdf0] sm:$0xff]
  %v3001 = vld [vmem:[%s15 + $0xdf8] sm:$0xf]
  %v3002 = vld [vmem:[%s15 + $0xdfc] sm:$0xff]
  %v3003 = vld [vmem:[%s15 + $0xe04] sm:$0xff]
  %v3004 = vld [vmem:[%s15 + $0xe0c] sm:$0xf]
  %v3005 = vld [vmem:[%s15 + $0xe10] sm:$0xff]
  %v3006 = vld [vmem:[%s15 + $0xe18] sm:$0xff]
  %v3007 = vld [vmem:[%s15 + $0xe20] sm:$0xf]
  %v3008 = vld [vmem:[%s15 + $0xe24] sm:$0xff]
  %v3009 = vld [vmem:[%s15 + $0xe2c] sm:$0xff]
  %v3010 = vld [vmem:[%s15 + $0xe34] sm:$0xf]
  %v3011 = vld [vmem:[%s15 + $0xe38] sm:$0xff]
  %v3012 = vld [vmem:[%s15 + $0xe40] sm:$0xff]
  %v3013 = vld [vmem:[%s15 + $0xe48] sm:$0xf]
  %v3014 = vld [vmem:[%s15 + $0xe4c] sm:$0xff]
  %v3015 = vld [vmem:[%s15 + $0xe54] sm:$0xff]
  %v3016 = vld [vmem:[%s15 + $0xe5c] sm:$0xf]
  %v3017 = vld [vmem:[%s15 + $0xe60] sm:$0xff]
  %v3018 = vld [vmem:[%s15 + $0xe68] sm:$0xff]
  %v3019 = vld [vmem:[%s15 + $0xe70] sm:$0xf]
  %v3020 = vld [vmem:[%s15 + $0xe74] sm:$0xff]
  %v3021 = vld [vmem:[%s15 + $0xe7c] sm:$0xff]
  %v3022 = vld [vmem:[%s15 + $0xe84] sm:$0xf]
  %v3023 = vld [vmem:[%s15 + $0xe88] sm:$0xff]
  %v3024 = vld [vmem:[%s15 + $0xe90] sm:$0xff]
  %v3025 = vld [vmem:[%s15 + $0xe98] sm:$0xf]
  %v3026 = vld [vmem:[%s15 + $0xe9c] sm:$0xff]
  %v3027 = vld [vmem:[%s15 + $0xea4] sm:$0xff]
  %v3028 = vld [vmem:[%s15 + $0xeac] sm:$0xf]
  %v3029 = vld [vmem:[%s15 + $0xeb0] sm:$0xff]
  %v3030 = vld [vmem:[%s15 + $0xeb8] sm:$0xff]
  %v3031 = vld [vmem:[%s15 + $0xec0] sm:$0xf]
  %v3032 = vld [vmem:[%s15 + $0xec4] sm:$0xff]
  %v3033 = vld [vmem:[%s15 + $0xecc] sm:$0xff]
  %v3034 = vld [vmem:[%s15 + $0xed4] sm:$0xf]
  %v3035 = vld [vmem:[%s15 + $0xed8] sm:$0xff]
  %v3036 = vld [vmem:[%s15 + $0xee0] sm:$0xff]
  %v3037 = vld [vmem:[%s15 + $0xee8] sm:$0xf]
  %v3038 = vld [vmem:[%s15 + $0xeec] sm:$0xff]
  %v3039 = vld [vmem:[%s15 + $0xef4] sm:$0xff]
  %v3040 = vld [vmem:[%s15 + $0xefc] sm:$0xf]
  %v3041 = vld [vmem:[%s15 + $0xf00] sm:$0xff]
  %v3042 = vld [vmem:[%s15 + $0xf08] sm:$0xff]
  %v3043 = vld [vmem:[%s15 + $0xf10] sm:$0xf]
  %v3044 = vld [vmem:[%s15 + $0xf14] sm:$0xff]
  %v3045 = vld [vmem:[%s15 + $0xf1c] sm:$0xff]
  %v3046 = vld [vmem:[%s15 + $0xf24] sm:$0xf]
  %v3047 = vld [vmem:[%s15 + $0xf28] sm:$0xff]
  %v3048 = vld [vmem:[%s15 + $0xf30] sm:$0xff]
  %v3049 = vld [vmem:[%s15 + $0xf38] sm:$0xf]
  %v3050 = vld [vmem:[%s15 + $0xf3c] sm:$0xff]
  %v3051 = vld [vmem:[%s15 + $0xf44] sm:$0xff]
  %v3052 = vld [vmem:[%s15 + $0xf4c] sm:$0xf]
  %v3053 = vld [vmem:[%s15 + $0xf50] sm:$0xff]
  %v3054 = vld [vmem:[%s15 + $0xf58] sm:$0xff]
  %v3055 = vld [vmem:[%s15 + $0xf60] sm:$0xf]
  %v3056 = vld [vmem:[%s15 + $0xf64] sm:$0xff]
  %v3057 = vld [vmem:[%s15 + $0xf6c] sm:$0xff]
  %v3058 = vld [vmem:[%s15 + $0xf74] sm:$0xf]
  %v3059 = vld [vmem:[%s15 + $0xf78] sm:$0xff]
  %v3060 = vld [vmem:[%s15 + $0xf80] sm:$0xff]
  %v3061 = vld [vmem:[%s15 + $0xf88] sm:$0xf]
  %v3062 = vld [vmem:[%s15 + $0xf8c] sm:$0xff]
  %v3063 = vld [vmem:[%s15 + $0xf94] sm:$0xff]
  %v3064 = vld [vmem:[%s15 + $0xf9c] sm:$0xf]
  %v3065 = vld [vmem:[%s15 + $0xfa0] sm:$0xff]
  %v3066 = vld [vmem:[%s15 + $0xfa8] sm:$0xff]
  %v3067 = vld [vmem:[%s15 + $0xfb0] sm:$0xf]
  %v3068 = vld [vmem:[%s15 + $0xfb4] sm:$0xff]
  %v3069 = vld [vmem:[%s15 + $0xfbc] sm:$0xff]
  %v3070 = vld [vmem:[%s15 + $0xfc4] sm:$0xf]
  %v3071 = vld [vmem:[%s15 + $0xfc8] sm:$0xff]
  %v3072 = vld [vmem:[%s15 + $0xfd0] sm:$0xff]
  %v3073 = vld [vmem:[%s15 + $0xfd8] sm:$0xf]
  %v3074 = vld [vmem:[%s15 + $0xfdc] sm:$0xff]
  %v3075 = vld [vmem:[%s15 + $0xfe4] sm:$0xff]
  %v3076 = vld [vmem:[%s15 + $0xfec] sm:$0xf]
  %v3077 = vld [vmem:[%s15 + $0xff0] sm:$0xff]
  %v3078 = vld [vmem:[%s15 + $0xff8] sm:$0xff]
  %v3079 = vld [vmem:[%s15 + $0x1000] sm:$0xf]
  %v3080 = vld [vmem:[%s15 + $0x1004] sm:$0xff]
  %v3081 = vld [vmem:[%s15 + $0x100c] sm:$0xff]
  %v3082 = vld [vmem:[%s15 + $0x1014] sm:$0xf]
  %v3083 = vld [vmem:[%s15 + $0x1018] sm:$0xff]
  %v3084 = vld [vmem:[%s15 + $0x1020] sm:$0xff]
  %v3085 = vld [vmem:[%s15 + $0x1028] sm:$0xf]
  %v3086 = vld [vmem:[%s15 + $0x102c] sm:$0xff]
  %v3087 = vld [vmem:[%s15 + $0x1034] sm:$0xff]
  %v3088 = vld [vmem:[%s15 + $0x103c] sm:$0xf]
  %v3089 = vld [vmem:[%s15 + $0x1040] sm:$0xff]
  %v3090 = vld [vmem:[%s15 + $0x1048] sm:$0xff]
  %v3091 = vld [vmem:[%s15 + $0x1050] sm:$0xf]
  %v3092 = vld [vmem:[%s15 + $0x1054] sm:$0xff]
  %v3093 = vld [vmem:[%s15 + $0x105c] sm:$0xff]
  %v3094 = vld [vmem:[%s15 + $0x1064] sm:$0xf]
  %v3095 = vld [vmem:[%s15 + $0x1068] sm:$0xff]
  %v3096 = vld [vmem:[%s15 + $0x1070] sm:$0xff]
  %v3097 = vld [vmem:[%s15 + $0x1078] sm:$0xf]
  %v3098 = vld [vmem:[%s15 + $0x107c] sm:$0xff]
  %v3099 = vld [vmem:[%s15 + $0x1084] sm:$0xff]
  %v3100 = vld [vmem:[%s15 + $0x108c] sm:$0xf]
  %v3101 = vld [vmem:[%s15 + $0x1090] sm:$0xff]
  %v3102 = vld [vmem:[%s15 + $0x1098] sm:$0xff]
  %v3103 = vld [vmem:[%s15 + $0x10a0] sm:$0xf]
  %v3104 = vld [vmem:[%s15 + $0x10a4] sm:$0xff]
  %v3105 = vld [vmem:[%s15 + $0x10ac] sm:$0xff]
  %v3106 = vld [vmem:[%s15 + $0x10b4] sm:$0xf]
  %v3107 = vld [vmem:[%s15 + $0x10b8] sm:$0xff]
  %v3108 = vld [vmem:[%s15 + $0x10c0] sm:$0xff]
  %v3109 = vld [vmem:[%s15 + $0x10c8] sm:$0xf]
  %v3110 = vld [vmem:[%s15 + $0x10cc] sm:$0xff]
  %v3111 = vld [vmem:[%s15 + $0x10d4] sm:$0xff]
  %v3112 = vld [vmem:[%s15 + $0x10dc] sm:$0xf]
  %v3113 = vld [vmem:[%s15 + $0x10e0] sm:$0xff]
  %v3114 = vld [vmem:[%s15 + $0x10e8] sm:$0xff]
  %v3115 = vld [vmem:[%s15 + $0x10f0] sm:$0xf]
  %v3116 = vld [vmem:[%s15 + $0x10f4] sm:$0xff]
  %v3117 = vld [vmem:[%s15 + $0x10fc] sm:$0xff]
  %v3118 = vld [vmem:[%s15 + $0x1104] sm:$0xf]
  %v3119 = vld [vmem:[%s15 + $0x1108] sm:$0xff]
  %v3120 = vld [vmem:[%s15 + $0x1110] sm:$0xff]
  %v3121 = vld [vmem:[%s15 + $0x1118] sm:$0xf]
  %v3122 = vld [vmem:[%s15 + $0x111c] sm:$0xff]
  %v3123 = vld [vmem:[%s15 + $0x1124] sm:$0xff]
  %v3124 = vld [vmem:[%s15 + $0x112c] sm:$0xf]
  %v3125 = vld [vmem:[%s15 + $0x1130] sm:$0xff]
  %v3126 = vld [vmem:[%s15 + $0x1138] sm:$0xff]
  %v3127 = vld [vmem:[%s15 + $0x1140] sm:$0xf]
  %v3128 = vld [vmem:[%s15 + $0x1144] sm:$0xff]
  %v3129 = vld [vmem:[%s15 + $0x114c] sm:$0xff]
  %v3130 = vld [vmem:[%s15 + $0x1154] sm:$0xf]
  %v3131 = vld [vmem:[%s15 + $0x1158] sm:$0xff]
  %v3132 = vld [vmem:[%s15 + $0x1160] sm:$0xff]
  %v3133 = vld [vmem:[%s15 + $0x1168] sm:$0xf]
  %v3134 = vld [vmem:[%s15 + $0x116c] sm:$0xff]
  %v3135 = vld [vmem:[%s15 + $0x1174] sm:$0xff]
  %v3136 = vld [vmem:[%s15 + $0x117c] sm:$0xf]
  %v3137 = vld [vmem:[%s15 + $0x1180] sm:$0xff]
  %v3138 = vld [vmem:[%s15 + $0x1188] sm:$0xff]
  %v3139 = vld [vmem:[%s15 + $0x1190] sm:$0xf]
  %v3140 = vld [vmem:[%s15 + $0x1194] sm:$0xff]
  %v3141 = vld [vmem:[%s15 + $0x119c] sm:$0xff]
  %v3142 = vld [vmem:[%s15 + $0x11a4] sm:$0xf]
  %v3143 = vld [vmem:[%s15 + $0x11a8] sm:$0xff]
  %v3144 = vld [vmem:[%s15 + $0x11b0] sm:$0xff]
  %v3145 = vld [vmem:[%s15 + $0x11b8] sm:$0xf]
  %v3146 = vld [vmem:[%s15 + $0x11bc] sm:$0xff]
  %v3147 = vld [vmem:[%s15 + $0x11c4] sm:$0xff]
  %v3148 = vld [vmem:[%s15 + $0x11cc] sm:$0xf]
  %v3149 = vld [vmem:[%s15 + $0x11d0] sm:$0xff]
  %v3150 = vld [vmem:[%s15 + $0x11d8] sm:$0xff]
  %v3151 = vld [vmem:[%s15 + $0x11e0] sm:$0xf]
  %v3152 = vld [vmem:[%s15 + $0x11e4] sm:$0xff]
  %v3153 = vld [vmem:[%s15 + $0x11ec] sm:$0xff]
  %v3154 = vld [vmem:[%s15 + $0x11f4] sm:$0xf]
  %v3155 = vld [vmem:[%s15 + $0x11f8] sm:$0xff]
  %v3156 = vld [vmem:[%s15 + $0x1200] sm:$0xff]
  %v3157 = vld [vmem:[%s15 + $0x1208] sm:$0xf]
  %v3158 = vld [vmem:[%s15 + $0x120c] sm:$0xff]
  %v3159 = vld [vmem:[%s15 + $0x1214] sm:$0xff]
  %v3160 = vld [vmem:[%s15 + $0x121c] sm:$0xf]
  %v3161 = vld [vmem:[%s15 + $0x1220] sm:$0xff]
  %v3162 = vld [vmem:[%s15 + $0x1228] sm:$0xff]
  %v3163 = vld [vmem:[%s15 + $0x1230] sm:$0xf]
  %v3164 = vld [vmem:[%s15 + $0x1234] sm:$0xff]
  %v3165 = vld [vmem:[%s15 + $0x123c] sm:$0xff]
  %v3166 = vld [vmem:[%s15 + $0x1244] sm:$0xf]
  %v3167 = vld [vmem:[%s15 + $0x1248] sm:$0xff]
  %v3168 = vld [vmem:[%s15 + $0x1250] sm:$0xff]
  %v3169 = vld [vmem:[%s15 + $0x1258] sm:$0xf]
  %v3170 = vld [vmem:[%s15 + $0x125c] sm:$0xff]
  %v3171 = vld [vmem:[%s15 + $0x1264] sm:$0xff]
  %v3172 = vld [vmem:[%s15 + $0x126c] sm:$0xf]
  %v3173 = vld [vmem:[%s15 + $0x1270] sm:$0xff]
  %v3174 = vld [vmem:[%s15 + $0x1278] sm:$0xff]
  %v3175 = vld [vmem:[%s15 + $0x1280] sm:$0xf]
  %v3176 = vld [vmem:[%s15 + $0x1284] sm:$0xff]
  %v3177 = vld [vmem:[%s15 + $0x128c] sm:$0xff]
  %v3178 = vld [vmem:[%s15 + $0x1294] sm:$0xf]
  %v3179 = vld [vmem:[%s15 + $0x1298] sm:$0xff]
  %v3180 = vld [vmem:[%s15 + $0x12a0] sm:$0xff]
  %v3181 = vld [vmem:[%s15 + $0x12a8] sm:$0xf]
  %v3182 = vld [vmem:[%s15 + $0x12ac] sm:$0xff]
  %v3183 = vld [vmem:[%s15 + $0x12b4] sm:$0xff]
  %v3184 = vld [vmem:[%s15 + $0x12bc] sm:$0xf]
  %v3185 = vld [vmem:[%s15 + $0x12c0] sm:$0xff]
  %v3186 = vld [vmem:[%s15 + $0x12c8] sm:$0xff]
  %v3187 = vld [vmem:[%s15 + $0x12d0] sm:$0xf]
  %v3188 = vld [vmem:[%s15 + $0x12d4] sm:$0xff]
  %v3189 = vld [vmem:[%s15 + $0x12dc] sm:$0xff]
  %v3190 = vld [vmem:[%s15 + $0x12e4] sm:$0xf]
  %v3191 = vld [vmem:[%s15 + $0x12e8] sm:$0xff]
  %v3192 = vld [vmem:[%s15 + $0x12f0] sm:$0xff]
  %v3193 = vld [vmem:[%s15 + $0x12f8] sm:$0xf]
  %v3194 = vld [vmem:[%s15 + $0x12fc] sm:$0xff]
  %v3195 = vld [vmem:[%s15 + $0x1304] sm:$0xff]
  %v3196 = vld [vmem:[%s15 + $0x130c] sm:$0xf]
  %v3197 = vld [vmem:[%s15 + $0x1310] sm:$0xff]
  %v3198 = vld [vmem:[%s15 + $0x1318] sm:$0xff]
  %v3199 = vld [vmem:[%s15 + $0x1320] sm:$0xf]
  %v3200 = vld [vmem:[%s15 + $0x1324] sm:$0xff]
  %v3201 = vld [vmem:[%s15 + $0x132c] sm:$0xff]
  %v3202 = vld [vmem:[%s15 + $0x1334] sm:$0xf]
  %v3203 = vld [vmem:[%s15 + $0x1338] sm:$0xff]
  %v3204 = vld [vmem:[%s15 + $0x1340] sm:$0xff]
  %v3205 = vld [vmem:[%s15 + $0x1348] sm:$0xf]
  %v3206 = vld [vmem:[%s15 + $0x134c] sm:$0xff]
  %v3207 = vld [vmem:[%s15 + $0x1354] sm:$0xff]
  %v3208 = vld [vmem:[%s15 + $0x135c] sm:$0xf]
  %v3209 = vld [vmem:[%s15 + $0x1360] sm:$0xff]
  %v3210 = vld [vmem:[%s15 + $0x1368] sm:$0xff]
  %v3211 = vld [vmem:[%s15 + $0x1370] sm:$0xf]
  %v3212 = vld [vmem:[%s15 + $0x1374] sm:$0xff]
  %v3213 = vld [vmem:[%s15 + $0x137c] sm:$0xff]
  %v3214 = vld [vmem:[%s15 + $0x1384] sm:$0xf]
  %v3215 = vld [vmem:[%s15 + $0x1388] sm:$0xff]
  %v3216 = vld [vmem:[%s15 + $0x1390] sm:$0xff]
  %v3217 = vld [vmem:[%s15 + $0x1398] sm:$0xf]
  %v3218 = vld [vmem:[%s15 + $0x139c] sm:$0xff]
  %v3219 = vld [vmem:[%s15 + $0x13a4] sm:$0xff]
  %v3220 = vld [vmem:[%s15 + $0x13ac] sm:$0xf]
  %v3221 = vld [vmem:[%s15 + $0x13b0] sm:$0xff]
  %v3222 = vld [vmem:[%s15 + $0x13b8] sm:$0xff]
  %v3223 = vld [vmem:[%s15 + $0x13c0] sm:$0xf]
  %v3224 = vld [vmem:[%s15 + $0x13c4] sm:$0xff]
  %v3225 = vld [vmem:[%s15 + $0x13cc] sm:$0xff]
  %v3226 = vld [vmem:[%s15 + $0x13d4] sm:$0xf]
  %v3227 = vld [vmem:[%s15 + $0x13d8] sm:$0xff]
  %v3228 = vld [vmem:[%s15 + $0x13e0] sm:$0xff]
  %v3229 = vld [vmem:[%s15 + $0x13e8] sm:$0xf]
  %v3230 = vld [vmem:[%s15 + $0x13ec] sm:$0xff]
  %v3231 = vld [vmem:[%s15 + $0x13f4] sm:$0xff]
  %v3232 = vld [vmem:[%s15 + $0x13fc] sm:$0xf]
  %v3233 = vld [vmem:[%s15 + $0x1400] sm:$0xff]
  %v3234 = vld [vmem:[%s15 + $0x1408] sm:$0xff]
  %v3235 = vld [vmem:[%s15 + $0x1410] sm:$0xf]
  %v3236 = vld [vmem:[%s15 + $0x1414] sm:$0xff]
  %v3237 = vld [vmem:[%s15 + $0x141c] sm:$0xff]
  %v3238 = vld [vmem:[%s15 + $0x1424] sm:$0xf]
  %v3239 = vld [vmem:[%s15 + $0x1428] sm:$0xff]
  %v3240 = vld [vmem:[%s15 + $0x1430] sm:$0xff]
  %v3241 = vld [vmem:[%s15 + $0x1438] sm:$0xf]
  %v3242 = vld [vmem:[%s15 + $0x143c] sm:$0xff]
  %v3243 = vld [vmem:[%s15 + $0x1444] sm:$0xff]
  %v3244 = vld [vmem:[%s15 + $0x144c] sm:$0xf]
  %v3245 = vld [vmem:[%s15 + $0x1450] sm:$0xff]
  %v3246 = vld [vmem:[%s15 + $0x1458] sm:$0xff]
  %v3247 = vld [vmem:[%s15 + $0x1460] sm:$0xf]
  %v3248 = vld [vmem:[%s15 + $0x1464] sm:$0xff]
  %v3249 = vld [vmem:[%s15 + $0x146c] sm:$0xff]
  %v3250 = vld [vmem:[%s15 + $0x1474] sm:$0xf]
  %v3251 = vld [vmem:[%s15 + $0x1478] sm:$0xff]
  %v3252 = vld [vmem:[%s15 + $0x1480] sm:$0xff]
  %v3253 = vld [vmem:[%s15 + $0x1488] sm:$0xf]
  %v3254 = vld [vmem:[%s15 + $0x148c] sm:$0xff]
  %v3255 = vld [vmem:[%s15 + $0x1494] sm:$0xff]
  %v3256 = vld [vmem:[%s15 + $0x149c] sm:$0xf]
  %v3257 = vld [vmem:[%s15 + $0x14a0] sm:$0xff]
  %v3258 = vld [vmem:[%s15 + $0x14a8] sm:$0xff]
  %v3259 = vld [vmem:[%s15 + $0x14b0] sm:$0xf]
  %v3260 = vld [vmem:[%s15 + $0x14b4] sm:$0xff]
  %v3261 = vld [vmem:[%s15 + $0x14bc] sm:$0xff]
  %v3262 = vld [vmem:[%s15 + $0x14c4] sm:$0xf]
  %v3263 = vld [vmem:[%s15 + $0x14c8] sm:$0xff]
  %v3264 = vld [vmem:[%s15 + $0x14d0] sm:$0xff]
  %v3265 = vld [vmem:[%s15 + $0x14d8] sm:$0xf]
  %v3266 = vld [vmem:[%s15 + $0x14dc] sm:$0xff]
  %v3267 = vld [vmem:[%s15 + $0x14e4] sm:$0xff]
  %v3268 = vld [vmem:[%s15 + $0x14ec] sm:$0xf]
  %v3269 = vld [vmem:[%s15 + $0x14f0] sm:$0xff]
  %v3270 = vld [vmem:[%s15 + $0x14f8] sm:$0xff]
  %v3271 = vld [vmem:[%s15 + $0x1500] sm:$0xf]
  %v3272 = vld [vmem:[%s15 + $0x1504] sm:$0xff]
  %v3273 = vld [vmem:[%s15 + $0x150c] sm:$0xff]
  %v3274 = vld [vmem:[%s15 + $0x1514] sm:$0xf]
  %v3275 = vld [vmem:[%s15 + $0x1518] sm:$0xff]
  %v3276 = vld [vmem:[%s15 + $0x1520] sm:$0xff]
  %v3277 = vld [vmem:[%s15 + $0x1528] sm:$0xf]
  %v3278 = vld [vmem:[%s15 + $0x152c] sm:$0xff]
  %v3279 = vld [vmem:[%s15 + $0x1534] sm:$0xff]
  %v3280 = vld [vmem:[%s15 + $0x153c] sm:$0xf]
  %v3281 = vld [vmem:[%s15 + $0x1540] sm:$0xff]
  %v3282 = vld [vmem:[%s15 + $0x1548] sm:$0xff]
  %v3283 = vld [vmem:[%s15 + $0x1550] sm:$0xf]
  %v3284 = vld [vmem:[%s15 + $0x1554] sm:$0xff]
  %v3285 = vld [vmem:[%s15 + $0x155c] sm:$0xff]
  %v3286 = vld [vmem:[%s15 + $0x1564] sm:$0xf]
  %v3287 = vld [vmem:[%s15 + $0x1568] sm:$0xff]
  %v3288 = vld [vmem:[%s15 + $0x1570] sm:$0xff]
  %v3289 = vld [vmem:[%s15 + $0x1578] sm:$0xf]
  %v3290 = vld [vmem:[%s15 + $0x157c] sm:$0xff]
  %v3291 = vld [vmem:[%s15 + $0x1584] sm:$0xff]
  %v3292 = vld [vmem:[%s15 + $0x158c] sm:$0xf]
  %v3293 = vld [vmem:[%s15 + $0x1590] sm:$0xff]
  %v3294 = vld [vmem:[%s15 + $0x1598] sm:$0xff]
  %v3295 = vld [vmem:[%s15 + $0x15a0] sm:$0xf]
  %v3296 = vld [vmem:[%s15 + $0x15a4] sm:$0xff]
  %v3297 = vld [vmem:[%s15 + $0x15ac] sm:$0xff]
  %v3298 = vld [vmem:[%s15 + $0x15b4] sm:$0xf]
  %v3299 = vld [vmem:[%s15 + $0x15b8] sm:$0xff]
  %v3300 = vld [vmem:[%s15 + $0x15c0] sm:$0xff]
  %v3301 = vld [vmem:[%s15 + $0x15c8] sm:$0xf]
  %v3302 = vld [vmem:[%s15 + $0x15cc] sm:$0xff]
  %v3303 = vld [vmem:[%s15 + $0x15d4] sm:$0xff]
  %v3304 = vld [vmem:[%s15 + $0x15dc] sm:$0xf]
  %v4145 = vunpack.c.l.b16 %v2465
  %v4146 = vunpack.c.h.b16 %v2465
  %v4147 = vunpack.c.l.b16 %v2466
  %v4148 = vunpack.c.h.b16 %v2466
  %v4149 = vunpack.c.l.b16 %v2467
  %v4150 = vunpack.c.l.b16 %v2468
  %v4151 = vunpack.c.h.b16 %v2468
  %v4152 = vunpack.c.l.b16 %v2469
  %v4153 = vunpack.c.h.b16 %v2469
  %v4154 = vunpack.c.l.b16 %v2470
  %v4155 = vunpack.c.l.b16 %v2471
  %v4156 = vunpack.c.h.b16 %v2471
  %v4157 = vunpack.c.l.b16 %v2472
  %v4158 = vunpack.c.h.b16 %v2472
  %v4159 = vunpack.c.l.b16 %v2473
  %v4160 = vunpack.c.l.b16 %v2474
  %v4161 = vunpack.c.h.b16 %v2474
  %v4162 = vunpack.c.l.b16 %v2475
  %v4163 = vunpack.c.h.b16 %v2475
  %v4164 = vunpack.c.l.b16 %v2476
  %v4165 = vunpack.c.l.b16 %v2477
  %v4166 = vunpack.c.h.b16 %v2477
  %v4167 = vunpack.c.l.b16 %v2478
  %v4168 = vunpack.c.h.b16 %v2478
  %v4169 = vunpack.c.l.b16 %v2479
  %v4170 = vunpack.c.l.b16 %v2480
  %v4171 = vunpack.c.h.b16 %v2480
  %v4172 = vunpack.c.l.b16 %v2481
  %v4173 = vunpack.c.h.b16 %v2481
  %v4174 = vunpack.c.l.b16 %v2482
  %v4175 = vunpack.c.l.b16 %v2483
  %v4176 = vunpack.c.h.b16 %v2483
  %v4177 = vunpack.c.l.b16 %v2484
  %v4178 = vunpack.c.h.b16 %v2484
  %v4179 = vunpack.c.l.b16 %v2485
  %v4180 = vunpack.c.l.b16 %v2486
  %v4181 = vunpack.c.h.b16 %v2486
  %v4182 = vunpack.c.l.b16 %v2487
  %v4183 = vunpack.c.h.b16 %v2487
  %v4184 = vunpack.c.l.b16 %v2488
  %v4185 = vunpack.c.l.b16 %v2489
  %v4186 = vunpack.c.h.b16 %v2489
  %v4187 = vunpack.c.l.b16 %v2490
  %v4188 = vunpack.c.h.b16 %v2490
  %v4189 = vunpack.c.l.b16 %v2491
  %v4190 = vunpack.c.l.b16 %v2492
  %v4191 = vunpack.c.h.b16 %v2492
  %v4192 = vunpack.c.l.b16 %v2493
  %v4193 = vunpack.c.h.b16 %v2493
  %v4194 = vunpack.c.l.b16 %v2494
  %v4195 = vunpack.c.l.b16 %v2495
  %v4196 = vunpack.c.h.b16 %v2495
  %v4197 = vunpack.c.l.b16 %v2496
  %v4198 = vunpack.c.h.b16 %v2496
  %v4199 = vunpack.c.l.b16 %v2497
  %v4200 = vunpack.c.l.b16 %v2498
  %v4201 = vunpack.c.h.b16 %v2498
  %v4202 = vunpack.c.l.b16 %v2499
  %v4203 = vunpack.c.h.b16 %v2499
  %v4204 = vunpack.c.l.b16 %v2500
  %v4205 = vunpack.c.l.b16 %v2501
  %v4206 = vunpack.c.h.b16 %v2501
  %v4207 = vunpack.c.l.b16 %v2502
  %v4208 = vunpack.c.h.b16 %v2502
  %v4209 = vunpack.c.l.b16 %v2503
  %v4210 = vunpack.c.l.b16 %v2504
  %v4211 = vunpack.c.h.b16 %v2504
  %v4212 = vunpack.c.l.b16 %v2505
  %v4213 = vunpack.c.h.b16 %v2505
  %v4214 = vunpack.c.l.b16 %v2506
  %v4215 = vunpack.c.l.b16 %v2507
  %v4216 = vunpack.c.h.b16 %v2507
  %v4217 = vunpack.c.l.b16 %v2508
  %v4218 = vunpack.c.h.b16 %v2508
  %v4219 = vunpack.c.l.b16 %v2509
  %v4220 = vunpack.c.l.b16 %v2510
  %v4221 = vunpack.c.h.b16 %v2510
  %v4222 = vunpack.c.l.b16 %v2511
  %v4223 = vunpack.c.h.b16 %v2511
  %v4224 = vunpack.c.l.b16 %v2512
  %v4225 = vunpack.c.l.b16 %v2513
  %v4226 = vunpack.c.h.b16 %v2513
  %v4227 = vunpack.c.l.b16 %v2514
  %v4228 = vunpack.c.h.b16 %v2514
  %v4229 = vunpack.c.l.b16 %v2515
  %v4230 = vunpack.c.l.b16 %v2516
  %v4231 = vunpack.c.h.b16 %v2516
  %v4232 = vunpack.c.l.b16 %v2517
  %v4233 = vunpack.c.h.b16 %v2517
  %v4234 = vunpack.c.l.b16 %v2518
  %v4235 = vunpack.c.l.b16 %v2519
  %v4236 = vunpack.c.h.b16 %v2519
  %v4237 = vunpack.c.l.b16 %v2520
  %v4238 = vunpack.c.h.b16 %v2520
  %v4239 = vunpack.c.l.b16 %v2521
  %v4240 = vunpack.c.l.b16 %v2522
  %v4241 = vunpack.c.h.b16 %v2522
  %v4242 = vunpack.c.l.b16 %v2523
  %v4243 = vunpack.c.h.b16 %v2523
  %v4244 = vunpack.c.l.b16 %v2524
  %v4245 = vunpack.c.l.b16 %v2525
  %v4246 = vunpack.c.h.b16 %v2525
  %v4247 = vunpack.c.l.b16 %v2526
  %v4248 = vunpack.c.h.b16 %v2526
  %v4249 = vunpack.c.l.b16 %v2527
  %v4250 = vunpack.c.l.b16 %v2528
  %v4251 = vunpack.c.h.b16 %v2528
  %v4252 = vunpack.c.l.b16 %v2529
  %v4253 = vunpack.c.h.b16 %v2529
  %v4254 = vunpack.c.l.b16 %v2530
  %v4255 = vunpack.c.l.b16 %v2531
  %v4256 = vunpack.c.h.b16 %v2531
  %v4257 = vunpack.c.l.b16 %v2532
  %v4258 = vunpack.c.h.b16 %v2532
  %v4259 = vunpack.c.l.b16 %v2533
  %v4260 = vunpack.c.l.b16 %v2534
  %v4261 = vunpack.c.h.b16 %v2534
  %v4262 = vunpack.c.l.b16 %v2535
  %v4263 = vunpack.c.h.b16 %v2535
  %v4264 = vunpack.c.l.b16 %v2536
  %v4265 = vunpack.c.l.b16 %v2537
  %v4266 = vunpack.c.h.b16 %v2537
  %v4267 = vunpack.c.l.b16 %v2538
  %v4268 = vunpack.c.h.b16 %v2538
  %v4269 = vunpack.c.l.b16 %v2539
  %v4270 = vunpack.c.l.b16 %v2540
  %v4271 = vunpack.c.h.b16 %v2540
  %v4272 = vunpack.c.l.b16 %v2541
  %v4273 = vunpack.c.h.b16 %v2541
  %v4274 = vunpack.c.l.b16 %v2542
  %v4275 = vunpack.c.l.b16 %v2543
  %v4276 = vunpack.c.h.b16 %v2543
  %v4277 = vunpack.c.l.b16 %v2544
  %v4278 = vunpack.c.h.b16 %v2544
  %v4279 = vunpack.c.l.b16 %v2545
  %v4280 = vunpack.c.l.b16 %v2546
  %v4281 = vunpack.c.h.b16 %v2546
  %v4282 = vunpack.c.l.b16 %v2547
  %v4283 = vunpack.c.h.b16 %v2547
  %v4284 = vunpack.c.l.b16 %v2548
  %v4285 = vunpack.c.l.b16 %v2549
  %v4286 = vunpack.c.h.b16 %v2549
  %v4287 = vunpack.c.l.b16 %v2550
  %v4288 = vunpack.c.h.b16 %v2550
  %v4289 = vunpack.c.l.b16 %v2551
  %v4290 = vunpack.c.l.b16 %v2552
  %v4291 = vunpack.c.h.b16 %v2552
  %v4292 = vunpack.c.l.b16 %v2553
  %v4293 = vunpack.c.h.b16 %v2553
  %v4294 = vunpack.c.l.b16 %v2554
  %v4295 = vunpack.c.l.b16 %v2555
  %v4296 = vunpack.c.h.b16 %v2555
  %v4297 = vunpack.c.l.b16 %v2556
  %v4298 = vunpack.c.h.b16 %v2556
  %v4299 = vunpack.c.l.b16 %v2557
  %v4300 = vunpack.c.l.b16 %v2558
  %v4301 = vunpack.c.h.b16 %v2558
  %v4302 = vunpack.c.l.b16 %v2559
  %v4303 = vunpack.c.h.b16 %v2559
  %v4304 = vunpack.c.l.b16 %v2560
  %v4305 = vunpack.c.l.b16 %v2561
  %v4306 = vunpack.c.h.b16 %v2561
  %v4307 = vunpack.c.l.b16 %v2562
  %v4308 = vunpack.c.h.b16 %v2562
  %v4309 = vunpack.c.l.b16 %v2563
  %v4310 = vunpack.c.l.b16 %v2564
  %v4311 = vunpack.c.h.b16 %v2564
  %v4312 = vunpack.c.l.b16 %v2565
  %v4313 = vunpack.c.h.b16 %v2565
  %v4314 = vunpack.c.l.b16 %v2566
  %v4315 = vunpack.c.l.b16 %v2567
  %v4316 = vunpack.c.h.b16 %v2567
  %v4317 = vunpack.c.l.b16 %v2568
  %v4318 = vunpack.c.h.b16 %v2568
  %v4319 = vunpack.c.l.b16 %v2569
  %v4320 = vunpack.c.l.b16 %v2570
  %v4321 = vunpack.c.h.b16 %v2570
  %v4322 = vunpack.c.l.b16 %v2571
  %v4323 = vunpack.c.h.b16 %v2571
  %v4324 = vunpack.c.l.b16 %v2572
  %v4325 = vunpack.c.l.b16 %v2573
  %v4326 = vunpack.c.h.b16 %v2573
  %v4327 = vunpack.c.l.b16 %v2574
  %v4328 = vunpack.c.h.b16 %v2574
  %v4329 = vunpack.c.l.b16 %v2575
  %v4330 = vunpack.c.l.b16 %v2576
  %v4331 = vunpack.c.h.b16 %v2576
  %v4332 = vunpack.c.l.b16 %v2577
  %v4333 = vunpack.c.h.b16 %v2577
  %v4334 = vunpack.c.l.b16 %v2578
  %v4335 = vunpack.c.l.b16 %v2579
  %v4336 = vunpack.c.h.b16 %v2579
  %v4337 = vunpack.c.l.b16 %v2580
  %v4338 = vunpack.c.h.b16 %v2580
  %v4339 = vunpack.c.l.b16 %v2581
  %v4340 = vunpack.c.l.b16 %v2582
  %v4341 = vunpack.c.h.b16 %v2582
  %v4342 = vunpack.c.l.b16 %v2583
  %v4343 = vunpack.c.h.b16 %v2583
  %v4344 = vunpack.c.l.b16 %v2584
  %v4345 = vunpack.c.l.b16 %v2585
  %v4346 = vunpack.c.h.b16 %v2585
  %v4347 = vunpack.c.l.b16 %v2586
  %v4348 = vunpack.c.h.b16 %v2586
  %v4349 = vunpack.c.l.b16 %v2587
  %v4350 = vunpack.c.l.b16 %v2588
  %v4351 = vunpack.c.h.b16 %v2588
  %v4352 = vunpack.c.l.b16 %v2589
  %v4353 = vunpack.c.h.b16 %v2589
  %v4354 = vunpack.c.l.b16 %v2590
  %v4355 = vunpack.c.l.b16 %v2591
  %v4356 = vunpack.c.h.b16 %v2591
  %v4357 = vunpack.c.l.b16 %v2592
  %v4358 = vunpack.c.h.b16 %v2592
  %v4359 = vunpack.c.l.b16 %v2593
  %v4360 = vunpack.c.l.b16 %v2594
  %v4361 = vunpack.c.h.b16 %v2594
  %v4362 = vunpack.c.l.b16 %v2595
  %v4363 = vunpack.c.h.b16 %v2595
  %v4364 = vunpack.c.l.b16 %v2596
  %v4365 = vunpack.c.l.b16 %v2597
  %v4366 = vunpack.c.h.b16 %v2597
  %v4367 = vunpack.c.l.b16 %v2598
  %v4368 = vunpack.c.h.b16 %v2598
  %v4369 = vunpack.c.l.b16 %v2599
  %v4370 = vunpack.c.l.b16 %v2600
  %v4371 = vunpack.c.h.b16 %v2600
  %v4372 = vunpack.c.l.b16 %v2601
  %v4373 = vunpack.c.h.b16 %v2601
  %v4374 = vunpack.c.l.b16 %v2602
  %v4375 = vunpack.c.l.b16 %v2603
  %v4376 = vunpack.c.h.b16 %v2603
  %v4377 = vunpack.c.l.b16 %v2604
  %v4378 = vunpack.c.h.b16 %v2604
  %v4379 = vunpack.c.l.b16 %v2605
  %v4380 = vunpack.c.l.b16 %v2606
  %v4381 = vunpack.c.h.b16 %v2606
  %v4382 = vunpack.c.l.b16 %v2607
  %v4383 = vunpack.c.h.b16 %v2607
  %v4384 = vunpack.c.l.b16 %v2608
  %v4385 = vunpack.c.l.b16 %v2609
  %v4386 = vunpack.c.h.b16 %v2609
  %v4387 = vunpack.c.l.b16 %v2610
  %v4388 = vunpack.c.h.b16 %v2610
  %v4389 = vunpack.c.l.b16 %v2611
  %v4390 = vunpack.c.l.b16 %v2612
  %v4391 = vunpack.c.h.b16 %v2612
  %v4392 = vunpack.c.l.b16 %v2613
  %v4393 = vunpack.c.h.b16 %v2613
  %v4394 = vunpack.c.l.b16 %v2614
  %v4395 = vunpack.c.l.b16 %v2615
  %v4396 = vunpack.c.h.b16 %v2615
  %v4397 = vunpack.c.l.b16 %v2616
  %v4398 = vunpack.c.h.b16 %v2616
  %v4399 = vunpack.c.l.b16 %v2617
  %v4400 = vunpack.c.l.b16 %v2618
  %v4401 = vunpack.c.h.b16 %v2618
  %v4402 = vunpack.c.l.b16 %v2619
  %v4403 = vunpack.c.h.b16 %v2619
  %v4404 = vunpack.c.l.b16 %v2620
  %v4405 = vunpack.c.l.b16 %v2621
  %v4406 = vunpack.c.h.b16 %v2621
  %v4407 = vunpack.c.l.b16 %v2622
  %v4408 = vunpack.c.h.b16 %v2622
  %v4409 = vunpack.c.l.b16 %v2623
  %v4410 = vunpack.c.l.b16 %v2624
  %v4411 = vunpack.c.h.b16 %v2624
  %v4412 = vunpack.c.l.b16 %v2625
  %v4413 = vunpack.c.h.b16 %v2625
  %v4414 = vunpack.c.l.b16 %v2626
  %v4415 = vunpack.c.l.b16 %v2627
  %v4416 = vunpack.c.h.b16 %v2627
  %v4417 = vunpack.c.l.b16 %v2628
  %v4418 = vunpack.c.h.b16 %v2628
  %v4419 = vunpack.c.l.b16 %v2629
  %v4420 = vunpack.c.l.b16 %v2630
  %v4421 = vunpack.c.h.b16 %v2630
  %v4422 = vunpack.c.l.b16 %v2631
  %v4423 = vunpack.c.h.b16 %v2631
  %v4424 = vunpack.c.l.b16 %v2632
  %v4425 = vunpack.c.l.b16 %v2633
  %v4426 = vunpack.c.h.b16 %v2633
  %v4427 = vunpack.c.l.b16 %v2634
  %v4428 = vunpack.c.h.b16 %v2634
  %v4429 = vunpack.c.l.b16 %v2635
  %v4430 = vunpack.c.l.b16 %v2636
  %v4431 = vunpack.c.h.b16 %v2636
  %v4432 = vunpack.c.l.b16 %v2637
  %v4433 = vunpack.c.h.b16 %v2637
  %v4434 = vunpack.c.l.b16 %v2638
  %v4435 = vunpack.c.l.b16 %v2639
  %v4436 = vunpack.c.h.b16 %v2639
  %v4437 = vunpack.c.l.b16 %v2640
  %v4438 = vunpack.c.h.b16 %v2640
  %v4439 = vunpack.c.l.b16 %v2641
  %v4440 = vunpack.c.l.b16 %v2642
  %v4441 = vunpack.c.h.b16 %v2642
  %v4442 = vunpack.c.l.b16 %v2643
  %v4443 = vunpack.c.h.b16 %v2643
  %v4444 = vunpack.c.l.b16 %v2644
  %v4445 = vunpack.c.l.b16 %v2645
  %v4446 = vunpack.c.h.b16 %v2645
  %v4447 = vunpack.c.l.b16 %v2646
  %v4448 = vunpack.c.h.b16 %v2646
  %v4449 = vunpack.c.l.b16 %v2647
  %v4450 = vunpack.c.l.b16 %v2648
  %v4451 = vunpack.c.h.b16 %v2648
  %v4452 = vunpack.c.l.b16 %v2649
  %v4453 = vunpack.c.h.b16 %v2649
  %v4454 = vunpack.c.l.b16 %v2650
  %v4455 = vunpack.c.l.b16 %v2651
  %v4456 = vunpack.c.h.b16 %v2651
  %v4457 = vunpack.c.l.b16 %v2652
  %v4458 = vunpack.c.h.b16 %v2652
  %v4459 = vunpack.c.l.b16 %v2653
  %v4460 = vunpack.c.l.b16 %v2654
  %v4461 = vunpack.c.h.b16 %v2654
  %v4462 = vunpack.c.l.b16 %v2655
  %v4463 = vunpack.c.h.b16 %v2655
  %v4464 = vunpack.c.l.b16 %v2656
  %v4465 = vunpack.c.l.b16 %v2657
  %v4466 = vunpack.c.h.b16 %v2657
  %v4467 = vunpack.c.l.b16 %v2658
  %v4468 = vunpack.c.h.b16 %v2658
  %v4469 = vunpack.c.l.b16 %v2659
  %v4470 = vunpack.c.l.b16 %v2660
  %v4471 = vunpack.c.h.b16 %v2660
  %v4472 = vunpack.c.l.b16 %v2661
  %v4473 = vunpack.c.h.b16 %v2661
  %v4474 = vunpack.c.l.b16 %v2662
  %v4475 = vunpack.c.l.b16 %v2663
  %v4476 = vunpack.c.h.b16 %v2663
  %v4477 = vunpack.c.l.b16 %v2664
  %v4478 = vunpack.c.h.b16 %v2664
  %v4479 = vunpack.c.l.b16 %v2665
  %v4480 = vunpack.c.l.b16 %v2666
  %v4481 = vunpack.c.h.b16 %v2666
  %v4482 = vunpack.c.l.b16 %v2667
  %v4483 = vunpack.c.h.b16 %v2667
  %v4484 = vunpack.c.l.b16 %v2668
  %v4485 = vunpack.c.l.b16 %v2669
  %v4486 = vunpack.c.h.b16 %v2669
  %v4487 = vunpack.c.l.b16 %v2670
  %v4488 = vunpack.c.h.b16 %v2670
  %v4489 = vunpack.c.l.b16 %v2671
  %v4490 = vunpack.c.l.b16 %v2672
  %v4491 = vunpack.c.h.b16 %v2672
  %v4492 = vunpack.c.l.b16 %v2673
  %v4493 = vunpack.c.h.b16 %v2673
  %v4494 = vunpack.c.l.b16 %v2674
  %v4495 = vunpack.c.l.b16 %v2675
  %v4496 = vunpack.c.h.b16 %v2675
  %v4497 = vunpack.c.l.b16 %v2676
  %v4498 = vunpack.c.h.b16 %v2676
  %v4499 = vunpack.c.l.b16 %v2677
  %v4500 = vunpack.c.l.b16 %v2678
  %v4501 = vunpack.c.h.b16 %v2678
  %v4502 = vunpack.c.l.b16 %v2679
  %v4503 = vunpack.c.h.b16 %v2679
  %v4504 = vunpack.c.l.b16 %v2680
  %v4505 = vunpack.c.l.b16 %v2681
  %v4506 = vunpack.c.h.b16 %v2681
  %v4507 = vunpack.c.l.b16 %v2682
  %v4508 = vunpack.c.h.b16 %v2682
  %v4509 = vunpack.c.l.b16 %v2683
  %v4510 = vunpack.c.l.b16 %v2684
  %v4511 = vunpack.c.h.b16 %v2684
  %v4512 = vunpack.c.l.b16 %v2685
  %v4513 = vunpack.c.h.b16 %v2685
  %v4514 = vunpack.c.l.b16 %v2686
  %v4515 = vunpack.c.l.b16 %v2687
  %v4516 = vunpack.c.h.b16 %v2687
  %v4517 = vunpack.c.l.b16 %v2688
  %v4518 = vunpack.c.h.b16 %v2688
  %v4519 = vunpack.c.l.b16 %v2689
  %v4520 = vunpack.c.l.b16 %v2690
  %v4521 = vunpack.c.h.b16 %v2690
  %v4522 = vunpack.c.l.b16 %v2691
  %v4523 = vunpack.c.h.b16 %v2691
  %v4524 = vunpack.c.l.b16 %v2692
  %v4525 = vunpack.c.l.b16 %v2693
  %v4526 = vunpack.c.h.b16 %v2693
  %v4527 = vunpack.c.l.b16 %v2694
  %v4528 = vunpack.c.h.b16 %v2694
  %v4529 = vunpack.c.l.b16 %v2695
  %v4530 = vunpack.c.l.b16 %v2696
  %v4531 = vunpack.c.h.b16 %v2696
  %v4532 = vunpack.c.l.b16 %v2697
  %v4533 = vunpack.c.h.b16 %v2697
  %v4534 = vunpack.c.l.b16 %v2698
  %v4535 = vunpack.c.l.b16 %v2699
  %v4536 = vunpack.c.h.b16 %v2699
  %v4537 = vunpack.c.l.b16 %v2700
  %v4538 = vunpack.c.h.b16 %v2700
  %v4539 = vunpack.c.l.b16 %v2701
  %v4540 = vunpack.c.l.b16 %v2702
  %v4541 = vunpack.c.h.b16 %v2702
  %v4542 = vunpack.c.l.b16 %v2703
  %v4543 = vunpack.c.h.b16 %v2703
  %v4544 = vunpack.c.l.b16 %v2704
  %v4545 = vunpack.c.l.b16 %v2705
  %v4546 = vunpack.c.h.b16 %v2705
  %v4547 = vunpack.c.l.b16 %v2706
  %v4548 = vunpack.c.h.b16 %v2706
  %v4549 = vunpack.c.l.b16 %v2707
  %v4550 = vunpack.c.l.b16 %v2708
  %v4551 = vunpack.c.h.b16 %v2708
  %v4552 = vunpack.c.l.b16 %v2709
  %v4553 = vunpack.c.h.b16 %v2709
  %v4554 = vunpack.c.l.b16 %v2710
  %v4555 = vunpack.c.l.b16 %v2711
  %v4556 = vunpack.c.h.b16 %v2711
  %v4557 = vunpack.c.l.b16 %v2712
  %v4558 = vunpack.c.h.b16 %v2712
  %v4559 = vunpack.c.l.b16 %v2713
  %v4560 = vunpack.c.l.b16 %v2714
  %v4561 = vunpack.c.h.b16 %v2714
  %v4562 = vunpack.c.l.b16 %v2715
  %v4563 = vunpack.c.h.b16 %v2715
  %v4564 = vunpack.c.l.b16 %v2716
  %v4565 = vunpack.c.l.b16 %v2717
  %v4566 = vunpack.c.h.b16 %v2717
  %v4567 = vunpack.c.l.b16 %v2718
  %v4568 = vunpack.c.h.b16 %v2718
  %v4569 = vunpack.c.l.b16 %v2719
  %v4570 = vunpack.c.l.b16 %v2720
  %v4571 = vunpack.c.h.b16 %v2720
  %v4572 = vunpack.c.l.b16 %v2721
  %v4573 = vunpack.c.h.b16 %v2721
  %v4574 = vunpack.c.l.b16 %v2722
  %v4575 = vunpack.c.l.b16 %v2723
  %v4576 = vunpack.c.h.b16 %v2723
  %v4577 = vunpack.c.l.b16 %v2724
  %v4578 = vunpack.c.h.b16 %v2724
  %v4579 = vunpack.c.l.b16 %v2725
  %v4580 = vunpack.c.l.b16 %v2726
  %v4581 = vunpack.c.h.b16 %v2726
  %v4582 = vunpack.c.l.b16 %v2727
  %v4583 = vunpack.c.h.b16 %v2727
  %v4584 = vunpack.c.l.b16 %v2728
  %v4585 = vunpack.c.l.b16 %v2729
  %v4586 = vunpack.c.h.b16 %v2729
  %v4587 = vunpack.c.l.b16 %v2730
  %v4588 = vunpack.c.h.b16 %v2730
  %v4589 = vunpack.c.l.b16 %v2731
  %v4590 = vunpack.c.l.b16 %v2732
  %v4591 = vunpack.c.h.b16 %v2732
  %v4592 = vunpack.c.l.b16 %v2733
  %v4593 = vunpack.c.h.b16 %v2733
  %v4594 = vunpack.c.l.b16 %v2734
  %v4595 = vunpack.c.l.b16 %v2735
  %v4596 = vunpack.c.h.b16 %v2735
  %v4597 = vunpack.c.l.b16 %v2736
  %v4598 = vunpack.c.h.b16 %v2736
  %v4599 = vunpack.c.l.b16 %v2737
  %v4600 = vunpack.c.l.b16 %v2738
  %v4601 = vunpack.c.h.b16 %v2738
  %v4602 = vunpack.c.l.b16 %v2739
  %v4603 = vunpack.c.h.b16 %v2739
  %v4604 = vunpack.c.l.b16 %v2740
  %v4605 = vunpack.c.l.b16 %v2741
  %v4606 = vunpack.c.h.b16 %v2741
  %v4607 = vunpack.c.l.b16 %v2742
  %v4608 = vunpack.c.h.b16 %v2742
  %v4609 = vunpack.c.l.b16 %v2743
  %v4610 = vunpack.c.l.b16 %v2744
  %v4611 = vunpack.c.h.b16 %v2744
  %v4612 = vunpack.c.l.b16 %v2745
  %v4613 = vunpack.c.h.b16 %v2745
  %v4614 = vunpack.c.l.b16 %v2746
  %v4615 = vunpack.c.l.b16 %v2747
  %v4616 = vunpack.c.h.b16 %v2747
  %v4617 = vunpack.c.l.b16 %v2748
  %v4618 = vunpack.c.h.b16 %v2748
  %v4619 = vunpack.c.l.b16 %v2749
  %v4620 = vunpack.c.l.b16 %v2750
  %v4621 = vunpack.c.h.b16 %v2750
  %v4622 = vunpack.c.l.b16 %v2751
  %v4623 = vunpack.c.h.b16 %v2751
  %v4624 = vunpack.c.l.b16 %v2752
  %v4625 = vunpack.c.l.b16 %v2753
  %v4626 = vunpack.c.h.b16 %v2753
  %v4627 = vunpack.c.l.b16 %v2754
  %v4628 = vunpack.c.h.b16 %v2754
  %v4629 = vunpack.c.l.b16 %v2755
  %v4630 = vunpack.c.l.b16 %v2756
  %v4631 = vunpack.c.h.b16 %v2756
  %v4632 = vunpack.c.l.b16 %v2757
  %v4633 = vunpack.c.h.b16 %v2757
  %v4634 = vunpack.c.l.b16 %v2758
  %v4635 = vunpack.c.l.b16 %v2759
  %v4636 = vunpack.c.h.b16 %v2759
  %v4637 = vunpack.c.l.b16 %v2760
  %v4638 = vunpack.c.h.b16 %v2760
  %v4639 = vunpack.c.l.b16 %v2761
  %v4640 = vunpack.c.l.b16 %v2762
  %v4641 = vunpack.c.h.b16 %v2762
  %v4642 = vunpack.c.l.b16 %v2763
  %v4643 = vunpack.c.h.b16 %v2763
  %v4644 = vunpack.c.l.b16 %v2764
  %v4645 = vunpack.c.l.b16 %v2765
  %v4646 = vunpack.c.h.b16 %v2765
  %v4647 = vunpack.c.l.b16 %v2766
  %v4648 = vunpack.c.h.b16 %v2766
  %v4649 = vunpack.c.l.b16 %v2767
  %v4650 = vunpack.c.l.b16 %v2768
  %v4651 = vunpack.c.h.b16 %v2768
  %v4652 = vunpack.c.l.b16 %v2769
  %v4653 = vunpack.c.h.b16 %v2769
  %v4654 = vunpack.c.l.b16 %v2770
  %v4655 = vunpack.c.l.b16 %v2771
  %v4656 = vunpack.c.h.b16 %v2771
  %v4657 = vunpack.c.l.b16 %v2772
  %v4658 = vunpack.c.h.b16 %v2772
  %v4659 = vunpack.c.l.b16 %v2773
  %v4660 = vunpack.c.l.b16 %v2774
  %v4661 = vunpack.c.h.b16 %v2774
  %v4662 = vunpack.c.l.b16 %v2775
  %v4663 = vunpack.c.h.b16 %v2775
  %v4664 = vunpack.c.l.b16 %v2776
  %v4665 = vunpack.c.l.b16 %v2777
  %v4666 = vunpack.c.h.b16 %v2777
  %v4667 = vunpack.c.l.b16 %v2778
  %v4668 = vunpack.c.h.b16 %v2778
  %v4669 = vunpack.c.l.b16 %v2779
  %v4670 = vunpack.c.l.b16 %v2780
  %v4671 = vunpack.c.h.b16 %v2780
  %v4672 = vunpack.c.l.b16 %v2781
  %v4673 = vunpack.c.h.b16 %v2781
  %v4674 = vunpack.c.l.b16 %v2782
  %v4675 = vunpack.c.l.b16 %v2783
  %v4676 = vunpack.c.h.b16 %v2783
  %v4677 = vunpack.c.l.b16 %v2784
  %v4678 = vunpack.c.h.b16 %v2784
  %v4679 = vunpack.c.l.b16 %v2785
  %v4680 = vunpack.c.l.b16 %v2786
  %v4681 = vunpack.c.h.b16 %v2786
  %v4682 = vunpack.c.l.b16 %v2787
  %v4683 = vunpack.c.h.b16 %v2787
  %v4684 = vunpack.c.l.b16 %v2788
  %v4685 = vunpack.c.l.b16 %v2789
  %v4686 = vunpack.c.h.b16 %v2789
  %v4687 = vunpack.c.l.b16 %v2790
  %v4688 = vunpack.c.h.b16 %v2790
  %v4689 = vunpack.c.l.b16 %v2791
  %v4690 = vunpack.c.l.b16 %v2792
  %v4691 = vunpack.c.h.b16 %v2792
  %v4692 = vunpack.c.l.b16 %v2793
  %v4693 = vunpack.c.h.b16 %v2793
  %v4694 = vunpack.c.l.b16 %v2794
  %v4695 = vunpack.c.l.b16 %v2795
  %v4696 = vunpack.c.h.b16 %v2795
  %v4697 = vunpack.c.l.b16 %v2796
  %v4698 = vunpack.c.h.b16 %v2796
  %v4699 = vunpack.c.l.b16 %v2797
  %v4700 = vunpack.c.l.b16 %v2798
  %v4701 = vunpack.c.h.b16 %v2798
  %v4702 = vunpack.c.l.b16 %v2799
  %v4703 = vunpack.c.h.b16 %v2799
  %v4704 = vunpack.c.l.b16 %v2800
  %v4705 = vunpack.c.l.b16 %v2801
  %v4706 = vunpack.c.h.b16 %v2801
  %v4707 = vunpack.c.l.b16 %v2802
  %v4708 = vunpack.c.h.b16 %v2802
  %v4709 = vunpack.c.l.b16 %v2803
  %v4710 = vunpack.c.l.b16 %v2804
  %v4711 = vunpack.c.h.b16 %v2804
  %v4712 = vunpack.c.l.b16 %v2805
  %v4713 = vunpack.c.h.b16 %v2805
  %v4714 = vunpack.c.l.b16 %v2806
  %v4715 = vunpack.c.l.b16 %v2807
  %v4716 = vunpack.c.h.b16 %v2807
  %v4717 = vunpack.c.l.b16 %v2808
  %v4718 = vunpack.c.h.b16 %v2808
  %v4719 = vunpack.c.l.b16 %v2809
  %v4720 = vunpack.c.l.b16 %v2810
  %v4721 = vunpack.c.h.b16 %v2810
  %v4722 = vunpack.c.l.b16 %v2811
  %v4723 = vunpack.c.h.b16 %v2811
  %v4724 = vunpack.c.l.b16 %v2812
  %v4725 = vunpack.c.l.b16 %v2813
  %v4726 = vunpack.c.h.b16 %v2813
  %v4727 = vunpack.c.l.b16 %v2814
  %v4728 = vunpack.c.h.b16 %v2814
  %v4729 = vunpack.c.l.b16 %v2815
  %v4730 = vunpack.c.l.b16 %v2816
  %v4731 = vunpack.c.h.b16 %v2816
  %v4732 = vunpack.c.l.b16 %v2817
  %v4733 = vunpack.c.h.b16 %v2817
  %v4734 = vunpack.c.l.b16 %v2818
  %v4735 = vunpack.c.l.b16 %v2819
  %v4736 = vunpack.c.h.b16 %v2819
  %v4737 = vunpack.c.l.b16 %v2820
  %v4738 = vunpack.c.h.b16 %v2820
  %v4739 = vunpack.c.l.b16 %v2821
  %v4740 = vunpack.c.l.b16 %v2822
  %v4741 = vunpack.c.h.b16 %v2822
  %v4742 = vunpack.c.l.b16 %v2823
  %v4743 = vunpack.c.h.b16 %v2823
  %v4744 = vunpack.c.l.b16 %v2824
  %v4745 = vunpack.c.l.b16 %v2825
  %v4746 = vunpack.c.h.b16 %v2825
  %v4747 = vunpack.c.l.b16 %v2826
  %v4748 = vunpack.c.h.b16 %v2826
  %v4749 = vunpack.c.l.b16 %v2827
  %v4750 = vunpack.c.l.b16 %v2828
  %v4751 = vunpack.c.h.b16 %v2828
  %v4752 = vunpack.c.l.b16 %v2829
  %v4753 = vunpack.c.h.b16 %v2829
  %v4754 = vunpack.c.l.b16 %v2830
  %v4755 = vunpack.c.l.b16 %v2831
  %v4756 = vunpack.c.h.b16 %v2831
  %v4757 = vunpack.c.l.b16 %v2832
  %v4758 = vunpack.c.h.b16 %v2832
  %v4759 = vunpack.c.l.b16 %v2833
  %v4760 = vunpack.c.l.b16 %v2834
  %v4761 = vunpack.c.h.b16 %v2834
  %v4762 = vunpack.c.l.b16 %v2835
  %v4763 = vunpack.c.h.b16 %v2835
  %v4764 = vunpack.c.l.b16 %v2836
  %v4765 = vunpack.c.l.b16 %v2837
  %v4766 = vunpack.c.h.b16 %v2837
  %v4767 = vunpack.c.l.b16 %v2838
  %v4768 = vunpack.c.h.b16 %v2838
  %v4769 = vunpack.c.l.b16 %v2839
  %v4770 = vunpack.c.l.b16 %v2840
  %v4771 = vunpack.c.h.b16 %v2840
  %v4772 = vunpack.c.l.b16 %v2841
  %v4773 = vunpack.c.h.b16 %v2841
  %v4774 = vunpack.c.l.b16 %v2842
  %v4775 = vunpack.c.l.b16 %v2843
  %v4776 = vunpack.c.h.b16 %v2843
  %v4777 = vunpack.c.l.b16 %v2844
  %v4778 = vunpack.c.h.b16 %v2844
  %v4779 = vunpack.c.l.b16 %v2845
  %v4780 = vunpack.c.l.b16 %v2846
  %v4781 = vunpack.c.h.b16 %v2846
  %v4782 = vunpack.c.l.b16 %v2847
  %v4783 = vunpack.c.h.b16 %v2847
  %v4784 = vunpack.c.l.b16 %v2848
  %v4785 = vunpack.c.l.b16 %v2849
  %v4786 = vunpack.c.h.b16 %v2849
  %v4787 = vunpack.c.l.b16 %v2850
  %v4788 = vunpack.c.h.b16 %v2850
  %v4789 = vunpack.c.l.b16 %v2851
  %v4790 = vunpack.c.l.b16 %v2852
  %v4791 = vunpack.c.h.b16 %v2852
  %v4792 = vunpack.c.l.b16 %v2853
  %v4793 = vunpack.c.h.b16 %v2853
  %v4794 = vunpack.c.l.b16 %v2854
  %v4795 = vunpack.c.l.b16 %v2855
  %v4796 = vunpack.c.h.b16 %v2855
  %v4797 = vunpack.c.l.b16 %v2856
  %v4798 = vunpack.c.h.b16 %v2856
  %v4799 = vunpack.c.l.b16 %v2857
  %v4800 = vunpack.c.l.b16 %v2858
  %v4801 = vunpack.c.h.b16 %v2858
  %v4802 = vunpack.c.l.b16 %v2859
  %v4803 = vunpack.c.h.b16 %v2859
  %v4804 = vunpack.c.l.b16 %v2860
  %v4805 = vunpack.c.l.b16 %v2861
  %v4806 = vunpack.c.h.b16 %v2861
  %v4807 = vunpack.c.l.b16 %v2862
  %v4808 = vunpack.c.h.b16 %v2862
  %v4809 = vunpack.c.l.b16 %v2863
  %v4810 = vunpack.c.l.b16 %v2864
  %v4811 = vunpack.c.h.b16 %v2864
  %v4812 = vunpack.c.l.b16 %v2865
  %v4813 = vunpack.c.h.b16 %v2865
  %v4814 = vunpack.c.l.b16 %v2866
  %v4815 = vunpack.c.l.b16 %v2867
  %v4816 = vunpack.c.h.b16 %v2867
  %v4817 = vunpack.c.l.b16 %v2868
  %v4818 = vunpack.c.h.b16 %v2868
  %v4819 = vunpack.c.l.b16 %v2869
  %v4820 = vunpack.c.l.b16 %v2870
  %v4821 = vunpack.c.h.b16 %v2870
  %v4822 = vunpack.c.l.b16 %v2871
  %v4823 = vunpack.c.h.b16 %v2871
  %v4824 = vunpack.c.l.b16 %v2872
  %v4825 = vunpack.c.l.b16 %v2873
  %v4826 = vunpack.c.h.b16 %v2873
  %v4827 = vunpack.c.l.b16 %v2874
  %v4828 = vunpack.c.h.b16 %v2874
  %v4829 = vunpack.c.l.b16 %v2875
  %v4830 = vunpack.c.l.b16 %v2876
  %v4831 = vunpack.c.h.b16 %v2876
  %v4832 = vunpack.c.l.b16 %v2877
  %v4833 = vunpack.c.h.b16 %v2877
  %v4834 = vunpack.c.l.b16 %v2878
  %v4835 = vunpack.c.l.b16 %v2879
  %v4836 = vunpack.c.h.b16 %v2879
  %v4837 = vunpack.c.l.b16 %v2880
  %v4838 = vunpack.c.h.b16 %v2880
  %v4839 = vunpack.c.l.b16 %v2881
  %v4840 = vunpack.c.l.b16 %v2882
  %v4841 = vunpack.c.h.b16 %v2882
  %v4842 = vunpack.c.l.b16 %v2883
  %v4843 = vunpack.c.h.b16 %v2883
  %v4844 = vunpack.c.l.b16 %v2884
  %v4845 = vunpack.c.l.b16 %v2885
  %v4846 = vunpack.c.h.b16 %v2885
  %v4847 = vunpack.c.l.b16 %v2886
  %v4848 = vunpack.c.h.b16 %v2886
  %v4849 = vunpack.c.l.b16 %v2887
  %v4850 = vunpack.c.l.b16 %v2888
  %v4851 = vunpack.c.h.b16 %v2888
  %v4852 = vunpack.c.l.b16 %v2889
  %v4853 = vunpack.c.h.b16 %v2889
  %v4854 = vunpack.c.l.b16 %v2890
  %v4855 = vunpack.c.l.b16 %v2891
  %v4856 = vunpack.c.h.b16 %v2891
  %v4857 = vunpack.c.l.b16 %v2892
  %v4858 = vunpack.c.h.b16 %v2892
  %v4859 = vunpack.c.l.b16 %v2893
  %v4860 = vunpack.c.l.b16 %v2894
  %v4861 = vunpack.c.h.b16 %v2894
  %v4862 = vunpack.c.l.b16 %v2895
  %v4863 = vunpack.c.h.b16 %v2895
  %v4864 = vunpack.c.l.b16 %v2896
  %v4865 = vunpack.c.l.b16 %v2897
  %v4866 = vunpack.c.h.b16 %v2897
  %v4867 = vunpack.c.l.b16 %v2898
  %v4868 = vunpack.c.h.b16 %v2898
  %v4869 = vunpack.c.l.b16 %v2899
  %v4870 = vunpack.c.l.b16 %v2900
  %v4871 = vunpack.c.h.b16 %v2900
  %v4872 = vunpack.c.l.b16 %v2901
  %v4873 = vunpack.c.h.b16 %v2901
  %v4874 = vunpack.c.l.b16 %v2902
  %v4875 = vunpack.c.l.b16 %v2903
  %v4876 = vunpack.c.h.b16 %v2903
  %v4877 = vunpack.c.l.b16 %v2904
  %v4878 = vunpack.c.h.b16 %v2904
  %v4879 = vunpack.c.l.b16 %v2905
  %v4880 = vunpack.c.l.b16 %v2906
  %v4881 = vunpack.c.h.b16 %v2906
  %v4882 = vunpack.c.l.b16 %v2907
  %v4883 = vunpack.c.h.b16 %v2907
  %v4884 = vunpack.c.l.b16 %v2908
  %v4885 = vunpack.c.l.b16 %v2909
  %v4886 = vunpack.c.h.b16 %v2909
  %v4887 = vunpack.c.l.b16 %v2910
  %v4888 = vunpack.c.h.b16 %v2910
  %v4889 = vunpack.c.l.b16 %v2911
  %v4890 = vunpack.c.l.b16 %v2912
  %v4891 = vunpack.c.h.b16 %v2912
  %v4892 = vunpack.c.l.b16 %v2913
  %v4893 = vunpack.c.h.b16 %v2913
  %v4894 = vunpack.c.l.b16 %v2914
  %v4895 = vunpack.c.l.b16 %v2915
  %v4896 = vunpack.c.h.b16 %v2915
  %v4897 = vunpack.c.l.b16 %v2916
  %v4898 = vunpack.c.h.b16 %v2916
  %v4899 = vunpack.c.l.b16 %v2917
  %v4900 = vunpack.c.l.b16 %v2918
  %v4901 = vunpack.c.h.b16 %v2918
  %v4902 = vunpack.c.l.b16 %v2919
  %v4903 = vunpack.c.h.b16 %v2919
  %v4904 = vunpack.c.l.b16 %v2920
  %v4905 = vunpack.c.l.b16 %v2921
  %v4906 = vunpack.c.h.b16 %v2921
  %v4907 = vunpack.c.l.b16 %v2922
  %v4908 = vunpack.c.h.b16 %v2922
  %v4909 = vunpack.c.l.b16 %v2923
  %v4910 = vunpack.c.l.b16 %v2924
  %v4911 = vunpack.c.h.b16 %v2924
  %v4912 = vunpack.c.l.b16 %v2925
  %v4913 = vunpack.c.h.b16 %v2925
  %v4914 = vunpack.c.l.b16 %v2926
  %v4915 = vunpack.c.l.b16 %v2927
  %v4916 = vunpack.c.h.b16 %v2927
  %v4917 = vunpack.c.l.b16 %v2928
  %v4918 = vunpack.c.h.b16 %v2928
  %v4919 = vunpack.c.l.b16 %v2929
  %v4920 = vunpack.c.l.b16 %v2930
  %v4921 = vunpack.c.h.b16 %v2930
  %v4922 = vunpack.c.l.b16 %v2931
  %v4923 = vunpack.c.h.b16 %v2931
  %v4924 = vunpack.c.l.b16 %v2932
  %v4925 = vunpack.c.l.b16 %v2933
  %v4926 = vunpack.c.h.b16 %v2933
  %v4927 = vunpack.c.l.b16 %v2934
  %v4928 = vunpack.c.h.b16 %v2934
  %v4929 = vunpack.c.l.b16 %v2935
  %v4930 = vunpack.c.l.b16 %v2936
  %v4931 = vunpack.c.h.b16 %v2936
  %v4932 = vunpack.c.l.b16 %v2937
  %v4933 = vunpack.c.h.b16 %v2937
  %v4934 = vunpack.c.l.b16 %v2938
  %v4935 = vunpack.c.l.b16 %v2939
  %v4936 = vunpack.c.h.b16 %v2939
  %v4937 = vunpack.c.l.b16 %v2940
  %v4938 = vunpack.c.h.b16 %v2940
  %v4939 = vunpack.c.l.b16 %v2941
  %v4940 = vunpack.c.l.b16 %v2942
  %v4941 = vunpack.c.h.b16 %v2942
  %v4942 = vunpack.c.l.b16 %v2943
  %v4943 = vunpack.c.h.b16 %v2943
  %v4944 = vunpack.c.l.b16 %v2944
  %v4945 = vunpack.c.l.b16 %v2945
  %v4946 = vunpack.c.h.b16 %v2945
  %v4947 = vunpack.c.l.b16 %v2946
  %v4948 = vunpack.c.h.b16 %v2946
  %v4949 = vunpack.c.l.b16 %v2947
  %v4950 = vunpack.c.l.b16 %v2948
  %v4951 = vunpack.c.h.b16 %v2948
  %v4952 = vunpack.c.l.b16 %v2949
  %v4953 = vunpack.c.h.b16 %v2949
  %v4954 = vunpack.c.l.b16 %v2950
  %v4955 = vunpack.c.l.b16 %v2951
  %v4956 = vunpack.c.h.b16 %v2951
  %v4957 = vunpack.c.l.b16 %v2952
  %v4958 = vunpack.c.h.b16 %v2952
  %v4959 = vunpack.c.l.b16 %v2953
  %v4960 = vunpack.c.l.b16 %v2954
  %v4961 = vunpack.c.h.b16 %v2954
  %v4962 = vunpack.c.l.b16 %v2955
  %v4963 = vunpack.c.h.b16 %v2955
  %v4964 = vunpack.c.l.b16 %v2956
  %v4965 = vunpack.c.l.b16 %v2957
  %v4966 = vunpack.c.h.b16 %v2957
  %v4967 = vunpack.c.l.b16 %v2958
  %v4968 = vunpack.c.h.b16 %v2958
  %v4969 = vunpack.c.l.b16 %v2959
  %v4970 = vunpack.c.l.b16 %v2960
  %v4971 = vunpack.c.h.b16 %v2960
  %v4972 = vunpack.c.l.b16 %v2961
  %v4973 = vunpack.c.h.b16 %v2961
  %v4974 = vunpack.c.l.b16 %v2962
  %v4975 = vunpack.c.l.b16 %v2963
  %v4976 = vunpack.c.h.b16 %v2963
  %v4977 = vunpack.c.l.b16 %v2964
  %v4978 = vunpack.c.h.b16 %v2964
  %v4979 = vunpack.c.l.b16 %v2965
  %v4980 = vunpack.c.l.b16 %v2966
  %v4981 = vunpack.c.h.b16 %v2966
  %v4982 = vunpack.c.l.b16 %v2967
  %v4983 = vunpack.c.h.b16 %v2967
  %v4984 = vunpack.c.l.b16 %v2968
  %v4985 = vunpack.c.l.b16 %v2969
  %v4986 = vunpack.c.h.b16 %v2969
  %v4987 = vunpack.c.l.b16 %v2970
  %v4988 = vunpack.c.h.b16 %v2970
  %v4989 = vunpack.c.l.b16 %v2971
  %v4990 = vunpack.c.l.b16 %v2972
  %v4991 = vunpack.c.h.b16 %v2972
  %v4992 = vunpack.c.l.b16 %v2973
  %v4993 = vunpack.c.h.b16 %v2973
  %v4994 = vunpack.c.l.b16 %v2974
  %v4995 = vunpack.c.l.b16 %v2975
  %v4996 = vunpack.c.h.b16 %v2975
  %v4997 = vunpack.c.l.b16 %v2976
  %v4998 = vunpack.c.h.b16 %v2976
  %v4999 = vunpack.c.l.b16 %v2977
  %v5000 = vunpack.c.l.b16 %v2978
  %v5001 = vunpack.c.h.b16 %v2978
  %v5002 = vunpack.c.l.b16 %v2979
  %v5003 = vunpack.c.h.b16 %v2979
  %v5004 = vunpack.c.l.b16 %v2980
  %v5005 = vunpack.c.l.b16 %v2981
  %v5006 = vunpack.c.h.b16 %v2981
  %v5007 = vunpack.c.l.b16 %v2982
  %v5008 = vunpack.c.h.b16 %v2982
  %v5009 = vunpack.c.l.b16 %v2983
  %v5010 = vunpack.c.l.b16 %v2984
  %v5011 = vunpack.c.h.b16 %v2984
  %v5012 = vunpack.c.l.b16 %v2985
  %v5013 = vunpack.c.h.b16 %v2985
  %v5014 = vunpack.c.l.b16 %v2986
  %v5015 = vunpack.c.l.b16 %v2987
  %v5016 = vunpack.c.h.b16 %v2987
  %v5017 = vunpack.c.l.b16 %v2988
  %v5018 = vunpack.c.h.b16 %v2988
  %v5019 = vunpack.c.l.b16 %v2989
  %v5020 = vunpack.c.l.b16 %v2990
  %v5021 = vunpack.c.h.b16 %v2990
  %v5022 = vunpack.c.l.b16 %v2991
  %v5023 = vunpack.c.h.b16 %v2991
  %v5024 = vunpack.c.l.b16 %v2992
  %v5025 = vunpack.c.l.b16 %v2993
  %v5026 = vunpack.c.h.b16 %v2993
  %v5027 = vunpack.c.l.b16 %v2994
  %v5028 = vunpack.c.h.b16 %v2994
  %v5029 = vunpack.c.l.b16 %v2995
  %v5030 = vunpack.c.l.b16 %v2996
  %v5031 = vunpack.c.h.b16 %v2996
  %v5032 = vunpack.c.l.b16 %v2997
  %v5033 = vunpack.c.h.b16 %v2997
  %v5034 = vunpack.c.l.b16 %v2998
  %v5035 = vunpack.c.l.b16 %v2999
  %v5036 = vunpack.c.h.b16 %v2999
  %v5037 = vunpack.c.l.b16 %v3000
  %v5038 = vunpack.c.h.b16 %v3000
  %v5039 = vunpack.c.l.b16 %v3001
  %v5040 = vunpack.c.l.b16 %v3002
  %v5041 = vunpack.c.h.b16 %v3002
  %v5042 = vunpack.c.l.b16 %v3003
  %v5043 = vunpack.c.h.b16 %v3003
  %v5044 = vunpack.c.l.b16 %v3004
  %v5045 = vunpack.c.l.b16 %v3005
  %v5046 = vunpack.c.h.b16 %v3005
  %v5047 = vunpack.c.l.b16 %v3006
  %v5048 = vunpack.c.h.b16 %v3006
  %v5049 = vunpack.c.l.b16 %v3007
  %v5050 = vunpack.c.l.b16 %v3008
  %v5051 = vunpack.c.h.b16 %v3008
  %v5052 = vunpack.c.l.b16 %v3009
  %v5053 = vunpack.c.h.b16 %v3009
  %v5054 = vunpack.c.l.b16 %v3010
  %v5055 = vunpack.c.l.b16 %v3011
  %v5056 = vunpack.c.h.b16 %v3011
  %v5057 = vunpack.c.l.b16 %v3012
  %v5058 = vunpack.c.h.b16 %v3012
  %v5059 = vunpack.c.l.b16 %v3013
  %v5060 = vunpack.c.l.b16 %v3014
  %v5061 = vunpack.c.h.b16 %v3014
  %v5062 = vunpack.c.l.b16 %v3015
  %v5063 = vunpack.c.h.b16 %v3015
  %v5064 = vunpack.c.l.b16 %v3016
  %v5065 = vunpack.c.l.b16 %v3017
  %v5066 = vunpack.c.h.b16 %v3017
  %v5067 = vunpack.c.l.b16 %v3018
  %v5068 = vunpack.c.h.b16 %v3018
  %v5069 = vunpack.c.l.b16 %v3019
  %v5070 = vunpack.c.l.b16 %v3020
  %v5071 = vunpack.c.h.b16 %v3020
  %v5072 = vunpack.c.l.b16 %v3021
  %v5073 = vunpack.c.h.b16 %v3021
  %v5074 = vunpack.c.l.b16 %v3022
  %v5075 = vunpack.c.l.b16 %v3023
  %v5076 = vunpack.c.h.b16 %v3023
  %v5077 = vunpack.c.l.b16 %v3024
  %v5078 = vunpack.c.h.b16 %v3024
  %v5079 = vunpack.c.l.b16 %v3025
  %v5080 = vunpack.c.l.b16 %v3026
  %v5081 = vunpack.c.h.b16 %v3026
  %v5082 = vunpack.c.l.b16 %v3027
  %v5083 = vunpack.c.h.b16 %v3027
  %v5084 = vunpack.c.l.b16 %v3028
  %v5085 = vunpack.c.l.b16 %v3029
  %v5086 = vunpack.c.h.b16 %v3029
  %v5087 = vunpack.c.l.b16 %v3030
  %v5088 = vunpack.c.h.b16 %v3030
  %v5089 = vunpack.c.l.b16 %v3031
  %v5090 = vunpack.c.l.b16 %v3032
  %v5091 = vunpack.c.h.b16 %v3032
  %v5092 = vunpack.c.l.b16 %v3033
  %v5093 = vunpack.c.h.b16 %v3033
  %v5094 = vunpack.c.l.b16 %v3034
  %v5095 = vunpack.c.l.b16 %v3035
  %v5096 = vunpack.c.h.b16 %v3035
  %v5097 = vunpack.c.l.b16 %v3036
  %v5098 = vunpack.c.h.b16 %v3036
  %v5099 = vunpack.c.l.b16 %v3037
  %v5100 = vunpack.c.l.b16 %v3038
  %v5101 = vunpack.c.h.b16 %v3038
  %v5102 = vunpack.c.l.b16 %v3039
  %v5103 = vunpack.c.h.b16 %v3039
  %v5104 = vunpack.c.l.b16 %v3040
  %v5105 = vunpack.c.l.b16 %v3041
  %v5106 = vunpack.c.h.b16 %v3041
  %v5107 = vunpack.c.l.b16 %v3042
  %v5108 = vunpack.c.h.b16 %v3042
  %v5109 = vunpack.c.l.b16 %v3043
  %v5110 = vunpack.c.l.b16 %v3044
  %v5111 = vunpack.c.h.b16 %v3044
  %v5112 = vunpack.c.l.b16 %v3045
  %v5113 = vunpack.c.h.b16 %v3045
  %v5114 = vunpack.c.l.b16 %v3046
  %v5115 = vunpack.c.l.b16 %v3047
  %v5116 = vunpack.c.h.b16 %v3047
  %v5117 = vunpack.c.l.b16 %v3048
  %v5118 = vunpack.c.h.b16 %v3048
  %v5119 = vunpack.c.l.b16 %v3049
  %v5120 = vunpack.c.l.b16 %v3050
  %v5121 = vunpack.c.h.b16 %v3050
  %v5122 = vunpack.c.l.b16 %v3051
  %v5123 = vunpack.c.h.b16 %v3051
  %v5124 = vunpack.c.l.b16 %v3052
  %v5125 = vunpack.c.l.b16 %v3053
  %v5126 = vunpack.c.h.b16 %v3053
  %v5127 = vunpack.c.l.b16 %v3054
  %v5128 = vunpack.c.h.b16 %v3054
  %v5129 = vunpack.c.l.b16 %v3055
  %v5130 = vunpack.c.l.b16 %v3056
  %v5131 = vunpack.c.h.b16 %v3056
  %v5132 = vunpack.c.l.b16 %v3057
  %v5133 = vunpack.c.h.b16 %v3057
  %v5134 = vunpack.c.l.b16 %v3058
  %v5135 = vunpack.c.l.b16 %v3059
  %v5136 = vunpack.c.h.b16 %v3059
  %v5137 = vunpack.c.l.b16 %v3060
  %v5138 = vunpack.c.h.b16 %v3060
  %v5139 = vunpack.c.l.b16 %v3061
  %v5140 = vunpack.c.l.b16 %v3062
  %v5141 = vunpack.c.h.b16 %v3062
  %v5142 = vunpack.c.l.b16 %v3063
  %v5143 = vunpack.c.h.b16 %v3063
  %v5144 = vunpack.c.l.b16 %v3064
  %v5145 = vunpack.c.l.b16 %v3065
  %v5146 = vunpack.c.h.b16 %v3065
  %v5147 = vunpack.c.l.b16 %v3066
  %v5148 = vunpack.c.h.b16 %v3066
  %v5149 = vunpack.c.l.b16 %v3067
  %v5150 = vunpack.c.l.b16 %v3068
  %v5151 = vunpack.c.h.b16 %v3068
  %v5152 = vunpack.c.l.b16 %v3069
  %v5153 = vunpack.c.h.b16 %v3069
  %v5154 = vunpack.c.l.b16 %v3070
  %v5155 = vunpack.c.l.b16 %v3071
  %v5156 = vunpack.c.h.b16 %v3071
  %v5157 = vunpack.c.l.b16 %v3072
  %v5158 = vunpack.c.h.b16 %v3072
  %v5159 = vunpack.c.l.b16 %v3073
  %v5160 = vunpack.c.l.b16 %v3074
  %v5161 = vunpack.c.h.b16 %v3074
  %v5162 = vunpack.c.l.b16 %v3075
  %v5163 = vunpack.c.h.b16 %v3075
  %v5164 = vunpack.c.l.b16 %v3076
  %v5165 = vunpack.c.l.b16 %v3077
  %v5166 = vunpack.c.h.b16 %v3077
  %v5167 = vunpack.c.l.b16 %v3078
  %v5168 = vunpack.c.h.b16 %v3078
  %v5169 = vunpack.c.l.b16 %v3079
  %v5170 = vunpack.c.l.b16 %v3080
  %v5171 = vunpack.c.h.b16 %v3080
  %v5172 = vunpack.c.l.b16 %v3081
  %v5173 = vunpack.c.h.b16 %v3081
  %v5174 = vunpack.c.l.b16 %v3082
  %v5175 = vunpack.c.l.b16 %v3083
  %v5176 = vunpack.c.h.b16 %v3083
  %v5177 = vunpack.c.l.b16 %v3084
  %v5178 = vunpack.c.h.b16 %v3084
  %v5179 = vunpack.c.l.b16 %v3085
  %v5180 = vunpack.c.l.b16 %v3086
  %v5181 = vunpack.c.h.b16 %v3086
  %v5182 = vunpack.c.l.b16 %v3087
  %v5183 = vunpack.c.h.b16 %v3087
  %v5184 = vunpack.c.l.b16 %v3088
  %v5185 = vunpack.c.l.b16 %v3089
  %v5186 = vunpack.c.h.b16 %v3089
  %v5187 = vunpack.c.l.b16 %v3090
  %v5188 = vunpack.c.h.b16 %v3090
  %v5189 = vunpack.c.l.b16 %v3091
  %v5190 = vunpack.c.l.b16 %v3092
  %v5191 = vunpack.c.h.b16 %v3092
  %v5192 = vunpack.c.l.b16 %v3093
  %v5193 = vunpack.c.h.b16 %v3093
  %v5194 = vunpack.c.l.b16 %v3094
  %v5195 = vunpack.c.l.b16 %v3095
  %v5196 = vunpack.c.h.b16 %v3095
  %v5197 = vunpack.c.l.b16 %v3096
  %v5198 = vunpack.c.h.b16 %v3096
  %v5199 = vunpack.c.l.b16 %v3097
  %v5200 = vunpack.c.l.b16 %v3098
  %v5201 = vunpack.c.h.b16 %v3098
  %v5202 = vunpack.c.l.b16 %v3099
  %v5203 = vunpack.c.h.b16 %v3099
  %v5204 = vunpack.c.l.b16 %v3100
  %v5205 = vunpack.c.l.b16 %v3101
  %v5206 = vunpack.c.h.b16 %v3101
  %v5207 = vunpack.c.l.b16 %v3102
  %v5208 = vunpack.c.h.b16 %v3102
  %v5209 = vunpack.c.l.b16 %v3103
  %v5210 = vunpack.c.l.b16 %v3104
  %v5211 = vunpack.c.h.b16 %v3104
  %v5212 = vunpack.c.l.b16 %v3105
  %v5213 = vunpack.c.h.b16 %v3105
  %v5214 = vunpack.c.l.b16 %v3106
  %v5215 = vunpack.c.l.b16 %v3107
  %v5216 = vunpack.c.h.b16 %v3107
  %v5217 = vunpack.c.l.b16 %v3108
  %v5218 = vunpack.c.h.b16 %v3108
  %v5219 = vunpack.c.l.b16 %v3109
  %v5220 = vunpack.c.l.b16 %v3110
  %v5221 = vunpack.c.h.b16 %v3110
  %v5222 = vunpack.c.l.b16 %v3111
  %v5223 = vunpack.c.h.b16 %v3111
  %v5224 = vunpack.c.l.b16 %v3112
  %v5225 = vunpack.c.l.b16 %v3113
  %v5226 = vunpack.c.h.b16 %v3113
  %v5227 = vunpack.c.l.b16 %v3114
  %v5228 = vunpack.c.h.b16 %v3114
  %v5229 = vunpack.c.l.b16 %v3115
  %v5230 = vunpack.c.l.b16 %v3116
  %v5231 = vunpack.c.h.b16 %v3116
  %v5232 = vunpack.c.l.b16 %v3117
  %v5233 = vunpack.c.h.b16 %v3117
  %v5234 = vunpack.c.l.b16 %v3118
  %v5235 = vunpack.c.l.b16 %v3119
  %v5236 = vunpack.c.h.b16 %v3119
  %v5237 = vunpack.c.l.b16 %v3120
  %v5238 = vunpack.c.h.b16 %v3120
  %v5239 = vunpack.c.l.b16 %v3121
  %v5240 = vunpack.c.l.b16 %v3122
  %v5241 = vunpack.c.h.b16 %v3122
  %v5242 = vunpack.c.l.b16 %v3123
  %v5243 = vunpack.c.h.b16 %v3123
  %v5244 = vunpack.c.l.b16 %v3124
  %v5245 = vunpack.c.l.b16 %v3125
  %v5246 = vunpack.c.h.b16 %v3125
  %v5247 = vunpack.c.l.b16 %v3126
  %v5248 = vunpack.c.h.b16 %v3126
  %v5249 = vunpack.c.l.b16 %v3127
  %v5250 = vunpack.c.l.b16 %v3128
  %v5251 = vunpack.c.h.b16 %v3128
  %v5252 = vunpack.c.l.b16 %v3129
  %v5253 = vunpack.c.h.b16 %v3129
  %v5254 = vunpack.c.l.b16 %v3130
  %v5255 = vunpack.c.l.b16 %v3131
  %v5256 = vunpack.c.h.b16 %v3131
  %v5257 = vunpack.c.l.b16 %v3132
  %v5258 = vunpack.c.h.b16 %v3132
  %v5259 = vunpack.c.l.b16 %v3133
  %v5260 = vunpack.c.l.b16 %v3134
  %v5261 = vunpack.c.h.b16 %v3134
  %v5262 = vunpack.c.l.b16 %v3135
  %v5263 = vunpack.c.h.b16 %v3135
  %v5264 = vunpack.c.l.b16 %v3136
  %v5265 = vunpack.c.l.b16 %v3137
  %v5266 = vunpack.c.h.b16 %v3137
  %v5267 = vunpack.c.l.b16 %v3138
  %v5268 = vunpack.c.h.b16 %v3138
  %v5269 = vunpack.c.l.b16 %v3139
  %v5270 = vunpack.c.l.b16 %v3140
  %v5271 = vunpack.c.h.b16 %v3140
  %v5272 = vunpack.c.l.b16 %v3141
  %v5273 = vunpack.c.h.b16 %v3141
  %v5274 = vunpack.c.l.b16 %v3142
  %v5275 = vunpack.c.l.b16 %v3143
  %v5276 = vunpack.c.h.b16 %v3143
  %v5277 = vunpack.c.l.b16 %v3144
  %v5278 = vunpack.c.h.b16 %v3144
  %v5279 = vunpack.c.l.b16 %v3145
  %v5280 = vunpack.c.l.b16 %v3146
  %v5281 = vunpack.c.h.b16 %v3146
  %v5282 = vunpack.c.l.b16 %v3147
  %v5283 = vunpack.c.h.b16 %v3147
  %v5284 = vunpack.c.l.b16 %v3148
  %v5285 = vunpack.c.l.b16 %v3149
  %v5286 = vunpack.c.h.b16 %v3149
  %v5287 = vunpack.c.l.b16 %v3150
  %v5288 = vunpack.c.h.b16 %v3150
  %v5289 = vunpack.c.l.b16 %v3151
  %v5290 = vunpack.c.l.b16 %v3152
  %v5291 = vunpack.c.h.b16 %v3152
  %v5292 = vunpack.c.l.b16 %v3153
  %v5293 = vunpack.c.h.b16 %v3153
  %v5294 = vunpack.c.l.b16 %v3154
  %v5295 = vunpack.c.l.b16 %v3155
  %v5296 = vunpack.c.h.b16 %v3155
  %v5297 = vunpack.c.l.b16 %v3156
  %v5298 = vunpack.c.h.b16 %v3156
  %v5299 = vunpack.c.l.b16 %v3157
  %v5300 = vunpack.c.l.b16 %v3158
  %v5301 = vunpack.c.h.b16 %v3158
  %v5302 = vunpack.c.l.b16 %v3159
  %v5303 = vunpack.c.h.b16 %v3159
  %v5304 = vunpack.c.l.b16 %v3160
  %v5305 = vunpack.c.l.b16 %v3161
  %v5306 = vunpack.c.h.b16 %v3161
  %v5307 = vunpack.c.l.b16 %v3162
  %v5308 = vunpack.c.h.b16 %v3162
  %v5309 = vunpack.c.l.b16 %v3163
  %v5310 = vunpack.c.l.b16 %v3164
  %v5311 = vunpack.c.h.b16 %v3164
  %v5312 = vunpack.c.l.b16 %v3165
  %v5313 = vunpack.c.h.b16 %v3165
  %v5314 = vunpack.c.l.b16 %v3166
  %v5315 = vunpack.c.l.b16 %v3167
  %v5316 = vunpack.c.h.b16 %v3167
  %v5317 = vunpack.c.l.b16 %v3168
  %v5318 = vunpack.c.h.b16 %v3168
  %v5319 = vunpack.c.l.b16 %v3169
  %v5320 = vunpack.c.l.b16 %v3170
  %v5321 = vunpack.c.h.b16 %v3170
  %v5322 = vunpack.c.l.b16 %v3171
  %v5323 = vunpack.c.h.b16 %v3171
  %v5324 = vunpack.c.l.b16 %v3172
  %v5325 = vunpack.c.l.b16 %v3173
  %v5326 = vunpack.c.h.b16 %v3173
  %v5327 = vunpack.c.l.b16 %v3174
  %v5328 = vunpack.c.h.b16 %v3174
  %v5329 = vunpack.c.l.b16 %v3175
  %v5330 = vunpack.c.l.b16 %v3176
  %v5331 = vunpack.c.h.b16 %v3176
  %v5332 = vunpack.c.l.b16 %v3177
  %v5333 = vunpack.c.h.b16 %v3177
  %v5334 = vunpack.c.l.b16 %v3178
  %v5335 = vunpack.c.l.b16 %v3179
  %v5336 = vunpack.c.h.b16 %v3179
  %v5337 = vunpack.c.l.b16 %v3180
  %v5338 = vunpack.c.h.b16 %v3180
  %v5339 = vunpack.c.l.b16 %v3181
  %v5340 = vunpack.c.l.b16 %v3182
  %v5341 = vunpack.c.h.b16 %v3182
  %v5342 = vunpack.c.l.b16 %v3183
  %v5343 = vunpack.c.h.b16 %v3183
  %v5344 = vunpack.c.l.b16 %v3184
  %v5345 = vunpack.c.l.b16 %v3185
  %v5346 = vunpack.c.h.b16 %v3185
  %v5347 = vunpack.c.l.b16 %v3186
  %v5348 = vunpack.c.h.b16 %v3186
  %v5349 = vunpack.c.l.b16 %v3187
  %v5350 = vunpack.c.l.b16 %v3188
  %v5351 = vunpack.c.h.b16 %v3188
  %v5352 = vunpack.c.l.b16 %v3189
  %v5353 = vunpack.c.h.b16 %v3189
  %v5354 = vunpack.c.l.b16 %v3190
  %v5355 = vunpack.c.l.b16 %v3191
  %v5356 = vunpack.c.h.b16 %v3191
  %v5357 = vunpack.c.l.b16 %v3192
  %v5358 = vunpack.c.h.b16 %v3192
  %v5359 = vunpack.c.l.b16 %v3193
  %v5360 = vunpack.c.l.b16 %v3194
  %v5361 = vunpack.c.h.b16 %v3194
  %v5362 = vunpack.c.l.b16 %v3195
  %v5363 = vunpack.c.h.b16 %v3195
  %v5364 = vunpack.c.l.b16 %v3196
  %v5365 = vunpack.c.l.b16 %v3197
  %v5366 = vunpack.c.h.b16 %v3197
  %v5367 = vunpack.c.l.b16 %v3198
  %v5368 = vunpack.c.h.b16 %v3198
  %v5369 = vunpack.c.l.b16 %v3199
  %v5370 = vunpack.c.l.b16 %v3200
  %v5371 = vunpack.c.h.b16 %v3200
  %v5372 = vunpack.c.l.b16 %v3201
  %v5373 = vunpack.c.h.b16 %v3201
  %v5374 = vunpack.c.l.b16 %v3202
  %v5375 = vunpack.c.l.b16 %v3203
  %v5376 = vunpack.c.h.b16 %v3203
  %v5377 = vunpack.c.l.b16 %v3204
  %v5378 = vunpack.c.h.b16 %v3204
  %v5379 = vunpack.c.l.b16 %v3205
  %v5380 = vunpack.c.l.b16 %v3206
  %v5381 = vunpack.c.h.b16 %v3206
  %v5382 = vunpack.c.l.b16 %v3207
  %v5383 = vunpack.c.h.b16 %v3207
  %v5384 = vunpack.c.l.b16 %v3208
  %v5385 = vunpack.c.l.b16 %v3209
  %v5386 = vunpack.c.h.b16 %v3209
  %v5387 = vunpack.c.l.b16 %v3210
  %v5388 = vunpack.c.h.b16 %v3210
  %v5389 = vunpack.c.l.b16 %v3211
  %v5390 = vunpack.c.l.b16 %v3212
  %v5391 = vunpack.c.h.b16 %v3212
  %v5392 = vunpack.c.l.b16 %v3213
  %v5393 = vunpack.c.h.b16 %v3213
  %v5394 = vunpack.c.l.b16 %v3214
  %v5395 = vunpack.c.l.b16 %v3215
  %v5396 = vunpack.c.h.b16 %v3215
  %v5397 = vunpack.c.l.b16 %v3216
  %v5398 = vunpack.c.h.b16 %v3216
  %v5399 = vunpack.c.l.b16 %v3217
  %v5400 = vunpack.c.l.b16 %v3218
  %v5401 = vunpack.c.h.b16 %v3218
  %v5402 = vunpack.c.l.b16 %v3219
  %v5403 = vunpack.c.h.b16 %v3219
  %v5404 = vunpack.c.l.b16 %v3220
  %v5405 = vunpack.c.l.b16 %v3221
  %v5406 = vunpack.c.h.b16 %v3221
  %v5407 = vunpack.c.l.b16 %v3222
  %v5408 = vunpack.c.h.b16 %v3222
  %v5409 = vunpack.c.l.b16 %v3223
  %v5410 = vunpack.c.l.b16 %v3224
  %v5411 = vunpack.c.h.b16 %v3224
  %v5412 = vunpack.c.l.b16 %v3225
  %v5413 = vunpack.c.h.b16 %v3225
  %v5414 = vunpack.c.l.b16 %v3226
  %v5415 = vunpack.c.l.b16 %v3227
  %v5416 = vunpack.c.h.b16 %v3227
  %v5417 = vunpack.c.l.b16 %v3228
  %v5418 = vunpack.c.h.b16 %v3228
  %v5419 = vunpack.c.l.b16 %v3229
  %v5420 = vunpack.c.l.b16 %v3230
  %v5421 = vunpack.c.h.b16 %v3230
  %v5422 = vunpack.c.l.b16 %v3231
  %v5423 = vunpack.c.h.b16 %v3231
  %v5424 = vunpack.c.l.b16 %v3232
  %v5425 = vunpack.c.l.b16 %v3233
  %v5426 = vunpack.c.h.b16 %v3233
  %v5427 = vunpack.c.l.b16 %v3234
  %v5428 = vunpack.c.h.b16 %v3234
  %v5429 = vunpack.c.l.b16 %v3235
  %v5430 = vunpack.c.l.b16 %v3236
  %v5431 = vunpack.c.h.b16 %v3236
  %v5432 = vunpack.c.l.b16 %v3237
  %v5433 = vunpack.c.h.b16 %v3237
  %v5434 = vunpack.c.l.b16 %v3238
  %v5435 = vunpack.c.l.b16 %v3239
  %v5436 = vunpack.c.h.b16 %v3239
  %v5437 = vunpack.c.l.b16 %v3240
  %v5438 = vunpack.c.h.b16 %v3240
  %v5439 = vunpack.c.l.b16 %v3241
  %v5440 = vunpack.c.l.b16 %v3242
  %v5441 = vunpack.c.h.b16 %v3242
  %v5442 = vunpack.c.l.b16 %v3243
  %v5443 = vunpack.c.h.b16 %v3243
  %v5444 = vunpack.c.l.b16 %v3244
  %v5445 = vunpack.c.l.b16 %v3245
  %v5446 = vunpack.c.h.b16 %v3245
  %v5447 = vunpack.c.l.b16 %v3246
  %v5448 = vunpack.c.h.b16 %v3246
  %v5449 = vunpack.c.l.b16 %v3247
  %v5450 = vunpack.c.l.b16 %v3248
  %v5451 = vunpack.c.h.b16 %v3248
  %v5452 = vunpack.c.l.b16 %v3249
  %v5453 = vunpack.c.h.b16 %v3249
  %v5454 = vunpack.c.l.b16 %v3250
  %v5455 = vunpack.c.l.b16 %v3251
  %v5456 = vunpack.c.h.b16 %v3251
  %v5457 = vunpack.c.l.b16 %v3252
  %v5458 = vunpack.c.h.b16 %v3252
  %v5459 = vunpack.c.l.b16 %v3253
  %v5460 = vunpack.c.l.b16 %v3254
  %v5461 = vunpack.c.h.b16 %v3254
  %v5462 = vunpack.c.l.b16 %v3255
  %v5463 = vunpack.c.h.b16 %v3255
  %v5464 = vunpack.c.l.b16 %v3256
  %v5465 = vunpack.c.l.b16 %v3257
  %v5466 = vunpack.c.h.b16 %v3257
  %v5467 = vunpack.c.l.b16 %v3258
  %v5468 = vunpack.c.h.b16 %v3258
  %v5469 = vunpack.c.l.b16 %v3259
  %v5470 = vunpack.c.l.b16 %v3260
  %v5471 = vunpack.c.h.b16 %v3260
  %v5472 = vunpack.c.l.b16 %v3261
  %v5473 = vunpack.c.h.b16 %v3261
  %v5474 = vunpack.c.l.b16 %v3262
  %v5475 = vunpack.c.l.b16 %v3263
  %v5476 = vunpack.c.h.b16 %v3263
  %v5477 = vunpack.c.l.b16 %v3264
  %v5478 = vunpack.c.h.b16 %v3264
  %v5479 = vunpack.c.l.b16 %v3265
  %v5480 = vunpack.c.l.b16 %v3266
  %v5481 = vunpack.c.h.b16 %v3266
  %v5482 = vunpack.c.l.b16 %v3267
  %v5483 = vunpack.c.h.b16 %v3267
  %v5484 = vunpack.c.l.b16 %v3268
  %v5485 = vunpack.c.l.b16 %v3269
  %v5486 = vunpack.c.h.b16 %v3269
  %v5487 = vunpack.c.l.b16 %v3270
  %v5488 = vunpack.c.h.b16 %v3270
  %v5489 = vunpack.c.l.b16 %v3271
  %v5490 = vunpack.c.l.b16 %v3272
  %v5491 = vunpack.c.h.b16 %v3272
  %v5492 = vunpack.c.l.b16 %v3273
  %v5493 = vunpack.c.h.b16 %v3273
  %v5494 = vunpack.c.l.b16 %v3274
  %v5495 = vunpack.c.l.b16 %v3275
  %v5496 = vunpack.c.h.b16 %v3275
  %v5497 = vunpack.c.l.b16 %v3276
  %v5498 = vunpack.c.h.b16 %v3276
  %v5499 = vunpack.c.l.b16 %v3277
  %v5500 = vunpack.c.l.b16 %v3278
  %v5501 = vunpack.c.h.b16 %v3278
  %v5502 = vunpack.c.l.b16 %v3279
  %v5503 = vunpack.c.h.b16 %v3279
  %v5504 = vunpack.c.l.b16 %v3280
  %v5505 = vunpack.c.l.b16 %v3281
  %v5506 = vunpack.c.h.b16 %v3281
  %v5507 = vunpack.c.l.b16 %v3282
  %v5508 = vunpack.c.h.b16 %v3282
  %v5509 = vunpack.c.l.b16 %v3283
  %v5510 = vunpack.c.l.b16 %v3284
  %v5511 = vunpack.c.h.b16 %v3284
  %v5512 = vunpack.c.l.b16 %v3285
  %v5513 = vunpack.c.h.b16 %v3285
  %v5514 = vunpack.c.l.b16 %v3286
  %v5515 = vunpack.c.l.b16 %v3287
  %v5516 = vunpack.c.h.b16 %v3287
  %v5517 = vunpack.c.l.b16 %v3288
  %v5518 = vunpack.c.h.b16 %v3288
  %v5519 = vunpack.c.l.b16 %v3289
  %v5520 = vunpack.c.l.b16 %v3290
  %v5521 = vunpack.c.h.b16 %v3290
  %v5522 = vunpack.c.l.b16 %v3291
  %v5523 = vunpack.c.h.b16 %v3291
  %v5524 = vunpack.c.l.b16 %v3292
  %v5525 = vunpack.c.l.b16 %v3293
  %v5526 = vunpack.c.h.b16 %v3293
  %v5527 = vunpack.c.l.b16 %v3294
  %v5528 = vunpack.c.h.b16 %v3294
  %v5529 = vunpack.c.l.b16 %v3295
  %v5530 = vunpack.c.l.b16 %v3296
  %v5531 = vunpack.c.h.b16 %v3296
  %v5532 = vunpack.c.l.b16 %v3297
  %v5533 = vunpack.c.h.b16 %v3297
  %v5534 = vunpack.c.l.b16 %v3298
  %v5535 = vunpack.c.l.b16 %v3299
  %v5536 = vunpack.c.h.b16 %v3299
  %v5537 = vunpack.c.l.b16 %v3300
  %v5538 = vunpack.c.h.b16 %v3300
  %v5539 = vunpack.c.l.b16 %v3301
  %v5540 = vunpack.c.l.b16 %v3302
  %v5541 = vunpack.c.h.b16 %v3302
  %v5542 = vunpack.c.l.b16 %v3303
  %v5543 = vunpack.c.h.b16 %v3303
  %v5544 = vunpack.c.l.b16 %v3304
  %v5545 = vpack.c.b16 %v4150, %v4145
  %v5546 = vpack.c.b16 %v4151, %v4146
  %v5547 = vpack.c.b16 %v4152, %v4147
  %v5548 = vpack.c.b16 %v4153, %v4148
  %v5549 = vpack.c.b16 %v4154, %v4149
  %v5550 = vpack.c.b16 %v4160, %v4155
  %v5551 = vpack.c.b16 %v4161, %v4156
  %v5552 = vpack.c.b16 %v4162, %v4157
  %v5553 = vpack.c.b16 %v4163, %v4158
  %v5554 = vpack.c.b16 %v4164, %v4159
  %v5555 = vpack.c.b16 %v4170, %v4165
  %v5556 = vpack.c.b16 %v4171, %v4166
  %v5557 = vpack.c.b16 %v4172, %v4167
  %v5558 = vpack.c.b16 %v4173, %v4168
  %v5559 = vpack.c.b16 %v4174, %v4169
  %v5560 = vpack.c.b16 %v4180, %v4175
  %v5561 = vpack.c.b16 %v4181, %v4176
  %v5562 = vpack.c.b16 %v4182, %v4177
  %v5563 = vpack.c.b16 %v4183, %v4178
  %v5564 = vpack.c.b16 %v4184, %v4179
  %v5565 = vpack.c.b16 %v4190, %v4185
  %v5566 = vpack.c.b16 %v4191, %v4186
  %v5567 = vpack.c.b16 %v4192, %v4187
  %v5568 = vpack.c.b16 %v4193, %v4188
  %v5569 = vpack.c.b16 %v4194, %v4189
  %v5570 = vpack.c.b16 %v4200, %v4195
  %v5571 = vpack.c.b16 %v4201, %v4196
  %v5572 = vpack.c.b16 %v4202, %v4197
  %v5573 = vpack.c.b16 %v4203, %v4198
  %v5574 = vpack.c.b16 %v4204, %v4199
  %v5575 = vpack.c.b16 %v4210, %v4205
  %v5576 = vpack.c.b16 %v4211, %v4206
  %v5577 = vpack.c.b16 %v4212, %v4207
  %v5578 = vpack.c.b16 %v4213, %v4208
  %v5579 = vpack.c.b16 %v4214, %v4209
  %v5580 = vpack.c.b16 %v4220, %v4215
  %v5581 = vpack.c.b16 %v4221, %v4216
  %v5582 = vpack.c.b16 %v4222, %v4217
  %v5583 = vpack.c.b16 %v4223, %v4218
  %v5584 = vpack.c.b16 %v4224, %v4219
  %v5585 = vpack.c.b16 %v4230, %v4225
  %v5586 = vpack.c.b16 %v4231, %v4226
  %v5587 = vpack.c.b16 %v4232, %v4227
  %v5588 = vpack.c.b16 %v4233, %v4228
  %v5589 = vpack.c.b16 %v4234, %v4229
  %v5590 = vpack.c.b16 %v4240, %v4235
  %v5591 = vpack.c.b16 %v4241, %v4236
  %v5592 = vpack.c.b16 %v4242, %v4237
  %v5593 = vpack.c.b16 %v4243, %v4238
  %v5594 = vpack.c.b16 %v4244, %v4239
  %v5595 = vpack.c.b16 %v4250, %v4245
  %v5596 = vpack.c.b16 %v4251, %v4246
  %v5597 = vpack.c.b16 %v4252, %v4247
  %v5598 = vpack.c.b16 %v4253, %v4248
  %v5599 = vpack.c.b16 %v4254, %v4249
  %v5600 = vpack.c.b16 %v4260, %v4255
  %v5601 = vpack.c.b16 %v4261, %v4256
  %v5602 = vpack.c.b16 %v4262, %v4257
  %v5603 = vpack.c.b16 %v4263, %v4258
  %v5604 = vpack.c.b16 %v4264, %v4259
  %v5605 = vpack.c.b16 %v4270, %v4265
  %v5606 = vpack.c.b16 %v4271, %v4266
  %v5607 = vpack.c.b16 %v4272, %v4267
  %v5608 = vpack.c.b16 %v4273, %v4268
  %v5609 = vpack.c.b16 %v4274, %v4269
  %v5610 = vpack.c.b16 %v4280, %v4275
  %v5611 = vpack.c.b16 %v4281, %v4276
  %v5612 = vpack.c.b16 %v4282, %v4277
  %v5613 = vpack.c.b16 %v4283, %v4278
  %v5614 = vpack.c.b16 %v4284, %v4279
  %v5615 = vpack.c.b16 %v4290, %v4285
  %v5616 = vpack.c.b16 %v4291, %v4286
  %v5617 = vpack.c.b16 %v4292, %v4287
  %v5618 = vpack.c.b16 %v4293, %v4288
  %v5619 = vpack.c.b16 %v4294, %v4289
  %v5620 = vpack.c.b16 %v4300, %v4295
  %v5621 = vpack.c.b16 %v4301, %v4296
  %v5622 = vpack.c.b16 %v4302, %v4297
  %v5623 = vpack.c.b16 %v4303, %v4298
  %v5624 = vpack.c.b16 %v4304, %v4299
  %v5625 = vpack.c.b16 %v4310, %v4305
  %v5626 = vpack.c.b16 %v4311, %v4306
  %v5627 = vpack.c.b16 %v4312, %v4307
  %v5628 = vpack.c.b16 %v4313, %v4308
  %v5629 = vpack.c.b16 %v4314, %v4309
  %v5630 = vpack.c.b16 %v4320, %v4315
  %v5631 = vpack.c.b16 %v4321, %v4316
  %v5632 = vpack.c.b16 %v4322, %v4317
  %v5633 = vpack.c.b16 %v4323, %v4318
  %v5634 = vpack.c.b16 %v4324, %v4319
  %v5635 = vpack.c.b16 %v4330, %v4325
  %v5636 = vpack.c.b16 %v4331, %v4326
  %v5637 = vpack.c.b16 %v4332, %v4327
  %v5638 = vpack.c.b16 %v4333, %v4328
  %v5639 = vpack.c.b16 %v4334, %v4329
  %v5640 = vpack.c.b16 %v4340, %v4335
  %v5641 = vpack.c.b16 %v4341, %v4336
  %v5642 = vpack.c.b16 %v4342, %v4337
  %v5643 = vpack.c.b16 %v4343, %v4338
  %v5644 = vpack.c.b16 %v4344, %v4339
  %v5645 = vpack.c.b16 %v4350, %v4345
  %v5646 = vpack.c.b16 %v4351, %v4346
  %v5647 = vpack.c.b16 %v4352, %v4347
  %v5648 = vpack.c.b16 %v4353, %v4348
  %v5649 = vpack.c.b16 %v4354, %v4349
  %v5650 = vpack.c.b16 %v4360, %v4355
  %v5651 = vpack.c.b16 %v4361, %v4356
  %v5652 = vpack.c.b16 %v4362, %v4357
  %v5653 = vpack.c.b16 %v4363, %v4358
  %v5654 = vpack.c.b16 %v4364, %v4359
  %v5655 = vpack.c.b16 %v4370, %v4365
  %v5656 = vpack.c.b16 %v4371, %v4366
  %v5657 = vpack.c.b16 %v4372, %v4367
  %v5658 = vpack.c.b16 %v4373, %v4368
  %v5659 = vpack.c.b16 %v4374, %v4369
  %v5660 = vpack.c.b16 %v4380, %v4375
  %v5661 = vpack.c.b16 %v4381, %v4376
  %v5662 = vpack.c.b16 %v4382, %v4377
  %v5663 = vpack.c.b16 %v4383, %v4378
  %v5664 = vpack.c.b16 %v4384, %v4379
  %v5665 = vpack.c.b16 %v4390, %v4385
  %v5666 = vpack.c.b16 %v4391, %v4386
  %v5667 = vpack.c.b16 %v4392, %v4387
  %v5668 = vpack.c.b16 %v4393, %v4388
  %v5669 = vpack.c.b16 %v4394, %v4389
  %v5670 = vpack.c.b16 %v4400, %v4395
  %v5671 = vpack.c.b16 %v4401, %v4396
  %v5672 = vpack.c.b16 %v4402, %v4397
  %v5673 = vpack.c.b16 %v4403, %v4398
  %v5674 = vpack.c.b16 %v4404, %v4399
  %v5675 = vpack.c.b16 %v4410, %v4405
  %v5676 = vpack.c.b16 %v4411, %v4406
  %v5677 = vpack.c.b16 %v4412, %v4407
  %v5678 = vpack.c.b16 %v4413, %v4408
  %v5679 = vpack.c.b16 %v4414, %v4409
  %v5680 = vpack.c.b16 %v4420, %v4415
  %v5681 = vpack.c.b16 %v4421, %v4416
  %v5682 = vpack.c.b16 %v4422, %v4417
  %v5683 = vpack.c.b16 %v4423, %v4418
  %v5684 = vpack.c.b16 %v4424, %v4419
  %v5685 = vpack.c.b16 %v4430, %v4425
  %v5686 = vpack.c.b16 %v4431, %v4426
  %v5687 = vpack.c.b16 %v4432, %v4427
  %v5688 = vpack.c.b16 %v4433, %v4428
  %v5689 = vpack.c.b16 %v4434, %v4429
  %v5690 = vpack.c.b16 %v4440, %v4435
  %v5691 = vpack.c.b16 %v4441, %v4436
  %v5692 = vpack.c.b16 %v4442, %v4437
  %v5693 = vpack.c.b16 %v4443, %v4438
  %v5694 = vpack.c.b16 %v4444, %v4439
  %v5695 = vpack.c.b16 %v4450, %v4445
  %v5696 = vpack.c.b16 %v4451, %v4446
  %v5697 = vpack.c.b16 %v4452, %v4447
  %v5698 = vpack.c.b16 %v4453, %v4448
  %v5699 = vpack.c.b16 %v4454, %v4449
  %v5700 = vpack.c.b16 %v4460, %v4455
  %v5701 = vpack.c.b16 %v4461, %v4456
  %v5702 = vpack.c.b16 %v4462, %v4457
  %v5703 = vpack.c.b16 %v4463, %v4458
  %v5704 = vpack.c.b16 %v4464, %v4459
  %v5705 = vpack.c.b16 %v4470, %v4465
  %v5706 = vpack.c.b16 %v4471, %v4466
  %v5707 = vpack.c.b16 %v4472, %v4467
  %v5708 = vpack.c.b16 %v4473, %v4468
  %v5709 = vpack.c.b16 %v4474, %v4469
  %v5710 = vpack.c.b16 %v4480, %v4475
  %v5711 = vpack.c.b16 %v4481, %v4476
  %v5712 = vpack.c.b16 %v4482, %v4477
  %v5713 = vpack.c.b16 %v4483, %v4478
  %v5714 = vpack.c.b16 %v4484, %v4479
  %v5715 = vpack.c.b16 %v4490, %v4485
  %v5716 = vpack.c.b16 %v4491, %v4486
  %v5717 = vpack.c.b16 %v4492, %v4487
  %v5718 = vpack.c.b16 %v4493, %v4488
  %v5719 = vpack.c.b16 %v4494, %v4489
  %v5720 = vpack.c.b16 %v4500, %v4495
  %v5721 = vpack.c.b16 %v4501, %v4496
  %v5722 = vpack.c.b16 %v4502, %v4497
  %v5723 = vpack.c.b16 %v4503, %v4498
  %v5724 = vpack.c.b16 %v4504, %v4499
  %v5725 = vpack.c.b16 %v4510, %v4505
  %v5726 = vpack.c.b16 %v4511, %v4506
  %v5727 = vpack.c.b16 %v4512, %v4507
  %v5728 = vpack.c.b16 %v4513, %v4508
  %v5729 = vpack.c.b16 %v4514, %v4509
  %v5730 = vpack.c.b16 %v4520, %v4515
  %v5731 = vpack.c.b16 %v4521, %v4516
  %v5732 = vpack.c.b16 %v4522, %v4517
  %v5733 = vpack.c.b16 %v4523, %v4518
  %v5734 = vpack.c.b16 %v4524, %v4519
  %v5735 = vpack.c.b16 %v4530, %v4525
  %v5736 = vpack.c.b16 %v4531, %v4526
  %v5737 = vpack.c.b16 %v4532, %v4527
  %v5738 = vpack.c.b16 %v4533, %v4528
  %v5739 = vpack.c.b16 %v4534, %v4529
  %v5740 = vpack.c.b16 %v4540, %v4535
  %v5741 = vpack.c.b16 %v4541, %v4536
  %v5742 = vpack.c.b16 %v4542, %v4537
  %v5743 = vpack.c.b16 %v4543, %v4538
  %v5744 = vpack.c.b16 %v4544, %v4539
  %v5745 = vpack.c.b16 %v4550, %v4545
  %v5746 = vpack.c.b16 %v4551, %v4546
  %v5747 = vpack.c.b16 %v4552, %v4547
  %v5748 = vpack.c.b16 %v4553, %v4548
  %v5749 = vpack.c.b16 %v4554, %v4549
  %v5750 = vpack.c.b16 %v4560, %v4555
  %v5751 = vpack.c.b16 %v4561, %v4556
  %v5752 = vpack.c.b16 %v4562, %v4557
  %v5753 = vpack.c.b16 %v4563, %v4558
  %v5754 = vpack.c.b16 %v4564, %v4559
  %v5755 = vpack.c.b16 %v4570, %v4565
  %v5756 = vpack.c.b16 %v4571, %v4566
  %v5757 = vpack.c.b16 %v4572, %v4567
  %v5758 = vpack.c.b16 %v4573, %v4568
  %v5759 = vpack.c.b16 %v4574, %v4569
  %v5760 = vpack.c.b16 %v4580, %v4575
  %v5761 = vpack.c.b16 %v4581, %v4576
  %v5762 = vpack.c.b16 %v4582, %v4577
  %v5763 = vpack.c.b16 %v4583, %v4578
  %v5764 = vpack.c.b16 %v4584, %v4579
  %v5765 = vpack.c.b16 %v4590, %v4585
  %v5766 = vpack.c.b16 %v4591, %v4586
  %v5767 = vpack.c.b16 %v4592, %v4587
  %v5768 = vpack.c.b16 %v4593, %v4588
  %v5769 = vpack.c.b16 %v4594, %v4589
  %v5770 = vpack.c.b16 %v4600, %v4595
  %v5771 = vpack.c.b16 %v4601, %v4596
  %v5772 = vpack.c.b16 %v4602, %v4597
  %v5773 = vpack.c.b16 %v4603, %v4598
  %v5774 = vpack.c.b16 %v4604, %v4599
  %v5775 = vpack.c.b16 %v4610, %v4605
  %v5776 = vpack.c.b16 %v4611, %v4606
  %v5777 = vpack.c.b16 %v4612, %v4607
  %v5778 = vpack.c.b16 %v4613, %v4608
  %v5779 = vpack.c.b16 %v4614, %v4609
  %v5780 = vpack.c.b16 %v4620, %v4615
  %v5781 = vpack.c.b16 %v4621, %v4616
  %v5782 = vpack.c.b16 %v4622, %v4617
  %v5783 = vpack.c.b16 %v4623, %v4618
  %v5784 = vpack.c.b16 %v4624, %v4619
  %v5785 = vpack.c.b16 %v4630, %v4625
  %v5786 = vpack.c.b16 %v4631, %v4626
  %v5787 = vpack.c.b16 %v4632, %v4627
  %v5788 = vpack.c.b16 %v4633, %v4628
  %v5789 = vpack.c.b16 %v4634, %v4629
  %v5790 = vpack.c.b16 %v4640, %v4635
  %v5791 = vpack.c.b16 %v4641, %v4636
  %v5792 = vpack.c.b16 %v4642, %v4637
  %v5793 = vpack.c.b16 %v4643, %v4638
  %v5794 = vpack.c.b16 %v4644, %v4639
  %v5795 = vpack.c.b16 %v4650, %v4645
  %v5796 = vpack.c.b16 %v4651, %v4646
  %v5797 = vpack.c.b16 %v4652, %v4647
  %v5798 = vpack.c.b16 %v4653, %v4648
  %v5799 = vpack.c.b16 %v4654, %v4649
  %v5800 = vpack.c.b16 %v4660, %v4655
  %v5801 = vpack.c.b16 %v4661, %v4656
  %v5802 = vpack.c.b16 %v4662, %v4657
  %v5803 = vpack.c.b16 %v4663, %v4658
  %v5804 = vpack.c.b16 %v4664, %v4659
  %v5805 = vpack.c.b16 %v4670, %v4665
  %v5806 = vpack.c.b16 %v4671, %v4666
  %v5807 = vpack.c.b16 %v4672, %v4667
  %v5808 = vpack.c.b16 %v4673, %v4668
  %v5809 = vpack.c.b16 %v4674, %v4669
  %v5810 = vpack.c.b16 %v4680, %v4675
  %v5811 = vpack.c.b16 %v4681, %v4676
  %v5812 = vpack.c.b16 %v4682, %v4677
  %v5813 = vpack.c.b16 %v4683, %v4678
  %v5814 = vpack.c.b16 %v4684, %v4679
  %v5815 = vpack.c.b16 %v4690, %v4685
  %v5816 = vpack.c.b16 %v4691, %v4686
  %v5817 = vpack.c.b16 %v4692, %v4687
  %v5818 = vpack.c.b16 %v4693, %v4688
  %v5819 = vpack.c.b16 %v4694, %v4689
  %v5820 = vpack.c.b16 %v4700, %v4695
  %v5821 = vpack.c.b16 %v4701, %v4696
  %v5822 = vpack.c.b16 %v4702, %v4697
  %v5823 = vpack.c.b16 %v4703, %v4698
  %v5824 = vpack.c.b16 %v4704, %v4699
  %v5825 = vpack.c.b16 %v4710, %v4705
  %v5826 = vpack.c.b16 %v4711, %v4706
  %v5827 = vpack.c.b16 %v4712, %v4707
  %v5828 = vpack.c.b16 %v4713, %v4708
  %v5829 = vpack.c.b16 %v4714, %v4709
  %v5830 = vpack.c.b16 %v4720, %v4715
  %v5831 = vpack.c.b16 %v4721, %v4716
  %v5832 = vpack.c.b16 %v4722, %v4717
  %v5833 = vpack.c.b16 %v4723, %v4718
  %v5834 = vpack.c.b16 %v4724, %v4719
  %v5835 = vpack.c.b16 %v4730, %v4725
  %v5836 = vpack.c.b16 %v4731, %v4726
  %v5837 = vpack.c.b16 %v4732, %v4727
  %v5838 = vpack.c.b16 %v4733, %v4728
  %v5839 = vpack.c.b16 %v4734, %v4729
  %v5840 = vpack.c.b16 %v4740, %v4735
  %v5841 = vpack.c.b16 %v4741, %v4736
  %v5842 = vpack.c.b16 %v4742, %v4737
  %v5843 = vpack.c.b16 %v4743, %v4738
  %v5844 = vpack.c.b16 %v4744, %v4739
  %v5845 = vpack.c.b16 %v4750, %v4745
  %v5846 = vpack.c.b16 %v4751, %v4746
  %v5847 = vpack.c.b16 %v4752, %v4747
  %v5848 = vpack.c.b16 %v4753, %v4748
  %v5849 = vpack.c.b16 %v4754, %v4749
  %v5850 = vpack.c.b16 %v4760, %v4755
  %v5851 = vpack.c.b16 %v4761, %v4756
  %v5852 = vpack.c.b16 %v4762, %v4757
  %v5853 = vpack.c.b16 %v4763, %v4758
  %v5854 = vpack.c.b16 %v4764, %v4759
  %v5855 = vpack.c.b16 %v4770, %v4765
  %v5856 = vpack.c.b16 %v4771, %v4766
  %v5857 = vpack.c.b16 %v4772, %v4767
  %v5858 = vpack.c.b16 %v4773, %v4768
  %v5859 = vpack.c.b16 %v4774, %v4769
  %v5860 = vpack.c.b16 %v4780, %v4775
  %v5861 = vpack.c.b16 %v4781, %v4776
  %v5862 = vpack.c.b16 %v4782, %v4777
  %v5863 = vpack.c.b16 %v4783, %v4778
  %v5864 = vpack.c.b16 %v4784, %v4779
  %v5865 = vpack.c.b16 %v4790, %v4785
  %v5866 = vpack.c.b16 %v4791, %v4786
  %v5867 = vpack.c.b16 %v4792, %v4787
  %v5868 = vpack.c.b16 %v4793, %v4788
  %v5869 = vpack.c.b16 %v4794, %v4789
  %v5870 = vpack.c.b16 %v4800, %v4795
  %v5871 = vpack.c.b16 %v4801, %v4796
  %v5872 = vpack.c.b16 %v4802, %v4797
  %v5873 = vpack.c.b16 %v4803, %v4798
  %v5874 = vpack.c.b16 %v4804, %v4799
  %v5875 = vpack.c.b16 %v4810, %v4805
  %v5876 = vpack.c.b16 %v4811, %v4806
  %v5877 = vpack.c.b16 %v4812, %v4807
  %v5878 = vpack.c.b16 %v4813, %v4808
  %v5879 = vpack.c.b16 %v4814, %v4809
  %v5880 = vpack.c.b16 %v4820, %v4815
  %v5881 = vpack.c.b16 %v4821, %v4816
  %v5882 = vpack.c.b16 %v4822, %v4817
  %v5883 = vpack.c.b16 %v4823, %v4818
  %v5884 = vpack.c.b16 %v4824, %v4819
  %v5885 = vpack.c.b16 %v4830, %v4825
  %v5886 = vpack.c.b16 %v4831, %v4826
  %v5887 = vpack.c.b16 %v4832, %v4827
  %v5888 = vpack.c.b16 %v4833, %v4828
  %v5889 = vpack.c.b16 %v4834, %v4829
  %v5890 = vpack.c.b16 %v4840, %v4835
  %v5891 = vpack.c.b16 %v4841, %v4836
  %v5892 = vpack.c.b16 %v4842, %v4837
  %v5893 = vpack.c.b16 %v4843, %v4838
  %v5894 = vpack.c.b16 %v4844, %v4839
  %v5895 = vpack.c.b16 %v4850, %v4845
  %v5896 = vpack.c.b16 %v4851, %v4846
  %v5897 = vpack.c.b16 %v4852, %v4847
  %v5898 = vpack.c.b16 %v4853, %v4848
  %v5899 = vpack.c.b16 %v4854, %v4849
  %v5900 = vpack.c.b16 %v4860, %v4855
  %v5901 = vpack.c.b16 %v4861, %v4856
  %v5902 = vpack.c.b16 %v4862, %v4857
  %v5903 = vpack.c.b16 %v4863, %v4858
  %v5904 = vpack.c.b16 %v4864, %v4859
  %v5905 = vpack.c.b16 %v4870, %v4865
  %v5906 = vpack.c.b16 %v4871, %v4866
  %v5907 = vpack.c.b16 %v4872, %v4867
  %v5908 = vpack.c.b16 %v4873, %v4868
  %v5909 = vpack.c.b16 %v4874, %v4869
  %v5910 = vpack.c.b16 %v4880, %v4875
  %v5911 = vpack.c.b16 %v4881, %v4876
  %v5912 = vpack.c.b16 %v4882, %v4877
  %v5913 = vpack.c.b16 %v4883, %v4878
  %v5914 = vpack.c.b16 %v4884, %v4879
  %v5915 = vpack.c.b16 %v4890, %v4885
  %v5916 = vpack.c.b16 %v4891, %v4886
  %v5917 = vpack.c.b16 %v4892, %v4887
  %v5918 = vpack.c.b16 %v4893, %v4888
  %v5919 = vpack.c.b16 %v4894, %v4889
  %v5920 = vpack.c.b16 %v4900, %v4895
  %v5921 = vpack.c.b16 %v4901, %v4896
  %v5922 = vpack.c.b16 %v4902, %v4897
  %v5923 = vpack.c.b16 %v4903, %v4898
  %v5924 = vpack.c.b16 %v4904, %v4899
  %v5925 = vpack.c.b16 %v4910, %v4905
  %v5926 = vpack.c.b16 %v4911, %v4906
  %v5927 = vpack.c.b16 %v4912, %v4907
  %v5928 = vpack.c.b16 %v4913, %v4908
  %v5929 = vpack.c.b16 %v4914, %v4909
  %v5930 = vpack.c.b16 %v4920, %v4915
  %v5931 = vpack.c.b16 %v4921, %v4916
  %v5932 = vpack.c.b16 %v4922, %v4917
  %v5933 = vpack.c.b16 %v4923, %v4918
  %v5934 = vpack.c.b16 %v4924, %v4919
  %v5935 = vpack.c.b16 %v4930, %v4925
  %v5936 = vpack.c.b16 %v4931, %v4926
  %v5937 = vpack.c.b16 %v4932, %v4927
  %v5938 = vpack.c.b16 %v4933, %v4928
  %v5939 = vpack.c.b16 %v4934, %v4929
  %v5940 = vpack.c.b16 %v4940, %v4935
  %v5941 = vpack.c.b16 %v4941, %v4936
  %v5942 = vpack.c.b16 %v4942, %v4937
  %v5943 = vpack.c.b16 %v4943, %v4938
  %v5944 = vpack.c.b16 %v4944, %v4939
  %v5945 = vpack.c.b16 %v4950, %v4945
  %v5946 = vpack.c.b16 %v4951, %v4946
  %v5947 = vpack.c.b16 %v4952, %v4947
  %v5948 = vpack.c.b16 %v4953, %v4948
  %v5949 = vpack.c.b16 %v4954, %v4949
  %v5950 = vpack.c.b16 %v4960, %v4955
  %v5951 = vpack.c.b16 %v4961, %v4956
  %v5952 = vpack.c.b16 %v4962, %v4957
  %v5953 = vpack.c.b16 %v4963, %v4958
  %v5954 = vpack.c.b16 %v4964, %v4959
  %v5955 = vpack.c.b16 %v4970, %v4965
  %v5956 = vpack.c.b16 %v4971, %v4966
  %v5957 = vpack.c.b16 %v4972, %v4967
  %v5958 = vpack.c.b16 %v4973, %v4968
  %v5959 = vpack.c.b16 %v4974, %v4969
  %v5960 = vpack.c.b16 %v4980, %v4975
  %v5961 = vpack.c.b16 %v4981, %v4976
  %v5962 = vpack.c.b16 %v4982, %v4977
  %v5963 = vpack.c.b16 %v4983, %v4978
  %v5964 = vpack.c.b16 %v4984, %v4979
  %v5965 = vpack.c.b16 %v4990, %v4985
  %v5966 = vpack.c.b16 %v4991, %v4986
  %v5967 = vpack.c.b16 %v4992, %v4987
  %v5968 = vpack.c.b16 %v4993, %v4988
  %v5969 = vpack.c.b16 %v4994, %v4989
  %v5970 = vpack.c.b16 %v5000, %v4995
  %v5971 = vpack.c.b16 %v5001, %v4996
  %v5972 = vpack.c.b16 %v5002, %v4997
  %v5973 = vpack.c.b16 %v5003, %v4998
  %v5974 = vpack.c.b16 %v5004, %v4999
  %v5975 = vpack.c.b16 %v5010, %v5005
  %v5976 = vpack.c.b16 %v5011, %v5006
  %v5977 = vpack.c.b16 %v5012, %v5007
  %v5978 = vpack.c.b16 %v5013, %v5008
  %v5979 = vpack.c.b16 %v5014, %v5009
  %v5980 = vpack.c.b16 %v5020, %v5015
  %v5981 = vpack.c.b16 %v5021, %v5016
  %v5982 = vpack.c.b16 %v5022, %v5017
  %v5983 = vpack.c.b16 %v5023, %v5018
  %v5984 = vpack.c.b16 %v5024, %v5019
  %v5985 = vpack.c.b16 %v5030, %v5025
  %v5986 = vpack.c.b16 %v5031, %v5026
  %v5987 = vpack.c.b16 %v5032, %v5027
  %v5988 = vpack.c.b16 %v5033, %v5028
  %v5989 = vpack.c.b16 %v5034, %v5029
  %v5990 = vpack.c.b16 %v5040, %v5035
  %v5991 = vpack.c.b16 %v5041, %v5036
  %v5992 = vpack.c.b16 %v5042, %v5037
  %v5993 = vpack.c.b16 %v5043, %v5038
  %v5994 = vpack.c.b16 %v5044, %v5039
  %v5995 = vpack.c.b16 %v5050, %v5045
  %v5996 = vpack.c.b16 %v5051, %v5046
  %v5997 = vpack.c.b16 %v5052, %v5047
  %v5998 = vpack.c.b16 %v5053, %v5048
  %v5999 = vpack.c.b16 %v5054, %v5049
  %v6000 = vpack.c.b16 %v5060, %v5055
  %v6001 = vpack.c.b16 %v5061, %v5056
  %v6002 = vpack.c.b16 %v5062, %v5057
  %v6003 = vpack.c.b16 %v5063, %v5058
  %v6004 = vpack.c.b16 %v5064, %v5059
  %v6005 = vpack.c.b16 %v5070, %v5065
  %v6006 = vpack.c.b16 %v5071, %v5066
  %v6007 = vpack.c.b16 %v5072, %v5067
  %v6008 = vpack.c.b16 %v5073, %v5068
  %v6009 = vpack.c.b16 %v5074, %v5069
  %v6010 = vpack.c.b16 %v5080, %v5075
  %v6011 = vpack.c.b16 %v5081, %v5076
  %v6012 = vpack.c.b16 %v5082, %v5077
  %v6013 = vpack.c.b16 %v5083, %v5078
  %v6014 = vpack.c.b16 %v5084, %v5079
  %v6015 = vpack.c.b16 %v5090, %v5085
  %v6016 = vpack.c.b16 %v5091, %v5086
  %v6017 = vpack.c.b16 %v5092, %v5087
  %v6018 = vpack.c.b16 %v5093, %v5088
  %v6019 = vpack.c.b16 %v5094, %v5089
  %v6020 = vpack.c.b16 %v5100, %v5095
  %v6021 = vpack.c.b16 %v5101, %v5096
  %v6022 = vpack.c.b16 %v5102, %v5097
  %v6023 = vpack.c.b16 %v5103, %v5098
  %v6024 = vpack.c.b16 %v5104, %v5099
  %v6025 = vpack.c.b16 %v5110, %v5105
  %v6026 = vpack.c.b16 %v5111, %v5106
  %v6027 = vpack.c.b16 %v5112, %v5107
  %v6028 = vpack.c.b16 %v5113, %v5108
  %v6029 = vpack.c.b16 %v5114, %v5109
  %v6030 = vpack.c.b16 %v5120, %v5115
  %v6031 = vpack.c.b16 %v5121, %v5116
  %v6032 = vpack.c.b16 %v5122, %v5117
  %v6033 = vpack.c.b16 %v5123, %v5118
  %v6034 = vpack.c.b16 %v5124, %v5119
  %v6035 = vpack.c.b16 %v5130, %v5125
  %v6036 = vpack.c.b16 %v5131, %v5126
  %v6037 = vpack.c.b16 %v5132, %v5127
  %v6038 = vpack.c.b16 %v5133, %v5128
  %v6039 = vpack.c.b16 %v5134, %v5129
  %v6040 = vpack.c.b16 %v5140, %v5135
  %v6041 = vpack.c.b16 %v5141, %v5136
  %v6042 = vpack.c.b16 %v5142, %v5137
  %v6043 = vpack.c.b16 %v5143, %v5138
  %v6044 = vpack.c.b16 %v5144, %v5139
  %v6045 = vpack.c.b16 %v5150, %v5145
  %v6046 = vpack.c.b16 %v5151, %v5146
  %v6047 = vpack.c.b16 %v5152, %v5147
  %v6048 = vpack.c.b16 %v5153, %v5148
  %v6049 = vpack.c.b16 %v5154, %v5149
  %v6050 = vpack.c.b16 %v5160, %v5155
  %v6051 = vpack.c.b16 %v5161, %v5156
  %v6052 = vpack.c.b16 %v5162, %v5157
  %v6053 = vpack.c.b16 %v5163, %v5158
  %v6054 = vpack.c.b16 %v5164, %v5159
  %v6055 = vpack.c.b16 %v5170, %v5165
  %v6056 = vpack.c.b16 %v5171, %v5166
  %v6057 = vpack.c.b16 %v5172, %v5167
  %v6058 = vpack.c.b16 %v5173, %v5168
  %v6059 = vpack.c.b16 %v5174, %v5169
  %v6060 = vpack.c.b16 %v5180, %v5175
  %v6061 = vpack.c.b16 %v5181, %v5176
  %v6062 = vpack.c.b16 %v5182, %v5177
  %v6063 = vpack.c.b16 %v5183, %v5178
  %v6064 = vpack.c.b16 %v5184, %v5179
  %v6065 = vpack.c.b16 %v5190, %v5185
  %v6066 = vpack.c.b16 %v5191, %v5186
  %v6067 = vpack.c.b16 %v5192, %v5187
  %v6068 = vpack.c.b16 %v5193, %v5188
  %v6069 = vpack.c.b16 %v5194, %v5189
  %v6070 = vpack.c.b16 %v5200, %v5195
  %v6071 = vpack.c.b16 %v5201, %v5196
  %v6072 = vpack.c.b16 %v5202, %v5197
  %v6073 = vpack.c.b16 %v5203, %v5198
  %v6074 = vpack.c.b16 %v5204, %v5199
  %v6075 = vpack.c.b16 %v5210, %v5205
  %v6076 = vpack.c.b16 %v5211, %v5206
  %v6077 = vpack.c.b16 %v5212, %v5207
  %v6078 = vpack.c.b16 %v5213, %v5208
  %v6079 = vpack.c.b16 %v5214, %v5209
  %v6080 = vpack.c.b16 %v5220, %v5215
  %v6081 = vpack.c.b16 %v5221, %v5216
  %v6082 = vpack.c.b16 %v5222, %v5217
  %v6083 = vpack.c.b16 %v5223, %v5218
  %v6084 = vpack.c.b16 %v5224, %v5219
  %v6085 = vpack.c.b16 %v5230, %v5225
  %v6086 = vpack.c.b16 %v5231, %v5226
  %v6087 = vpack.c.b16 %v5232, %v5227
  %v6088 = vpack.c.b16 %v5233, %v5228
  %v6089 = vpack.c.b16 %v5234, %v5229
  %v6090 = vpack.c.b16 %v5240, %v5235
  %v6091 = vpack.c.b16 %v5241, %v5236
  %v6092 = vpack.c.b16 %v5242, %v5237
  %v6093 = vpack.c.b16 %v5243, %v5238
  %v6094 = vpack.c.b16 %v5244, %v5239
  %v6095 = vpack.c.b16 %v5250, %v5245
  %v6096 = vpack.c.b16 %v5251, %v5246
  %v6097 = vpack.c.b16 %v5252, %v5247
  %v6098 = vpack.c.b16 %v5253, %v5248
  %v6099 = vpack.c.b16 %v5254, %v5249
  %v6100 = vpack.c.b16 %v5260, %v5255
  %v6101 = vpack.c.b16 %v5261, %v5256
  %v6102 = vpack.c.b16 %v5262, %v5257
  %v6103 = vpack.c.b16 %v5263, %v5258
  %v6104 = vpack.c.b16 %v5264, %v5259
  %v6105 = vpack.c.b16 %v5270, %v5265
  %v6106 = vpack.c.b16 %v5271, %v5266
  %v6107 = vpack.c.b16 %v5272, %v5267
  %v6108 = vpack.c.b16 %v5273, %v5268
  %v6109 = vpack.c.b16 %v5274, %v5269
  %v6110 = vpack.c.b16 %v5280, %v5275
  %v6111 = vpack.c.b16 %v5281, %v5276
  %v6112 = vpack.c.b16 %v5282, %v5277
  %v6113 = vpack.c.b16 %v5283, %v5278
  %v6114 = vpack.c.b16 %v5284, %v5279
  %v6115 = vpack.c.b16 %v5290, %v5285
  %v6116 = vpack.c.b16 %v5291, %v5286
  %v6117 = vpack.c.b16 %v5292, %v5287
  %v6118 = vpack.c.b16 %v5293, %v5288
  %v6119 = vpack.c.b16 %v5294, %v5289
  %v6120 = vpack.c.b16 %v5300, %v5295
  %v6121 = vpack.c.b16 %v5301, %v5296
  %v6122 = vpack.c.b16 %v5302, %v5297
  %v6123 = vpack.c.b16 %v5303, %v5298
  %v6124 = vpack.c.b16 %v5304, %v5299
  %v6125 = vpack.c.b16 %v5310, %v5305
  %v6126 = vpack.c.b16 %v5311, %v5306
  %v6127 = vpack.c.b16 %v5312, %v5307
  %v6128 = vpack.c.b16 %v5313, %v5308
  %v6129 = vpack.c.b16 %v5314, %v5309
  %v6130 = vpack.c.b16 %v5320, %v5315
  %v6131 = vpack.c.b16 %v5321, %v5316
  %v6132 = vpack.c.b16 %v5322, %v5317
  %v6133 = vpack.c.b16 %v5323, %v5318
  %v6134 = vpack.c.b16 %v5324, %v5319
  %v6135 = vpack.c.b16 %v5330, %v5325
  %v6136 = vpack.c.b16 %v5331, %v5326
  %v6137 = vpack.c.b16 %v5332, %v5327
  %v6138 = vpack.c.b16 %v5333, %v5328
  %v6139 = vpack.c.b16 %v5334, %v5329
  %v6140 = vpack.c.b16 %v5340, %v5335
  %v6141 = vpack.c.b16 %v5341, %v5336
  %v6142 = vpack.c.b16 %v5342, %v5337
  %v6143 = vpack.c.b16 %v5343, %v5338
  %v6144 = vpack.c.b16 %v5344, %v5339
  %v6145 = vpack.c.b16 %v5350, %v5345
  %v6146 = vpack.c.b16 %v5351, %v5346
  %v6147 = vpack.c.b16 %v5352, %v5347
  %v6148 = vpack.c.b16 %v5353, %v5348
  %v6149 = vpack.c.b16 %v5354, %v5349
  %v6150 = vpack.c.b16 %v5360, %v5355
  %v6151 = vpack.c.b16 %v5361, %v5356
  %v6152 = vpack.c.b16 %v5362, %v5357
  %v6153 = vpack.c.b16 %v5363, %v5358
  %v6154 = vpack.c.b16 %v5364, %v5359
  %v6155 = vpack.c.b16 %v5370, %v5365
  %v6156 = vpack.c.b16 %v5371, %v5366
  %v6157 = vpack.c.b16 %v5372, %v5367
  %v6158 = vpack.c.b16 %v5373, %v5368
  %v6159 = vpack.c.b16 %v5374, %v5369
  %v6160 = vpack.c.b16 %v5380, %v5375
  %v6161 = vpack.c.b16 %v5381, %v5376
  %v6162 = vpack.c.b16 %v5382, %v5377
  %v6163 = vpack.c.b16 %v5383, %v5378
  %v6164 = vpack.c.b16 %v5384, %v5379
  %v6165 = vpack.c.b16 %v5390, %v5385
  %v6166 = vpack.c.b16 %v5391, %v5386
  %v6167 = vpack.c.b16 %v5392, %v5387
  %v6168 = vpack.c.b16 %v5393, %v5388
  %v6169 = vpack.c.b16 %v5394, %v5389
  %v6170 = vpack.c.b16 %v5400, %v5395
  %v6171 = vpack.c.b16 %v5401, %v5396
  %v6172 = vpack.c.b16 %v5402, %v5397
  %v6173 = vpack.c.b16 %v5403, %v5398
  %v6174 = vpack.c.b16 %v5404, %v5399
  %v6175 = vpack.c.b16 %v5410, %v5405
  %v6176 = vpack.c.b16 %v5411, %v5406
  %v6177 = vpack.c.b16 %v5412, %v5407
  %v6178 = vpack.c.b16 %v5413, %v5408
  %v6179 = vpack.c.b16 %v5414, %v5409
  %v6180 = vpack.c.b16 %v5420, %v5415
  %v6181 = vpack.c.b16 %v5421, %v5416
  %v6182 = vpack.c.b16 %v5422, %v5417
  %v6183 = vpack.c.b16 %v5423, %v5418
  %v6184 = vpack.c.b16 %v5424, %v5419
  %v6185 = vpack.c.b16 %v5430, %v5425
  %v6186 = vpack.c.b16 %v5431, %v5426
  %v6187 = vpack.c.b16 %v5432, %v5427
  %v6188 = vpack.c.b16 %v5433, %v5428
  %v6189 = vpack.c.b16 %v5434, %v5429
  %v6190 = vpack.c.b16 %v5440, %v5435
  %v6191 = vpack.c.b16 %v5441, %v5436
  %v6192 = vpack.c.b16 %v5442, %v5437
  %v6193 = vpack.c.b16 %v5443, %v5438
  %v6194 = vpack.c.b16 %v5444, %v5439
  %v6195 = vpack.c.b16 %v5450, %v5445
  %v6196 = vpack.c.b16 %v5451, %v5446
  %v6197 = vpack.c.b16 %v5452, %v5447
  %v6198 = vpack.c.b16 %v5453, %v5448
  %v6199 = vpack.c.b16 %v5454, %v5449
  %v6200 = vpack.c.b16 %v5460, %v5455
  %v6201 = vpack.c.b16 %v5461, %v5456
  %v6202 = vpack.c.b16 %v5462, %v5457
  %v6203 = vpack.c.b16 %v5463, %v5458
  %v6204 = vpack.c.b16 %v5464, %v5459
  %v6205 = vpack.c.b16 %v5470, %v5465
  %v6206 = vpack.c.b16 %v5471, %v5466
  %v6207 = vpack.c.b16 %v5472, %v5467
  %v6208 = vpack.c.b16 %v5473, %v5468
  %v6209 = vpack.c.b16 %v5474, %v5469
  %v6210 = vpack.c.b16 %v5480, %v5475
  %v6211 = vpack.c.b16 %v5481, %v5476
  %v6212 = vpack.c.b16 %v5482, %v5477
  %v6213 = vpack.c.b16 %v5483, %v5478
  %v6214 = vpack.c.b16 %v5484, %v5479
  %v6215 = vpack.c.b16 %v5490, %v5485
  %v6216 = vpack.c.b16 %v5491, %v5486
  %v6217 = vpack.c.b16 %v5492, %v5487
  %v6218 = vpack.c.b16 %v5493, %v5488
  %v6219 = vpack.c.b16 %v5494, %v5489
  %v6220 = vpack.c.b16 %v5500, %v5495
  %v6221 = vpack.c.b16 %v5501, %v5496
  %v6222 = vpack.c.b16 %v5502, %v5497
  %v6223 = vpack.c.b16 %v5503, %v5498
  %v6224 = vpack.c.b16 %v5504, %v5499
  %v6225 = vpack.c.b16 %v5510, %v5505
  %v6226 = vpack.c.b16 %v5511, %v5506
  %v6227 = vpack.c.b16 %v5512, %v5507
  %v6228 = vpack.c.b16 %v5513, %v5508
  %v6229 = vpack.c.b16 %v5514, %v5509
  %v6230 = vpack.c.b16 %v5520, %v5515
  %v6231 = vpack.c.b16 %v5521, %v5516
  %v6232 = vpack.c.b16 %v5522, %v5517
  %v6233 = vpack.c.b16 %v5523, %v5518
  %v6234 = vpack.c.b16 %v5524, %v5519
  %v6235 = vpack.c.b16 %v5530, %v5525
  %v6236 = vpack.c.b16 %v5531, %v5526
  %v6237 = vpack.c.b16 %v5532, %v5527
  %v6238 = vpack.c.b16 %v5533, %v5528
  %v6239 = vpack.c.b16 %v5534, %v5529
  %v6240 = vpack.c.b16 %v5540, %v5535
  %v6241 = vpack.c.b16 %v5541, %v5536
  %v6242 = vpack.c.b16 %v5542, %v5537
  %v6243 = vpack.c.b16 %v5543, %v5538
  %v6244 = vpack.c.b16 %v5544, %v5539
  %vm6945 = vcmask 523264
  %v6947 = vsel %vm6945, %v2464, 0
  %6949 = vmatprep.subr.bf16.mxu0 %v5546
  %6950 = vmatpush1.bf16.msra.mxu0 %v5545
  %6951 = vmatprep.subr.bf16.mxu0 %v5551
  %6952 = vmatpush1.bf16.msra.mxu0 %v5550
  %6953 = vmatprep.subr.bf16.mxu0 %v5556
  %6954 = vmatpush1.bf16.msra.mxu0 %v5555
  %6955 = vmatprep.subr.bf16.mxu0 %v5561
  %6956 = vmatpush1.bf16.msra.mxu0 %v5560
  %6957 = vmatprep.subr.bf16.mxu0 %v5566
  %6958 = vmatpush1.bf16.msra.mxu0 %v5565
  %6959 = vmatprep.subr.bf16.mxu0 %v5571
  %6960 = vmatpush1.bf16.msra.mxu0 %v5570
  %6961 = vmatprep.subr.bf16.mxu0 %v5576
  %6962 = vmatpush1.bf16.msra.mxu0 %v5575
  %6963 = vmatprep.subr.bf16.mxu0 %v5581
  %6964 = vmatpush1.bf16.msra.mxu0 %v5580
  %6965 = vmatprep.subr.bf16.mxu0 %v5586
  %6966 = vmatpush1.bf16.msra.mxu0 %v5585
  %6967 = vmatprep.subr.bf16.mxu0 %v5591
  %6968 = vmatpush1.bf16.msra.mxu0 %v5590
  %6969 = vmatprep.subr.bf16.mxu0 %v5596
  %6970 = vmatpush1.bf16.msra.mxu0 %v5595
  %6971 = vmatprep.subr.bf16.mxu0 %v5601
  %6972 = vmatpush1.bf16.msra.mxu0 %v5600
  %6973 = vmatprep.subr.bf16.mxu0 %v5606
  %6974 = vmatpush1.bf16.msra.mxu0 %v5605
  %6975 = vmatprep.subr.bf16.mxu0 %v5611
  %6976 = vmatpush1.bf16.msra.mxu0 %v5610
  %6977 = vmatprep.subr.bf16.mxu0 %v5616
  %6978 = vmatpush1.bf16.msra.mxu0 %v5615
  %6979 = vmatprep.subr.bf16.mxu0 %v5621
  %6980 = vmatpush1.bf16.msra.mxu0 %v5620
  %6981 = vmatprep.mubr.bf16.mxu0 %v2448
  %6982 = vmatmul.mubr.bf16.gmra.mrb[0].mxu0 %v2447
  %v6983 = vpop.f32.mrb[0].mxu0
  %v6984 = vadd.f32 0.0, %v6983
  %v6985 = vpop.f32.mrb[0].mxu0
  %v6986 = vadd.f32 0.0, %v6985
  %v6987 = vpop.f32.mrb[0].mxu0
  %v6988 = vpop.f32.mrb[0].mxu0
  %6989 = vdwg.mxu0
  %6990 = vmatprep.subr.bf16.mxu0 %v5626
  %6991 = vmatpush1.bf16.msra.mxu0 %v5625
  %6992 = vmatprep.subr.bf16.mxu0 %v5631
  %6993 = vmatpush1.bf16.msra.mxu0 %v5630
  %6994 = vmatprep.subr.bf16.mxu0 %v5636
  %6995 = vmatpush1.bf16.msra.mxu0 %v5635
  %6996 = vmatprep.subr.bf16.mxu0 %v5641
  %6997 = vmatpush1.bf16.msra.mxu0 %v5640
  %6998 = vmatprep.subr.bf16.mxu0 %v5646
  %6999 = vmatpush1.bf16.msra.mxu0 %v5645
  %7000 = vmatprep.subr.bf16.mxu0 %v5651
  %7001 = vmatpush1.bf16.msra.mxu0 %v5650
  %7002 = vmatprep.subr.bf16.mxu0 %v5656
  %7003 = vmatpush1.bf16.msra.mxu0 %v5655
  %7004 = vmatprep.subr.bf16.mxu0 %v5661
  %7005 = vmatpush1.bf16.msra.mxu0 %v5660
  %7006 = vmatprep.subr.bf16.mxu0 %v5666
  %7007 = vmatpush1.bf16.msra.mxu0 %v5665
  %7008 = vmatprep.subr.bf16.mxu0 %v5671
  %7009 = vmatpush1.bf16.msra.mxu0 %v5670
  %7010 = vmatprep.subr.bf16.mxu0 %v5676
  %7011 = vmatpush1.bf16.msra.mxu0 %v5675
  %7012 = vmatprep.subr.bf16.mxu0 %v5681
  %7013 = vmatpush1.bf16.msra.mxu0 %v5680
  %7014 = vmatprep.subr.bf16.mxu0 %v5686
  %7015 = vmatpush1.bf16.msra.mxu0 %v5685
  %7016 = vmatprep.subr.bf16.mxu0 %v5691
  %7017 = vmatpush1.bf16.msra.mxu0 %v5690
  %7018 = vmatprep.subr.bf16.mxu0 %v5696
  %7019 = vmatpush1.bf16.msra.mxu0 %v5695
  %7020 = vmatprep.subr.bf16.mxu0 %v5701
  %7021 = vmatpush1.bf16.msra.mxu0 %v5700
  %7022 = vmatprep.mubr.bf16.mxu0 %v2450
  %7023 = vmatmul.mubr.bf16.gmra.mrb[0].mxu0 %v2449
  %v7024 = vpop.f32.mrb[0].mxu0
  %v7025 = vadd.f32 %v6984, %v7024
  %v7026 = vpop.f32.mrb[0].mxu0
  %v7027 = vadd.f32 %v6986, %v7026
  %v7028 = vpop.f32.mrb[0].mxu0
  %v7029 = vpop.f32.mrb[0].mxu0
  %7030 = vdwg.mxu0
  %7031 = vmatprep.subr.bf16.mxu0 %v5706
  %7032 = vmatpush1.bf16.msra.mxu0 %v5705
  %7033 = vmatprep.subr.bf16.mxu0 %v5711
  %7034 = vmatpush1.bf16.msra.mxu0 %v5710
  %7035 = vmatprep.subr.bf16.mxu0 %v5716
  %7036 = vmatpush1.bf16.msra.mxu0 %v5715
  %7037 = vmatprep.subr.bf16.mxu0 %v5721
  %7038 = vmatpush1.bf16.msra.mxu0 %v5720
  %7039 = vmatprep.subr.bf16.mxu0 %v5726
  %7040 = vmatpush1.bf16.msra.mxu0 %v5725
  %7041 = vmatprep.subr.bf16.mxu0 %v5731
  %7042 = vmatpush1.bf16.msra.mxu0 %v5730
  %7043 = vmatprep.subr.bf16.mxu0 %v5736
  %7044 = vmatpush1.bf16.msra.mxu0 %v5735
  %7045 = vmatprep.subr.bf16.mxu0 %v5741
  %7046 = vmatpush1.bf16.msra.mxu0 %v5740
  %7047 = vmatprep.subr.bf16.mxu0 %v5746
  %7048 = vmatpush1.bf16.msra.mxu0 %v5745
  %7049 = vmatprep.subr.bf16.mxu0 %v5751
  %7050 = vmatpush1.bf16.msra.mxu0 %v5750
  %7051 = vmatprep.subr.bf16.mxu0 %v5756
  %7052 = vmatpush1.bf16.msra.mxu0 %v5755
  %7053 = vmatprep.subr.bf16.mxu0 %v5761
  %7054 = vmatpush1.bf16.msra.mxu0 %v5760
  %7055 = vmatprep.subr.bf16.mxu0 %v5766
  %7056 = vmatpush1.bf16.msra.mxu0 %v5765
  %7057 = vmatprep.subr.bf16.mxu0 %v5771
  %7058 = vmatpush1.bf16.msra.mxu0 %v5770
  %7059 = vmatprep.subr.bf16.mxu0 %v5776
  %7060 = vmatpush1.bf16.msra.mxu0 %v5775
  %7061 = vmatprep.subr.bf16.mxu0 %v5781
  %7062 = vmatpush1.bf16.msra.mxu0 %v5780
  %7063 = vmatprep.mubr.bf16.mxu0 %v2452
  %7064 = vmatmul.mubr.bf16.gmra.mrb[0].mxu0 %v2451
  %v7065 = vpop.f32.mrb[0].mxu0
  %v7066 = vadd.f32 %v7025, %v7065
  %v7067 = vpop.f32.mrb[0].mxu0
  %v7068 = vadd.f32 %v7027, %v7067
  %v7069 = vpop.f32.mrb[0].mxu0
  %v7070 = vpop.f32.mrb[0].mxu0
  %7071 = vdwg.mxu0
  %7072 = vmatprep.subr.bf16.mxu0 %v5786
  %7073 = vmatpush1.bf16.msra.mxu0 %v5785
  %7074 = vmatprep.subr.bf16.mxu0 %v5791
  %7075 = vmatpush1.bf16.msra.mxu0 %v5790
  %7076 = vmatprep.subr.bf16.mxu0 %v5796
  %7077 = vmatpush1.bf16.msra.mxu0 %v5795
  %7078 = vmatprep.subr.bf16.mxu0 %v5801
  %7079 = vmatpush1.bf16.msra.mxu0 %v5800
  %7080 = vmatprep.subr.bf16.mxu0 %v5806
  %7081 = vmatpush1.bf16.msra.mxu0 %v5805
  %7082 = vmatprep.subr.bf16.mxu0 %v5811
  %7083 = vmatpush1.bf16.msra.mxu0 %v5810
  %7084 = vmatprep.subr.bf16.mxu0 %v5816
  %7085 = vmatpush1.bf16.msra.mxu0 %v5815
  %7086 = vmatprep.subr.bf16.mxu0 %v5821
  %7087 = vmatpush1.bf16.msra.mxu0 %v5820
  %7088 = vmatprep.subr.bf16.mxu0 %v5826
  %7089 = vmatpush1.bf16.msra.mxu0 %v5825
  %7090 = vmatprep.subr.bf16.mxu0 %v5831
  %7091 = vmatpush1.bf16.msra.mxu0 %v5830
  %7092 = vmatprep.subr.bf16.mxu0 %v5836
  %7093 = vmatpush1.bf16.msra.mxu0 %v5835
  %7094 = vmatprep.subr.bf16.mxu0 %v5841
  %7095 = vmatpush1.bf16.msra.mxu0 %v5840
  %7096 = vmatprep.subr.bf16.mxu0 %v5846
  %7097 = vmatpush1.bf16.msra.mxu0 %v5845
  %7098 = vmatprep.subr.bf16.mxu0 %v5851
  %7099 = vmatpush1.bf16.msra.mxu0 %v5850
  %7100 = vmatprep.subr.bf16.mxu0 %v5856
  %7101 = vmatpush1.bf16.msra.mxu0 %v5855
  %7102 = vmatprep.subr.bf16.mxu0 %v5861
  %7103 = vmatpush1.bf16.msra.mxu0 %v5860
  %7104 = vmatprep.mubr.bf16.mxu0 %v2454
  %7105 = vmatmul.mubr.bf16.gmra.mrb[0].mxu0 %v2453
  %v7106 = vpop.f32.mrb[0].mxu0
  %v7107 = vadd.f32 %v7066, %v7106
  %v7108 = vpop.f32.mrb[0].mxu0
  %v7109 = vadd.f32 %v7068, %v7108
  %v7110 = vpop.f32.mrb[0].mxu0
  %v7111 = vpop.f32.mrb[0].mxu0
  %7112 = vdwg.mxu0
  %7113 = vmatprep.subr.bf16.mxu0 %v5866
  %7114 = vmatpush1.bf16.msra.mxu0 %v5865
  %7115 = vmatprep.subr.bf16.mxu0 %v5871
  %7116 = vmatpush1.bf16.msra.mxu0 %v5870
  %7117 = vmatprep.subr.bf16.mxu0 %v5876
  %7118 = vmatpush1.bf16.msra.mxu0 %v5875
  %7119 = vmatprep.subr.bf16.mxu0 %v5881
  %7120 = vmatpush1.bf16.msra.mxu0 %v5880
  %7121 = vmatprep.subr.bf16.mxu0 %v5886
  %7122 = vmatpush1.bf16.msra.mxu0 %v5885
  %7123 = vmatprep.subr.bf16.mxu0 %v5891
  %7124 = vmatpush1.bf16.msra.mxu0 %v5890
  %7125 = vmatprep.subr.bf16.mxu0 %v5896
  %7126 = vmatpush1.bf16.msra.mxu0 %v5895
  %7127 = vmatprep.subr.bf16.mxu0 %v5901
  %7128 = vmatpush1.bf16.msra.mxu0 %v5900
  %7129 = vmatprep.subr.bf16.mxu0 %v5906
  %7130 = vmatpush1.bf16.msra.mxu0 %v5905
  %7131 = vmatprep.subr.bf16.mxu0 %v5911
  %7132 = vmatpush1.bf16.msra.mxu0 %v5910
  %7133 = vmatprep.subr.bf16.mxu0 %v5916
  %7134 = vmatpush1.bf16.msra.mxu0 %v5915
  %7135 = vmatprep.subr.bf16.mxu0 %v5921
  %7136 = vmatpush1.bf16.msra.mxu0 %v5920
  %7137 = vmatprep.subr.bf16.mxu0 %v5926
  %7138 = vmatpush1.bf16.msra.mxu0 %v5925
  %7139 = vmatprep.subr.bf16.mxu0 %v5931
  %7140 = vmatpush1.bf16.msra.mxu0 %v5930
  %7141 = vmatprep.subr.bf16.mxu0 %v5936
  %7142 = vmatpush1.bf16.msra.mxu0 %v5935
  %7143 = vmatprep.subr.bf16.mxu0 %v5941
  %7144 = vmatpush1.bf16.msra.mxu0 %v5940
  %7145 = vmatprep.mubr.bf16.mxu0 %v2456
  %7146 = vmatmul.mubr.bf16.gmra.mrb[0].mxu0 %v2455
  %v7147 = vpop.f32.mrb[0].mxu0
  %v7148 = vadd.f32 %v7107, %v7147
  %v7149 = vpop.f32.mrb[0].mxu0
  %v7150 = vadd.f32 %v7109, %v7149
  %v7151 = vpop.f32.mrb[0].mxu0
  %v7152 = vpop.f32.mrb[0].mxu0
  %7153 = vdwg.mxu0
  %7154 = vmatprep.subr.bf16.mxu0 %v5946
  %7155 = vmatpush1.bf16.msra.mxu0 %v5945
  %7156 = vmatprep.subr.bf16.mxu0 %v5951
  %7157 = vmatpush1.bf16.msra.mxu0 %v5950
  %7158 = vmatprep.subr.bf16.mxu0 %v5956
  %7159 = vmatpush1.bf16.msra.mxu0 %v5955
  %7160 = vmatprep.subr.bf16.mxu0 %v5961
  %7161 = vmatpush1.bf16.msra.mxu0 %v5960
  %7162 = vmatprep.subr.bf16.mxu0 %v5966
  %7163 = vmatpush1.bf16.msra.mxu0 %v5965
  %7164 = vmatprep.subr.bf16.mxu0 %v5971
  %7165 = vmatpush1.bf16.msra.mxu0 %v5970
  %7166 = vmatprep.subr.bf16.mxu0 %v5976
  %7167 = vmatpush1.bf16.msra.mxu0 %v5975
  %7168 = vmatprep.subr.bf16.mxu0 %v5981
  %7169 = vmatpush1.bf16.msra.mxu0 %v5980
  %7170 = vmatprep.subr.bf16.mxu0 %v5986
  %7171 = vmatpush1.bf16.msra.mxu0 %v5985
  %7172 = vmatprep.subr.bf16.mxu0 %v5991
  %7173 = vmatpush1.bf16.msra.mxu0 %v5990
  %7174 = vmatprep.subr.bf16.mxu0 %v5996
  %7175 = vmatpush1.bf16.msra.mxu0 %v5995
  %7176 = vmatprep.subr.bf16.mxu0 %v6001
  %7177 = vmatpush1.bf16.msra.mxu0 %v6000
  %7178 = vmatprep.subr.bf16.mxu0 %v6006
  %7179 = vmatpush1.bf16.msra.mxu0 %v6005
  %7180 = vmatprep.subr.bf16.mxu0 %v6011
  %7181 = vmatpush1.bf16.msra.mxu0 %v6010
  %7182 = vmatprep.subr.bf16.mxu0 %v6016
  %7183 = vmatpush1.bf16.msra.mxu0 %v6015
  %7184 = vmatprep.subr.bf16.mxu0 %v6021
  %7185 = vmatpush1.bf16.msra.mxu0 %v6020
  %7186 = vmatprep.mubr.bf16.mxu0 %v2458
  %7187 = vmatmul.mubr.bf16.gmra.mrb[0].mxu0 %v2457
  %v7188 = vpop.f32.mrb[0].mxu0
  %v7189 = vadd.f32 %v7148, %v7188
  %v7190 = vpop.f32.mrb[0].mxu0
  %v7191 = vadd.f32 %v7150, %v7190
  %v7192 = vpop.f32.mrb[0].mxu0
  %v7193 = vpop.f32.mrb[0].mxu0
  %7194 = vdwg.mxu0
  %7195 = vmatprep.subr.bf16.mxu0 %v6026
  %7196 = vmatpush1.bf16.msra.mxu0 %v6025
  %7197 = vmatprep.subr.bf16.mxu0 %v6031
  %7198 = vmatpush1.bf16.msra.mxu0 %v6030
  %7199 = vmatprep.subr.bf16.mxu0 %v6036
  %7200 = vmatpush1.bf16.msra.mxu0 %v6035
  %7201 = vmatprep.subr.bf16.mxu0 %v6041
  %7202 = vmatpush1.bf16.msra.mxu0 %v6040
  %7203 = vmatprep.subr.bf16.mxu0 %v6046
  %7204 = vmatpush1.bf16.msra.mxu0 %v6045
  %7205 = vmatprep.subr.bf16.mxu0 %v6051
  %7206 = vmatpush1.bf16.msra.mxu0 %v6050
  %7207 = vmatprep.subr.bf16.mxu0 %v6056
  %7208 = vmatpush1.bf16.msra.mxu0 %v6055
  %7209 = vmatprep.subr.bf16.mxu0 %v6061
  %7210 = vmatpush1.bf16.msra.mxu0 %v6060
  %7211 = vmatprep.subr.bf16.mxu0 %v6066
  %7212 = vmatpush1.bf16.msra.mxu0 %v6065
  %7213 = vmatprep.subr.bf16.mxu0 %v6071
  %7214 = vmatpush1.bf16.msra.mxu0 %v6070
  %7215 = vmatprep.subr.bf16.mxu0 %v6076
  %7216 = vmatpush1.bf16.msra.mxu0 %v6075
  %7217 = vmatprep.subr.bf16.mxu0 %v6081
  %7218 = vmatpush1.bf16.msra.mxu0 %v6080
  %7219 = vmatprep.subr.bf16.mxu0 %v6086
  %7220 = vmatpush1.bf16.msra.mxu0 %v6085
  %7221 = vmatprep.subr.bf16.mxu0 %v6091
  %7222 = vmatpush1.bf16.msra.mxu0 %v6090
  %7223 = vmatprep.subr.bf16.mxu0 %v6096
  %7224 = vmatpush1.bf16.msra.mxu0 %v6095
  %7225 = vmatprep.subr.bf16.mxu0 %v6101
  %7226 = vmatpush1.bf16.msra.mxu0 %v6100
  %7227 = vmatprep.mubr.bf16.mxu0 %v2460
  %7228 = vmatmul.mubr.bf16.gmra.mrb[0].mxu0 %v2459
  %v7229 = vpop.f32.mrb[0].mxu0
  %v7230 = vadd.f32 %v7189, %v7229
  %v7231 = vpop.f32.mrb[0].mxu0
  %v7232 = vadd.f32 %v7191, %v7231
  %v7233 = vpop.f32.mrb[0].mxu0
  %v7234 = vpop.f32.mrb[0].mxu0
  %7235 = vdwg.mxu0
  %7236 = vmatprep.subr.bf16.mxu0 %v6106
  %7237 = vmatpush1.bf16.msra.mxu0 %v6105
  %7238 = vmatprep.subr.bf16.mxu0 %v6111
  %7239 = vmatpush1.bf16.msra.mxu0 %v6110
  %7240 = vmatprep.subr.bf16.mxu0 %v6116
  %7241 = vmatpush1.bf16.msra.mxu0 %v6115
  %7242 = vmatprep.subr.bf16.mxu0 %v6121
  %7243 = vmatpush1.bf16.msra.mxu0 %v6120
  %7244 = vmatprep.subr.bf16.mxu0 %v6126
  %7245 = vmatpush1.bf16.msra.mxu0 %v6125
  %7246 = vmatprep.subr.bf16.mxu0 %v6131
  %7247 = vmatpush1.bf16.msra.mxu0 %v6130
  %7248 = vmatprep.subr.bf16.mxu0 %v6136
  %7249 = vmatpush1.bf16.msra.mxu0 %v6135
  %7250 = vmatprep.subr.bf16.mxu0 %v6141
  %7251 = vmatpush1.bf16.msra.mxu0 %v6140
  %7252 = vmatprep.subr.bf16.mxu0 %v6146
  %7253 = vmatpush1.bf16.msra.mxu0 %v6145
  %7254 = vmatprep.subr.bf16.mxu0 %v6151
  %7255 = vmatpush1.bf16.msra.mxu0 %v6150
  %7256 = vmatprep.subr.bf16.mxu0 %v6156
  %7257 = vmatpush1.bf16.msra.mxu0 %v6155
  %7258 = vmatprep.subr.bf16.mxu0 %v6161
  %7259 = vmatpush1.bf16.msra.mxu0 %v6160
  %7260 = vmatprep.subr.bf16.mxu0 %v6166
  %7261 = vmatpush1.bf16.msra.mxu0 %v6165
  %7262 = vmatprep.subr.bf16.mxu0 %v6171
  %7263 = vmatpush1.bf16.msra.mxu0 %v6170
  %7264 = vmatprep.subr.bf16.mxu0 %v6176
  %7265 = vmatpush1.bf16.msra.mxu0 %v6175
  %7266 = vmatprep.subr.bf16.mxu0 %v6181
  %7267 = vmatpush1.bf16.msra.mxu0 %v6180
  %7268 = vmatprep.mubr.bf16.mxu0 %v2462
  %7269 = vmatmul.mubr.bf16.gmra.mrb[0].mxu0 %v2461
  %v7270 = vpop.f32.mrb[0].mxu0
  %v7271 = vadd.f32 %v7230, %v7270
  %v7272 = vpop.f32.mrb[0].mxu0
  %v7273 = vadd.f32 %v7232, %v7272
  %v7274 = vpop.f32.mrb[0].mxu0
  %v7275 = vpop.f32.mrb[0].mxu0
  %7276 = vdwg.mxu0
  %7277 = vmatprep.subr.bf16.mxu0 %v6186
  %7278 = vmatpush1.bf16.msra.mxu0 %v6185
  %7279 = vmatprep.subr.bf16.mxu0 %v6191
  %7280 = vmatpush1.bf16.msra.mxu0 %v6190
  %7281 = vmatprep.subr.bf16.mxu0 %v6196
  %7282 = vmatpush1.bf16.msra.mxu0 %v6195
  %7283 = vmatprep.subr.bf16.mxu0 %v6201
  %7284 = vmatpush1.bf16.msra.mxu0 %v6200
  %7285 = vmatprep.subr.bf16.mxu0 %v6206
  %7286 = vmatpush1.bf16.msra.mxu0 %v6205
  %7287 = vmatprep.subr.bf16.mxu0 %v6211
  %7288 = vmatpush1.bf16.msra.mxu0 %v6210
  %7289 = vmatprep.subr.bf16.mxu0 %v6216
  %7290 = vmatpush1.bf16.msra.mxu0 %v6215
  %7291 = vmatprep.subr.bf16.mxu0 %v6221
  %7292 = vmatpush1.bf16.msra.mxu0 %v6220
  %7293 = vmatprep.subr.bf16.mxu0 %v6226
  %7294 = vmatpush1.bf16.msra.mxu0 %v6225
  %7295 = vmatprep.subr.bf16.mxu0 %v6231
  %7296 = vmatpush1.bf16.msra.mxu0 %v6230
  %7297 = vmatprep.subr.bf16.mxu0 %v6236
  %7298 = vmatpush1.bf16.msra.mxu0 %v6235
  %7299 = vmatprep.subr.bf16.mxu0 %v6241
  %7300 = vmatpush1.bf16.msra.mxu0 %v6240
  %7301 = vmatprep.subr.bf16.mxu0 0
  %7302 = vmatpush1.bf16.msra.mxu0 0
  %7303 = vmatprep.subr.bf16.mxu0 0
  %7304 = vmatpush1.bf16.msra.mxu0 0
  %7305 = vmatprep.subr.bf16.mxu0 0
  %7306 = vmatpush1.bf16.msra.mxu0 0
  %7307 = vmatprep.subr.bf16.mxu0 0
  %7308 = vmatpush1.bf16.msra.mxu0 0
  %7309 = vmatprep.mubr.bf16.mxu0 %v6947
  %7310 = vmatmul.mubr.bf16.gmra.mrb[0].mxu0 %v2463
  %v7311 = vpop.f32.mrb[0].mxu0
  %v7312 = vadd.f32 %v7271, %v7311
  %v7313 = vpop.f32.mrb[0].mxu0
  %v7314 = vadd.f32 %v7273, %v7313
  %v7315 = vpop.f32.mrb[0].mxu0
  %v7316 = vpop.f32.mrb[0].mxu0
  %7317 = vdwg.mxu0
  %7318 = vmatprep.subr.bf16.mxu0 %v5548
  %7319 = vmatpush1.bf16.msra.mxu0 %v5547
  %7320 = vmatprep.subr.bf16.mxu0 %v5553
  %7321 = vmatpush1.bf16.msra.mxu0 %v5552
  %7322 = vmatprep.subr.bf16.mxu0 %v5558
  %7323 = vmatpush1.bf16.msra.mxu0 %v5557
  %7324 = vmatprep.subr.bf16.mxu0 %v5563
  %7325 = vmatpush1.bf16.msra.mxu0 %v5562
  %7326 = vmatprep.subr.bf16.mxu0 %v5568
  %7327 = vmatpush1.bf16.msra.mxu0 %v5567
  %7328 = vmatprep.subr.bf16.mxu0 %v5573
  %7329 = vmatpush1.bf16.msra.mxu0 %v5572
  %7330 = vmatprep.subr.bf16.mxu0 %v5578
  %7331 = vmatpush1.bf16.msra.mxu0 %v5577
  %7332 = vmatprep.subr.bf16.mxu0 %v5583
  %7333 = vmatpush1.bf16.msra.mxu0 %v5582
  %7334 = vmatprep.subr.bf16.mxu0 %v5588
  %7335 = vmatpush1.bf16.msra.mxu0 %v5587
  %7336 = vmatprep.subr.bf16.mxu0 %v5593
  %7337 = vmatpush1.bf16.msra.mxu0 %v5592
  %7338 = vmatprep.subr.bf16.mxu0 %v5598
  %7339 = vmatpush1.bf16.msra.mxu0 %v5597
  %7340 = vmatprep.subr.bf16.mxu0 %v5603
  %7341 = vmatpush1.bf16.msra.mxu0 %v5602
  %7342 = vmatprep.subr.bf16.mxu0 %v5608
  %7343 = vmatpush1.bf16.msra.mxu0 %v5607
  %7344 = vmatprep.subr.bf16.mxu0 %v5613
  %7345 = vmatpush1.bf16.msra.mxu0 %v5612
  %7346 = vmatprep.subr.bf16.mxu0 %v5618
  %7347 = vmatpush1.bf16.msra.mxu0 %v5617
  %7348 = vmatprep.subr.bf16.mxu0 %v5623
  %7349 = vmatpush1.bf16.msra.mxu0 %v5622
  %7350 = vmatprep.mubr.bf16.mxu0 %v2448
  %7351 = vmatmul.mubr.bf16.gmra.mrb[0].mxu0 %v2447
  %v7352 = vpop.f32.mrb[0].mxu0
  %v7353 = vadd.f32 0.0, %v7352
  %v7354 = vpop.f32.mrb[0].mxu0
  %v7355 = vadd.f32 0.0, %v7354
  %v7356 = vpop.f32.mrb[0].mxu0
  %v7357 = vpop.f32.mrb[0].mxu0
  %7358 = vdwg.mxu0
  %7359 = vmatprep.subr.bf16.mxu0 %v5628
  %7360 = vmatpush1.bf16.msra.mxu0 %v5627
  %7361 = vmatprep.subr.bf16.mxu0 %v5633
  %7362 = vmatpush1.bf16.msra.mxu0 %v5632
  %7363 = vmatprep.subr.bf16.mxu0 %v5638
  %7364 = vmatpush1.bf16.msra.mxu0 %v5637
  %7365 = vmatprep.subr.bf16.mxu0 %v5643
  %7366 = vmatpush1.bf16.msra.mxu0 %v5642
  %7367 = vmatprep.subr.bf16.mxu0 %v5648
  %7368 = vmatpush1.bf16.msra.mxu0 %v5647
  %7369 = vmatprep.subr.bf16.mxu0 %v5653
  %7370 = vmatpush1.bf16.msra.mxu0 %v5652
  %7371 = vmatprep.subr.bf16.mxu0 %v5658
  %7372 = vmatpush1.bf16.msra.mxu0 %v5657
  %7373 = vmatprep.subr.bf16.mxu0 %v5663
  %7374 = vmatpush1.bf16.msra.mxu0 %v5662
  %7375 = vmatprep.subr.bf16.mxu0 %v5668
  %7376 = vmatpush1.bf16.msra.mxu0 %v5667
  %7377 = vmatprep.subr.bf16.mxu0 %v5673
  %7378 = vmatpush1.bf16.msra.mxu0 %v5672
  %7379 = vmatprep.subr.bf16.mxu0 %v5678
  %7380 = vmatpush1.bf16.msra.mxu0 %v5677
  %7381 = vmatprep.subr.bf16.mxu0 %v5683
  %7382 = vmatpush1.bf16.msra.mxu0 %v5682
  %7383 = vmatprep.subr.bf16.mxu0 %v5688
  %7384 = vmatpush1.bf16.msra.mxu0 %v5687
  %7385 = vmatprep.subr.bf16.mxu0 %v5693
  %7386 = vmatpush1.bf16.msra.mxu0 %v5692
  %7387 = vmatprep.subr.bf16.mxu0 %v5698
  %7388 = vmatpush1.bf16.msra.mxu0 %v5697
  %7389 = vmatprep.subr.bf16.mxu0 %v5703
  %7390 = vmatpush1.bf16.msra.mxu0 %v5702
  %7391 = vmatprep.mubr.bf16.mxu0 %v2450
  %7392 = vmatmul.mubr.bf16.gmra.mrb[0].mxu0 %v2449
  %v7393 = vpop.f32.mrb[0].mxu0
  %v7394 = vadd.f32 %v7353, %v7393
  %v7395 = vpop.f32.mrb[0].mxu0
  %v7396 = vadd.f32 %v7355, %v7395
  %v7397 = vpop.f32.mrb[0].mxu0
  %v7398 = vpop.f32.mrb[0].mxu0
  %7399 = vdwg.mxu0
  %7400 = vmatprep.subr.bf16.mxu0 %v5708
  %7401 = vmatpush1.bf16.msra.mxu0 %v5707
  %7402 = vmatprep.subr.bf16.mxu0 %v5713
  %7403 = vmatpush1.bf16.msra.mxu0 %v5712
  %7404 = vmatprep.subr.bf16.mxu0 %v5718
  %7405 = vmatpush1.bf16.msra.mxu0 %v5717
  %7406 = vmatprep.subr.bf16.mxu0 %v5723
  %7407 = vmatpush1.bf16.msra.mxu0 %v5722
  %7408 = vmatprep.subr.bf16.mxu0 %v5728
  %7409 = vmatpush1.bf16.msra.mxu0 %v5727
  %7410 = vmatprep.subr.bf16.mxu0 %v5733
  %7411 = vmatpush1.bf16.msra.mxu0 %v5732
  %7412 = vmatprep.subr.bf16.mxu0 %v5738
  %7413 = vmatpush1.bf16.msra.mxu0 %v5737
  %7414 = vmatprep.subr.bf16.mxu0 %v5743
  %7415 = vmatpush1.bf16.msra.mxu0 %v5742
  %7416 = vmatprep.subr.bf16.mxu0 %v5748
  %7417 = vmatpush1.bf16.msra.mxu0 %v5747
  %7418 = vmatprep.subr.bf16.mxu0 %v5753
  %7419 = vmatpush1.bf16.msra.mxu0 %v5752
  %7420 = vmatprep.subr.bf16.mxu0 %v5758
  %7421 = vmatpush1.bf16.msra.mxu0 %v5757
  %7422 = vmatprep.subr.bf16.mxu0 %v5763
  %7423 = vmatpush1.bf16.msra.mxu0 %v5762
  %7424 = vmatprep.subr.bf16.mxu0 %v5768
  %7425 = vmatpush1.bf16.msra.mxu0 %v5767
  %7426 = vmatprep.subr.bf16.mxu0 %v5773
  %7427 = vmatpush1.bf16.msra.mxu0 %v5772
  %7428 = vmatprep.subr.bf16.mxu0 %v5778
  %7429 = vmatpush1.bf16.msra.mxu0 %v5777
  %7430 = vmatprep.subr.bf16.mxu0 %v5783
  %7431 = vmatpush1.bf16.msra.mxu0 %v5782
  %7432 = vmatprep.mubr.bf16.mxu0 %v2452
  %7433 = vmatmul.mubr.bf16.gmra.mrb[0].mxu0 %v2451
  %v7434 = vpop.f32.mrb[0].mxu0
  %v7435 = vadd.f32 %v7394, %v7434
  %v7436 = vpop.f32.mrb[0].mxu0
  %v7437 = vadd.f32 %v7396, %v7436
  %v7438 = vpop.f32.mrb[0].mxu0
  %v7439 = vpop.f32.mrb[0].mxu0
  %7440 = vdwg.mxu0
  %7441 = vmatprep.subr.bf16.mxu0 %v5788
  %7442 = vmatpush1.bf16.msra.mxu0 %v5787
  %7443 = vmatprep.subr.bf16.mxu0 %v5793
  %7444 = vmatpush1.bf16.msra.mxu0 %v5792
  %7445 = vmatprep.subr.bf16.mxu0 %v5798
  %7446 = vmatpush1.bf16.msra.mxu0 %v5797
  %7447 = vmatprep.subr.bf16.mxu0 %v5803
  %7448 = vmatpush1.bf16.msra.mxu0 %v5802
  %7449 = vmatprep.subr.bf16.mxu0 %v5808
  %7450 = vmatpush1.bf16.msra.mxu0 %v5807
  %7451 = vmatprep.subr.bf16.mxu0 %v5813
  %7452 = vmatpush1.bf16.msra.mxu0 %v5812
  %7453 = vmatprep.subr.bf16.mxu0 %v5818
  %7454 = vmatpush1.bf16.msra.mxu0 %v5817
  %7455 = vmatprep.subr.bf16.mxu0 %v5823
  %7456 = vmatpush1.bf16.msra.mxu0 %v5822
  %7457 = vmatprep.subr.bf16.mxu0 %v5828
  %7458 = vmatpush1.bf16.msra.mxu0 %v5827
  %7459 = vmatprep.subr.bf16.mxu0 %v5833
  %7460 = vmatpush1.bf16.msra.mxu0 %v5832
  %7461 = vmatprep.subr.bf16.mxu0 %v5838
  %7462 = vmatpush1.bf16.msra.mxu0 %v5837
  %7463 = vmatprep.subr.bf16.mxu0 %v5843
  %7464 = vmatpush1.bf16.msra.mxu0 %v5842
  %7465 = vmatprep.subr.bf16.mxu0 %v5848
  %7466 = vmatpush1.bf16.msra.mxu0 %v5847
  %7467 = vmatprep.subr.bf16.mxu0 %v5853
  %7468 = vmatpush1.bf16.msra.mxu0 %v5852
  %7469 = vmatprep.subr.bf16.mxu0 %v5858
  %7470 = vmatpush1.bf16.msra.mxu0 %v5857
  %7471 = vmatprep.subr.bf16.mxu0 %v5863
  %7472 = vmatpush1.bf16.msra.mxu0 %v5862
  %7473 = vmatprep.mubr.bf16.mxu0 %v2454
  %7474 = vmatmul.mubr.bf16.gmra.mrb[0].mxu0 %v2453
  %v7475 = vpop.f32.mrb[0].mxu0
  %v7476 = vadd.f32 %v7435, %v7475
  %v7477 = vpop.f32.mrb[0].mxu0
  %v7478 = vadd.f32 %v7437, %v7477
  %v7479 = vpop.f32.mrb[0].mxu0
  %v7480 = vpop.f32.mrb[0].mxu0
  %7481 = vdwg.mxu0
  %7482 = vmatprep.subr.bf16.mxu0 %v5868
  %7483 = vmatpush1.bf16.msra.mxu0 %v5867
  %7484 = vmatprep.subr.bf16.mxu0 %v5873
  %7485 = vmatpush1.bf16.msra.mxu0 %v5872
  %7486 = vmatprep.subr.bf16.mxu0 %v5878
  %7487 = vmatpush1.bf16.msra.mxu0 %v5877
  %7488 = vmatprep.subr.bf16.mxu0 %v5883
  %7489 = vmatpush1.bf16.msra.mxu0 %v5882
  %7490 = vmatprep.subr.bf16.mxu0 %v5888
  %7491 = vmatpush1.bf16.msra.mxu0 %v5887
  %7492 = vmatprep.subr.bf16.mxu0 %v5893
  %7493 = vmatpush1.bf16.msra.mxu0 %v5892
  %7494 = vmatprep.subr.bf16.mxu0 %v5898
  %7495 = vmatpush1.bf16.msra.mxu0 %v5897
  %7496 = vmatprep.subr.bf16.mxu0 %v5903
  %7497 = vmatpush1.bf16.msra.mxu0 %v5902
  %7498 = vmatprep.subr.bf16.mxu0 %v5908
  %7499 = vmatpush1.bf16.msra.mxu0 %v5907
  %7500 = vmatprep.subr.bf16.mxu0 %v5913
  %7501 = vmatpush1.bf16.msra.mxu0 %v5912
  %7502 = vmatprep.subr.bf16.mxu0 %v5918
  %7503 = vmatpush1.bf16.msra.mxu0 %v5917
  %7504 = vmatprep.subr.bf16.mxu0 %v5923
  %7505 = vmatpush1.bf16.msra.mxu0 %v5922
  %7506 = vmatprep.subr.bf16.mxu0 %v5928
  %7507 = vmatpush1.bf16.msra.mxu0 %v5927
  %7508 = vmatprep.subr.bf16.mxu0 %v5933
  %7509 = vmatpush1.bf16.msra.mxu0 %v5932
  %7510 = vmatprep.subr.bf16.mxu0 %v5938
  %7511 = vmatpush1.bf16.msra.mxu0 %v5937
  %7512 = vmatprep.subr.bf16.mxu0 %v5943
  %7513 = vmatpush1.bf16.msra.mxu0 %v5942
  %7514 = vmatprep.mubr.bf16.mxu0 %v2456
  %7515 = vmatmul.mubr.bf16.gmra.mrb[0].mxu0 %v2455
  %v7516 = vpop.f32.mrb[0].mxu0
  %v7517 = vadd.f32 %v7476, %v7516
  %v7518 = vpop.f32.mrb[0].mxu0
  %v7519 = vadd.f32 %v7478, %v7518
  %v7520 = vpop.f32.mrb[0].mxu0
  %v7521 = vpop.f32.mrb[0].mxu0
  %7522 = vdwg.mxu0
  %7523 = vmatprep.subr.bf16.mxu0 %v5948
  %7524 = vmatpush1.bf16.msra.mxu0 %v5947
  %7525 = vmatprep.subr.bf16.mxu0 %v5953
  %7526 = vmatpush1.bf16.msra.mxu0 %v5952
  %7527 = vmatprep.subr.bf16.mxu0 %v5958
  %7528 = vmatpush1.bf16.msra.mxu0 %v5957
  %7529 = vmatprep.subr.bf16.mxu0 %v5963
  %7530 = vmatpush1.bf16.msra.mxu0 %v5962
  %7531 = vmatprep.subr.bf16.mxu0 %v5968
  %7532 = vmatpush1.bf16.msra.mxu0 %v5967
  %7533 = vmatprep.subr.bf16.mxu0 %v5973
  %7534 = vmatpush1.bf16.msra.mxu0 %v5972
  %7535 = vmatprep.subr.bf16.mxu0 %v5978
  %7536 = vmatpush1.bf16.msra.mxu0 %v5977
  %7537 = vmatprep.subr.bf16.mxu0 %v5983
  %7538 = vmatpush1.bf16.msra.mxu0 %v5982
  %7539 = vmatprep.subr.bf16.mxu0 %v5988
  %7540 = vmatpush1.bf16.msra.mxu0 %v5987
  %7541 = vmatprep.subr.bf16.mxu0 %v5993
  %7542 = vmatpush1.bf16.msra.mxu0 %v5992
  %7543 = vmatprep.subr.bf16.mxu0 %v5998
  %7544 = vmatpush1.bf16.msra.mxu0 %v5997
  %7545 = vmatprep.subr.bf16.mxu0 %v6003
  %7546 = vmatpush1.bf16.msra.mxu0 %v6002
  %7547 = vmatprep.subr.bf16.mxu0 %v6008
  %7548 = vmatpush1.bf16.msra.mxu0 %v6007
  %7549 = vmatprep.subr.bf16.mxu0 %v6013
  %7550 = vmatpush1.bf16.msra.mxu0 %v6012
  %7551 = vmatprep.subr.bf16.mxu0 %v6018
  %7552 = vmatpush1.bf16.msra.mxu0 %v6017
  %7553 = vmatprep.subr.bf16.mxu0 %v6023
  %7554 = vmatpush1.bf16.msra.mxu0 %v6022
  %7555 = vmatprep.mubr.bf16.mxu0 %v2458
  %7556 = vmatmul.mubr.bf16.gmra.mrb[0].mxu0 %v2457
  %v7557 = vpop.f32.mrb[0].mxu0
  %v7558 = vadd.f32 %v7517, %v7557
  %v7559 = vpop.f32.mrb[0].mxu0
  %v7560 = vadd.f32 %v7519, %v7559
  %v7561 = vpop.f32.mrb[0].mxu0
  %v7562 = vpop.f32.mrb[0].mxu0
  %7563 = vdwg.mxu0
  %7564 = vmatprep.subr.bf16.mxu0 %v6028
  %7565 = vmatpush1.bf16.msra.mxu0 %v6027
  %7566 = vmatprep.subr.bf16.mxu0 %v6033
  %7567 = vmatpush1.bf16.msra.mxu0 %v6032
  %7568 = vmatprep.subr.bf16.mxu0 %v6038
  %7569 = vmatpush1.bf16.msra.mxu0 %v6037
  %7570 = vmatprep.subr.bf16.mxu0 %v6043
  %7571 = vmatpush1.bf16.msra.mxu0 %v6042
  %7572 = vmatprep.subr.bf16.mxu0 %v6048
  %7573 = vmatpush1.bf16.msra.mxu0 %v6047
  %7574 = vmatprep.subr.bf16.mxu0 %v6053
  %7575 = vmatpush1.bf16.msra.mxu0 %v6052
  %7576 = vmatprep.subr.bf16.mxu0 %v6058
  %7577 = vmatpush1.bf16.msra.mxu0 %v6057
  %7578 = vmatprep.subr.bf16.mxu0 %v6063
  %7579 = vmatpush1.bf16.msra.mxu0 %v6062
  %7580 = vmatprep.subr.bf16.mxu0 %v6068
  %7581 = vmatpush1.bf16.msra.mxu0 %v6067
  %7582 = vmatprep.subr.bf16.mxu0 %v6073
  %7583 = vmatpush1.bf16.msra.mxu0 %v6072
  %7584 = vmatprep.subr.bf16.mxu0 %v6078
  %7585 = vmatpush1.bf16.msra.mxu0 %v6077
  %7586 = vmatprep.subr.bf16.mxu0 %v6083
  %7587 = vmatpush1.bf16.msra.mxu0 %v6082
  %7588 = vmatprep.subr.bf16.mxu0 %v6088
  %7589 = vmatpush1.bf16.msra.mxu0 %v6087
  %7590 = vmatprep.subr.bf16.mxu0 %v6093
  %7591 = vmatpush1.bf16.msra.mxu0 %v6092
  %7592 = vmatprep.subr.bf16.mxu0 %v6098
  %7593 = vmatpush1.bf16.msra.mxu0 %v6097
  %7594 = vmatprep.subr.bf16.mxu0 %v6103
  %7595 = vmatpush1.bf16.msra.mxu0 %v6102
  %7596 = vmatprep.mubr.bf16.mxu0 %v2460
  %7597 = vmatmul.mubr.bf16.gmra.mrb[0].mxu0 %v2459
  %v7598 = vpop.f32.mrb[0].mxu0
  %v7599 = vadd.f32 %v7558, %v7598
  %v7600 = vpop.f32.mrb[0].mxu0
  %v7601 = vadd.f32 %v7560, %v7600
  %v7602 = vpop.f32.mrb[0].mxu0
  %v7603 = vpop.f32.mrb[0].mxu0
  %7604 = vdwg.mxu0
  %7605 = vmatprep.subr.bf16.mxu0 %v6108
  %7606 = vmatpush1.bf16.msra.mxu0 %v6107
  %7607 = vmatprep.subr.bf16.mxu0 %v6113
  %7608 = vmatpush1.bf16.msra.mxu0 %v6112
  %7609 = vmatprep.subr.bf16.mxu0 %v6118
  %7610 = vmatpush1.bf16.msra.mxu0 %v6117
  %7611 = vmatprep.subr.bf16.mxu0 %v6123
  %7612 = vmatpush1.bf16.msra.mxu0 %v6122
  %7613 = vmatprep.subr.bf16.mxu0 %v6128
  %7614 = vmatpush1.bf16.msra.mxu0 %v6127
  %7615 = vmatprep.subr.bf16.mxu0 %v6133
  %7616 = vmatpush1.bf16.msra.mxu0 %v6132
  %7617 = vmatprep.subr.bf16.mxu0 %v6138
  %7618 = vmatpush1.bf16.msra.mxu0 %v6137
  %7619 = vmatprep.subr.bf16.mxu0 %v6143
  %7620 = vmatpush1.bf16.msra.mxu0 %v6142
  %7621 = vmatprep.subr.bf16.mxu0 %v6148
  %7622 = vmatpush1.bf16.msra.mxu0 %v6147
  %7623 = vmatprep.subr.bf16.mxu0 %v6153
  %7624 = vmatpush1.bf16.msra.mxu0 %v6152
  %7625 = vmatprep.subr.bf16.mxu0 %v6158
  %7626 = vmatpush1.bf16.msra.mxu0 %v6157
  %7627 = vmatprep.subr.bf16.mxu0 %v6163
  %7628 = vmatpush1.bf16.msra.mxu0 %v6162
  %7629 = vmatprep.subr.bf16.mxu0 %v6168
  %7630 = vmatpush1.bf16.msra.mxu0 %v6167
  %7631 = vmatprep.subr.bf16.mxu0 %v6173
  %7632 = vmatpush1.bf16.msra.mxu0 %v6172
  %7633 = vmatprep.subr.bf16.mxu0 %v6178
  %7634 = vmatpush1.bf16.msra.mxu0 %v6177
  %7635 = vmatprep.subr.bf16.mxu0 %v6183
  %7636 = vmatpush1.bf16.msra.mxu0 %v6182
  %7637 = vmatprep.mubr.bf16.mxu0 %v2462
  %7638 = vmatmul.mubr.bf16.gmra.mrb[0].mxu0 %v2461
  %v7639 = vpop.f32.mrb[0].mxu0
  %v7640 = vadd.f32 %v7599, %v7639
  %v7641 = vpop.f32.mrb[0].mxu0
  %v7642 = vadd.f32 %v7601, %v7641
  %v7643 = vpop.f32.mrb[0].mxu0
  %v7644 = vpop.f32.mrb[0].mxu0
  %7645 = vdwg.mxu0
  %7646 = vmatprep.subr.bf16.mxu0 %v6188
  %7647 = vmatpush1.bf16.msra.mxu0 %v6187
  %7648 = vmatprep.subr.bf16.mxu0 %v6193
  %7649 = vmatpush1.bf16.msra.mxu0 %v6192
  %7650 = vmatprep.subr.bf16.mxu0 %v6198
  %7651 = vmatpush1.bf16.msra.mxu0 %v6197
  %7652 = vmatprep.subr.bf16.mxu0 %v6203
  %7653 = vmatpush1.bf16.msra.mxu0 %v6202
  %7654 = vmatprep.subr.bf16.mxu0 %v6208
  %7655 = vmatpush1.bf16.msra.mxu0 %v6207
  %7656 = vmatprep.subr.bf16.mxu0 %v6213
  %7657 = vmatpush1.bf16.msra.mxu0 %v6212
  %7658 = vmatprep.subr.bf16.mxu0 %v6218
  %7659 = vmatpush1.bf16.msra.mxu0 %v6217
  %7660 = vmatprep.subr.bf16.mxu0 %v6223
  %7661 = vmatpush1.bf16.msra.mxu0 %v6222
  %7662 = vmatprep.subr.bf16.mxu0 %v6228
  %7663 = vmatpush1.bf16.msra.mxu0 %v6227
  %7664 = vmatprep.subr.bf16.mxu0 %v6233
  %7665 = vmatpush1.bf16.msra.mxu0 %v6232
  %7666 = vmatprep.subr.bf16.mxu0 %v6238
  %7667 = vmatpush1.bf16.msra.mxu0 %v6237
  %7668 = vmatprep.subr.bf16.mxu0 %v6243
  %7669 = vmatpush1.bf16.msra.mxu0 %v6242
  %7670 = vmatprep.subr.bf16.mxu0 0
  %7671 = vmatpush1.bf16.msra.mxu0 0
  %7672 = vmatprep.subr.bf16.mxu0 0
  %7673 = vmatpush1.bf16.msra.mxu0 0
  %7674 = vmatprep.subr.bf16.mxu0 0
  %7675 = vmatpush1.bf16.msra.mxu0 0
  %7676 = vmatprep.subr.bf16.mxu0 0
  %7677 = vmatpush1.bf16.msra.mxu0 0
  %7678 = vmatprep.mubr.bf16.mxu0 %v6947
  %7679 = vmatmul.mubr.bf16.gmra.mrb[0].mxu0 %v2463
  %v7680 = vpop.f32.mrb[0].mxu0
  %v7681 = vadd.f32 %v7640, %v7680
  %v7682 = vpop.f32.mrb[0].mxu0
  %v7683 = vadd.f32 %v7642, %v7682
  %v7684 = vpop.f32.mrb[0].mxu0
  %v7685 = vpop.f32.mrb[0].mxu0
  %7686 = vdwg.mxu0
  %7687 = vmatprep.subr.bf16.mxu0 0
  %7688 = vmatpush1.bf16.msra.mxu0 %v5549
  %7689 = vmatprep.subr.bf16.mxu0 0
  %7690 = vmatpush1.bf16.msra.mxu0 %v5554
  %7691 = vmatprep.subr.bf16.mxu0 0
  %7692 = vmatpush1.bf16.msra.mxu0 %v5559
  %7693 = vmatprep.subr.bf16.mxu0 0
  %7694 = vmatpush1.bf16.msra.mxu0 %v5564
  %7695 = vmatprep.subr.bf16.mxu0 0
  %7696 = vmatpush1.bf16.msra.mxu0 %v5569
  %7697 = vmatprep.subr.bf16.mxu0 0
  %7698 = vmatpush1.bf16.msra.mxu0 %v5574
  %7699 = vmatprep.subr.bf16.mxu0 0
  %7700 = vmatpush1.bf16.msra.mxu0 %v5579
  %7701 = vmatprep.subr.bf16.mxu0 0
  %7702 = vmatpush1.bf16.msra.mxu0 %v5584
  %7703 = vmatprep.subr.bf16.mxu0 0
  %7704 = vmatpush1.bf16.msra.mxu0 %v5589
  %7705 = vmatprep.subr.bf16.mxu0 0
  %7706 = vmatpush1.bf16.msra.mxu0 %v5594
  %7707 = vmatprep.subr.bf16.mxu0 0
  %7708 = vmatpush1.bf16.msra.mxu0 %v5599
  %7709 = vmatprep.subr.bf16.mxu0 0
  %7710 = vmatpush1.bf16.msra.mxu0 %v5604
  %7711 = vmatprep.subr.bf16.mxu0 0
  %7712 = vmatpush1.bf16.msra.mxu0 %v5609
  %7713 = vmatprep.subr.bf16.mxu0 0
  %7714 = vmatpush1.bf16.msra.mxu0 %v5614
  %7715 = vmatprep.subr.bf16.mxu0 0
  %7716 = vmatpush1.bf16.msra.mxu0 %v5619
  %7717 = vmatprep.subr.bf16.mxu0 0
  %7718 = vmatpush1.bf16.msra.mxu0 %v5624
  %7719 = vmatprep.mubr.bf16.mxu0 %v2448
  %7720 = vmatmul.mubr.bf16.gmra.mrb[0].mxu0 %v2447
  %v7721 = vpop.f32.mrb[0].mxu0
  %v7722 = vadd.f32 0.0, %v7721
  %v7723 = vpop.f32.mrb[0].mxu0
  %v7724 = vpop.f32.mrb[0].mxu0
  %v7725 = vpop.f32.mrb[0].mxu0
  %7726 = vdwg.mxu0
  %7727 = vmatprep.subr.bf16.mxu0 0
  %7728 = vmatpush1.bf16.msra.mxu0 %v5629
  %7729 = vmatprep.subr.bf16.mxu0 0
  %7730 = vmatpush1.bf16.msra.mxu0 %v5634
  %7731 = vmatprep.subr.bf16.mxu0 0
  %7732 = vmatpush1.bf16.msra.mxu0 %v5639
  %7733 = vmatprep.subr.bf16.mxu0 0
  %7734 = vmatpush1.bf16.msra.mxu0 %v5644
  %7735 = vmatprep.subr.bf16.mxu0 0
  %7736 = vmatpush1.bf16.msra.mxu0 %v5649
  %7737 = vmatprep.subr.bf16.mxu0 0
  %7738 = vmatpush1.bf16.msra.mxu0 %v5654
  %7739 = vmatprep.subr.bf16.mxu0 0
  %7740 = vmatpush1.bf16.msra.mxu0 %v5659
  %7741 = vmatprep.subr.bf16.mxu0 0
  %7742 = vmatpush1.bf16.msra.mxu0 %v5664
  %7743 = vmatprep.subr.bf16.mxu0 0
  %7744 = vmatpush1.bf16.msra.mxu0 %v5669
  %7745 = vmatprep.subr.bf16.mxu0 0
  %7746 = vmatpush1.bf16.msra.mxu0 %v5674
  %7747 = vmatprep.subr.bf16.mxu0 0
  %7748 = vmatpush1.bf16.msra.mxu0 %v5679
  %7749 = vmatprep.subr.bf16.mxu0 0
  %7750 = vmatpush1.bf16.msra.mxu0 %v5684
  %7751 = vmatprep.subr.bf16.mxu0 0
  %7752 = vmatpush1.bf16.msra.mxu0 %v5689
  %7753 = vmatprep.subr.bf16.mxu0 0
  %7754 = vmatpush1.bf16.msra.mxu0 %v5694
  %7755 = vmatprep.subr.bf16.mxu0 0
  %7756 = vmatpush1.bf16.msra.mxu0 %v5699
  %7757 = vmatprep.subr.bf16.mxu0 0
  %7758 = vmatpush1.bf16.msra.mxu0 %v5704
  %7759 = vmatprep.mubr.bf16.mxu0 %v2450
  %7760 = vmatmul.mubr.bf16.gmra.mrb[0].mxu0 %v2449
  %v7761 = vpop.f32.mrb[0].mxu0
  %v7762 = vadd.f32 %v7722, %v7761
  %v7763 = vpop.f32.mrb[0].mxu0
  %v7764 = vpop.f32.mrb[0].mxu0
  %v7765 = vpop.f32.mrb[0].mxu0
  %7766 = vdwg.mxu0
  %7767 = vmatprep.subr.bf16.mxu0 0
  %7768 = vmatpush1.bf16.msra.mxu0 %v5709
  %7769 = vmatprep.subr.bf16.mxu0 0
  %7770 = vmatpush1.bf16.msra.mxu0 %v5714
  %7771 = vmatprep.subr.bf16.mxu0 0
  %7772 = vmatpush1.bf16.msra.mxu0 %v5719
  %7773 = vmatprep.subr.bf16.mxu0 0
  %7774 = vmatpush1.bf16.msra.mxu0 %v5724
  %7775 = vmatprep.subr.bf16.mxu0 0
  %7776 = vmatpush1.bf16.msra.mxu0 %v5729
  %7777 = vmatprep.subr.bf16.mxu0 0
  %7778 = vmatpush1.bf16.msra.mxu0 %v5734
  %7779 = vmatprep.subr.bf16.mxu0 0
  %7780 = vmatpush1.bf16.msra.mxu0 %v5739
  %7781 = vmatprep.subr.bf16.mxu0 0
  %7782 = vmatpush1.bf16.msra.mxu0 %v5744
  %7783 = vmatprep.subr.bf16.mxu0 0
  %7784 = vmatpush1.bf16.msra.mxu0 %v5749
  %7785 = vmatprep.subr.bf16.mxu0 0
  %7786 = vmatpush1.bf16.msra.mxu0 %v5754
  %7787 = vmatprep.subr.bf16.mxu0 0
  %7788 = vmatpush1.bf16.msra.mxu0 %v5759
  %7789 = vmatprep.subr.bf16.mxu0 0
  %7790 = vmatpush1.bf16.msra.mxu0 %v5764
  %7791 = vmatprep.subr.bf16.mxu0 0
  %7792 = vmatpush1.bf16.msra.mxu0 %v5769
  %7793 = vmatprep.subr.bf16.mxu0 0
  %7794 = vmatpush1.bf16.msra.mxu0 %v5774
  %7795 = vmatprep.subr.bf16.mxu0 0
  %7796 = vmatpush1.bf16.msra.mxu0 %v5779
  %7797 = vmatprep.subr.bf16.mxu0 0
  %7798 = vmatpush1.bf16.msra.mxu0 %v5784
  %7799 = vmatprep.mubr.bf16.mxu0 %v2452
  %7800 = vmatmul.mubr.bf16.gmra.mrb[0].mxu0 %v2451
  %v7801 = vpop.f32.mrb[0].mxu0
  %v7802 = vadd.f32 %v7762, %v7801
  %v7803 = vpop.f32.mrb[0].mxu0
  %v7804 = vpop.f32.mrb[0].mxu0
  %v7805 = vpop.f32.mrb[0].mxu0
  %7806 = vdwg.mxu0
  %7807 = vmatprep.subr.bf16.mxu0 0
  %7808 = vmatpush1.bf16.msra.mxu0 %v5789
  %7809 = vmatprep.subr.bf16.mxu0 0
  %7810 = vmatpush1.bf16.msra.mxu0 %v5794
  %7811 = vmatprep.subr.bf16.mxu0 0
  %7812 = vmatpush1.bf16.msra.mxu0 %v5799
  %7813 = vmatprep.subr.bf16.mxu0 0
  %7814 = vmatpush1.bf16.msra.mxu0 %v5804
  %7815 = vmatprep.subr.bf16.mxu0 0
  %7816 = vmatpush1.bf16.msra.mxu0 %v5809
  %7817 = vmatprep.subr.bf16.mxu0 0
  %7818 = vmatpush1.bf16.msra.mxu0 %v5814
  %7819 = vmatprep.subr.bf16.mxu0 0
  %7820 = vmatpush1.bf16.msra.mxu0 %v5819
  %7821 = vmatprep.subr.bf16.mxu0 0
  %7822 = vmatpush1.bf16.msra.mxu0 %v5824
  %7823 = vmatprep.subr.bf16.mxu0 0
  %7824 = vmatpush1.bf16.msra.mxu0 %v5829
  %7825 = vmatprep.subr.bf16.mxu0 0
  %7826 = vmatpush1.bf16.msra.mxu0 %v5834
  %7827 = vmatprep.subr.bf16.mxu0 0
  %7828 = vmatpush1.bf16.msra.mxu0 %v5839
  %7829 = vmatprep.subr.bf16.mxu0 0
  %7830 = vmatpush1.bf16.msra.mxu0 %v5844
  %7831 = vmatprep.subr.bf16.mxu0 0
  %7832 = vmatpush1.bf16.msra.mxu0 %v5849
  %7833 = vmatprep.subr.bf16.mxu0 0
  %7834 = vmatpush1.bf16.msra.mxu0 %v5854
  %7835 = vmatprep.subr.bf16.mxu0 0
  %7836 = vmatpush1.bf16.msra.mxu0 %v5859
  %7837 = vmatprep.subr.bf16.mxu0 0
  %7838 = vmatpush1.bf16.msra.mxu0 %v5864
  %7839 = vmatprep.mubr.bf16.mxu0 %v2454
  %7840 = vmatmul.mubr.bf16.gmra.mrb[0].mxu0 %v2453
  %v7841 = vpop.f32.mrb[0].mxu0
  %v7842 = vadd.f32 %v7802, %v7841
  %v7843 = vpop.f32.mrb[0].mxu0
  %v7844 = vpop.f32.mrb[0].mxu0
  %v7845 = vpop.f32.mrb[0].mxu0
  %7846 = vdwg.mxu0
  %7847 = vmatprep.subr.bf16.mxu0 0
  %7848 = vmatpush1.bf16.msra.mxu0 %v5869
  %7849 = vmatprep.subr.bf16.mxu0 0
  %7850 = vmatpush1.bf16.msra.mxu0 %v5874
  %7851 = vmatprep.subr.bf16.mxu0 0
  %7852 = vmatpush1.bf16.msra.mxu0 %v5879
  %7853 = vmatprep.subr.bf16.mxu0 0
  %7854 = vmatpush1.bf16.msra.mxu0 %v5884
  %7855 = vmatprep.subr.bf16.mxu0 0
  %7856 = vmatpush1.bf16.msra.mxu0 %v5889
  %7857 = vmatprep.subr.bf16.mxu0 0
  %7858 = vmatpush1.bf16.msra.mxu0 %v5894
  %7859 = vmatprep.subr.bf16.mxu0 0
  %7860 = vmatpush1.bf16.msra.mxu0 %v5899
  %7861 = vmatprep.subr.bf16.mxu0 0
  %7862 = vmatpush1.bf16.msra.mxu0 %v5904
  %7863 = vmatprep.subr.bf16.mxu0 0
  %7864 = vmatpush1.bf16.msra.mxu0 %v5909
  %7865 = vmatprep.subr.bf16.mxu0 0
  %7866 = vmatpush1.bf16.msra.mxu0 %v5914
  %7867 = vmatprep.subr.bf16.mxu0 0
  %7868 = vmatpush1.bf16.msra.mxu0 %v5919
  %7869 = vmatprep.subr.bf16.mxu0 0
  %7870 = vmatpush1.bf16.msra.mxu0 %v5924
  %7871 = vmatprep.subr.bf16.mxu0 0
  %7872 = vmatpush1.bf16.msra.mxu0 %v5929
  %7873 = vmatprep.subr.bf16.mxu0 0
  %7874 = vmatpush1.bf16.msra.mxu0 %v5934
  %7875 = vmatprep.subr.bf16.mxu0 0
  %7876 = vmatpush1.bf16.msra.mxu0 %v5939
  %7877 = vmatprep.subr.bf16.mxu0 0
  %7878 = vmatpush1.bf16.msra.mxu0 %v5944
  %7879 = vmatprep.mubr.bf16.mxu0 %v2456
  %7880 = vmatmul.mubr.bf16.gmra.mrb[0].mxu0 %v2455
  %v7881 = vpop.f32.mrb[0].mxu0
  %v7882 = vadd.f32 %v7842, %v7881
  %v7883 = vpop.f32.mrb[0].mxu0
  %v7884 = vpop.f32.mrb[0].mxu0
  %v7885 = vpop.f32.mrb[0].mxu0
  %7886 = vdwg.mxu0
  %7887 = vmatprep.subr.bf16.mxu0 0
  %7888 = vmatpush1.bf16.msra.mxu0 %v5949
  %7889 = vmatprep.subr.bf16.mxu0 0
  %7890 = vmatpush1.bf16.msra.mxu0 %v5954
  %7891 = vmatprep.subr.bf16.mxu0 0
  %7892 = vmatpush1.bf16.msra.mxu0 %v5959
  %7893 = vmatprep.subr.bf16.mxu0 0
  %7894 = vmatpush1.bf16.msra.mxu0 %v5964
  %7895 = vmatprep.subr.bf16.mxu0 0
  %7896 = vmatpush1.bf16.msra.mxu0 %v5969
  %7897 = vmatprep.subr.bf16.mxu0 0
  %7898 = vmatpush1.bf16.msra.mxu0 %v5974
  %7899 = vmatprep.subr.bf16.mxu0 0
  %7900 = vmatpush1.bf16.msra.mxu0 %v5979
  %7901 = vmatprep.subr.bf16.mxu0 0
  %7902 = vmatpush1.bf16.msra.mxu0 %v5984
  %7903 = vmatprep.subr.bf16.mxu0 0
  %7904 = vmatpush1.bf16.msra.mxu0 %v5989
  %7905 = vmatprep.subr.bf16.mxu0 0
  %7906 = vmatpush1.bf16.msra.mxu0 %v5994
  %7907 = vmatprep.subr.bf16.mxu0 0
  %7908 = vmatpush1.bf16.msra.mxu0 %v5999
  %7909 = vmatprep.subr.bf16.mxu0 0
  %7910 = vmatpush1.bf16.msra.mxu0 %v6004
  %7911 = vmatprep.subr.bf16.mxu0 0
  %7912 = vmatpush1.bf16.msra.mxu0 %v6009
  %7913 = vmatprep.subr.bf16.mxu0 0
  %7914 = vmatpush1.bf16.msra.mxu0 %v6014
  %7915 = vmatprep.subr.bf16.mxu0 0
  %7916 = vmatpush1.bf16.msra.mxu0 %v6019
  %7917 = vmatprep.subr.bf16.mxu0 0
  %7918 = vmatpush1.bf16.msra.mxu0 %v6024
  %7919 = vmatprep.mubr.bf16.mxu0 %v2458
  %7920 = vmatmul.mubr.bf16.gmra.mrb[0].mxu0 %v2457
  %v7921 = vpop.f32.mrb[0].mxu0
  %v7922 = vadd.f32 %v7882, %v7921
  %v7923 = vpop.f32.mrb[0].mxu0
  %v7924 = vpop.f32.mrb[0].mxu0
  %v7925 = vpop.f32.mrb[0].mxu0
  %7926 = vdwg.mxu0
  %7927 = vmatprep.subr.bf16.mxu0 0
  %7928 = vmatpush1.bf16.msra.mxu0 %v6029
  %7929 = vmatprep.subr.bf16.mxu0 0
  %7930 = vmatpush1.bf16.msra.mxu0 %v6034
  %7931 = vmatprep.subr.bf16.mxu0 0
  %7932 = vmatpush1.bf16.msra.mxu0 %v6039
  %7933 = vmatprep.subr.bf16.mxu0 0
  %7934 = vmatpush1.bf16.msra.mxu0 %v6044
  %7935 = vmatprep.subr.bf16.mxu0 0
  %7936 = vmatpush1.bf16.msra.mxu0 %v6049
  %7937 = vmatprep.subr.bf16.mxu0 0
  %7938 = vmatpush1.bf16.msra.mxu0 %v6054
  %7939 = vmatprep.subr.bf16.mxu0 0
  %7940 = vmatpush1.bf16.msra.mxu0 %v6059
  %7941 = vmatprep.subr.bf16.mxu0 0
  %7942 = vmatpush1.bf16.msra.mxu0 %v6064
  %7943 = vmatprep.subr.bf16.mxu0 0
  %7944 = vmatpush1.bf16.msra.mxu0 %v6069
  %7945 = vmatprep.subr.bf16.mxu0 0
  %7946 = vmatpush1.bf16.msra.mxu0 %v6074
  %7947 = vmatprep.subr.bf16.mxu0 0
  %7948 = vmatpush1.bf16.msra.mxu0 %v6079
  %7949 = vmatprep.subr.bf16.mxu0 0
  %7950 = vmatpush1.bf16.msra.mxu0 %v6084
  %7951 = vmatprep.subr.bf16.mxu0 0
  %7952 = vmatpush1.bf16.msra.mxu0 %v6089
  %7953 = vmatprep.subr.bf16.mxu0 0
  %7954 = vmatpush1.bf16.msra.mxu0 %v6094
  %7955 = vmatprep.subr.bf16.mxu0 0
  %7956 = vmatpush1.bf16.msra.mxu0 %v6099
  %7957 = vmatprep.subr.bf16.mxu0 0
  %7958 = vmatpush1.bf16.msra.mxu0 %v6104
  %7959 = vmatprep.mubr.bf16.mxu0 %v2460
  %7960 = vmatmul.mubr.bf16.gmra.mrb[0].mxu0 %v2459
  %v7961 = vpop.f32.mrb[0].mxu0
  %v7962 = vadd.f32 %v7922, %v7961
  %v7963 = vpop.f32.mrb[0].mxu0
  %v7964 = vpop.f32.mrb[0].mxu0
  %v7965 = vpop.f32.mrb[0].mxu0
  %7966 = vdwg.mxu0
  %7967 = vmatprep.subr.bf16.mxu0 0
  %7968 = vmatpush1.bf16.msra.mxu0 %v6109
  %7969 = vmatprep.subr.bf16.mxu0 0
  %7970 = vmatpush1.bf16.msra.mxu0 %v6114
  %7971 = vmatprep.subr.bf16.mxu0 0
  %7972 = vmatpush1.bf16.msra.mxu0 %v6119
  %7973 = vmatprep.subr.bf16.mxu0 0
  %7974 = vmatpush1.bf16.msra.mxu0 %v6124
  %7975 = vmatprep.subr.bf16.mxu0 0
  %7976 = vmatpush1.bf16.msra.mxu0 %v6129
  %7977 = vmatprep.subr.bf16.mxu0 0
  %7978 = vmatpush1.bf16.msra.mxu0 %v6134
  %7979 = vmatprep.subr.bf16.mxu0 0
  %7980 = vmatpush1.bf16.msra.mxu0 %v6139
  %7981 = vmatprep.subr.bf16.mxu0 0
  %7982 = vmatpush1.bf16.msra.mxu0 %v6144
  %7983 = vmatprep.subr.bf16.mxu0 0
  %7984 = vmatpush1.bf16.msra.mxu0 %v6149
  %7985 = vmatprep.subr.bf16.mxu0 0
  %7986 = vmatpush1.bf16.msra.mxu0 %v6154
  %7987 = vmatprep.subr.bf16.mxu0 0
  %7988 = vmatpush1.bf16.msra.mxu0 %v6159
  %7989 = vmatprep.subr.bf16.mxu0 0
  %7990 = vmatpush1.bf16.msra.mxu0 %v6164
  %7991 = vmatprep.subr.bf16.mxu0 0
  %7992 = vmatpush1.bf16.msra.mxu0 %v6169
  %7993 = vmatprep.subr.bf16.mxu0 0
  %7994 = vmatpush1.bf16.msra.mxu0 %v6174
  %7995 = vmatprep.subr.bf16.mxu0 0
  %7996 = vmatpush1.bf16.msra.mxu0 %v6179
  %7997 = vmatprep.subr.bf16.mxu0 0
  %7998 = vmatpush1.bf16.msra.mxu0 %v6184
  %7999 = vmatprep.mubr.bf16.mxu0 %v2462
  %8000 = vmatmul.mubr.bf16.gmra.mrb[0].mxu0 %v2461
  %v8001 = vpop.f32.mrb[0].mxu0
  %v8002 = vadd.f32 %v7962, %v8001
  %v8003 = vpop.f32.mrb[0].mxu0
  %v8004 = vpop.f32.mrb[0].mxu0
  %v8005 = vpop.f32.mrb[0].mxu0
  %8006 = vdwg.mxu0
  %8007 = vmatprep.subr.bf16.mxu0 0
  %8008 = vmatpush1.bf16.msra.mxu0 %v6189
  %8009 = vmatprep.subr.bf16.mxu0 0
  %8010 = vmatpush1.bf16.msra.mxu0 %v6194
  %8011 = vmatprep.subr.bf16.mxu0 0
  %8012 = vmatpush1.bf16.msra.mxu0 %v6199
  %8013 = vmatprep.subr.bf16.mxu0 0
  %8014 = vmatpush1.bf16.msra.mxu0 %v6204
  %8015 = vmatprep.subr.bf16.mxu0 0
  %8016 = vmatpush1.bf16.msra.mxu0 %v6209
  %8017 = vmatprep.subr.bf16.mxu0 0
  %8018 = vmatpush1.bf16.msra.mxu0 %v6214
  %8019 = vmatprep.subr.bf16.mxu0 0
  %8020 = vmatpush1.bf16.msra.mxu0 %v6219
  %8021 = vmatprep.subr.bf16.mxu0 0
  %8022 = vmatpush1.bf16.msra.mxu0 %v6224
  %8023 = vmatprep.subr.bf16.mxu0 0
  %8024 = vmatpush1.bf16.msra.mxu0 %v6229
  %8025 = vmatprep.subr.bf16.mxu0 0
  %8026 = vmatpush1.bf16.msra.mxu0 %v6234
  %8027 = vmatprep.subr.bf16.mxu0 0
  %8028 = vmatpush1.bf16.msra.mxu0 %v6239
  %8029 = vmatprep.subr.bf16.mxu0 0
  %8030 = vmatpush1.bf16.msra.mxu0 %v6244
  %8031 = vmatprep.subr.bf16.mxu0 0
  %8032 = vmatpush1.bf16.msra.mxu0 0
  %8033 = vmatprep.subr.bf16.mxu0 0
  %8034 = vmatpush1.bf16.msra.mxu0 0
  %8035 = vmatprep.subr.bf16.mxu0 0
  %8036 = vmatpush1.bf16.msra.mxu0 0
  %8037 = vmatprep.subr.bf16.mxu0 0
  %8038 = vmatpush1.bf16.msra.mxu0 0
  %8039 = vmatprep.mubr.bf16.mxu0 %v6947
  %8040 = vmatmul.mubr.bf16.gmra.mrb[0].mxu0 %v2463
  %v8041 = vpop.f32.mrb[0].mxu0
  %v8042 = vadd.f32 %v8002, %v8041
  %v8043 = vpop.f32.mrb[0].mxu0
  %v8044 = vpop.f32.mrb[0].mxu0
  %v8045 = vpop.f32.mrb[0].mxu0
  %8046 = vdwg.mxu0
  %vm8047 = vcmp.gt.f32.partialorder %v2302, 0.0
  %vm8048 = vcmp.gt.f32.partialorder %v2304, 0.0
  %vm8049 = vcmp.gt.f32.partialorder %v2373, 0.0
  %vm8050 = vcmp.gt.f32.partialorder %v2375, 0.0
  %vm8051 = vcmp.gt.f32.partialorder %v2444, 0.0
  %v8052 = vmul.f32 %v7312, %v2302
  %v8053 = vmul.f32 %v7314, %v2304
  %v8054 = vmul.f32 %v7681, %v2373
  %v8055 = vmul.f32 %v7683, %v2375
  %v8056 = vmul.f32 %v8042, %v2444
  %v8057 = vld [vmem:[%s19] sm:$0x1f]
  %v8059 = vlaneseq
  %v8060 = vshrl.u32 %v8059, 7
  %v8061 = vsub.s32 0, %v8060
  %v8062 = vrot.slane %v8057, %v8061
  %v8063 = vlaneseq
  %v8064 = vshrl.u32 %v8063, 7
  %v8065 = vsub.s32 1, %v8064
  %v8066 = vrot.slane %v8057, %v8065
  %v8067 = vlaneseq
  %v8068 = vshrl.u32 %v8067, 7
  %v8069 = vsub.s32 2, %v8068
  %v8070 = vrot.slane %v8057, %v8069
  %v8071 = vlaneseq
  %v8072 = vshrl.u32 %v8071, 7
  %v8073 = vsub.s32 3, %v8072
  %v8074 = vrot.slane %v8057, %v8073
  %v8075 = vlaneseq
  %v8076 = vshrl.u32 %v8075, 7
  %v8077 = vsub.s32 4, %v8076
  %v8078 = vrot.slane %v8057, %v8077
  %v8084 = vadd.f32 %v8052, %v8062
  %v8085 = vadd.f32 %v8053, %v8066
  %v8086 = vadd.f32 %v8054, %v8070
  %v8087 = vadd.f32 %v8055, %v8074
  %v8088 = vadd.f32 %v8056, %v8078
  %v8089 = vmax.f32 %v8084, 0.0
  %v8090 = vmax.f32 %v8085, 0.0
  %v8091 = vmax.f32 %v8086, 0.0
  %v8092 = vmax.f32 %v8087, 0.0
  %v8093 = vmax.f32 %v8088, 0.0
  %v8094 = vsel %vm8047, %v8089, 0.0
  %v8095 = vsel %vm8048, %v8090, 0.0
  %v8096 = vsel %vm8049, %v8091, 0.0
  %v8097 = vsel %vm8050, %v8092, 0.0
  %v8098 = vsel %vm8051, %v8093, 0.0
  %v8099 = vpack.c.bf16 %v8094, %v8094
  %v8100 = vpack.c.bf16 %v8095, %v8095
  %v8101 = vpack.c.bf16 %v8096, %v8096
  %v8102 = vpack.c.bf16 %v8097, %v8097
  %v8103 = vpack.c.bf16 %v8098, %v8098
  %v8104 = vld [vmem:[%s21] sm:$0xf]
  %v8105 = vld [vmem:[%s21 + $0x4] sm:$0xf]
  %v8106 = vld [vmem:[%s21 + $0x8] sm:$0xf]
  %v8107 = vld [vmem:[%s21 + $0xc] sm:$0xf]
  %v8108 = vld [vmem:[%s21 + $0x10] sm:$0xf]
  %v8109 = vld [vmem:[%s21 + $0x14] sm:$0xf]
  %v8110 = vld [vmem:[%s21 + $0x18] sm:$0xf]
  %v8111 = vld [vmem:[%s21 + $0x1c] sm:$0xf]
  %v8112 = vld [vmem:[%s21 + $0x20] sm:$0xf]
  %v8113 = vld [vmem:[%s21 + $0x24] sm:$0xf]
  %v8114 = vld [vmem:[%s21 + $0x28] sm:$0xf]
  %v8115 = vld [vmem:[%s21 + $0x2c] sm:$0xf]
  %v8116 = vld [vmem:[%s21 + $0x30] sm:$0xf]
  %v8117 = vld [vmem:[%s21 + $0x34] sm:$0xf]
  %v8118 = vld [vmem:[%s21 + $0x38] sm:$0xf]
  %v8119 = vld [vmem:[%s21 + $0x3c] sm:$0xf]
  %v8120 = vld [vmem:[%s21 + $0x40] sm:$0xf]
  %v8121 = vld [vmem:[%s21 + $0x44] sm:$0xf]
  %v8122 = vld [vmem:[%s21 + $0x48] sm:$0xf]
  %v8123 = vld [vmem:[%s21 + $0x4c] sm:$0xf]
  %v8124 = vld [vmem:[%s21 + $0x50] sm:$0xf]
  %v8125 = vld [vmem:[%s21 + $0x54] sm:$0xf]
  %v8126 = vld [vmem:[%s21 + $0x58] sm:$0xf]
  %v8127 = vld [vmem:[%s21 + $0x5c] sm:$0xf]
  %v8128 = vld [vmem:[%s21 + $0x60] sm:$0xf]
  %v8129 = vld [vmem:[%s21 + $0x64] sm:$0xf]
  %v8130 = vld [vmem:[%s21 + $0x68] sm:$0xf]
  %v8131 = vld [vmem:[%s21 + $0x6c] sm:$0xf]
  %v8132 = vld [vmem:[%s21 + $0x70] sm:$0xf]
  %v8133 = vld [vmem:[%s21 + $0x74] sm:$0xf]
  %v8134 = vld [vmem:[%s21 + $0x78] sm:$0xf]
  %v8135 = vld [vmem:[%s21 + $0x7c] sm:$0xf]
  %v8136 = vld [vmem:[%s21 + $0x80] sm:$0xf]
  %v8137 = vld [vmem:[%s21 + $0x84] sm:$0xf]
  %v8138 = vld [vmem:[%s21 + $0x88] sm:$0xf]
  %v8139 = vld [vmem:[%s21 + $0x8c] sm:$0xf]
  %v8140 = vld [vmem:[%s21 + $0x90] sm:$0xf]
  %v8141 = vld [vmem:[%s21 + $0x94] sm:$0xf]
  %v8142 = vld [vmem:[%s21 + $0x98] sm:$0xf]
  %v8143 = vld [vmem:[%s21 + $0x9c] sm:$0xf]
  %v8144 = vld [vmem:[%s21 + $0xa0] sm:$0xf]
  %v8145 = vld [vmem:[%s21 + $0xa4] sm:$0xf]
  %v8146 = vld [vmem:[%s21 + $0xa8] sm:$0xf]
  %v8147 = vld [vmem:[%s21 + $0xac] sm:$0xf]
  %v8148 = vld [vmem:[%s21 + $0xb0] sm:$0xf]
  %v8149 = vld [vmem:[%s21 + $0xb4] sm:$0xf]
  %v8150 = vld [vmem:[%s21 + $0xb8] sm:$0xf]
  %v8151 = vld [vmem:[%s21 + $0xbc] sm:$0xf]
  %v8152 = vld [vmem:[%s21 + $0xc0] sm:$0xf]
  %v8153 = vld [vmem:[%s21 + $0xc4] sm:$0xf]
  %v8154 = vld [vmem:[%s21 + $0xc8] sm:$0xf]
  %v8155 = vld [vmem:[%s21 + $0xcc] sm:$0xf]
  %v8156 = vld [vmem:[%s21 + $0xd0] sm:$0xf]
  %v8157 = vld [vmem:[%s21 + $0xd4] sm:$0xf]
  %v8158 = vld [vmem:[%s21 + $0xd8] sm:$0xf]
  %v8159 = vld [vmem:[%s21 + $0xdc] sm:$0xf]
  %v8160 = vld [vmem:[%s21 + $0xe0] sm:$0xf]
  %v8161 = vld [vmem:[%s21 + $0xe4] sm:$0xf]
  %v8162 = vld [vmem:[%s21 + $0xe8] sm:$0xf]
  %v8163 = vld [vmem:[%s21 + $0xec] sm:$0xf]
  %v8164 = vld [vmem:[%s21 + $0xf0] sm:$0xf]
  %v8165 = vld [vmem:[%s21 + $0xf4] sm:$0xf]
  %v8166 = vld [vmem:[%s21 + $0xf8] sm:$0xf]
  %v8167 = vld [vmem:[%s21 + $0xfc] sm:$0xf]
  %v8168 = vld [vmem:[%s21 + $0x100] sm:$0xf]
  %v8169 = vld [vmem:[%s21 + $0x104] sm:$0xf]
  %v8170 = vld [vmem:[%s21 + $0x108] sm:$0xf]
  %v8171 = vld [vmem:[%s21 + $0x10c] sm:$0xf]
  %v8172 = vld [vmem:[%s23] sm:$0xf]
  %v8173 = vld [vmem:[%s23 + $0x4] sm:$0xf]
  %v8174 = vld [vmem:[%s23 + $0x8] sm:$0xf]
  %v8175 = vld [vmem:[%s23 + $0xc] sm:$0xf]
  %v8176 = vld [vmem:[%s23 + $0x10] sm:$0xf]
  %v8177 = vld [vmem:[%s23 + $0x14] sm:$0xf]
  %v8178 = vld [vmem:[%s23 + $0x18] sm:$0xf]
  %v8179 = vld [vmem:[%s23 + $0x1c] sm:$0xf]
  %v8180 = vld [vmem:[%s23 + $0x20] sm:$0xf]
  %v8181 = vld [vmem:[%s23 + $0x24] sm:$0xf]
  %v8182 = vld [vmem:[%s23 + $0x28] sm:$0xf]
  %v8183 = vld [vmem:[%s23 + $0x2c] sm:$0xf]
  %v8184 = vld [vmem:[%s23 + $0x30] sm:$0xf]
  %v8185 = vld [vmem:[%s23 + $0x34] sm:$0xf]
  %v8186 = vld [vmem:[%s23 + $0x38] sm:$0xf]
  %v8187 = vld [vmem:[%s23 + $0x3c] sm:$0xf]
  %v8188 = vld [vmem:[%s23 + $0x40] sm:$0xf]
  %v8189 = vld [vmem:[%s23 + $0x44] sm:$0xf]
  %v8190 = vld [vmem:[%s23 + $0x48] sm:$0xf]
  %v8191 = vld [vmem:[%s23 + $0x4c] sm:$0xf]
  %v8192 = vld [vmem:[%s23 + $0x50] sm:$0xf]
  %v8193 = vld [vmem:[%s23 + $0x54] sm:$0xf]
  %v8194 = vld [vmem:[%s23 + $0x58] sm:$0xf]
  %v8195 = vld [vmem:[%s23 + $0x5c] sm:$0xf]
  %v8196 = vld [vmem:[%s23 + $0x60] sm:$0xf]
  %v8197 = vld [vmem:[%s23 + $0x64] sm:$0xf]
  %v8198 = vld [vmem:[%s23 + $0x68] sm:$0xf]
  %v8199 = vld [vmem:[%s23 + $0x6c] sm:$0xf]
  %v8200 = vld [vmem:[%s23 + $0x70] sm:$0xf]
  %v8201 = vld [vmem:[%s23 + $0x74] sm:$0xf]
  %v8202 = vld [vmem:[%s23 + $0x78] sm:$0xf]
  %v8203 = vld [vmem:[%s23 + $0x7c] sm:$0xf]
  %v8204 = vld [vmem:[%s23 + $0x80] sm:$0xf]
  %v8205 = vld [vmem:[%s23 + $0x84] sm:$0xf]
  %v8206 = vld [vmem:[%s23 + $0x88] sm:$0xf]
  %v8207 = vld [vmem:[%s23 + $0x8c] sm:$0xf]
  %v8208 = vld [vmem:[%s23 + $0x90] sm:$0xf]
  %v8209 = vld [vmem:[%s23 + $0x94] sm:$0xf]
  %v8210 = vld [vmem:[%s23 + $0x98] sm:$0xf]
  %v8211 = vld [vmem:[%s23 + $0x9c] sm:$0xf]
  %v8212 = vld [vmem:[%s23 + $0xa0] sm:$0xf]
  %v8213 = vld [vmem:[%s23 + $0xa4] sm:$0xf]
  %v8214 = vld [vmem:[%s23 + $0xa8] sm:$0xf]
  %v8215 = vld [vmem:[%s23 + $0xac] sm:$0xf]
  %v8216 = vld [vmem:[%s23 + $0xb0] sm:$0xf]
  %v8217 = vld [vmem:[%s23 + $0xb4] sm:$0xf]
  %v8218 = vld [vmem:[%s23 + $0xb8] sm:$0xf]
  %v8219 = vld [vmem:[%s23 + $0xbc] sm:$0xf]
  %v8220 = vld [vmem:[%s23 + $0xc0] sm:$0xf]
  %v8221 = vld [vmem:[%s23 + $0xc4] sm:$0xf]
  %v8222 = vld [vmem:[%s23 + $0xc8] sm:$0xf]
  %v8223 = vld [vmem:[%s23 + $0xcc] sm:$0xf]
  %v8224 = vld [vmem:[%s23 + $0xd0] sm:$0xf]
  %v8225 = vld [vmem:[%s23 + $0xd4] sm:$0xf]
  %v8226 = vld [vmem:[%s23 + $0xd8] sm:$0xf]
  %v8227 = vld [vmem:[%s23 + $0xdc] sm:$0xf]
  %v8228 = vld [vmem:[%s23 + $0xe0] sm:$0xf]
  %v8229 = vld [vmem:[%s23 + $0xe4] sm:$0xf]
  %v8230 = vld [vmem:[%s23 + $0xe8] sm:$0xf]
  %v8231 = vld [vmem:[%s23 + $0xec] sm:$0xf]
  %v8232 = vld [vmem:[%s23 + $0xf0] sm:$0xf]
  %v8233 = vld [vmem:[%s23 + $0xf4] sm:$0xf]
  %v8234 = vld [vmem:[%s23 + $0xf8] sm:$0xf]
  %v8235 = vld [vmem:[%s23 + $0xfc] sm:$0xf]
  %v8236 = vld [vmem:[%s23 + $0x100] sm:$0xf]
  %v8237 = vld [vmem:[%s23 + $0x104] sm:$0xf]
  %v8238 = vld [vmem:[%s23 + $0x108] sm:$0xf]
  %v8239 = vld [vmem:[%s23 + $0x10c] sm:$0xf]
  %v8245 = vrot.slane %v8099, 1
  %v8246 = vrot.slane %v8100, 1
  %v8247 = vrot.slane %v8101, 1
  %v8248 = vrot.slane %v8102, 1
  %v8249 = vrot.slane %v8103, 1
  %v8322 = vunpack.c.l.b16 %v8172
  %v8323 = vunpack.c.l.b16 %v8173
  %v8324 = vunpack.c.l.b16 %v8174
  %v8325 = vunpack.c.l.b16 %v8175
  %v8326 = vunpack.c.l.b16 %v8176
  %v8327 = vunpack.c.l.b16 %v8177
  %v8328 = vunpack.c.l.b16 %v8178
  %v8329 = vunpack.c.l.b16 %v8179
  %v8330 = vunpack.c.l.b16 %v8180
  %v8331 = vunpack.c.l.b16 %v8181
  %v8332 = vunpack.c.l.b16 %v8182
  %v8333 = vunpack.c.l.b16 %v8183
  %v8334 = vunpack.c.l.b16 %v8184
  %v8335 = vunpack.c.l.b16 %v8185
  %v8336 = vunpack.c.l.b16 %v8186
  %v8337 = vunpack.c.l.b16 %v8187
  %v8338 = vunpack.c.l.b16 %v8188
  %v8339 = vunpack.c.l.b16 %v8189
  %v8340 = vunpack.c.l.b16 %v8190
  %v8341 = vunpack.c.l.b16 %v8191
  %v8342 = vunpack.c.l.b16 %v8192
  %v8343 = vunpack.c.l.b16 %v8193
  %v8344 = vunpack.c.l.b16 %v8194
  %v8345 = vunpack.c.l.b16 %v8195
  %v8346 = vunpack.c.l.b16 %v8196
  %v8347 = vunpack.c.l.b16 %v8197
  %v8348 = vunpack.c.l.b16 %v8198
  %v8349 = vunpack.c.l.b16 %v8199
  %v8350 = vunpack.c.l.b16 %v8200
  %v8351 = vunpack.c.l.b16 %v8201
  %v8352 = vunpack.c.l.b16 %v8202
  %v8353 = vunpack.c.l.b16 %v8203
  %v8354 = vunpack.c.l.b16 %v8204
  %v8355 = vunpack.c.l.b16 %v8205
  %v8356 = vunpack.c.l.b16 %v8206
  %v8357 = vunpack.c.l.b16 %v8207
  %v8358 = vunpack.c.l.b16 %v8208
  %v8359 = vunpack.c.l.b16 %v8209
  %v8360 = vunpack.c.l.b16 %v8210
  %v8361 = vunpack.c.l.b16 %v8211
  %v8362 = vunpack.c.l.b16 %v8212
  %v8363 = vunpack.c.l.b16 %v8213
  %v8364 = vunpack.c.l.b16 %v8214
  %v8365 = vunpack.c.l.b16 %v8215
  %v8366 = vunpack.c.l.b16 %v8216
  %v8367 = vunpack.c.l.b16 %v8217
  %v8368 = vunpack.c.l.b16 %v8218
  %v8369 = vunpack.c.l.b16 %v8219
  %v8370 = vunpack.c.l.b16 %v8220
  %v8371 = vunpack.c.l.b16 %v8221
  %v8372 = vunpack.c.l.b16 %v8222
  %v8373 = vunpack.c.l.b16 %v8223
  %v8374 = vunpack.c.l.b16 %v8224
  %v8375 = vunpack.c.l.b16 %v8225
  %v8376 = vunpack.c.l.b16 %v8226
  %v8377 = vunpack.c.l.b16 %v8227
  %v8378 = vunpack.c.l.b16 %v8228
  %v8379 = vunpack.c.l.b16 %v8229
  %v8380 = vunpack.c.l.b16 %v8230
  %v8381 = vunpack.c.l.b16 %v8231
  %v8382 = vunpack.c.l.b16 %v8232
  %v8383 = vunpack.c.l.b16 %v8233
  %v8384 = vunpack.c.l.b16 %v8234
  %v8385 = vunpack.c.l.b16 %v8235
  %v8386 = vunpack.c.l.b16 %v8236
  %v8387 = vunpack.c.l.b16 %v8237
  %v8388 = vunpack.c.l.b16 %v8238
  %v8389 = vunpack.c.l.b16 %v8239
  %v8390 = vpack.c.b16 %v8323, %v8322
  %v8391 = vpack.c.b16 %v8325, %v8324
  %v8392 = vpack.c.b16 %v8327, %v8326
  %v8393 = vpack.c.b16 %v8329, %v8328
  %v8394 = vpack.c.b16 %v8331, %v8330
  %v8395 = vpack.c.b16 %v8333, %v8332
  %v8396 = vpack.c.b16 %v8335, %v8334
  %v8397 = vpack.c.b16 %v8337, %v8336
  %v8398 = vpack.c.b16 %v8339, %v8338
  %v8399 = vpack.c.b16 %v8341, %v8340
  %v8400 = vpack.c.b16 %v8343, %v8342
  %v8401 = vpack.c.b16 %v8345, %v8344
  %v8402 = vpack.c.b16 %v8347, %v8346
  %v8403 = vpack.c.b16 %v8349, %v8348
  %v8404 = vpack.c.b16 %v8351, %v8350
  %v8405 = vpack.c.b16 %v8353, %v8352
  %v8406 = vpack.c.b16 %v8355, %v8354
  %v8407 = vpack.c.b16 %v8357, %v8356
  %v8408 = vpack.c.b16 %v8359, %v8358
  %v8409 = vpack.c.b16 %v8361, %v8360
  %v8410 = vpack.c.b16 %v8363, %v8362
  %v8411 = vpack.c.b16 %v8365, %v8364
  %v8412 = vpack.c.b16 %v8367, %v8366
  %v8413 = vpack.c.b16 %v8369, %v8368
  %v8414 = vpack.c.b16 %v8371, %v8370
  %v8415 = vpack.c.b16 %v8373, %v8372
  %v8416 = vpack.c.b16 %v8375, %v8374
  %v8417 = vpack.c.b16 %v8377, %v8376
  %v8418 = vpack.c.b16 %v8379, %v8378
  %v8419 = vpack.c.b16 %v8381, %v8380
  %v8420 = vpack.c.b16 %v8383, %v8382
  %v8421 = vpack.c.b16 %v8385, %v8384
  %v8422 = vpack.c.b16 %v8387, %v8386
  %v8423 = vpack.c.b16 %v8389, %v8388
  %vm8458 = vcmask 261120
  %v8460 = vsel %vm8458, %v8249, 0
  %8462 = vmatprep.subr.bf16.mxu0 0
  %8463 = vmatpush1.bf16.msra.mxu0 %v8390
  %8464 = vmatprep.subr.bf16.mxu0 0
  %8465 = vmatpush1.bf16.msra.mxu0 %v8391
  %8466 = vmatprep.subr.bf16.mxu0 0
  %8467 = vmatpush1.bf16.msra.mxu0 %v8392
  %8468 = vmatprep.subr.bf16.mxu0 0
  %8469 = vmatpush1.bf16.msra.mxu0 %v8393
  %8470 = vmatprep.subr.bf16.mxu0 0
  %8471 = vmatpush1.bf16.msra.mxu0 %v8394
  %8472 = vmatprep.subr.bf16.mxu0 0
  %8473 = vmatpush1.bf16.msra.mxu0 %v8395
  %8474 = vmatprep.subr.bf16.mxu0 0
  %8475 = vmatpush1.bf16.msra.mxu0 %v8396
  %8476 = vmatprep.subr.bf16.mxu0 0
  %8477 = vmatpush1.bf16.msra.mxu0 %v8397
  %8478 = vmatprep.subr.bf16.mxu0 0
  %8479 = vmatpush1.bf16.msra.mxu0 %v8398
  %8480 = vmatprep.subr.bf16.mxu0 0
  %8481 = vmatpush1.bf16.msra.mxu0 %v8399
  %8482 = vmatprep.subr.bf16.mxu0 0
  %8483 = vmatpush1.bf16.msra.mxu0 %v8400
  %8484 = vmatprep.subr.bf16.mxu0 0
  %8485 = vmatpush1.bf16.msra.mxu0 %v8401
  %8486 = vmatprep.subr.bf16.mxu0 0
  %8487 = vmatpush1.bf16.msra.mxu0 %v8402
  %8488 = vmatprep.subr.bf16.mxu0 0
  %8489 = vmatpush1.bf16.msra.mxu0 %v8403
  %8490 = vmatprep.subr.bf16.mxu0 0
  %8491 = vmatpush1.bf16.msra.mxu0 %v8404
  %8492 = vmatprep.subr.bf16.mxu0 0
  %8493 = vmatpush1.bf16.msra.mxu0 %v8405
  %8494 = vmatprep.mubr.bf16.mxu0 %v8246
  %8495 = vmatmul.mubr.bf16.gmra.mrb[0].mxu0 %v8245
  %v8496 = vpop.f32.mrb[0].mxu0
  %v8497 = vadd.f32 0.0, %v8496
  %v8498 = vpop.f32.mrb[0].mxu0
  %v8499 = vpop.f32.mrb[0].mxu0
  %v8500 = vpop.f32.mrb[0].mxu0
  %8501 = vdwg.mxu0
  %8502 = vmatprep.subr.bf16.mxu0 0
  %8503 = vmatpush1.bf16.msra.mxu0 %v8406
  %8504 = vmatprep.subr.bf16.mxu0 0
  %8505 = vmatpush1.bf16.msra.mxu0 %v8407
  %8506 = vmatprep.subr.bf16.mxu0 0
  %8507 = vmatpush1.bf16.msra.mxu0 %v8408
  %8508 = vmatprep.subr.bf16.mxu0 0
  %8509 = vmatpush1.bf16.msra.mxu0 %v8409
  %8510 = vmatprep.subr.bf16.mxu0 0
  %8511 = vmatpush1.bf16.msra.mxu0 %v8410
  %8512 = vmatprep.subr.bf16.mxu0 0
  %8513 = vmatpush1.bf16.msra.mxu0 %v8411
  %8514 = vmatprep.subr.bf16.mxu0 0
  %8515 = vmatpush1.bf16.msra.mxu0 %v8412
  %8516 = vmatprep.subr.bf16.mxu0 0
  %8517 = vmatpush1.bf16.msra.mxu0 %v8413
  %8518 = vmatprep.subr.bf16.mxu0 0
  %8519 = vmatpush1.bf16.msra.mxu0 %v8414
  %8520 = vmatprep.subr.bf16.mxu0 0
  %8521 = vmatpush1.bf16.msra.mxu0 %v8415
  %8522 = vmatprep.subr.bf16.mxu0 0
  %8523 = vmatpush1.bf16.msra.mxu0 %v8416
  %8524 = vmatprep.subr.bf16.mxu0 0
  %8525 = vmatpush1.bf16.msra.mxu0 %v8417
  %8526 = vmatprep.subr.bf16.mxu0 0
  %8527 = vmatpush1.bf16.msra.mxu0 %v8418
  %8528 = vmatprep.subr.bf16.mxu0 0
  %8529 = vmatpush1.bf16.msra.mxu0 %v8419
  %8530 = vmatprep.subr.bf16.mxu0 0
  %8531 = vmatpush1.bf16.msra.mxu0 %v8420
  %8532 = vmatprep.subr.bf16.mxu0 0
  %8533 = vmatpush1.bf16.msra.mxu0 %v8421
  %8534 = vmatprep.mubr.bf16.mxu0 %v8248
  %8535 = vmatmul.mubr.bf16.gmra.mrb[0].mxu0 %v8247
  %v8536 = vpop.f32.mrb[0].mxu0
  %v8537 = vadd.f32 %v8497, %v8536
  %v8538 = vpop.f32.mrb[0].mxu0
  %v8539 = vpop.f32.mrb[0].mxu0
  %v8540 = vpop.f32.mrb[0].mxu0
  %8541 = vdwg.mxu0
  %8542 = vmatprep.subr.bf16.mxu0 0
  %8543 = vmatpush1.bf16.msra.mxu0 %v8422
  %8544 = vmatprep.subr.bf16.mxu0 0
  %8545 = vmatpush1.bf16.msra.mxu0 %v8423
  %8546 = vmatprep.subr.bf16.mxu0 0
  %8547 = vmatpush1.bf16.msra.mxu0 0
  %8548 = vmatprep.subr.bf16.mxu0 0
  %8549 = vmatpush1.bf16.msra.mxu0 0
  %8550 = vmatprep.subr.bf16.mxu0 0
  %8551 = vmatpush1.bf16.msra.mxu0 0
  %8552 = vmatprep.subr.bf16.mxu0 0
  %8553 = vmatpush1.bf16.msra.mxu0 0
  %8554 = vmatprep.subr.bf16.mxu0 0
  %8555 = vmatpush1.bf16.msra.mxu0 0
  %8556 = vmatprep.subr.bf16.mxu0 0
  %8557 = vmatpush1.bf16.msra.mxu0 0
  %8558 = vmatprep.subr.bf16.mxu0 0
  %8559 = vmatpush1.bf16.msra.mxu0 0
  %8560 = vmatprep.subr.bf16.mxu0 0
  %8561 = vmatpush1.bf16.msra.mxu0 0
  %8562 = vmatprep.subr.bf16.mxu0 0
  %8563 = vmatpush1.bf16.msra.mxu0 0
  %8564 = vmatprep.subr.bf16.mxu0 0
  %8565 = vmatpush1.bf16.msra.mxu0 0
  %8566 = vmatprep.subr.bf16.mxu0 0
  %8567 = vmatpush1.bf16.msra.mxu0 0
  %8568 = vmatprep.subr.bf16.mxu0 0
  %8569 = vmatpush1.bf16.msra.mxu0 0
  %8570 = vmatprep.subr.bf16.mxu0 0
  %8571 = vmatpush1.bf16.msra.mxu0 0
  %8572 = vmatprep.subr.bf16.mxu0 0
  %8573 = vmatpush1.bf16.msra.mxu0 0
  %8574 = vmatprep.mubr.bf16.mxu0 0
  %8575 = vmatmul.mubr.bf16.gmra.mrb[0].mxu0 %v8460
  %v8576 = vpop.f32.mrb[0].mxu0
  %v8577 = vadd.f32 %v8537, %v8576
  %v8578 = vpop.f32.mrb[0].mxu0
  %v8579 = vpop.f32.mrb[0].mxu0
  %v8580 = vpop.f32.mrb[0].mxu0
  %8581 = vdwg.mxu0
  %v8650 = vunpack.c.l.b16 %v8104
  %v8651 = vunpack.c.l.b16 %v8105
  %v8652 = vunpack.c.l.b16 %v8106
  %v8653 = vunpack.c.l.b16 %v8107
  %v8654 = vunpack.c.l.b16 %v8108
  %v8655 = vunpack.c.l.b16 %v8109
  %v8656 = vunpack.c.l.b16 %v8110
  %v8657 = vunpack.c.l.b16 %v8111
  %v8658 = vunpack.c.l.b16 %v8112
  %v8659 = vunpack.c.l.b16 %v8113
  %v8660 = vunpack.c.l.b16 %v8114
  %v8661 = vunpack.c.l.b16 %v8115
  %v8662 = vunpack.c.l.b16 %v8116
  %v8663 = vunpack.c.l.b16 %v8117
  %v8664 = vunpack.c.l.b16 %v8118
  %v8665 = vunpack.c.l.b16 %v8119
  %v8666 = vunpack.c.l.b16 %v8120
  %v8667 = vunpack.c.l.b16 %v8121
  %v8668 = vunpack.c.l.b16 %v8122
  %v8669 = vunpack.c.l.b16 %v8123
  %v8670 = vunpack.c.l.b16 %v8124
  %v8671 = vunpack.c.l.b16 %v8125
  %v8672 = vunpack.c.l.b16 %v8126
  %v8673 = vunpack.c.l.b16 %v8127
  %v8674 = vunpack.c.l.b16 %v8128
  %v8675 = vunpack.c.l.b16 %v8129
  %v8676 = vunpack.c.l.b16 %v8130
  %v8677 = vunpack.c.l.b16 %v8131
  %v8678 = vunpack.c.l.b16 %v8132
  %v8679 = vunpack.c.l.b16 %v8133
  %v8680 = vunpack.c.l.b16 %v8134
  %v8681 = vunpack.c.l.b16 %v8135
  %v8682 = vunpack.c.l.b16 %v8136
  %v8683 = vunpack.c.l.b16 %v8137
  %v8684 = vunpack.c.l.b16 %v8138
  %v8685 = vunpack.c.l.b16 %v8139
  %v8686 = vunpack.c.l.b16 %v8140
  %v8687 = vunpack.c.l.b16 %v8141
  %v8688 = vunpack.c.l.b16 %v8142
  %v8689 = vunpack.c.l.b16 %v8143
  %v8690 = vunpack.c.l.b16 %v8144
  %v8691 = vunpack.c.l.b16 %v8145
  %v8692 = vunpack.c.l.b16 %v8146
  %v8693 = vunpack.c.l.b16 %v8147
  %v8694 = vunpack.c.l.b16 %v8148
  %v8695 = vunpack.c.l.b16 %v8149
  %v8696 = vunpack.c.l.b16 %v8150
  %v8697 = vunpack.c.l.b16 %v8151
  %v8698 = vunpack.c.l.b16 %v8152
  %v8699 = vunpack.c.l.b16 %v8153
  %v8700 = vunpack.c.l.b16 %v8154
  %v8701 = vunpack.c.l.b16 %v8155
  %v8702 = vunpack.c.l.b16 %v8156
  %v8703 = vunpack.c.l.b16 %v8157
  %v8704 = vunpack.c.l.b16 %v8158
  %v8705 = vunpack.c.l.b16 %v8159
  %v8706 = vunpack.c.l.b16 %v8160
  %v8707 = vunpack.c.l.b16 %v8161
  %v8708 = vunpack.c.l.b16 %v8162
  %v8709 = vunpack.c.l.b16 %v8163
  %v8710 = vunpack.c.l.b16 %v8164
  %v8711 = vunpack.c.l.b16 %v8165
  %v8712 = vunpack.c.l.b16 %v8166
  %v8713 = vunpack.c.l.b16 %v8167
  %v8714 = vunpack.c.l.b16 %v8168
  %v8715 = vunpack.c.l.b16 %v8169
  %v8716 = vunpack.c.l.b16 %v8170
  %v8717 = vunpack.c.l.b16 %v8171
  %v8718 = vpack.c.b16 %v8651, %v8650
  %v8719 = vpack.c.b16 %v8653, %v8652
  %v8720 = vpack.c.b16 %v8655, %v8654
  %v8721 = vpack.c.b16 %v8657, %v8656
  %v8722 = vpack.c.b16 %v8659, %v8658
  %v8723 = vpack.c.b16 %v8661, %v8660
  %v8724 = vpack.c.b16 %v8663, %v8662
  %v8725 = vpack.c.b16 %v8665, %v8664
  %v8726 = vpack.c.b16 %v8667, %v8666
  %v8727 = vpack.c.b16 %v8669, %v8668
  %v8728 = vpack.c.b16 %v8671, %v8670
  %v8729 = vpack.c.b16 %v8673, %v8672
  %v8730 = vpack.c.b16 %v8675, %v8674
  %v8731 = vpack.c.b16 %v8677, %v8676
  %v8732 = vpack.c.b16 %v8679, %v8678
  %v8733 = vpack.c.b16 %v8681, %v8680
  %v8734 = vpack.c.b16 %v8683, %v8682
  %v8735 = vpack.c.b16 %v8685, %v8684
  %v8736 = vpack.c.b16 %v8687, %v8686
  %v8737 = vpack.c.b16 %v8689, %v8688
  %v8738 = vpack.c.b16 %v8691, %v8690
  %v8739 = vpack.c.b16 %v8693, %v8692
  %v8740 = vpack.c.b16 %v8695, %v8694
  %v8741 = vpack.c.b16 %v8697, %v8696
  %v8742 = vpack.c.b16 %v8699, %v8698
  %v8743 = vpack.c.b16 %v8701, %v8700
  %v8744 = vpack.c.b16 %v8703, %v8702
  %v8745 = vpack.c.b16 %v8705, %v8704
  %v8746 = vpack.c.b16 %v8707, %v8706
  %v8747 = vpack.c.b16 %v8709, %v8708
  %v8748 = vpack.c.b16 %v8711, %v8710
  %v8749 = vpack.c.b16 %v8713, %v8712
  %v8750 = vpack.c.b16 %v8715, %v8714
  %v8751 = vpack.c.b16 %v8717, %v8716
  %v8787 = vsel %vm8458, %v8103, 0
  %8789 = vmatprep.subr.bf16.mxu0 0
  %8790 = vmatpush1.bf16.msra.mxu0 %v8718
  %8791 = vmatprep.subr.bf16.mxu0 0
  %8792 = vmatpush1.bf16.msra.mxu0 %v8719
  %8793 = vmatprep.subr.bf16.mxu0 0
  %8794 = vmatpush1.bf16.msra.mxu0 %v8720
  %8795 = vmatprep.subr.bf16.mxu0 0
  %8796 = vmatpush1.bf16.msra.mxu0 %v8721
  %8797 = vmatprep.subr.bf16.mxu0 0
  %8798 = vmatpush1.bf16.msra.mxu0 %v8722
  %8799 = vmatprep.subr.bf16.mxu0 0
  %8800 = vmatpush1.bf16.msra.mxu0 %v8723
  %8801 = vmatprep.subr.bf16.mxu0 0
  %8802 = vmatpush1.bf16.msra.mxu0 %v8724
  %8803 = vmatprep.subr.bf16.mxu0 0
  %8804 = vmatpush1.bf16.msra.mxu0 %v8725
  %8805 = vmatprep.subr.bf16.mxu0 0
  %8806 = vmatpush1.bf16.msra.mxu0 %v8726
  %8807 = vmatprep.subr.bf16.mxu0 0
  %8808 = vmatpush1.bf16.msra.mxu0 %v8727
  %8809 = vmatprep.subr.bf16.mxu0 0
  %8810 = vmatpush1.bf16.msra.mxu0 %v8728
  %8811 = vmatprep.subr.bf16.mxu0 0
  %8812 = vmatpush1.bf16.msra.mxu0 %v8729
  %8813 = vmatprep.subr.bf16.mxu0 0
  %8814 = vmatpush1.bf16.msra.mxu0 %v8730
  %8815 = vmatprep.subr.bf16.mxu0 0
  %8816 = vmatpush1.bf16.msra.mxu0 %v8731
  %8817 = vmatprep.subr.bf16.mxu0 0
  %8818 = vmatpush1.bf16.msra.mxu0 %v8732
  %8819 = vmatprep.subr.bf16.mxu0 0
  %8820 = vmatpush1.bf16.msra.mxu0 %v8733
  %8821 = vmatprep.mubr.bf16.mxu0 %v8100
  %8822 = vmatmul.mubr.bf16.gmra.mrb[0].mxu0 %v8099
  %v8823 = vpop.f32.mrb[0].mxu0
  %v8824 = vadd.f32 %v8577, %v8823
  %v8825 = vpop.f32.mrb[0].mxu0
  %v8826 = vpop.f32.mrb[0].mxu0
  %v8827 = vpop.f32.mrb[0].mxu0
  %8828 = vdwg.mxu0
  %8829 = vmatprep.subr.bf16.mxu0 0
  %8830 = vmatpush1.bf16.msra.mxu0 %v8734
  %8831 = vmatprep.subr.bf16.mxu0 0
  %8832 = vmatpush1.bf16.msra.mxu0 %v8735
  %8833 = vmatprep.subr.bf16.mxu0 0
  %8834 = vmatpush1.bf16.msra.mxu0 %v8736
  %8835 = vmatprep.subr.bf16.mxu0 0
  %8836 = vmatpush1.bf16.msra.mxu0 %v8737
  %8837 = vmatprep.subr.bf16.mxu0 0
  %8838 = vmatpush1.bf16.msra.mxu0 %v8738
  %8839 = vmatprep.subr.bf16.mxu0 0
  %8840 = vmatpush1.bf16.msra.mxu0 %v8739
  %8841 = vmatprep.subr.bf16.mxu0 0
  %8842 = vmatpush1.bf16.msra.mxu0 %v8740
  %8843 = vmatprep.subr.bf16.mxu0 0
  %8844 = vmatpush1.bf16.msra.mxu0 %v8741
  %8845 = vmatprep.subr.bf16.mxu0 0
  %8846 = vmatpush1.bf16.msra.mxu0 %v8742
  %8847 = vmatprep.subr.bf16.mxu0 0
  %8848 = vmatpush1.bf16.msra.mxu0 %v8743
  %8849 = vmatprep.subr.bf16.mxu0 0
  %8850 = vmatpush1.bf16.msra.mxu0 %v8744
  %8851 = vmatprep.subr.bf16.mxu0 0
  %8852 = vmatpush1.bf16.msra.mxu0 %v8745
  %8853 = vmatprep.subr.bf16.mxu0 0
  %8854 = vmatpush1.bf16.msra.mxu0 %v8746
  %8855 = vmatprep.subr.bf16.mxu0 0
  %8856 = vmatpush1.bf16.msra.mxu0 %v8747
  %8857 = vmatprep.subr.bf16.mxu0 0
  %8858 = vmatpush1.bf16.msra.mxu0 %v8748
  %8859 = vmatprep.subr.bf16.mxu0 0
  %8860 = vmatpush1.bf16.msra.mxu0 %v8749
  %8861 = vmatprep.mubr.bf16.mxu0 %v8102
  %8862 = vmatmul.mubr.bf16.gmra.mrb[0].mxu0 %v8101
  %v8863 = vpop.f32.mrb[0].mxu0
  %v8864 = vadd.f32 %v8824, %v8863
  %v8865 = vpop.f32.mrb[0].mxu0
  %v8866 = vpop.f32.mrb[0].mxu0
  %v8867 = vpop.f32.mrb[0].mxu0
  %8868 = vdwg.mxu0
  %8869 = vmatprep.subr.bf16.mxu0 0
  %8870 = vmatpush1.bf16.msra.mxu0 %v8750
  %8871 = vmatprep.subr.bf16.mxu0 0
  %8872 = vmatpush1.bf16.msra.mxu0 %v8751
  %8873 = vmatprep.subr.bf16.mxu0 0
  %8874 = vmatpush1.bf16.msra.mxu0 0
  %8875 = vmatprep.subr.bf16.mxu0 0
  %8876 = vmatpush1.bf16.msra.mxu0 0
  %8877 = vmatprep.subr.bf16.mxu0 0
  %8878 = vmatpush1.bf16.msra.mxu0 0
  %8879 = vmatprep.subr.bf16.mxu0 0
  %8880 = vmatpush1.bf16.msra.mxu0 0
  %8881 = vmatprep.subr.bf16.mxu0 0
  %8882 = vmatpush1.bf16.msra.mxu0 0
  %8883 = vmatprep.subr.bf16.mxu0 0
  %8884 = vmatpush1.bf16.msra.mxu0 0
  %8885 = vmatprep.subr.bf16.mxu0 0
  %8886 = vmatpush1.bf16.msra.mxu0 0
  %8887 = vmatprep.subr.bf16.mxu0 0
  %8888 = vmatpush1.bf16.msra.mxu0 0
  %8889 = vmatprep.subr.bf16.mxu0 0
  %8890 = vmatpush1.bf16.msra.mxu0 0
  %8891 = vmatprep.subr.bf16.mxu0 0
  %8892 = vmatpush1.bf16.msra.mxu0 0
  %8893 = vmatprep.subr.bf16.mxu0 0
  %8894 = vmatpush1.bf16.msra.mxu0 0
  %8895 = vmatprep.subr.bf16.mxu0 0
  %8896 = vmatpush1.bf16.msra.mxu0 0
  %8897 = vmatprep.subr.bf16.mxu0 0
  %8898 = vmatpush1.bf16.msra.mxu0 0
  %8899 = vmatprep.subr.bf16.mxu0 0
  %8900 = vmatpush1.bf16.msra.mxu0 0
  %8901 = vmatprep.mubr.bf16.mxu0 0
  %8902 = vmatmul.mubr.bf16.gmra.mrb[0].mxu0 %v8787
  %v8903 = vpop.f32.mrb[0].mxu0
  %v8904 = vadd.f32 %v8864, %v8903
  %v8905 = vpop.f32.mrb[0].mxu0
  %v8906 = vpop.f32.mrb[0].mxu0
  %v8907 = vpop.f32.mrb[0].mxu0
  %8908 = vdwg.mxu0
  %v8909 = vld [vmem:[%s25] sm:$0xf]
  %v8910 = vld [vmem:[%s25 + $0x4] sm:$0xf]
  %v8911 = vld [vmem:[%s25 + $0x8] sm:$0xf]
  %v8912 = vld [vmem:[%s25 + $0xc] sm:$0xf]
  %v8913 = vld [vmem:[%s25 + $0x10] sm:$0xf]
  %v8914 = vld [vmem:[%s25 + $0x14] sm:$0xf]
  %v8915 = vld [vmem:[%s25 + $0x18] sm:$0xf]
  %v8916 = vld [vmem:[%s25 + $0x1c] sm:$0xf]
  %v8917 = vld [vmem:[%s25 + $0x20] sm:$0xf]
  %v8918 = vld [vmem:[%s25 + $0x24] sm:$0xf]
  %v8919 = vld [vmem:[%s25 + $0x28] sm:$0xf]
  %v8920 = vld [vmem:[%s25 + $0x2c] sm:$0xf]
  %v8921 = vld [vmem:[%s25 + $0x30] sm:$0xf]
  %v8922 = vld [vmem:[%s25 + $0x34] sm:$0xf]
  %v8923 = vld [vmem:[%s25 + $0x38] sm:$0xf]
  %v8924 = vld [vmem:[%s25 + $0x3c] sm:$0xf]
  %v8925 = vld [vmem:[%s25 + $0x40] sm:$0xf]
  %v8926 = vld [vmem:[%s25 + $0x44] sm:$0xf]
  %v8927 = vld [vmem:[%s25 + $0x48] sm:$0xf]
  %v8928 = vld [vmem:[%s25 + $0x4c] sm:$0xf]
  %v8929 = vld [vmem:[%s25 + $0x50] sm:$0xf]
  %v8930 = vld [vmem:[%s25 + $0x54] sm:$0xf]
  %v8931 = vld [vmem:[%s25 + $0x58] sm:$0xf]
  %v8932 = vld [vmem:[%s25 + $0x5c] sm:$0xf]
  %v8933 = vld [vmem:[%s25 + $0x60] sm:$0xf]
  %v8934 = vld [vmem:[%s25 + $0x64] sm:$0xf]
  %v8935 = vld [vmem:[%s25 + $0x68] sm:$0xf]
  %v8936 = vld [vmem:[%s25 + $0x6c] sm:$0xf]
  %v8937 = vld [vmem:[%s25 + $0x70] sm:$0xf]
  %v8938 = vld [vmem:[%s25 + $0x74] sm:$0xf]
  %v8939 = vld [vmem:[%s25 + $0x78] sm:$0xf]
  %v8940 = vld [vmem:[%s25 + $0x7c] sm:$0xf]
  %v8941 = vld [vmem:[%s25 + $0x80] sm:$0xf]
  %v8942 = vld [vmem:[%s25 + $0x84] sm:$0xf]
  %v8943 = vld [vmem:[%s25 + $0x88] sm:$0xf]
  %v8944 = vld [vmem:[%s25 + $0x8c] sm:$0xf]
  %v8945 = vld [vmem:[%s25 + $0x90] sm:$0xf]
  %v8946 = vld [vmem:[%s25 + $0x94] sm:$0xf]
  %v8947 = vld [vmem:[%s25 + $0x98] sm:$0xf]
  %v8948 = vld [vmem:[%s25 + $0x9c] sm:$0xf]
  %v8949 = vld [vmem:[%s25 + $0xa0] sm:$0xf]
  %v8950 = vld [vmem:[%s25 + $0xa4] sm:$0xf]
  %v8951 = vld [vmem:[%s25 + $0xa8] sm:$0xf]
  %v8952 = vld [vmem:[%s25 + $0xac] sm:$0xf]
  %v8953 = vld [vmem:[%s25 + $0xb0] sm:$0xf]
  %v8954 = vld [vmem:[%s25 + $0xb4] sm:$0xf]
  %v8955 = vld [vmem:[%s25 + $0xb8] sm:$0xf]
  %v8956 = vld [vmem:[%s25 + $0xbc] sm:$0xf]
  %v8957 = vld [vmem:[%s25 + $0xc0] sm:$0xf]
  %v8958 = vld [vmem:[%s25 + $0xc4] sm:$0xf]
  %v8959 = vld [vmem:[%s25 + $0xc8] sm:$0xf]
  %v8960 = vld [vmem:[%s25 + $0xcc] sm:$0xf]
  %v8961 = vld [vmem:[%s25 + $0xd0] sm:$0xf]
  %v8962 = vld [vmem:[%s25 + $0xd4] sm:$0xf]
  %v8963 = vld [vmem:[%s25 + $0xd8] sm:$0xf]
  %v8964 = vld [vmem:[%s25 + $0xdc] sm:$0xf]
  %v8965 = vld [vmem:[%s25 + $0xe0] sm:$0xf]
  %v8966 = vld [vmem:[%s25 + $0xe4] sm:$0xf]
  %v8967 = vld [vmem:[%s25 + $0xe8] sm:$0xf]
  %v8968 = vld [vmem:[%s25 + $0xec] sm:$0xf]
  %v8969 = vld [vmem:[%s25 + $0xf0] sm:$0xf]
  %v8970 = vld [vmem:[%s25 + $0xf4] sm:$0xf]
  %v8971 = vld [vmem:[%s25 + $0xf8] sm:$0xf]
  %v8972 = vld [vmem:[%s25 + $0xfc] sm:$0xf]
  %v8973 = vld [vmem:[%s25 + $0x100] sm:$0xf]
  %v8974 = vld [vmem:[%s25 + $0x104] sm:$0xf]
  %v8975 = vld [vmem:[%s25 + $0x108] sm:$0xf]
  %v8976 = vld [vmem:[%s25 + $0x10c] sm:$0xf]
  %v8977 = vrot.slane %v8099, 2
  %v8978 = vrot.slane %v8100, 2
  %v8979 = vrot.slane %v8101, 2
  %v8980 = vrot.slane %v8102, 2
  %v8981 = vrot.slane %v8103, 2
  %v9054 = vunpack.c.l.b16 %v8909
  %v9055 = vunpack.c.l.b16 %v8910
  %v9056 = vunpack.c.l.b16 %v8911
  %v9057 = vunpack.c.l.b16 %v8912
  %v9058 = vunpack.c.l.b16 %v8913
  %v9059 = vunpack.c.l.b16 %v8914
  %v9060 = vunpack.c.l.b16 %v8915
  %v9061 = vunpack.c.l.b16 %v8916
  %v9062 = vunpack.c.l.b16 %v8917
  %v9063 = vunpack.c.l.b16 %v8918
  %v9064 = vunpack.c.l.b16 %v8919
  %v9065 = vunpack.c.l.b16 %v8920
  %v9066 = vunpack.c.l.b16 %v8921
  %v9067 = vunpack.c.l.b16 %v8922
  %v9068 = vunpack.c.l.b16 %v8923
  %v9069 = vunpack.c.l.b16 %v8924
  %v9070 = vunpack.c.l.b16 %v8925
  %v9071 = vunpack.c.l.b16 %v8926
  %v9072 = vunpack.c.l.b16 %v8927
  %v9073 = vunpack.c.l.b16 %v8928
  %v9074 = vunpack.c.l.b16 %v8929
  %v9075 = vunpack.c.l.b16 %v8930
  %v9076 = vunpack.c.l.b16 %v8931
  %v9077 = vunpack.c.l.b16 %v8932
  %v9078 = vunpack.c.l.b16 %v8933
  %v9079 = vunpack.c.l.b16 %v8934
  %v9080 = vunpack.c.l.b16 %v8935
  %v9081 = vunpack.c.l.b16 %v8936
  %v9082 = vunpack.c.l.b16 %v8937
  %v9083 = vunpack.c.l.b16 %v8938
  %v9084 = vunpack.c.l.b16 %v8939
  %v9085 = vunpack.c.l.b16 %v8940
  %v9086 = vunpack.c.l.b16 %v8941
  %v9087 = vunpack.c.l.b16 %v8942
  %v9088 = vunpack.c.l.b16 %v8943
  %v9089 = vunpack.c.l.b16 %v8944
  %v9090 = vunpack.c.l.b16 %v8945
  %v9091 = vunpack.c.l.b16 %v8946
  %v9092 = vunpack.c.l.b16 %v8947
  %v9093 = vunpack.c.l.b16 %v8948
  %v9094 = vunpack.c.l.b16 %v8949
  %v9095 = vunpack.c.l.b16 %v8950
  %v9096 = vunpack.c.l.b16 %v8951
  %v9097 = vunpack.c.l.b16 %v8952
  %v9098 = vunpack.c.l.b16 %v8953
  %v9099 = vunpack.c.l.b16 %v8954
  %v9100 = vunpack.c.l.b16 %v8955
  %v9101 = vunpack.c.l.b16 %v8956
  %v9102 = vunpack.c.l.b16 %v8957
  %v9103 = vunpack.c.l.b16 %v8958
  %v9104 = vunpack.c.l.b16 %v8959
  %v9105 = vunpack.c.l.b16 %v8960
  %v9106 = vunpack.c.l.b16 %v8961
  %v9107 = vunpack.c.l.b16 %v8962
  %v9108 = vunpack.c.l.b16 %v8963
  %v9109 = vunpack.c.l.b16 %v8964
  %v9110 = vunpack.c.l.b16 %v8965
  %v9111 = vunpack.c.l.b16 %v8966
  %v9112 = vunpack.c.l.b16 %v8967
  %v9113 = vunpack.c.l.b16 %v8968
  %v9114 = vunpack.c.l.b16 %v8969
  %v9115 = vunpack.c.l.b16 %v8970
  %v9116 = vunpack.c.l.b16 %v8971
  %v9117 = vunpack.c.l.b16 %v8972
  %v9118 = vunpack.c.l.b16 %v8973
  %v9119 = vunpack.c.l.b16 %v8974
  %v9120 = vunpack.c.l.b16 %v8975
  %v9121 = vunpack.c.l.b16 %v8976
  %v9122 = vpack.c.b16 %v9055, %v9054
  %v9123 = vpack.c.b16 %v9057, %v9056
  %v9124 = vpack.c.b16 %v9059, %v9058
  %v9125 = vpack.c.b16 %v9061, %v9060
  %v9126 = vpack.c.b16 %v9063, %v9062
  %v9127 = vpack.c.b16 %v9065, %v9064
  %v9128 = vpack.c.b16 %v9067, %v9066
  %v9129 = vpack.c.b16 %v9069, %v9068
  %v9130 = vpack.c.b16 %v9071, %v9070
  %v9131 = vpack.c.b16 %v9073, %v9072
  %v9132 = vpack.c.b16 %v9075, %v9074
  %v9133 = vpack.c.b16 %v9077, %v9076
  %v9134 = vpack.c.b16 %v9079, %v9078
  %v9135 = vpack.c.b16 %v9081, %v9080
  %v9136 = vpack.c.b16 %v9083, %v9082
  %v9137 = vpack.c.b16 %v9085, %v9084
  %v9138 = vpack.c.b16 %v9087, %v9086
  %v9139 = vpack.c.b16 %v9089, %v9088
  %v9140 = vpack.c.b16 %v9091, %v9090
  %v9141 = vpack.c.b16 %v9093, %v9092
  %v9142 = vpack.c.b16 %v9095, %v9094
  %v9143 = vpack.c.b16 %v9097, %v9096
  %v9144 = vpack.c.b16 %v9099, %v9098
  %v9145 = vpack.c.b16 %v9101, %v9100
  %v9146 = vpack.c.b16 %v9103, %v9102
  %v9147 = vpack.c.b16 %v9105, %v9104
  %v9148 = vpack.c.b16 %v9107, %v9106
  %v9149 = vpack.c.b16 %v9109, %v9108
  %v9150 = vpack.c.b16 %v9111, %v9110
  %v9151 = vpack.c.b16 %v9113, %v9112
  %v9152 = vpack.c.b16 %v9115, %v9114
  %v9153 = vpack.c.b16 %v9117, %v9116
  %v9154 = vpack.c.b16 %v9119, %v9118
  %v9155 = vpack.c.b16 %v9121, %v9120
  %v9191 = vsel %vm8458, %v8981, 0
  %9193 = vmatprep.subr.bf16.mxu0 0
  %9194 = vmatpush1.bf16.msra.mxu0 %v9122
  %9195 = vmatprep.subr.bf16.mxu0 0
  %9196 = vmatpush1.bf16.msra.mxu0 %v9123
  %9197 = vmatprep.subr.bf16.mxu0 0
  %9198 = vmatpush1.bf16.msra.mxu0 %v9124
  %9199 = vmatprep.subr.bf16.mxu0 0
  %9200 = vmatpush1.bf16.msra.mxu0 %v9125
  %9201 = vmatprep.subr.bf16.mxu0 0
  %9202 = vmatpush1.bf16.msra.mxu0 %v9126
  %9203 = vmatprep.subr.bf16.mxu0 0
  %9204 = vmatpush1.bf16.msra.mxu0 %v9127
  %9205 = vmatprep.subr.bf16.mxu0 0
  %9206 = vmatpush1.bf16.msra.mxu0 %v9128
  %9207 = vmatprep.subr.bf16.mxu0 0
  %9208 = vmatpush1.bf16.msra.mxu0 %v9129
  %9209 = vmatprep.subr.bf16.mxu0 0
  %9210 = vmatpush1.bf16.msra.mxu0 %v9130
  %9211 = vmatprep.subr.bf16.mxu0 0
  %9212 = vmatpush1.bf16.msra.mxu0 %v9131
  %9213 = vmatprep.subr.bf16.mxu0 0
  %9214 = vmatpush1.bf16.msra.mxu0 %v9132
  %9215 = vmatprep.subr.bf16.mxu0 0
  %9216 = vmatpush1.bf16.msra.mxu0 %v9133
  %9217 = vmatprep.subr.bf16.mxu0 0
  %9218 = vmatpush1.bf16.msra.mxu0 %v9134
  %9219 = vmatprep.subr.bf16.mxu0 0
  %9220 = vmatpush1.bf16.msra.mxu0 %v9135
  %9221 = vmatprep.subr.bf16.mxu0 0
  %9222 = vmatpush1.bf16.msra.mxu0 %v9136
  %9223 = vmatprep.subr.bf16.mxu0 0
  %9224 = vmatpush1.bf16.msra.mxu0 %v9137
  %9225 = vmatprep.mubr.bf16.mxu0 %v8978
  %9226 = vmatmul.mubr.bf16.gmra.mrb[0].mxu0 %v8977
  %v9227 = vpop.f32.mrb[0].mxu0
  %v9228 = vadd.f32 0.0, %v9227
  %v9229 = vpop.f32.mrb[0].mxu0
  %v9230 = vpop.f32.mrb[0].mxu0
  %v9231 = vpop.f32.mrb[0].mxu0
  %9232 = vdwg.mxu0
  %9233 = vmatprep.subr.bf16.mxu0 0
  %9234 = vmatpush1.bf16.msra.mxu0 %v9138
  %9235 = vmatprep.subr.bf16.mxu0 0
  %9236 = vmatpush1.bf16.msra.mxu0 %v9139
  %9237 = vmatprep.subr.bf16.mxu0 0
  %9238 = vmatpush1.bf16.msra.mxu0 %v9140
  %9239 = vmatprep.subr.bf16.mxu0 0
  %9240 = vmatpush1.bf16.msra.mxu0 %v9141
  %9241 = vmatprep.subr.bf16.mxu0 0
  %9242 = vmatpush1.bf16.msra.mxu0 %v9142
  %9243 = vmatprep.subr.bf16.mxu0 0
  %9244 = vmatpush1.bf16.msra.mxu0 %v9143
  %9245 = vmatprep.subr.bf16.mxu0 0
  %9246 = vmatpush1.bf16.msra.mxu0 %v9144
  %9247 = vmatprep.subr.bf16.mxu0 0
  %9248 = vmatpush1.bf16.msra.mxu0 %v9145
  %9249 = vmatprep.subr.bf16.mxu0 0
  %9250 = vmatpush1.bf16.msra.mxu0 %v9146
  %9251 = vmatprep.subr.bf16.mxu0 0
  %9252 = vmatpush1.bf16.msra.mxu0 %v9147
  %9253 = vmatprep.subr.bf16.mxu0 0
  %9254 = vmatpush1.bf16.msra.mxu0 %v9148
  %9255 = vmatprep.subr.bf16.mxu0 0
  %9256 = vmatpush1.bf16.msra.mxu0 %v9149
  %9257 = vmatprep.subr.bf16.mxu0 0
  %9258 = vmatpush1.bf16.msra.mxu0 %v9150
  %9259 = vmatprep.subr.bf16.mxu0 0
  %9260 = vmatpush1.bf16.msra.mxu0 %v9151
  %9261 = vmatprep.subr.bf16.mxu0 0
  %9262 = vmatpush1.bf16.msra.mxu0 %v9152
  %9263 = vmatprep.subr.bf16.mxu0 0
  %9264 = vmatpush1.bf16.msra.mxu0 %v9153
  %9265 = vmatprep.mubr.bf16.mxu0 %v8980
  %9266 = vmatmul.mubr.bf16.gmra.mrb[0].mxu0 %v8979
  %v9267 = vpop.f32.mrb[0].mxu0
  %v9268 = vadd.f32 %v9228, %v9267
  %v9269 = vpop.f32.mrb[0].mxu0
  %v9270 = vpop.f32.mrb[0].mxu0
  %v9271 = vpop.f32.mrb[0].mxu0
  %9272 = vdwg.mxu0
  %9273 = vmatprep.subr.bf16.mxu0 0
  %9274 = vmatpush1.bf16.msra.mxu0 %v9154
  %9275 = vmatprep.subr.bf16.mxu0 0
  %9276 = vmatpush1.bf16.msra.mxu0 %v9155
  %9277 = vmatprep.subr.bf16.mxu0 0
  %9278 = vmatpush1.bf16.msra.mxu0 0
  %9279 = vmatprep.subr.bf16.mxu0 0
  %9280 = vmatpush1.bf16.msra.mxu0 0
  %9281 = vmatprep.subr.bf16.mxu0 0
  %9282 = vmatpush1.bf16.msra.mxu0 0
  %9283 = vmatprep.subr.bf16.mxu0 0
  %9284 = vmatpush1.bf16.msra.mxu0 0
  %9285 = vmatprep.subr.bf16.mxu0 0
  %9286 = vmatpush1.bf16.msra.mxu0 0
  %9287 = vmatprep.subr.bf16.mxu0 0
  %9288 = vmatpush1.bf16.msra.mxu0 0
  %9289 = vmatprep.subr.bf16.mxu0 0
  %9290 = vmatpush1.bf16.msra.mxu0 0
  %9291 = vmatprep.subr.bf16.mxu0 0
  %9292 = vmatpush1.bf16.msra.mxu0 0
  %9293 = vmatprep.subr.bf16.mxu0 0
  %9294 = vmatpush1.bf16.msra.mxu0 0
  %9295 = vmatprep.subr.bf16.mxu0 0
  %9296 = vmatpush1.bf16.msra.mxu0 0
  %9297 = vmatprep.subr.bf16.mxu0 0
  %9298 = vmatpush1.bf16.msra.mxu0 0
  %9299 = vmatprep.subr.bf16.mxu0 0
  %9300 = vmatpush1.bf16.msra.mxu0 0
  %9301 = vmatprep.subr.bf16.mxu0 0
  %9302 = vmatpush1.bf16.msra.mxu0 0
  %9303 = vmatprep.subr.bf16.mxu0 0
  %9304 = vmatpush1.bf16.msra.mxu0 0
  %9305 = vmatprep.mubr.bf16.mxu0 0
  %9306 = vmatmul.mubr.bf16.gmra.mrb[0].mxu0 %v9191
  %v9307 = vpop.f32.mrb[0].mxu0
  %v9308 = vadd.f32 %v9268, %v9307
  %v9309 = vpop.f32.mrb[0].mxu0
  %v9310 = vpop.f32.mrb[0].mxu0
  %v9311 = vpop.f32.mrb[0].mxu0
  %9312 = vdwg.mxu0
  %v9313 = vadd.f32 %v8904, %v9308
  %v9314 = vld [vmem:[%s27] sm:$0x1]
  %v9316 = vlaneseq
  %v9317 = vshrl.u32 %v9316, 7
  %v9318 = vsub.s32 0, %v9317
  %v9319 = vrot.slane %v9314, %v9318
  %v9321 = vadd.f32 %v9313, %v9319
  %v9322 = vtanh.pop %v9321
  %v9323 = vpack.c.bf16 %v9322, %v9322
  %v9324 = vld [vmem:[%s29] sm:$0xf]
  %v9325 = vld [vmem:[%s29 + $0x4] sm:$0xf]
  %v9326 = vld [vmem:[%s29 + $0x8] sm:$0xf]
  %v9327 = vld [vmem:[%s29 + $0xc] sm:$0xf]
  %v9328 = vld [vmem:[%s31] sm:$0x1]
  %v9330 = vlaneseq
  %v9331 = vshrl.u32 %v9330, 7
  %v9332 = vsub.s32 0, %v9331
  %v9333 = vrot.slane %v9328, %v9332
  %v9339 = vunpack.c.l.b16 %v9324
  %v9340 = vunpack.c.l.b16 %v9325
  %v9341 = vunpack.c.l.b16 %v9326
  %v9342 = vunpack.c.l.b16 %v9327
  %v9343 = vpack.c.b16 %v9340, %v9339
  %v9344 = vpack.c.b16 %v9342, %v9341
  %v9348 = vsel %vm8458, %v9323, 0
  %9350 = vmatprep.subr.bf16.mxu0 0
  %9351 = vmatpush1.bf16.msra.mxu0 %v9343
  %9352 = vmatprep.subr.bf16.mxu0 0
  %9353 = vmatpush1.bf16.msra.mxu0 %v9344
  %9354 = vmatprep.subr.bf16.mxu0 0
  %9355 = vmatpush1.bf16.msra.mxu0 0
  %9356 = vmatprep.subr.bf16.mxu0 0
  %9357 = vmatpush1.bf16.msra.mxu0 0
  %9358 = vmatprep.subr.bf16.mxu0 0
  %9359 = vmatpush1.bf16.msra.mxu0 0
  %9360 = vmatprep.subr.bf16.mxu0 0
  %9361 = vmatpush1.bf16.msra.mxu0 0
  %9362 = vmatprep.subr.bf16.mxu0 0
  %9363 = vmatpush1.bf16.msra.mxu0 0
  %9364 = vmatprep.subr.bf16.mxu0 0
  %9365 = vmatpush1.bf16.msra.mxu0 0
  %9366 = vmatprep.subr.bf16.mxu0 0
  %9367 = vmatpush1.bf16.msra.mxu0 0
  %9368 = vmatprep.subr.bf16.mxu0 0
  %9369 = vmatpush1.bf16.msra.mxu0 0
  %9370 = vmatprep.subr.bf16.mxu0 0
  %9371 = vmatpush1.bf16.msra.mxu0 0
  %9372 = vmatprep.subr.bf16.mxu0 0
  %9373 = vmatpush1.bf16.msra.mxu0 0
  %9374 = vmatprep.subr.bf16.mxu0 0
  %9375 = vmatpush1.bf16.msra.mxu0 0
  %9376 = vmatprep.subr.bf16.mxu0 0
  %9377 = vmatpush1.bf16.msra.mxu0 0
  %9378 = vmatprep.subr.bf16.mxu0 0
  %9379 = vmatpush1.bf16.msra.mxu0 0
  %9380 = vmatprep.subr.bf16.mxu0 0
  %9381 = vmatpush1.bf16.msra.mxu0 0
  %9382 = vmatprep.mubr.bf16.mxu0 0
  %9383 = vmatmul.mubr.bf16.gmra.mrb[0].mxu0 %v9348
  %v9384 = vpop.f32.mrb[0].mxu0
  %v9385 = vadd.f32 %v9333, %v9384
  %v9386 = vpop.f32.mrb[0].mxu0
  %v9387 = vpop.f32.mrb[0].mxu0
  %v9388 = vpop.f32.mrb[0].mxu0
  %9389 = vdwg.mxu0
  %vm9390 = vcmask 254976
  %9391 = vst.msk [vmem:[%s57] sm:$0x3] %vm9390, %v9385
  %v9392 = vld [vmem:[%s3] sm:$0x3]
  %v9393 = vmul.f32 %v9385, 0.5
  %v9394 = vmul.f32 %v9393, 1.442695
  %v9395 = vpow.pop %v9394
  %9397 = vrot.lane.b32.xlu0 %v9395, 112
  %v9398 = vpop.permute.xlu0 %9397
  %v9400 = vmul.f32 %v9392, %v9398
  %v9401 = vadd.f32 %v9385, %v9400
  %v9402 = vpack.c.bf16 %v9401, %v9401
  %v9403 = vld [vmem:[%s33] sm:$0xff]
  %v9404 = vld [vmem:[%s33 + $0x8] sm:$0xff]
  %v9405 = vld [vmem:[%s33 + $0x10] sm:$0xff]
  %v9406 = vld [vmem:[%s33 + $0x18] sm:$0xff]
  %v9407 = vld [vmem:[%s33 + $0x20] sm:$0xff]
  %v9408 = vld [vmem:[%s33 + $0x28] sm:$0xff]
  %v9409 = vld [vmem:[%s33 + $0x30] sm:$0xff]
  %v9410 = vld [vmem:[%s33 + $0x38] sm:$0xff]
  %v9411 = vld [vmem:[%s33 + $0x40] sm:$0xff]
  %v9412 = vld [vmem:[%s33 + $0x48] sm:$0xff]
  %v9413 = vld [vmem:[%s33 + $0x50] sm:$0xff]
  %v9414 = vld [vmem:[%s33 + $0x58] sm:$0xff]
  %v9415 = vld [vmem:[%s33 + $0x60] sm:$0xff]
  %v9416 = vld [vmem:[%s33 + $0x68] sm:$0xff]
  %v9417 = vld [vmem:[%s33 + $0x70] sm:$0xff]
  %v9418 = vld [vmem:[%s33 + $0x78] sm:$0xff]
  %v9419 = vld [vmem:[%s33 + $0x80] sm:$0xff]
  %v9420 = vld [vmem:[%s33 + $0x88] sm:$0xff]
  %v9421 = vld [vmem:[%s33 + $0x90] sm:$0xff]
  %v9422 = vld [vmem:[%s33 + $0x98] sm:$0xff]
  %v9423 = vld [vmem:[%s33 + $0xa0] sm:$0xff]
  %v9424 = vld [vmem:[%s33 + $0xa8] sm:$0xff]
  %v9425 = vld [vmem:[%s33 + $0xb0] sm:$0xff]
  %v9426 = vld [vmem:[%s33 + $0xb8] sm:$0xff]
  %v9427 = vld [vmem:[%s33 + $0xc0] sm:$0xff]
  %v9428 = vld [vmem:[%s33 + $0xc8] sm:$0xff]
  %v9429 = vld [vmem:[%s33 + $0xd0] sm:$0xff]
  %v9430 = vld [vmem:[%s33 + $0xd8] sm:$0xff]
  %v9431 = vld [vmem:[%s33 + $0xe0] sm:$0xff]
  %v9432 = vld [vmem:[%s33 + $0xe8] sm:$0xff]
  %v9433 = vld [vmem:[%s33 + $0xf0] sm:$0xff]
  %v9434 = vld [vmem:[%s33 + $0xf8] sm:$0xff]
  %v9435 = vld [vmem:[%s35] sm:$0xff]
  %v9436 = vld [vmem:[%s35 + $0x8] sm:$0xff]
  %v9437 = vld [vmem:[%s35 + $0x10] sm:$0xff]
  %v9438 = vld [vmem:[%s35 + $0x18] sm:$0xff]
  %v9443 = vlaneseq
  %v9444 = vshrl.u32 %v9443, 7
  %v9445 = vsub.s32 0, %v9444
  %v9446 = vrot.slane %v9435, %v9445
  %v9447 = vlaneseq
  %v9448 = vshrl.u32 %v9447, 7
  %v9449 = vsub.s32 1, %v9448
  %v9450 = vrot.slane %v9435, %v9449
  %v9451 = vlaneseq
  %v9452 = vshrl.u32 %v9451, 7
  %v9453 = vsub.s32 2, %v9452
  %v9454 = vrot.slane %v9435, %v9453
  %v9455 = vlaneseq
  %v9456 = vshrl.u32 %v9455, 7
  %v9457 = vsub.s32 3, %v9456
  %v9458 = vrot.slane %v9435, %v9457
  %v9459 = vlaneseq
  %v9460 = vshrl.u32 %v9459, 7
  %v9461 = vsub.s32 4, %v9460
  %v9462 = vrot.slane %v9435, %v9461
  %v9463 = vlaneseq
  %v9464 = vshrl.u32 %v9463, 7
  %v9465 = vsub.s32 5, %v9464
  %v9466 = vrot.slane %v9435, %v9465
  %v9467 = vlaneseq
  %v9468 = vshrl.u32 %v9467, 7
  %v9469 = vsub.s32 6, %v9468
  %v9470 = vrot.slane %v9435, %v9469
  %v9471 = vlaneseq
  %v9472 = vshrl.u32 %v9471, 7
  %v9473 = vsub.s32 7, %v9472
  %v9474 = vrot.slane %v9435, %v9473
  %v9475 = vlaneseq
  %v9476 = vshrl.u32 %v9475, 7
  %v9477 = vsub.s32 0, %v9476
  %v9478 = vrot.slane %v9436, %v9477
  %v9479 = vlaneseq
  %v9480 = vshrl.u32 %v9479, 7
  %v9481 = vsub.s32 1, %v9480
  %v9482 = vrot.slane %v9436, %v9481
  %v9483 = vlaneseq
  %v9484 = vshrl.u32 %v9483, 7
  %v9485 = vsub.s32 2, %v9484
  %v9486 = vrot.slane %v9436, %v9485
  %v9487 = vlaneseq
  %v9488 = vshrl.u32 %v9487, 7
  %v9489 = vsub.s32 3, %v9488
  %v9490 = vrot.slane %v9436, %v9489
  %v9491 = vlaneseq
  %v9492 = vshrl.u32 %v9491, 7
  %v9493 = vsub.s32 4, %v9492
  %v9494 = vrot.slane %v9436, %v9493
  %v9495 = vlaneseq
  %v9496 = vshrl.u32 %v9495, 7
  %v9497 = vsub.s32 5, %v9496
  %v9498 = vrot.slane %v9436, %v9497
  %v9499 = vlaneseq
  %v9500 = vshrl.u32 %v9499, 7
  %v9501 = vsub.s32 6, %v9500
  %v9502 = vrot.slane %v9436, %v9501
  %v9503 = vlaneseq
  %v9504 = vshrl.u32 %v9503, 7
  %v9505 = vsub.s32 7, %v9504
  %v9506 = vrot.slane %v9436, %v9505
  %v9507 = vlaneseq
  %v9508 = vshrl.u32 %v9507, 7
  %v9509 = vsub.s32 0, %v9508
  %v9510 = vrot.slane %v9437, %v9509
  %v9511 = vlaneseq
  %v9512 = vshrl.u32 %v9511, 7
  %v9513 = vsub.s32 1, %v9512
  %v9514 = vrot.slane %v9437, %v9513
  %v9515 = vlaneseq
  %v9516 = vshrl.u32 %v9515, 7
  %v9517 = vsub.s32 2, %v9516
  %v9518 = vrot.slane %v9437, %v9517
  %v9519 = vlaneseq
  %v9520 = vshrl.u32 %v9519, 7
  %v9521 = vsub.s32 3, %v9520
  %v9522 = vrot.slane %v9437, %v9521
  %v9523 = vlaneseq
  %v9524 = vshrl.u32 %v9523, 7
  %v9525 = vsub.s32 4, %v9524
  %v9526 = vrot.slane %v9437, %v9525
  %v9527 = vlaneseq
  %v9528 = vshrl.u32 %v9527, 7
  %v9529 = vsub.s32 5, %v9528
  %v9530 = vrot.slane %v9437, %v9529
  %v9531 = vlaneseq
  %v9532 = vshrl.u32 %v9531, 7
  %v9533 = vsub.s32 6, %v9532
  %v9534 = vrot.slane %v9437, %v9533
  %v9535 = vlaneseq
  %v9536 = vshrl.u32 %v9535, 7
  %v9537 = vsub.s32 7, %v9536
  %v9538 = vrot.slane %v9437, %v9537
  %v9539 = vlaneseq
  %v9540 = vshrl.u32 %v9539, 7
  %v9541 = vsub.s32 0, %v9540
  %v9542 = vrot.slane %v9438, %v9541
  %v9543 = vlaneseq
  %v9544 = vshrl.u32 %v9543, 7
  %v9545 = vsub.s32 1, %v9544
  %v9546 = vrot.slane %v9438, %v9545
  %v9547 = vlaneseq
  %v9548 = vshrl.u32 %v9547, 7
  %v9549 = vsub.s32 2, %v9548
  %v9550 = vrot.slane %v9438, %v9549
  %v9551 = vlaneseq
  %v9552 = vshrl.u32 %v9551, 7
  %v9553 = vsub.s32 3, %v9552
  %v9554 = vrot.slane %v9438, %v9553
  %v9555 = vlaneseq
  %v9556 = vshrl.u32 %v9555, 7
  %v9557 = vsub.s32 4, %v9556
  %v9558 = vrot.slane %v9438, %v9557
  %v9559 = vlaneseq
  %v9560 = vshrl.u32 %v9559, 7
  %v9561 = vsub.s32 5, %v9560
  %v9562 = vrot.slane %v9438, %v9561
  %v9563 = vlaneseq
  %v9564 = vshrl.u32 %v9563, 7
  %v9565 = vsub.s32 6, %v9564
  %v9566 = vrot.slane %v9438, %v9565
  %v9567 = vlaneseq
  %v9568 = vshrl.u32 %v9567, 7
  %v9569 = vsub.s32 7, %v9568
  %v9570 = vrot.slane %v9438, %v9569
  %v9635 = vunpack.c.l.b16 %v9403
  %v9636 = vunpack.c.h.b16 %v9403
  %v9637 = vunpack.c.l.b16 %v9404
  %v9638 = vunpack.c.h.b16 %v9404
  %v9639 = vunpack.c.l.b16 %v9405
  %v9640 = vunpack.c.h.b16 %v9405
  %v9641 = vunpack.c.l.b16 %v9406
  %v9642 = vunpack.c.h.b16 %v9406
  %v9643 = vunpack.c.l.b16 %v9407
  %v9644 = vunpack.c.h.b16 %v9407
  %v9645 = vunpack.c.l.b16 %v9408
  %v9646 = vunpack.c.h.b16 %v9408
  %v9647 = vunpack.c.l.b16 %v9409
  %v9648 = vunpack.c.h.b16 %v9409
  %v9649 = vunpack.c.l.b16 %v9410
  %v9650 = vunpack.c.h.b16 %v9410
  %v9651 = vunpack.c.l.b16 %v9411
  %v9652 = vunpack.c.h.b16 %v9411
  %v9653 = vunpack.c.l.b16 %v9412
  %v9654 = vunpack.c.h.b16 %v9412
  %v9655 = vunpack.c.l.b16 %v9413
  %v9656 = vunpack.c.h.b16 %v9413
  %v9657 = vunpack.c.l.b16 %v9414
  %v9658 = vunpack.c.h.b16 %v9414
  %v9659 = vunpack.c.l.b16 %v9415
  %v9660 = vunpack.c.h.b16 %v9415
  %v9661 = vunpack.c.l.b16 %v9416
  %v9662 = vunpack.c.h.b16 %v9416
  %v9663 = vunpack.c.l.b16 %v9417
  %v9664 = vunpack.c.h.b16 %v9417
  %v9665 = vunpack.c.l.b16 %v9418
  %v9666 = vunpack.c.h.b16 %v9418
  %v9667 = vunpack.c.l.b16 %v9419
  %v9668 = vunpack.c.h.b16 %v9419
  %v9669 = vunpack.c.l.b16 %v9420
  %v9670 = vunpack.c.h.b16 %v9420
  %v9671 = vunpack.c.l.b16 %v9421
  %v9672 = vunpack.c.h.b16 %v9421
  %v9673 = vunpack.c.l.b16 %v9422
  %v9674 = vunpack.c.h.b16 %v9422
  %v9675 = vunpack.c.l.b16 %v9423
  %v9676 = vunpack.c.h.b16 %v9423
  %v9677 = vunpack.c.l.b16 %v9424
  %v9678 = vunpack.c.h.b16 %v9424
  %v9679 = vunpack.c.l.b16 %v9425
  %v9680 = vunpack.c.h.b16 %v9425
  %v9681 = vunpack.c.l.b16 %v9426
  %v9682 = vunpack.c.h.b16 %v9426
  %v9683 = vunpack.c.l.b16 %v9427
  %v9684 = vunpack.c.h.b16 %v9427
  %v9685 = vunpack.c.l.b16 %v9428
  %v9686 = vunpack.c.h.b16 %v9428
  %v9687 = vunpack.c.l.b16 %v9429
  %v9688 = vunpack.c.h.b16 %v9429
  %v9689 = vunpack.c.l.b16 %v9430
  %v9690 = vunpack.c.h.b16 %v9430
  %v9691 = vunpack.c.l.b16 %v9431
  %v9692 = vunpack.c.h.b16 %v9431
  %v9693 = vunpack.c.l.b16 %v9432
  %v9694 = vunpack.c.h.b16 %v9432
  %v9695 = vunpack.c.l.b16 %v9433
  %v9696 = vunpack.c.h.b16 %v9433
  %v9697 = vunpack.c.l.b16 %v9434
  %v9698 = vunpack.c.h.b16 %v9434
  %v9699 = vpack.c.b16 %v9667, %v9635
  %v9700 = vpack.c.b16 %v9668, %v9636
  %v9701 = vpack.c.b16 %v9669, %v9637
  %v9702 = vpack.c.b16 %v9670, %v9638
  %v9703 = vpack.c.b16 %v9671, %v9639
  %v9704 = vpack.c.b16 %v9672, %v9640
  %v9705 = vpack.c.b16 %v9673, %v9641
  %v9706 = vpack.c.b16 %v9674, %v9642
  %v9707 = vpack.c.b16 %v9675, %v9643
  %v9708 = vpack.c.b16 %v9676, %v9644
  %v9709 = vpack.c.b16 %v9677, %v9645
  %v9710 = vpack.c.b16 %v9678, %v9646
  %v9711 = vpack.c.b16 %v9679, %v9647
  %v9712 = vpack.c.b16 %v9680, %v9648
  %v9713 = vpack.c.b16 %v9681, %v9649
  %v9714 = vpack.c.b16 %v9682, %v9650
  %v9715 = vpack.c.b16 %v9683, %v9651
  %v9716 = vpack.c.b16 %v9684, %v9652
  %v9717 = vpack.c.b16 %v9685, %v9653
  %v9718 = vpack.c.b16 %v9686, %v9654
  %v9719 = vpack.c.b16 %v9687, %v9655
  %v9720 = vpack.c.b16 %v9688, %v9656
  %v9721 = vpack.c.b16 %v9689, %v9657
  %v9722 = vpack.c.b16 %v9690, %v9658
  %v9723 = vpack.c.b16 %v9691, %v9659
  %v9724 = vpack.c.b16 %v9692, %v9660
  %v9725 = vpack.c.b16 %v9693, %v9661
  %v9726 = vpack.c.b16 %v9694, %v9662
  %v9727 = vpack.c.b16 %v9695, %v9663
  %v9728 = vpack.c.b16 %v9696, %v9664
  %v9729 = vpack.c.b16 %v9697, %v9665
  %v9730 = vpack.c.b16 %v9698, %v9666
  %vm9763 = vcmask 130048
  %v9765 = vsel %vm9763, %v9402, 0
  %9767 = vmatprep.subr.bf16.mxu0 %v9700
  %9768 = vmatpush1.bf16.msra.mxu0 %v9699
  %9769 = vmatprep.subr.bf16.mxu0 0
  %9770 = vmatpush1.bf16.msra.mxu0 0
  %9771 = vmatprep.subr.bf16.mxu0 0
  %9772 = vmatpush1.bf16.msra.mxu0 0
  %9773 = vmatprep.subr.bf16.mxu0 0
  %9774 = vmatpush1.bf16.msra.mxu0 0
  %9775 = vmatprep.subr.bf16.mxu0 0
  %9776 = vmatpush1.bf16.msra.mxu0 0
  %9777 = vmatprep.subr.bf16.mxu0 0
  %9778 = vmatpush1.bf16.msra.mxu0 0
  %9779 = vmatprep.subr.bf16.mxu0 0
  %9780 = vmatpush1.bf16.msra.mxu0 0
  %9781 = vmatprep.subr.bf16.mxu0 0
  %9782 = vmatpush1.bf16.msra.mxu0 0
  %9783 = vmatprep.subr.bf16.mxu0 0
  %9784 = vmatpush1.bf16.msra.mxu0 0
  %9785 = vmatprep.subr.bf16.mxu0 0
  %9786 = vmatpush1.bf16.msra.mxu0 0
  %9787 = vmatprep.subr.bf16.mxu0 0
  %9788 = vmatpush1.bf16.msra.mxu0 0
  %9789 = vmatprep.subr.bf16.mxu0 0
  %9790 = vmatpush1.bf16.msra.mxu0 0
  %9791 = vmatprep.subr.bf16.mxu0 0
  %9792 = vmatpush1.bf16.msra.mxu0 0
  %9793 = vmatprep.subr.bf16.mxu0 0
  %9794 = vmatpush1.bf16.msra.mxu0 0
  %9795 = vmatprep.subr.bf16.mxu0 0
  %9796 = vmatpush1.bf16.msra.mxu0 0
  %9797 = vmatprep.subr.bf16.mxu0 0
  %9798 = vmatpush1.bf16.msra.mxu0 0
  %9799 = vmatprep.mubr.bf16.mxu0 0
  %9800 = vmatmul.mubr.bf16.gmra.mrb[0].mxu0 %v9765
  %v9801 = vpop.f32.mrb[0].mxu0
  %v9802 = vadd.f32 %v9446, %v9801
  %v9803 = vpop.f32.mrb[0].mxu0
  %v9804 = vadd.f32 %v9450, %v9803
  %v9805 = vpop.f32.mrb[0].mxu0
  %v9806 = vpop.f32.mrb[0].mxu0
  %9807 = vdwg.mxu0
  %9808 = vmatprep.subr.bf16.mxu0 %v9702
  %9809 = vmatpush1.bf16.msra.mxu0 %v9701
  %9810 = vmatprep.subr.bf16.mxu0 0
  %9811 = vmatpush1.bf16.msra.mxu0 0
  %9812 = vmatprep.subr.bf16.mxu0 0
  %9813 = vmatpush1.bf16.msra.mxu0 0
  %9814 = vmatprep.subr.bf16.mxu0 0
  %9815 = vmatpush1.bf16.msra.mxu0 0
  %9816 = vmatprep.subr.bf16.mxu0 0
  %9817 = vmatpush1.bf16.msra.mxu0 0
  %9818 = vmatprep.subr.bf16.mxu0 0
  %9819 = vmatpush1.bf16.msra.mxu0 0
  %9820 = vmatprep.subr.bf16.mxu0 0
  %9821 = vmatpush1.bf16.msra.mxu0 0
  %9822 = vmatprep.subr.bf16.mxu0 0
  %9823 = vmatpush1.bf16.msra.mxu0 0
  %9824 = vmatprep.subr.bf16.mxu0 0
  %9825 = vmatpush1.bf16.msra.mxu0 0
  %9826 = vmatprep.subr.bf16.mxu0 0
  %9827 = vmatpush1.bf16.msra.mxu0 0
  %9828 = vmatprep.subr.bf16.mxu0 0
  %9829 = vmatpush1.bf16.msra.mxu0 0
  %9830 = vmatprep.subr.bf16.mxu0 0
  %9831 = vmatpush1.bf16.msra.mxu0 0
  %9832 = vmatprep.subr.bf16.mxu0 0
  %9833 = vmatpush1.bf16.msra.mxu0 0
  %9834 = vmatprep.subr.bf16.mxu0 0
  %9835 = vmatpush1.bf16.msra.mxu0 0
  %9836 = vmatprep.subr.bf16.mxu0 0
  %9837 = vmatpush1.bf16.msra.mxu0 0
  %9838 = vmatprep.subr.bf16.mxu0 0
  %9839 = vmatpush1.bf16.msra.mxu0 0
  %9840 = vmatprep.mubr.bf16.mxu0 0
  %9841 = vmatmul.mubr.bf16.gmra.mrb[0].mxu0 %v9765
  %v9842 = vpop.f32.mrb[0].mxu0
  %v9843 = vadd.f32 %v9454, %v9842
  %v9844 = vpop.f32.mrb[0].mxu0
  %v9845 = vadd.f32 %v9458, %v9844
  %v9846 = vpop.f32.mrb[0].mxu0
  %v9847 = vpop.f32.mrb[0].mxu0
  %9848 = vdwg.mxu0
  %9849 = vmatprep.subr.bf16.mxu0 %v9704
  %9850 = vmatpush1.bf16.msra.mxu0 %v9703
  %9851 = vmatprep.subr.bf16.mxu0 0
  %9852 = vmatpush1.bf16.msra.mxu0 0
  %9853 = vmatprep.subr.bf16.mxu0 0
  %9854 = vmatpush1.bf16.msra.mxu0 0
  %9855 = vmatprep.subr.bf16.mxu0 0
  %9856 = vmatpush1.bf16.msra.mxu0 0
  %9857 = vmatprep.subr.bf16.mxu0 0
  %9858 = vmatpush1.bf16.msra.mxu0 0
  %9859 = vmatprep.subr.bf16.mxu0 0
  %9860 = vmatpush1.bf16.msra.mxu0 0
  %9861 = vmatprep.subr.bf16.mxu0 0
  %9862 = vmatpush1.bf16.msra.mxu0 0
  %9863 = vmatprep.subr.bf16.mxu0 0
  %9864 = vmatpush1.bf16.msra.mxu0 0
  %9865 = vmatprep.subr.bf16.mxu0 0
  %9866 = vmatpush1.bf16.msra.mxu0 0
  %9867 = vmatprep.subr.bf16.mxu0 0
  %9868 = vmatpush1.bf16.msra.mxu0 0
  %9869 = vmatprep.subr.bf16.mxu0 0
  %9870 = vmatpush1.bf16.msra.mxu0 0
  %9871 = vmatprep.subr.bf16.mxu0 0
  %9872 = vmatpush1.bf16.msra.mxu0 0
  %9873 = vmatprep.subr.bf16.mxu0 0
  %9874 = vmatpush1.bf16.msra.mxu0 0
  %9875 = vmatprep.subr.bf16.mxu0 0
  %9876 = vmatpush1.bf16.msra.mxu0 0
  %9877 = vmatprep.subr.bf16.mxu0 0
  %9878 = vmatpush1.bf16.msra.mxu0 0
  %9879 = vmatprep.subr.bf16.mxu0 0
  %9880 = vmatpush1.bf16.msra.mxu0 0
  %9881 = vmatprep.mubr.bf16.mxu0 0
  %9882 = vmatmul.mubr.bf16.gmra.mrb[0].mxu0 %v9765
  %v9883 = vpop.f32.mrb[0].mxu0
  %v9884 = vadd.f32 %v9462, %v9883
  %v9885 = vpop.f32.mrb[0].mxu0
  %v9886 = vadd.f32 %v9466, %v9885
  %v9887 = vpop.f32.mrb[0].mxu0
  %v9888 = vpop.f32.mrb[0].mxu0
  %9889 = vdwg.mxu0
  %9890 = vmatprep.subr.bf16.mxu0 %v9706
  %9891 = vmatpush1.bf16.msra.mxu0 %v9705
  %9892 = vmatprep.subr.bf16.mxu0 0
  %9893 = vmatpush1.bf16.msra.mxu0 0
  %9894 = vmatprep.subr.bf16.mxu0 0
  %9895 = vmatpush1.bf16.msra.mxu0 0
  %9896 = vmatprep.subr.bf16.mxu0 0
  %9897 = vmatpush1.bf16.msra.mxu0 0
  %9898 = vmatprep.subr.bf16.mxu0 0
  %9899 = vmatpush1.bf16.msra.mxu0 0
  %9900 = vmatprep.subr.bf16.mxu0 0
  %9901 = vmatpush1.bf16.msra.mxu0 0
  %9902 = vmatprep.subr.bf16.mxu0 0
  %9903 = vmatpush1.bf16.msra.mxu0 0
  %9904 = vmatprep.subr.bf16.mxu0 0
  %9905 = vmatpush1.bf16.msra.mxu0 0
  %9906 = vmatprep.subr.bf16.mxu0 0
  %9907 = vmatpush1.bf16.msra.mxu0 0
  %9908 = vmatprep.subr.bf16.mxu0 0
  %9909 = vmatpush1.bf16.msra.mxu0 0
  %9910 = vmatprep.subr.bf16.mxu0 0
  %9911 = vmatpush1.bf16.msra.mxu0 0
  %9912 = vmatprep.subr.bf16.mxu0 0
  %9913 = vmatpush1.bf16.msra.mxu0 0
  %9914 = vmatprep.subr.bf16.mxu0 0
  %9915 = vmatpush1.bf16.msra.mxu0 0
  %9916 = vmatprep.subr.bf16.mxu0 0
  %9917 = vmatpush1.bf16.msra.mxu0 0
  %9918 = vmatprep.subr.bf16.mxu0 0
  %9919 = vmatpush1.bf16.msra.mxu0 0
  %9920 = vmatprep.subr.bf16.mxu0 0
  %9921 = vmatpush1.bf16.msra.mxu0 0
  %9922 = vmatprep.mubr.bf16.mxu0 0
  %9923 = vmatmul.mubr.bf16.gmra.mrb[0].mxu0 %v9765
  %v9924 = vpop.f32.mrb[0].mxu0
  %v9925 = vadd.f32 %v9470, %v9924
  %v9926 = vpop.f32.mrb[0].mxu0
  %v9927 = vadd.f32 %v9474, %v9926
  %v9928 = vpop.f32.mrb[0].mxu0
  %v9929 = vpop.f32.mrb[0].mxu0
  %9930 = vdwg.mxu0
  %9931 = vmatprep.subr.bf16.mxu0 %v9708
  %9932 = vmatpush1.bf16.msra.mxu0 %v9707
  %9933 = vmatprep.subr.bf16.mxu0 0
  %9934 = vmatpush1.bf16.msra.mxu0 0
  %9935 = vmatprep.subr.bf16.mxu0 0
  %9936 = vmatpush1.bf16.msra.mxu0 0
  %9937 = vmatprep.subr.bf16.mxu0 0
  %9938 = vmatpush1.bf16.msra.mxu0 0
  %9939 = vmatprep.subr.bf16.mxu0 0
  %9940 = vmatpush1.bf16.msra.mxu0 0
  %9941 = vmatprep.subr.bf16.mxu0 0
  %9942 = vmatpush1.bf16.msra.mxu0 0
  %9943 = vmatprep.subr.bf16.mxu0 0
  %9944 = vmatpush1.bf16.msra.mxu0 0
  %9945 = vmatprep.subr.bf16.mxu0 0
  %9946 = vmatpush1.bf16.msra.mxu0 0
  %9947 = vmatprep.subr.bf16.mxu0 0
  %9948 = vmatpush1.bf16.msra.mxu0 0
  %9949 = vmatprep.subr.bf16.mxu0 0
  %9950 = vmatpush1.bf16.msra.mxu0 0
  %9951 = vmatprep.subr.bf16.mxu0 0
  %9952 = vmatpush1.bf16.msra.mxu0 0
  %9953 = vmatprep.subr.bf16.mxu0 0
  %9954 = vmatpush1.bf16.msra.mxu0 0
  %9955 = vmatprep.subr.bf16.mxu0 0
  %9956 = vmatpush1.bf16.msra.mxu0 0
  %9957 = vmatprep.subr.bf16.mxu0 0
  %9958 = vmatpush1.bf16.msra.mxu0 0
  %9959 = vmatprep.subr.bf16.mxu0 0
  %9960 = vmatpush1.bf16.msra.mxu0 0
  %9961 = vmatprep.subr.bf16.mxu0 0
  %9962 = vmatpush1.bf16.msra.mxu0 0
  %9963 = vmatprep.mubr.bf16.mxu0 0
  %9964 = vmatmul.mubr.bf16.gmra.mrb[0].mxu0 %v9765
  %v9965 = vpop.f32.mrb[0].mxu0
  %v9966 = vadd.f32 %v9478, %v9965
  %v9967 = vpop.f32.mrb[0].mxu0
  %v9968 = vadd.f32 %v9482, %v9967
  %v9969 = vpop.f32.mrb[0].mxu0
  %v9970 = vpop.f32.mrb[0].mxu0
  %9971 = vdwg.mxu0
  %9972 = vmatprep.subr.bf16.mxu0 %v9710
  %9973 = vmatpush1.bf16.msra.mxu0 %v9709
  %9974 = vmatprep.subr.bf16.mxu0 0
  %9975 = vmatpush1.bf16.msra.mxu0 0
  %9976 = vmatprep.subr.bf16.mxu0 0
  %9977 = vmatpush1.bf16.msra.mxu0 0
  %9978 = vmatprep.subr.bf16.mxu0 0
  %9979 = vmatpush1.bf16.msra.mxu0 0
  %9980 = vmatprep.subr.bf16.mxu0 0
  %9981 = vmatpush1.bf16.msra.mxu0 0
  %9982 = vmatprep.subr.bf16.mxu0 0
  %9983 = vmatpush1.bf16.msra.mxu0 0
  %9984 = vmatprep.subr.bf16.mxu0 0
  %9985 = vmatpush1.bf16.msra.mxu0 0
  %9986 = vmatprep.subr.bf16.mxu0 0
  %9987 = vmatpush1.bf16.msra.mxu0 0
  %9988 = vmatprep.subr.bf16.mxu0 0
  %9989 = vmatpush1.bf16.msra.mxu0 0
  %9990 = vmatprep.subr.bf16.mxu0 0
  %9991 = vmatpush1.bf16.msra.mxu0 0
  %9992 = vmatprep.subr.bf16.mxu0 0
  %9993 = vmatpush1.bf16.msra.mxu0 0
  %9994 = vmatprep.subr.bf16.mxu0 0
  %9995 = vmatpush1.bf16.msra.mxu0 0
  %9996 = vmatprep.subr.bf16.mxu0 0
  %9997 = vmatpush1.bf16.msra.mxu0 0
  %9998 = vmatprep.subr.bf16.mxu0 0
  %9999 = vmatpush1.bf16.msra.mxu0 0
  %10000 = vmatprep.subr.bf16.mxu0 0
  %10001 = vmatpush1.bf16.msra.mxu0 0
  %10002 = vmatprep.subr.bf16.mxu0 0
  %10003 = vmatpush1.bf16.msra.mxu0 0
  %10004 = vmatprep.mubr.bf16.mxu0 0
  %10005 = vmatmul.mubr.bf16.gmra.mrb[0].mxu0 %v9765
  %v10006 = vpop.f32.mrb[0].mxu0
  %v10007 = vadd.f32 %v9486, %v10006
  %v10008 = vpop.f32.mrb[0].mxu0
  %v10009 = vadd.f32 %v9490, %v10008
  %v10010 = vpop.f32.mrb[0].mxu0
  %v10011 = vpop.f32.mrb[0].mxu0
  %10012 = vdwg.mxu0
  %10013 = vmatprep.subr.bf16.mxu0 %v9712
  %10014 = vmatpush1.bf16.msra.mxu0 %v9711
  %10015 = vmatprep.subr.bf16.mxu0 0
  %10016 = vmatpush1.bf16.msra.mxu0 0
  %10017 = vmatprep.subr.bf16.mxu0 0
  %10018 = vmatpush1.bf16.msra.mxu0 0
  %10019 = vmatprep.subr.bf16.mxu0 0
  %10020 = vmatpush1.bf16.msra.mxu0 0
  %10021 = vmatprep.subr.bf16.mxu0 0
  %10022 = vmatpush1.bf16.msra.mxu0 0
  %10023 = vmatprep.subr.bf16.mxu0 0
  %10024 = vmatpush1.bf16.msra.mxu0 0
  %10025 = vmatprep.subr.bf16.mxu0 0
  %10026 = vmatpush1.bf16.msra.mxu0 0
  %10027 = vmatprep.subr.bf16.mxu0 0
  %10028 = vmatpush1.bf16.msra.mxu0 0
  %10029 = vmatprep.subr.bf16.mxu0 0
  %10030 = vmatpush1.bf16.msra.mxu0 0
  %10031 = vmatprep.subr.bf16.mxu0 0
  %10032 = vmatpush1.bf16.msra.mxu0 0
  %10033 = vmatprep.subr.bf16.mxu0 0
  %10034 = vmatpush1.bf16.msra.mxu0 0
  %10035 = vmatprep.subr.bf16.mxu0 0
  %10036 = vmatpush1.bf16.msra.mxu0 0
  %10037 = vmatprep.subr.bf16.mxu0 0
  %10038 = vmatpush1.bf16.msra.mxu0 0
  %10039 = vmatprep.subr.bf16.mxu0 0
  %10040 = vmatpush1.bf16.msra.mxu0 0
  %10041 = vmatprep.subr.bf16.mxu0 0
  %10042 = vmatpush1.bf16.msra.mxu0 0
  %10043 = vmatprep.subr.bf16.mxu0 0
  %10044 = vmatpush1.bf16.msra.mxu0 0
  %10045 = vmatprep.mubr.bf16.mxu0 0
  %10046 = vmatmul.mubr.bf16.gmra.mrb[0].mxu0 %v9765
  %v10047 = vpop.f32.mrb[0].mxu0
  %v10048 = vadd.f32 %v9494, %v10047
  %v10049 = vpop.f32.mrb[0].mxu0
  %v10050 = vadd.f32 %v9498, %v10049
  %v10051 = vpop.f32.mrb[0].mxu0
  %v10052 = vpop.f32.mrb[0].mxu0
  %10053 = vdwg.mxu0
  %10054 = vmatprep.subr.bf16.mxu0 %v9714
  %10055 = vmatpush1.bf16.msra.mxu0 %v9713
  %10056 = vmatprep.subr.bf16.mxu0 0
  %10057 = vmatpush1.bf16.msra.mxu0 0
  %10058 = vmatprep.subr.bf16.mxu0 0
  %10059 = vmatpush1.bf16.msra.mxu0 0
  %10060 = vmatprep.subr.bf16.mxu0 0
  %10061 = vmatpush1.bf16.msra.mxu0 0
  %10062 = vmatprep.subr.bf16.mxu0 0
  %10063 = vmatpush1.bf16.msra.mxu0 0
  %10064 = vmatprep.subr.bf16.mxu0 0
  %10065 = vmatpush1.bf16.msra.mxu0 0
  %10066 = vmatprep.subr.bf16.mxu0 0
  %10067 = vmatpush1.bf16.msra.mxu0 0
  %10068 = vmatprep.subr.bf16.mxu0 0
  %10069 = vmatpush1.bf16.msra.mxu0 0
  %10070 = vmatprep.subr.bf16.mxu0 0
  %10071 = vmatpush1.bf16.msra.mxu0 0
  %10072 = vmatprep.subr.bf16.mxu0 0
  %10073 = vmatpush1.bf16.msra.mxu0 0
  %10074 = vmatprep.subr.bf16.mxu0 0
  %10075 = vmatpush1.bf16.msra.mxu0 0
  %10076 = vmatprep.subr.bf16.mxu0 0
  %10077 = vmatpush1.bf16.msra.mxu0 0
  %10078 = vmatprep.subr.bf16.mxu0 0
  %10079 = vmatpush1.bf16.msra.mxu0 0
  %10080 = vmatprep.subr.bf16.mxu0 0
  %10081 = vmatpush1.bf16.msra.mxu0 0
  %10082 = vmatprep.subr.bf16.mxu0 0
  %10083 = vmatpush1.bf16.msra.mxu0 0
  %10084 = vmatprep.subr.bf16.mxu0 0
  %10085 = vmatpush1.bf16.msra.mxu0 0
  %10086 = vmatprep.mubr.bf16.mxu0 0
  %10087 = vmatmul.mubr.bf16.gmra.mrb[0].mxu0 %v9765
  %v10088 = vpop.f32.mrb[0].mxu0
  %v10089 = vadd.f32 %v9502, %v10088
  %v10090 = vpop.f32.mrb[0].mxu0
  %v10091 = vadd.f32 %v9506, %v10090
  %v10092 = vpop.f32.mrb[0].mxu0
  %v10093 = vpop.f32.mrb[0].mxu0
  %10094 = vdwg.mxu0
  %10095 = vmatprep.subr.bf16.mxu0 %v9716
  %10096 = vmatpush1.bf16.msra.mxu0 %v9715
  %10097 = vmatprep.subr.bf16.mxu0 0
  %10098 = vmatpush1.bf16.msra.mxu0 0
  %10099 = vmatprep.subr.bf16.mxu0 0
  %10100 = vmatpush1.bf16.msra.mxu0 0
  %10101 = vmatprep.subr.bf16.mxu0 0
  %10102 = vmatpush1.bf16.msra.mxu0 0
  %10103 = vmatprep.subr.bf16.mxu0 0
  %10104 = vmatpush1.bf16.msra.mxu0 0
  %10105 = vmatprep.subr.bf16.mxu0 0
  %10106 = vmatpush1.bf16.msra.mxu0 0
  %10107 = vmatprep.subr.bf16.mxu0 0
  %10108 = vmatpush1.bf16.msra.mxu0 0
  %10109 = vmatprep.subr.bf16.mxu0 0
  %10110 = vmatpush1.bf16.msra.mxu0 0
  %10111 = vmatprep.subr.bf16.mxu0 0
  %10112 = vmatpush1.bf16.msra.mxu0 0
  %10113 = vmatprep.subr.bf16.mxu0 0
  %10114 = vmatpush1.bf16.msra.mxu0 0
  %10115 = vmatprep.subr.bf16.mxu0 0
  %10116 = vmatpush1.bf16.msra.mxu0 0
  %10117 = vmatprep.subr.bf16.mxu0 0
  %10118 = vmatpush1.bf16.msra.mxu0 0
  %10119 = vmatprep.subr.bf16.mxu0 0
  %10120 = vmatpush1.bf16.msra.mxu0 0
  %10121 = vmatprep.subr.bf16.mxu0 0
  %10122 = vmatpush1.bf16.msra.mxu0 0
  %10123 = vmatprep.subr.bf16.mxu0 0
  %10124 = vmatpush1.bf16.msra.mxu0 0
  %10125 = vmatprep.subr.bf16.mxu0 0
  %10126 = vmatpush1.bf16.msra.mxu0 0
  %10127 = vmatprep.mubr.bf16.mxu0 0
  %10128 = vmatmul.mubr.bf16.gmra.mrb[0].mxu0 %v9765
  %v10129 = vpop.f32.mrb[0].mxu0
  %v10130 = vadd.f32 %v9510, %v10129
  %v10131 = vpop.f32.mrb[0].mxu0
  %v10132 = vadd.f32 %v9514, %v10131
  %v10133 = vpop.f32.mrb[0].mxu0
  %v10134 = vpop.f32.mrb[0].mxu0
  %10135 = vdwg.mxu0
  %10136 = vmatprep.subr.bf16.mxu0 %v9718
  %10137 = vmatpush1.bf16.msra.mxu0 %v9717
  %10138 = vmatprep.subr.bf16.mxu0 0
  %10139 = vmatpush1.bf16.msra.mxu0 0
  %10140 = vmatprep.subr.bf16.mxu0 0
  %10141 = vmatpush1.bf16.msra.mxu0 0
  %10142 = vmatprep.subr.bf16.mxu0 0
  %10143 = vmatpush1.bf16.msra.mxu0 0
  %10144 = vmatprep.subr.bf16.mxu0 0
  %10145 = vmatpush1.bf16.msra.mxu0 0
  %10146 = vmatprep.subr.bf16.mxu0 0
  %10147 = vmatpush1.bf16.msra.mxu0 0
  %10148 = vmatprep.subr.bf16.mxu0 0
  %10149 = vmatpush1.bf16.msra.mxu0 0
  %10150 = vmatprep.subr.bf16.mxu0 0
  %10151 = vmatpush1.bf16.msra.mxu0 0
  %10152 = vmatprep.subr.bf16.mxu0 0
  %10153 = vmatpush1.bf16.msra.mxu0 0
  %10154 = vmatprep.subr.bf16.mxu0 0
  %10155 = vmatpush1.bf16.msra.mxu0 0
  %10156 = vmatprep.subr.bf16.mxu0 0
  %10157 = vmatpush1.bf16.msra.mxu0 0
  %10158 = vmatprep.subr.bf16.mxu0 0
  %10159 = vmatpush1.bf16.msra.mxu0 0
  %10160 = vmatprep.subr.bf16.mxu0 0
  %10161 = vmatpush1.bf16.msra.mxu0 0
  %10162 = vmatprep.subr.bf16.mxu0 0
  %10163 = vmatpush1.bf16.msra.mxu0 0
  %10164 = vmatprep.subr.bf16.mxu0 0
  %10165 = vmatpush1.bf16.msra.mxu0 0
  %10166 = vmatprep.subr.bf16.mxu0 0
  %10167 = vmatpush1.bf16.msra.mxu0 0
  %10168 = vmatprep.mubr.bf16.mxu0 0
  %10169 = vmatmul.mubr.bf16.gmra.mrb[0].mxu0 %v9765
  %v10170 = vpop.f32.mrb[0].mxu0
  %v10171 = vadd.f32 %v9518, %v10170
  %v10172 = vpop.f32.mrb[0].mxu0
  %v10173 = vadd.f32 %v9522, %v10172
  %v10174 = vpop.f32.mrb[0].mxu0
  %v10175 = vpop.f32.mrb[0].mxu0
  %10176 = vdwg.mxu0
  %10177 = vmatprep.subr.bf16.mxu0 %v9720
  %10178 = vmatpush1.bf16.msra.mxu0 %v9719
  %10179 = vmatprep.subr.bf16.mxu0 0
  %10180 = vmatpush1.bf16.msra.mxu0 0
  %10181 = vmatprep.subr.bf16.mxu0 0
  %10182 = vmatpush1.bf16.msra.mxu0 0
  %10183 = vmatprep.subr.bf16.mxu0 0
  %10184 = vmatpush1.bf16.msra.mxu0 0
  %10185 = vmatprep.subr.bf16.mxu0 0
  %10186 = vmatpush1.bf16.msra.mxu0 0
  %10187 = vmatprep.subr.bf16.mxu0 0
  %10188 = vmatpush1.bf16.msra.mxu0 0
  %10189 = vmatprep.subr.bf16.mxu0 0
  %10190 = vmatpush1.bf16.msra.mxu0 0
  %10191 = vmatprep.subr.bf16.mxu0 0
  %10192 = vmatpush1.bf16.msra.mxu0 0
  %10193 = vmatprep.subr.bf16.mxu0 0
  %10194 = vmatpush1.bf16.msra.mxu0 0
  %10195 = vmatprep.subr.bf16.mxu0 0
  %10196 = vmatpush1.bf16.msra.mxu0 0
  %10197 = vmatprep.subr.bf16.mxu0 0
  %10198 = vmatpush1.bf16.msra.mxu0 0
  %10199 = vmatprep.subr.bf16.mxu0 0
  %10200 = vmatpush1.bf16.msra.mxu0 0
  %10201 = vmatprep.subr.bf16.mxu0 0
  %10202 = vmatpush1.bf16.msra.mxu0 0
  %10203 = vmatprep.subr.bf16.mxu0 0
  %10204 = vmatpush1.bf16.msra.mxu0 0
  %10205 = vmatprep.subr.bf16.mxu0 0
  %10206 = vmatpush1.bf16.msra.mxu0 0
  %10207 = vmatprep.subr.bf16.mxu0 0
  %10208 = vmatpush1.bf16.msra.mxu0 0
  %10209 = vmatprep.mubr.bf16.mxu0 0
  %10210 = vmatmul.mubr.bf16.gmra.mrb[0].mxu0 %v9765
  %v10211 = vpop.f32.mrb[0].mxu0
  %v10212 = vadd.f32 %v9526, %v10211
  %v10213 = vpop.f32.mrb[0].mxu0
  %v10214 = vadd.f32 %v9530, %v10213
  %v10215 = vpop.f32.mrb[0].mxu0
  %v10216 = vpop.f32.mrb[0].mxu0
  %10217 = vdwg.mxu0
  %10218 = vmatprep.subr.bf16.mxu0 %v9722
  %10219 = vmatpush1.bf16.msra.mxu0 %v9721
  %10220 = vmatprep.subr.bf16.mxu0 0
  %10221 = vmatpush1.bf16.msra.mxu0 0
  %10222 = vmatprep.subr.bf16.mxu0 0
  %10223 = vmatpush1.bf16.msra.mxu0 0
  %10224 = vmatprep.subr.bf16.mxu0 0
  %10225 = vmatpush1.bf16.msra.mxu0 0
  %10226 = vmatprep.subr.bf16.mxu0 0
  %10227 = vmatpush1.bf16.msra.mxu0 0
  %10228 = vmatprep.subr.bf16.mxu0 0
  %10229 = vmatpush1.bf16.msra.mxu0 0
  %10230 = vmatprep.subr.bf16.mxu0 0
  %10231 = vmatpush1.bf16.msra.mxu0 0
  %10232 = vmatprep.subr.bf16.mxu0 0
  %10233 = vmatpush1.bf16.msra.mxu0 0
  %10234 = vmatprep.subr.bf16.mxu0 0
  %10235 = vmatpush1.bf16.msra.mxu0 0
  %10236 = vmatprep.subr.bf16.mxu0 0
  %10237 = vmatpush1.bf16.msra.mxu0 0
  %10238 = vmatprep.subr.bf16.mxu0 0
  %10239 = vmatpush1.bf16.msra.mxu0 0
  %10240 = vmatprep.subr.bf16.mxu0 0
  %10241 = vmatpush1.bf16.msra.mxu0 0
  %10242 = vmatprep.subr.bf16.mxu0 0
  %10243 = vmatpush1.bf16.msra.mxu0 0
  %10244 = vmatprep.subr.bf16.mxu0 0
  %10245 = vmatpush1.bf16.msra.mxu0 0
  %10246 = vmatprep.subr.bf16.mxu0 0
  %10247 = vmatpush1.bf16.msra.mxu0 0
  %10248 = vmatprep.subr.bf16.mxu0 0
  %10249 = vmatpush1.bf16.msra.mxu0 0
  %10250 = vmatprep.mubr.bf16.mxu0 0
  %10251 = vmatmul.mubr.bf16.gmra.mrb[0].mxu0 %v9765
  %v10252 = vpop.f32.mrb[0].mxu0
  %v10253 = vadd.f32 %v9534, %v10252
  %v10254 = vpop.f32.mrb[0].mxu0
  %v10255 = vadd.f32 %v9538, %v10254
  %v10256 = vpop.f32.mrb[0].mxu0
  %v10257 = vpop.f32.mrb[0].mxu0
  %10258 = vdwg.mxu0
  %10259 = vmatprep.subr.bf16.mxu0 %v9724
  %10260 = vmatpush1.bf16.msra.mxu0 %v9723
  %10261 = vmatprep.subr.bf16.mxu0 0
  %10262 = vmatpush1.bf16.msra.mxu0 0
  %10263 = vmatprep.subr.bf16.mxu0 0
  %10264 = vmatpush1.bf16.msra.mxu0 0
  %10265 = vmatprep.subr.bf16.mxu0 0
  %10266 = vmatpush1.bf16.msra.mxu0 0
  %10267 = vmatprep.subr.bf16.mxu0 0
  %10268 = vmatpush1.bf16.msra.mxu0 0
  %10269 = vmatprep.subr.bf16.mxu0 0
  %10270 = vmatpush1.bf16.msra.mxu0 0
  %10271 = vmatprep.subr.bf16.mxu0 0
  %10272 = vmatpush1.bf16.msra.mxu0 0
  %10273 = vmatprep.subr.bf16.mxu0 0
  %10274 = vmatpush1.bf16.msra.mxu0 0
  %10275 = vmatprep.subr.bf16.mxu0 0
  %10276 = vmatpush1.bf16.msra.mxu0 0
  %10277 = vmatprep.subr.bf16.mxu0 0
  %10278 = vmatpush1.bf16.msra.mxu0 0
  %10279 = vmatprep.subr.bf16.mxu0 0
  %10280 = vmatpush1.bf16.msra.mxu0 0
  %10281 = vmatprep.subr.bf16.mxu0 0
  %10282 = vmatpush1.bf16.msra.mxu0 0
  %10283 = vmatprep.subr.bf16.mxu0 0
  %10284 = vmatpush1.bf16.msra.mxu0 0
  %10285 = vmatprep.subr.bf16.mxu0 0
  %10286 = vmatpush1.bf16.msra.mxu0 0
  %10287 = vmatprep.subr.bf16.mxu0 0
  %10288 = vmatpush1.bf16.msra.mxu0 0
  %10289 = vmatprep.subr.bf16.mxu0 0
  %10290 = vmatpush1.bf16.msra.mxu0 0
  %10291 = vmatprep.mubr.bf16.mxu0 0
  %10292 = vmatmul.mubr.bf16.gmra.mrb[0].mxu0 %v9765
  %v10293 = vpop.f32.mrb[0].mxu0
  %v10294 = vadd.f32 %v9542, %v10293
  %v10295 = vpop.f32.mrb[0].mxu0
  %v10296 = vadd.f32 %v9546, %v10295
  %v10297 = vpop.f32.mrb[0].mxu0
  %v10298 = vpop.f32.mrb[0].mxu0
  %10299 = vdwg.mxu0
  %10300 = vmatprep.subr.bf16.mxu0 %v9726
  %10301 = vmatpush1.bf16.msra.mxu0 %v9725
  %10302 = vmatprep.subr.bf16.mxu0 0
  %10303 = vmatpush1.bf16.msra.mxu0 0
  %10304 = vmatprep.subr.bf16.mxu0 0
  %10305 = vmatpush1.bf16.msra.mxu0 0
  %10306 = vmatprep.subr.bf16.mxu0 0
  %10307 = vmatpush1.bf16.msra.mxu0 0
  %10308 = vmatprep.subr.bf16.mxu0 0
  %10309 = vmatpush1.bf16.msra.mxu0 0
  %10310 = vmatprep.subr.bf16.mxu0 0
  %10311 = vmatpush1.bf16.msra.mxu0 0
  %10312 = vmatprep.subr.bf16.mxu0 0
  %10313 = vmatpush1.bf16.msra.mxu0 0
  %10314 = vmatprep.subr.bf16.mxu0 0
  %10315 = vmatpush1.bf16.msra.mxu0 0
  %10316 = vmatprep.subr.bf16.mxu0 0
  %10317 = vmatpush1.bf16.msra.mxu0 0
  %10318 = vmatprep.subr.bf16.mxu0 0
  %10319 = vmatpush1.bf16.msra.mxu0 0
  %10320 = vmatprep.subr.bf16.mxu0 0
  %10321 = vmatpush1.bf16.msra.mxu0 0
  %10322 = vmatprep.subr.bf16.mxu0 0
  %10323 = vmatpush1.bf16.msra.mxu0 0
  %10324 = vmatprep.subr.bf16.mxu0 0
  %10325 = vmatpush1.bf16.msra.mxu0 0
  %10326 = vmatprep.subr.bf16.mxu0 0
  %10327 = vmatpush1.bf16.msra.mxu0 0
  %10328 = vmatprep.subr.bf16.mxu0 0
  %10329 = vmatpush1.bf16.msra.mxu0 0
  %10330 = vmatprep.subr.bf16.mxu0 0
  %10331 = vmatpush1.bf16.msra.mxu0 0
  %10332 = vmatprep.mubr.bf16.mxu0 0
  %10333 = vmatmul.mubr.bf16.gmra.mrb[0].mxu0 %v9765
  %v10334 = vpop.f32.mrb[0].mxu0
  %v10335 = vadd.f32 %v9550, %v10334
  %v10336 = vpop.f32.mrb[0].mxu0
  %v10337 = vadd.f32 %v9554, %v10336
  %v10338 = vpop.f32.mrb[0].mxu0
  %v10339 = vpop.f32.mrb[0].mxu0
  %10340 = vdwg.mxu0
  %10341 = vmatprep.subr.bf16.mxu0 %v9728
  %10342 = vmatpush1.bf16.msra.mxu0 %v9727
  %10343 = vmatprep.subr.bf16.mxu0 0
  %10344 = vmatpush1.bf16.msra.mxu0 0
  %10345 = vmatprep.subr.bf16.mxu0 0
  %10346 = vmatpush1.bf16.msra.mxu0 0
  %10347 = vmatprep.subr.bf16.mxu0 0
  %10348 = vmatpush1.bf16.msra.mxu0 0
  %10349 = vmatprep.subr.bf16.mxu0 0
  %10350 = vmatpush1.bf16.msra.mxu0 0
  %10351 = vmatprep.subr.bf16.mxu0 0
  %10352 = vmatpush1.bf16.msra.mxu0 0
  %10353 = vmatprep.subr.bf16.mxu0 0
  %10354 = vmatpush1.bf16.msra.mxu0 0
  %10355 = vmatprep.subr.bf16.mxu0 0
  %10356 = vmatpush1.bf16.msra.mxu0 0
  %10357 = vmatprep.subr.bf16.mxu0 0
  %10358 = vmatpush1.bf16.msra.mxu0 0
  %10359 = vmatprep.subr.bf16.mxu0 0
  %10360 = vmatpush1.bf16.msra.mxu0 0
  %10361 = vmatprep.subr.bf16.mxu0 0
  %10362 = vmatpush1.bf16.msra.mxu0 0
  %10363 = vmatprep.subr.bf16.mxu0 0
  %10364 = vmatpush1.bf16.msra.mxu0 0
  %10365 = vmatprep.subr.bf16.mxu0 0
  %10366 = vmatpush1.bf16.msra.mxu0 0
  %10367 = vmatprep.subr.bf16.mxu0 0
  %10368 = vmatpush1.bf16.msra.mxu0 0
  %10369 = vmatprep.subr.bf16.mxu0 0
  %10370 = vmatpush1.bf16.msra.mxu0 0
  %10371 = vmatprep.subr.bf16.mxu0 0
  %10372 = vmatpush1.bf16.msra.mxu0 0
  %10373 = vmatprep.mubr.bf16.mxu0 0
  %10374 = vmatmul.mubr.bf16.gmra.mrb[0].mxu0 %v9765
  %v10375 = vpop.f32.mrb[0].mxu0
  %v10376 = vadd.f32 %v9558, %v10375
  %v10377 = vpop.f32.mrb[0].mxu0
  %v10378 = vadd.f32 %v9562, %v10377
  %v10379 = vpop.f32.mrb[0].mxu0
  %v10380 = vpop.f32.mrb[0].mxu0
  %10381 = vdwg.mxu0
  %10382 = vmatprep.subr.bf16.mxu0 %v9730
  %10383 = vmatpush1.bf16.msra.mxu0 %v9729
  %10384 = vmatprep.subr.bf16.mxu0 0
  %10385 = vmatpush1.bf16.msra.mxu0 0
  %10386 = vmatprep.subr.bf16.mxu0 0
  %10387 = vmatpush1.bf16.msra.mxu0 0
  %10388 = vmatprep.subr.bf16.mxu0 0
  %10389 = vmatpush1.bf16.msra.mxu0 0
  %10390 = vmatprep.subr.bf16.mxu0 0
  %10391 = vmatpush1.bf16.msra.mxu0 0
  %10392 = vmatprep.subr.bf16.mxu0 0
  %10393 = vmatpush1.bf16.msra.mxu0 0
  %10394 = vmatprep.subr.bf16.mxu0 0
  %10395 = vmatpush1.bf16.msra.mxu0 0
  %10396 = vmatprep.subr.bf16.mxu0 0
  %10397 = vmatpush1.bf16.msra.mxu0 0
  %10398 = vmatprep.subr.bf16.mxu0 0
  %10399 = vmatpush1.bf16.msra.mxu0 0
  %10400 = vmatprep.subr.bf16.mxu0 0
  %10401 = vmatpush1.bf16.msra.mxu0 0
  %10402 = vmatprep.subr.bf16.mxu0 0
  %10403 = vmatpush1.bf16.msra.mxu0 0
  %10404 = vmatprep.subr.bf16.mxu0 0
  %10405 = vmatpush1.bf16.msra.mxu0 0
  %10406 = vmatprep.subr.bf16.mxu0 0
  %10407 = vmatpush1.bf16.msra.mxu0 0
  %10408 = vmatprep.subr.bf16.mxu0 0
  %10409 = vmatpush1.bf16.msra.mxu0 0
  %10410 = vmatprep.subr.bf16.mxu0 0
  %10411 = vmatpush1.bf16.msra.mxu0 0
  %10412 = vmatprep.subr.bf16.mxu0 0
  %10413 = vmatpush1.bf16.msra.mxu0 0
  %10414 = vmatprep.mubr.bf16.mxu0 0
  %10415 = vmatmul.mubr.bf16.gmra.mrb[0].mxu0 %v9765
  %v10416 = vpop.f32.mrb[0].mxu0
  %v10417 = vadd.f32 %v9566, %v10416
  %v10418 = vpop.f32.mrb[0].mxu0
  %v10419 = vadd.f32 %v9570, %v10418
  %v10420 = vpop.f32.mrb[0].mxu0
  %v10421 = vpop.f32.mrb[0].mxu0
  %10422 = vdwg.mxu0
  %v10423 = vmax.f32 %v9802, 0.0
  %v10424 = vmax.f32 %v9804, 0.0
  %v10425 = vmax.f32 %v9843, 0.0
  %v10426 = vmax.f32 %v9845, 0.0
  %v10427 = vmax.f32 %v9884, 0.0
  %v10428 = vmax.f32 %v9886, 0.0
  %v10429 = vmax.f32 %v9925, 0.0
  %v10430 = vmax.f32 %v9927, 0.0
  %v10431 = vmax.f32 %v9966, 0.0
  %v10432 = vmax.f32 %v9968, 0.0
  %v10433 = vmax.f32 %v10007, 0.0
  %v10434 = vmax.f32 %v10009, 0.0
  %v10435 = vmax.f32 %v10048, 0.0
  %v10436 = vmax.f32 %v10050, 0.0
  %v10437 = vmax.f32 %v10089, 0.0
  %v10438 = vmax.f32 %v10091, 0.0
  %v10439 = vmax.f32 %v10130, 0.0
  %v10440 = vmax.f32 %v10132, 0.0
  %v10441 = vmax.f32 %v10171, 0.0
  %v10442 = vmax.f32 %v10173, 0.0
  %v10443 = vmax.f32 %v10212, 0.0
  %v10444 = vmax.f32 %v10214, 0.0
  %v10445 = vmax.f32 %v10253, 0.0
  %v10446 = vmax.f32 %v10255, 0.0
  %v10447 = vmax.f32 %v10294, 0.0
  %v10448 = vmax.f32 %v10296, 0.0
  %v10449 = vmax.f32 %v10335, 0.0
  %v10450 = vmax.f32 %v10337, 0.0
  %v10451 = vmax.f32 %v10376, 0.0
  %v10452 = vmax.f32 %v10378, 0.0
  %v10453 = vmax.f32 %v10417, 0.0
  %v10454 = vmax.f32 %v10419, 0.0
  %v10455 = vld [vmem:[%s37] sm:$0xff]
  %v10456 = vld [vmem:[%s37 + $0x8] sm:$0xff]
  %v10457 = vld [vmem:[%s37 + $0x10] sm:$0xff]
  %v10458 = vld [vmem:[%s37 + $0x18] sm:$0xff]
  %v10459 = vld [vmem:[%s37 + $0x20] sm:$0xff]
  %v10460 = vld [vmem:[%s37 + $0x28] sm:$0xff]
  %v10461 = vld [vmem:[%s37 + $0x30] sm:$0xff]
  %v10462 = vld [vmem:[%s37 + $0x38] sm:$0xff]
  %v10463 = vld [vmem:[%s37 + $0x40] sm:$0xff]
  %v10464 = vld [vmem:[%s37 + $0x48] sm:$0xff]
  %v10465 = vld [vmem:[%s37 + $0x50] sm:$0xff]
  %v10466 = vld [vmem:[%s37 + $0x58] sm:$0xff]
  %v10467 = vld [vmem:[%s37 + $0x60] sm:$0xff]
  %v10468 = vld [vmem:[%s37 + $0x68] sm:$0xff]
  %v10469 = vld [vmem:[%s37 + $0x70] sm:$0xff]
  %v10470 = vld [vmem:[%s37 + $0x78] sm:$0xff]
  %v10471 = vld [vmem:[%s37 + $0x80] sm:$0xff]
  %v10472 = vld [vmem:[%s37 + $0x88] sm:$0xff]
  %v10473 = vld [vmem:[%s37 + $0x90] sm:$0xff]
  %v10474 = vld [vmem:[%s37 + $0x98] sm:$0xff]
  %v10475 = vld [vmem:[%s37 + $0xa0] sm:$0xff]
  %v10476 = vld [vmem:[%s37 + $0xa8] sm:$0xff]
  %v10477 = vld [vmem:[%s37 + $0xb0] sm:$0xff]
  %v10478 = vld [vmem:[%s37 + $0xb8] sm:$0xff]
  %v10479 = vld [vmem:[%s37 + $0xc0] sm:$0xff]
  %v10480 = vld [vmem:[%s37 + $0xc8] sm:$0xff]
  %v10481 = vld [vmem:[%s37 + $0xd0] sm:$0xff]
  %v10482 = vld [vmem:[%s37 + $0xd8] sm:$0xff]
  %v10483 = vld [vmem:[%s37 + $0xe0] sm:$0xff]
  %v10484 = vld [vmem:[%s37 + $0xe8] sm:$0xff]
  %v10485 = vld [vmem:[%s37 + $0xf0] sm:$0xff]
  %v10486 = vld [vmem:[%s37 + $0xf8] sm:$0xff]
  %v10487 = vld [vmem:[%s39] sm:$0xff]
  %v10488 = vld [vmem:[%s39 + $0x8] sm:$0xff]
  %v10489 = vld [vmem:[%s39 + $0x10] sm:$0xff]
  %v10490 = vld [vmem:[%s39 + $0x18] sm:$0xff]
  %v10495 = vlaneseq
  %v10496 = vshrl.u32 %v10495, 7
  %v10497 = vsub.s32 0, %v10496
  %v10498 = vrot.slane %v10487, %v10497
  %v10499 = vlaneseq
  %v10500 = vshrl.u32 %v10499, 7
  %v10501 = vsub.s32 1, %v10500
  %v10502 = vrot.slane %v10487, %v10501
  %v10503 = vlaneseq
  %v10504 = vshrl.u32 %v10503, 7
  %v10505 = vsub.s32 2, %v10504
  %v10506 = vrot.slane %v10487, %v10505
  %v10507 = vlaneseq
  %v10508 = vshrl.u32 %v10507, 7
  %v10509 = vsub.s32 3, %v10508
  %v10510 = vrot.slane %v10487, %v10509
  %v10511 = vlaneseq
  %v10512 = vshrl.u32 %v10511, 7
  %v10513 = vsub.s32 4, %v10512
  %v10514 = vrot.slane %v10487, %v10513
  %v10515 = vlaneseq
  %v10516 = vshrl.u32 %v10515, 7
  %v10517 = vsub.s32 5, %v10516
  %v10518 = vrot.slane %v10487, %v10517
  %v10519 = vlaneseq
  %v10520 = vshrl.u32 %v10519, 7
  %v10521 = vsub.s32 6, %v10520
  %v10522 = vrot.slane %v10487, %v10521
  %v10523 = vlaneseq
  %v10524 = vshrl.u32 %v10523, 7
  %v10525 = vsub.s32 7, %v10524
  %v10526 = vrot.slane %v10487, %v10525
  %v10527 = vlaneseq
  %v10528 = vshrl.u32 %v10527, 7
  %v10529 = vsub.s32 0, %v10528
  %v10530 = vrot.slane %v10488, %v10529
  %v10531 = vlaneseq
  %v10532 = vshrl.u32 %v10531, 7
  %v10533 = vsub.s32 1, %v10532
  %v10534 = vrot.slane %v10488, %v10533
  %v10535 = vlaneseq
  %v10536 = vshrl.u32 %v10535, 7
  %v10537 = vsub.s32 2, %v10536
  %v10538 = vrot.slane %v10488, %v10537
  %v10539 = vlaneseq
  %v10540 = vshrl.u32 %v10539, 7
  %v10541 = vsub.s32 3, %v10540
  %v10542 = vrot.slane %v10488, %v10541
  %v10543 = vlaneseq
  %v10544 = vshrl.u32 %v10543, 7
  %v10545 = vsub.s32 4, %v10544
  %v10546 = vrot.slane %v10488, %v10545
  %v10547 = vlaneseq
  %v10548 = vshrl.u32 %v10547, 7
  %v10549 = vsub.s32 5, %v10548
  %v10550 = vrot.slane %v10488, %v10549
  %v10551 = vlaneseq
  %v10552 = vshrl.u32 %v10551, 7
  %v10553 = vsub.s32 6, %v10552
  %v10554 = vrot.slane %v10488, %v10553
  %v10555 = vlaneseq
  %v10556 = vshrl.u32 %v10555, 7
  %v10557 = vsub.s32 7, %v10556
  %v10558 = vrot.slane %v10488, %v10557
  %v10559 = vlaneseq
  %v10560 = vshrl.u32 %v10559, 7
  %v10561 = vsub.s32 0, %v10560
  %v10562 = vrot.slane %v10489, %v10561
  %v10563 = vlaneseq
  %v10564 = vshrl.u32 %v10563, 7
  %v10565 = vsub.s32 1, %v10564
  %v10566 = vrot.slane %v10489, %v10565
  %v10567 = vlaneseq
  %v10568 = vshrl.u32 %v10567, 7
  %v10569 = vsub.s32 2, %v10568
  %v10570 = vrot.slane %v10489, %v10569
  %v10571 = vlaneseq
  %v10572 = vshrl.u32 %v10571, 7
  %v10573 = vsub.s32 3, %v10572
  %v10574 = vrot.slane %v10489, %v10573
  %v10575 = vlaneseq
  %v10576 = vshrl.u32 %v10575, 7
  %v10577 = vsub.s32 4, %v10576
  %v10578 = vrot.slane %v10489, %v10577
  %v10579 = vlaneseq
  %v10580 = vshrl.u32 %v10579, 7
  %v10581 = vsub.s32 5, %v10580
  %v10582 = vrot.slane %v10489, %v10581
  %v10583 = vlaneseq
  %v10584 = vshrl.u32 %v10583, 7
  %v10585 = vsub.s32 6, %v10584
  %v10586 = vrot.slane %v10489, %v10585
  %v10587 = vlaneseq
  %v10588 = vshrl.u32 %v10587, 7
  %v10589 = vsub.s32 7, %v10588
  %v10590 = vrot.slane %v10489, %v10589
  %v10591 = vlaneseq
  %v10592 = vshrl.u32 %v10591, 7
  %v10593 = vsub.s32 0, %v10592
  %v10594 = vrot.slane %v10490, %v10593
  %v10595 = vlaneseq
  %v10596 = vshrl.u32 %v10595, 7
  %v10597 = vsub.s32 1, %v10596
  %v10598 = vrot.slane %v10490, %v10597
  %v10599 = vlaneseq
  %v10600 = vshrl.u32 %v10599, 7
  %v10601 = vsub.s32 2, %v10600
  %v10602 = vrot.slane %v10490, %v10601
  %v10603 = vlaneseq
  %v10604 = vshrl.u32 %v10603, 7
  %v10605 = vsub.s32 3, %v10604
  %v10606 = vrot.slane %v10490, %v10605
  %v10607 = vlaneseq
  %v10608 = vshrl.u32 %v10607, 7
  %v10609 = vsub.s32 4, %v10608
  %v10610 = vrot.slane %v10490, %v10609
  %v10611 = vlaneseq
  %v10612 = vshrl.u32 %v10611, 7
  %v10613 = vsub.s32 5, %v10612
  %v10614 = vrot.slane %v10490, %v10613
  %v10615 = vlaneseq
  %v10616 = vshrl.u32 %v10615, 7
  %v10617 = vsub.s32 6, %v10616
  %v10618 = vrot.slane %v10490, %v10617
  %v10619 = vlaneseq
  %v10620 = vshrl.u32 %v10619, 7
  %v10621 = vsub.s32 7, %v10620
  %v10622 = vrot.slane %v10490, %v10621
  %v10687 = vunpack.c.l.b16 %v10455
  %v10688 = vunpack.c.h.b16 %v10455
  %v10689 = vunpack.c.l.b16 %v10456
  %v10690 = vunpack.c.h.b16 %v10456
  %v10691 = vunpack.c.l.b16 %v10457
  %v10692 = vunpack.c.h.b16 %v10457
  %v10693 = vunpack.c.l.b16 %v10458
  %v10694 = vunpack.c.h.b16 %v10458
  %v10695 = vunpack.c.l.b16 %v10459
  %v10696 = vunpack.c.h.b16 %v10459
  %v10697 = vunpack.c.l.b16 %v10460
  %v10698 = vunpack.c.h.b16 %v10460
  %v10699 = vunpack.c.l.b16 %v10461
  %v10700 = vunpack.c.h.b16 %v10461
  %v10701 = vunpack.c.l.b16 %v10462
  %v10702 = vunpack.c.h.b16 %v10462
  %v10703 = vunpack.c.l.b16 %v10463
  %v10704 = vunpack.c.h.b16 %v10463
  %v10705 = vunpack.c.l.b16 %v10464
  %v10706 = vunpack.c.h.b16 %v10464
  %v10707 = vunpack.c.l.b16 %v10465
  %v10708 = vunpack.c.h.b16 %v10465
  %v10709 = vunpack.c.l.b16 %v10466
  %v10710 = vunpack.c.h.b16 %v10466
  %v10711 = vunpack.c.l.b16 %v10467
  %v10712 = vunpack.c.h.b16 %v10467
  %v10713 = vunpack.c.l.b16 %v10468
  %v10714 = vunpack.c.h.b16 %v10468
  %v10715 = vunpack.c.l.b16 %v10469
  %v10716 = vunpack.c.h.b16 %v10469
  %v10717 = vunpack.c.l.b16 %v10470
  %v10718 = vunpack.c.h.b16 %v10470
  %v10719 = vunpack.c.l.b16 %v10471
  %v10720 = vunpack.c.h.b16 %v10471
  %v10721 = vunpack.c.l.b16 %v10472
  %v10722 = vunpack.c.h.b16 %v10472
  %v10723 = vunpack.c.l.b16 %v10473
  %v10724 = vunpack.c.h.b16 %v10473
  %v10725 = vunpack.c.l.b16 %v10474
  %v10726 = vunpack.c.h.b16 %v10474
  %v10727 = vunpack.c.l.b16 %v10475
  %v10728 = vunpack.c.h.b16 %v10475
  %v10729 = vunpack.c.l.b16 %v10476
  %v10730 = vunpack.c.h.b16 %v10476
  %v10731 = vunpack.c.l.b16 %v10477
  %v10732 = vunpack.c.h.b16 %v10477
  %v10733 = vunpack.c.l.b16 %v10478
  %v10734 = vunpack.c.h.b16 %v10478
  %v10735 = vunpack.c.l.b16 %v10479
  %v10736 = vunpack.c.h.b16 %v10479
  %v10737 = vunpack.c.l.b16 %v10480
  %v10738 = vunpack.c.h.b16 %v10480
  %v10739 = vunpack.c.l.b16 %v10481
  %v10740 = vunpack.c.h.b16 %v10481
  %v10741 = vunpack.c.l.b16 %v10482
  %v10742 = vunpack.c.h.b16 %v10482
  %v10743 = vunpack.c.l.b16 %v10483
  %v10744 = vunpack.c.h.b16 %v10483
  %v10745 = vunpack.c.l.b16 %v10484
  %v10746 = vunpack.c.h.b16 %v10484
  %v10747 = vunpack.c.l.b16 %v10485
  %v10748 = vunpack.c.h.b16 %v10485
  %v10749 = vunpack.c.l.b16 %v10486
  %v10750 = vunpack.c.h.b16 %v10486
  %v10751 = vpack.c.b16 %v10719, %v10687
  %v10752 = vpack.c.b16 %v10720, %v10688
  %v10753 = vpack.c.b16 %v10721, %v10689
  %v10754 = vpack.c.b16 %v10722, %v10690
  %v10755 = vpack.c.b16 %v10723, %v10691
  %v10756 = vpack.c.b16 %v10724, %v10692
  %v10757 = vpack.c.b16 %v10725, %v10693
  %v10758 = vpack.c.b16 %v10726, %v10694
  %v10759 = vpack.c.b16 %v10727, %v10695
  %v10760 = vpack.c.b16 %v10728, %v10696
  %v10761 = vpack.c.b16 %v10729, %v10697
  %v10762 = vpack.c.b16 %v10730, %v10698
  %v10763 = vpack.c.b16 %v10731, %v10699
  %v10764 = vpack.c.b16 %v10732, %v10700
  %v10765 = vpack.c.b16 %v10733, %v10701
  %v10766 = vpack.c.b16 %v10734, %v10702
  %v10767 = vpack.c.b16 %v10735, %v10703
  %v10768 = vpack.c.b16 %v10736, %v10704
  %v10769 = vpack.c.b16 %v10737, %v10705
  %v10770 = vpack.c.b16 %v10738, %v10706
  %v10771 = vpack.c.b16 %v10739, %v10707
  %v10772 = vpack.c.b16 %v10740, %v10708
  %v10773 = vpack.c.b16 %v10741, %v10709
  %v10774 = vpack.c.b16 %v10742, %v10710
  %v10775 = vpack.c.b16 %v10743, %v10711
  %v10776 = vpack.c.b16 %v10744, %v10712
  %v10777 = vpack.c.b16 %v10745, %v10713
  %v10778 = vpack.c.b16 %v10746, %v10714
  %v10779 = vpack.c.b16 %v10747, %v10715
  %v10780 = vpack.c.b16 %v10748, %v10716
  %v10781 = vpack.c.b16 %v10749, %v10717
  %v10782 = vpack.c.b16 %v10750, %v10718
  %10815 = vmatprep.subr.bf16.mxu0 %v10752
  %10816 = vmatpush1.bf16.msra.mxu0 %v10751
  %10817 = vmatprep.subr.bf16.mxu0 0
  %10818 = vmatpush1.bf16.msra.mxu0 0
  %10819 = vmatprep.subr.bf16.mxu0 0
  %10820 = vmatpush1.bf16.msra.mxu0 0
  %10821 = vmatprep.subr.bf16.mxu0 0
  %10822 = vmatpush1.bf16.msra.mxu0 0
  %10823 = vmatprep.subr.bf16.mxu0 0
  %10824 = vmatpush1.bf16.msra.mxu0 0
  %10825 = vmatprep.subr.bf16.mxu0 0
  %10826 = vmatpush1.bf16.msra.mxu0 0
  %10827 = vmatprep.subr.bf16.mxu0 0
  %10828 = vmatpush1.bf16.msra.mxu0 0
  %10829 = vmatprep.subr.bf16.mxu0 0
  %10830 = vmatpush1.bf16.msra.mxu0 0
  %10831 = vmatprep.subr.bf16.mxu0 0
  %10832 = vmatpush1.bf16.msra.mxu0 0
  %10833 = vmatprep.subr.bf16.mxu0 0
  %10834 = vmatpush1.bf16.msra.mxu0 0
  %10835 = vmatprep.subr.bf16.mxu0 0
  %10836 = vmatpush1.bf16.msra.mxu0 0
  %10837 = vmatprep.subr.bf16.mxu0 0
  %10838 = vmatpush1.bf16.msra.mxu0 0
  %10839 = vmatprep.subr.bf16.mxu0 0
  %10840 = vmatpush1.bf16.msra.mxu0 0
  %10841 = vmatprep.subr.bf16.mxu0 0
  %10842 = vmatpush1.bf16.msra.mxu0 0
  %10843 = vmatprep.subr.bf16.mxu0 0
  %10844 = vmatpush1.bf16.msra.mxu0 0
  %10845 = vmatprep.subr.bf16.mxu0 0
  %10846 = vmatpush1.bf16.msra.mxu0 0
  %10847 = vmatprep.mubr.bf16.mxu0 0
  %10848 = vmatmul.mubr.bf16.gmra.mrb[0].mxu0 %v9765
  %v10849 = vpop.f32.mrb[0].mxu0
  %v10850 = vadd.f32 %v10498, %v10849
  %v10851 = vpop.f32.mrb[0].mxu0
  %v10852 = vadd.f32 %v10502, %v10851
  %v10853 = vpop.f32.mrb[0].mxu0
  %v10854 = vpop.f32.mrb[0].mxu0
  %10855 = vdwg.mxu0
  %10856 = vmatprep.subr.bf16.mxu0 %v10754
  %10857 = vmatpush1.bf16.msra.mxu0 %v10753
  %10858 = vmatprep.subr.bf16.mxu0 0
  %10859 = vmatpush1.bf16.msra.mxu0 0
  %10860 = vmatprep.subr.bf16.mxu0 0
  %10861 = vmatpush1.bf16.msra.mxu0 0
  %10862 = vmatprep.subr.bf16.mxu0 0
  %10863 = vmatpush1.bf16.msra.mxu0 0
  %10864 = vmatprep.subr.bf16.mxu0 0
  %10865 = vmatpush1.bf16.msra.mxu0 0
  %10866 = vmatprep.subr.bf16.mxu0 0
  %10867 = vmatpush1.bf16.msra.mxu0 0
  %10868 = vmatprep.subr.bf16.mxu0 0
  %10869 = vmatpush1.bf16.msra.mxu0 0
  %10870 = vmatprep.subr.bf16.mxu0 0
  %10871 = vmatpush1.bf16.msra.mxu0 0
  %10872 = vmatprep.subr.bf16.mxu0 0
  %10873 = vmatpush1.bf16.msra.mxu0 0
  %10874 = vmatprep.subr.bf16.mxu0 0
  %10875 = vmatpush1.bf16.msra.mxu0 0
  %10876 = vmatprep.subr.bf16.mxu0 0
  %10877 = vmatpush1.bf16.msra.mxu0 0
  %10878 = vmatprep.subr.bf16.mxu0 0
  %10879 = vmatpush1.bf16.msra.mxu0 0
  %10880 = vmatprep.subr.bf16.mxu0 0
  %10881 = vmatpush1.bf16.msra.mxu0 0
  %10882 = vmatprep.subr.bf16.mxu0 0
  %10883 = vmatpush1.bf16.msra.mxu0 0
  %10884 = vmatprep.subr.bf16.mxu0 0
  %10885 = vmatpush1.bf16.msra.mxu0 0
  %10886 = vmatprep.subr.bf16.mxu0 0
  %10887 = vmatpush1.bf16.msra.mxu0 0
  %10888 = vmatprep.mubr.bf16.mxu0 0
  %10889 = vmatmul.mubr.bf16.gmra.mrb[0].mxu0 %v9765
  %v10890 = vpop.f32.mrb[0].mxu0
  %v10891 = vadd.f32 %v10506, %v10890
  %v10892 = vpop.f32.mrb[0].mxu0
  %v10893 = vadd.f32 %v10510, %v10892
  %v10894 = vpop.f32.mrb[0].mxu0
  %v10895 = vpop.f32.mrb[0].mxu0
  %10896 = vdwg.mxu0
  %10897 = vmatprep.subr.bf16.mxu0 %v10756
  %10898 = vmatpush1.bf16.msra.mxu0 %v10755
  %10899 = vmatprep.subr.bf16.mxu0 0
  %10900 = vmatpush1.bf16.msra.mxu0 0
  %10901 = vmatprep.subr.bf16.mxu0 0
  %10902 = vmatpush1.bf16.msra.mxu0 0
  %10903 = vmatprep.subr.bf16.mxu0 0
  %10904 = vmatpush1.bf16.msra.mxu0 0
  %10905 = vmatprep.subr.bf16.mxu0 0
  %10906 = vmatpush1.bf16.msra.mxu0 0
  %10907 = vmatprep.subr.bf16.mxu0 0
  %10908 = vmatpush1.bf16.msra.mxu0 0
  %10909 = vmatprep.subr.bf16.mxu0 0
  %10910 = vmatpush1.bf16.msra.mxu0 0
  %10911 = vmatprep.subr.bf16.mxu0 0
  %10912 = vmatpush1.bf16.msra.mxu0 0
  %10913 = vmatprep.subr.bf16.mxu0 0
  %10914 = vmatpush1.bf16.msra.mxu0 0
  %10915 = vmatprep.subr.bf16.mxu0 0
  %10916 = vmatpush1.bf16.msra.mxu0 0
  %10917 = vmatprep.subr.bf16.mxu0 0
  %10918 = vmatpush1.bf16.msra.mxu0 0
  %10919 = vmatprep.subr.bf16.mxu0 0
  %10920 = vmatpush1.bf16.msra.mxu0 0
  %10921 = vmatprep.subr.bf16.mxu0 0
  %10922 = vmatpush1.bf16.msra.mxu0 0
  %10923 = vmatprep.subr.bf16.mxu0 0
  %10924 = vmatpush1.bf16.msra.mxu0 0
  %10925 = vmatprep.subr.bf16.mxu0 0
  %10926 = vmatpush1.bf16.msra.mxu0 0
  %10927 = vmatprep.subr.bf16.mxu0 0
  %10928 = vmatpush1.bf16.msra.mxu0 0
  %10929 = vmatprep.mubr.bf16.mxu0 0
  %10930 = vmatmul.mubr.bf16.gmra.mrb[0].mxu0 %v9765
  %v10931 = vpop.f32.mrb[0].mxu0
  %v10932 = vadd.f32 %v10514, %v10931
  %v10933 = vpop.f32.mrb[0].mxu0
  %v10934 = vadd.f32 %v10518, %v10933
  %v10935 = vpop.f32.mrb[0].mxu0
  %v10936 = vpop.f32.mrb[0].mxu0
  %10937 = vdwg.mxu0
  %10938 = vmatprep.subr.bf16.mxu0 %v10758
  %10939 = vmatpush1.bf16.msra.mxu0 %v10757
  %10940 = vmatprep.subr.bf16.mxu0 0
  %10941 = vmatpush1.bf16.msra.mxu0 0
  %10942 = vmatprep.subr.bf16.mxu0 0
  %10943 = vmatpush1.bf16.msra.mxu0 0
  %10944 = vmatprep.subr.bf16.mxu0 0
  %10945 = vmatpush1.bf16.msra.mxu0 0
  %10946 = vmatprep.subr.bf16.mxu0 0
  %10947 = vmatpush1.bf16.msra.mxu0 0
  %10948 = vmatprep.subr.bf16.mxu0 0
  %10949 = vmatpush1.bf16.msra.mxu0 0
  %10950 = vmatprep.subr.bf16.mxu0 0
  %10951 = vmatpush1.bf16.msra.mxu0 0
  %10952 = vmatprep.subr.bf16.mxu0 0
  %10953 = vmatpush1.bf16.msra.mxu0 0
  %10954 = vmatprep.subr.bf16.mxu0 0
  %10955 = vmatpush1.bf16.msra.mxu0 0
  %10956 = vmatprep.subr.bf16.mxu0 0
  %10957 = vmatpush1.bf16.msra.mxu0 0
  %10958 = vmatprep.subr.bf16.mxu0 0
  %10959 = vmatpush1.bf16.msra.mxu0 0
  %10960 = vmatprep.subr.bf16.mxu0 0
  %10961 = vmatpush1.bf16.msra.mxu0 0
  %10962 = vmatprep.subr.bf16.mxu0 0
  %10963 = vmatpush1.bf16.msra.mxu0 0
  %10964 = vmatprep.subr.bf16.mxu0 0
  %10965 = vmatpush1.bf16.msra.mxu0 0
  %10966 = vmatprep.subr.bf16.mxu0 0
  %10967 = vmatpush1.bf16.msra.mxu0 0
  %10968 = vmatprep.subr.bf16.mxu0 0
  %10969 = vmatpush1.bf16.msra.mxu0 0
  %10970 = vmatprep.mubr.bf16.mxu0 0
  %10971 = vmatmul.mubr.bf16.gmra.mrb[0].mxu0 %v9765
  %v10972 = vpop.f32.mrb[0].mxu0
  %v10973 = vadd.f32 %v10522, %v10972
  %v10974 = vpop.f32.mrb[0].mxu0
  %v10975 = vadd.f32 %v10526, %v10974
  %v10976 = vpop.f32.mrb[0].mxu0
  %v10977 = vpop.f32.mrb[0].mxu0
  %10978 = vdwg.mxu0
  %10979 = vmatprep.subr.bf16.mxu0 %v10760
  %10980 = vmatpush1.bf16.msra.mxu0 %v10759
  %10981 = vmatprep.subr.bf16.mxu0 0
  %10982 = vmatpush1.bf16.msra.mxu0 0
  %10983 = vmatprep.subr.bf16.mxu0 0
  %10984 = vmatpush1.bf16.msra.mxu0 0
  %10985 = vmatprep.subr.bf16.mxu0 0
  %10986 = vmatpush1.bf16.msra.mxu0 0
  %10987 = vmatprep.subr.bf16.mxu0 0
  %10988 = vmatpush1.bf16.msra.mxu0 0
  %10989 = vmatprep.subr.bf16.mxu0 0
  %10990 = vmatpush1.bf16.msra.mxu0 0
  %10991 = vmatprep.subr.bf16.mxu0 0
  %10992 = vmatpush1.bf16.msra.mxu0 0
  %10993 = vmatprep.subr.bf16.mxu0 0
  %10994 = vmatpush1.bf16.msra.mxu0 0
  %10995 = vmatprep.subr.bf16.mxu0 0
  %10996 = vmatpush1.bf16.msra.mxu0 0
  %10997 = vmatprep.subr.bf16.mxu0 0
  %10998 = vmatpush1.bf16.msra.mxu0 0
  %10999 = vmatprep.subr.bf16.mxu0 0
  %11000 = vmatpush1.bf16.msra.mxu0 0
  %11001 = vmatprep.subr.bf16.mxu0 0
  %11002 = vmatpush1.bf16.msra.mxu0 0
  %11003 = vmatprep.subr.bf16.mxu0 0
  %11004 = vmatpush1.bf16.msra.mxu0 0
  %11005 = vmatprep.subr.bf16.mxu0 0
  %11006 = vmatpush1.bf16.msra.mxu0 0
  %11007 = vmatprep.subr.bf16.mxu0 0
  %11008 = vmatpush1.bf16.msra.mxu0 0
  %11009 = vmatprep.subr.bf16.mxu0 0
  %11010 = vmatpush1.bf16.msra.mxu0 0
  %11011 = vmatprep.mubr.bf16.mxu0 0
  %11012 = vmatmul.mubr.bf16.gmra.mrb[0].mxu0 %v9765
  %v11013 = vpop.f32.mrb[0].mxu0
  %v11014 = vadd.f32 %v10530, %v11013
  %v11015 = vpop.f32.mrb[0].mxu0
  %v11016 = vadd.f32 %v10534, %v11015
  %v11017 = vpop.f32.mrb[0].mxu0
  %v11018 = vpop.f32.mrb[0].mxu0
  %11019 = vdwg.mxu0
  %11020 = vmatprep.subr.bf16.mxu0 %v10762
  %11021 = vmatpush1.bf16.msra.mxu0 %v10761
  %11022 = vmatprep.subr.bf16.mxu0 0
  %11023 = vmatpush1.bf16.msra.mxu0 0
  %11024 = vmatprep.subr.bf16.mxu0 0
  %11025 = vmatpush1.bf16.msra.mxu0 0
  %11026 = vmatprep.subr.bf16.mxu0 0
  %11027 = vmatpush1.bf16.msra.mxu0 0
  %11028 = vmatprep.subr.bf16.mxu0 0
  %11029 = vmatpush1.bf16.msra.mxu0 0
  %11030 = vmatprep.subr.bf16.mxu0 0
  %11031 = vmatpush1.bf16.msra.mxu0 0
  %11032 = vmatprep.subr.bf16.mxu0 0
  %11033 = vmatpush1.bf16.msra.mxu0 0
  %11034 = vmatprep.subr.bf16.mxu0 0
  %11035 = vmatpush1.bf16.msra.mxu0 0
  %11036 = vmatprep.subr.bf16.mxu0 0
  %11037 = vmatpush1.bf16.msra.mxu0 0
  %11038 = vmatprep.subr.bf16.mxu0 0
  %11039 = vmatpush1.bf16.msra.mxu0 0
  %11040 = vmatprep.subr.bf16.mxu0 0
  %11041 = vmatpush1.bf16.msra.mxu0 0
  %11042 = vmatprep.subr.bf16.mxu0 0
  %11043 = vmatpush1.bf16.msra.mxu0 0
  %11044 = vmatprep.subr.bf16.mxu0 0
  %11045 = vmatpush1.bf16.msra.mxu0 0
  %11046 = vmatprep.subr.bf16.mxu0 0
  %11047 = vmatpush1.bf16.msra.mxu0 0
  %11048 = vmatprep.subr.bf16.mxu0 0
  %11049 = vmatpush1.bf16.msra.mxu0 0
  %11050 = vmatprep.subr.bf16.mxu0 0
  %11051 = vmatpush1.bf16.msra.mxu0 0
  %11052 = vmatprep.mubr.bf16.mxu0 0
  %11053 = vmatmul.mubr.bf16.gmra.mrb[0].mxu0 %v9765
  %v11054 = vpop.f32.mrb[0].mxu0
  %v11055 = vadd.f32 %v10538, %v11054
  %v11056 = vpop.f32.mrb[0].mxu0
  %v11057 = vadd.f32 %v10542, %v11056
  %v11058 = vpop.f32.mrb[0].mxu0
  %v11059 = vpop.f32.mrb[0].mxu0
  %11060 = vdwg.mxu0
  %11061 = vmatprep.subr.bf16.mxu0 %v10764
  %11062 = vmatpush1.bf16.msra.mxu0 %v10763
  %11063 = vmatprep.subr.bf16.mxu0 0
  %11064 = vmatpush1.bf16.msra.mxu0 0
  %11065 = vmatprep.subr.bf16.mxu0 0
  %11066 = vmatpush1.bf16.msra.mxu0 0
  %11067 = vmatprep.subr.bf16.mxu0 0
  %11068 = vmatpush1.bf16.msra.mxu0 0
  %11069 = vmatprep.subr.bf16.mxu0 0
  %11070 = vmatpush1.bf16.msra.mxu0 0
  %11071 = vmatprep.subr.bf16.mxu0 0
  %11072 = vmatpush1.bf16.msra.mxu0 0
  %11073 = vmatprep.subr.bf16.mxu0 0
  %11074 = vmatpush1.bf16.msra.mxu0 0
  %11075 = vmatprep.subr.bf16.mxu0 0
  %11076 = vmatpush1.bf16.msra.mxu0 0
  %11077 = vmatprep.subr.bf16.mxu0 0
  %11078 = vmatpush1.bf16.msra.mxu0 0
  %11079 = vmatprep.subr.bf16.mxu0 0
  %11080 = vmatpush1.bf16.msra.mxu0 0
  %11081 = vmatprep.subr.bf16.mxu0 0
  %11082 = vmatpush1.bf16.msra.mxu0 0
  %11083 = vmatprep.subr.bf16.mxu0 0
  %11084 = vmatpush1.bf16.msra.mxu0 0
  %11085 = vmatprep.subr.bf16.mxu0 0
  %11086 = vmatpush1.bf16.msra.mxu0 0
  %11087 = vmatprep.subr.bf16.mxu0 0
  %11088 = vmatpush1.bf16.msra.mxu0 0
  %11089 = vmatprep.subr.bf16.mxu0 0
  %11090 = vmatpush1.bf16.msra.mxu0 0
  %11091 = vmatprep.subr.bf16.mxu0 0
  %11092 = vmatpush1.bf16.msra.mxu0 0
  %11093 = vmatprep.mubr.bf16.mxu0 0
  %11094 = vmatmul.mubr.bf16.gmra.mrb[0].mxu0 %v9765
  %v11095 = vpop.f32.mrb[0].mxu0
  %v11096 = vadd.f32 %v10546, %v11095
  %v11097 = vpop.f32.mrb[0].mxu0
  %v11098 = vadd.f32 %v10550, %v11097
  %v11099 = vpop.f32.mrb[0].mxu0
  %v11100 = vpop.f32.mrb[0].mxu0
  %11101 = vdwg.mxu0
  %11102 = vmatprep.subr.bf16.mxu0 %v10766
  %11103 = vmatpush1.bf16.msra.mxu0 %v10765
  %11104 = vmatprep.subr.bf16.mxu0 0
  %11105 = vmatpush1.bf16.msra.mxu0 0
  %11106 = vmatprep.subr.bf16.mxu0 0
  %11107 = vmatpush1.bf16.msra.mxu0 0
  %11108 = vmatprep.subr.bf16.mxu0 0
  %11109 = vmatpush1.bf16.msra.mxu0 0
  %11110 = vmatprep.subr.bf16.mxu0 0
  %11111 = vmatpush1.bf16.msra.mxu0 0
  %11112 = vmatprep.subr.bf16.mxu0 0
  %11113 = vmatpush1.bf16.msra.mxu0 0
  %11114 = vmatprep.subr.bf16.mxu0 0
  %11115 = vmatpush1.bf16.msra.mxu0 0
  %11116 = vmatprep.subr.bf16.mxu0 0
  %11117 = vmatpush1.bf16.msra.mxu0 0
  %11118 = vmatprep.subr.bf16.mxu0 0
  %11119 = vmatpush1.bf16.msra.mxu0 0
  %11120 = vmatprep.subr.bf16.mxu0 0
  %11121 = vmatpush1.bf16.msra.mxu0 0
  %11122 = vmatprep.subr.bf16.mxu0 0
  %11123 = vmatpush1.bf16.msra.mxu0 0
  %11124 = vmatprep.subr.bf16.mxu0 0
  %11125 = vmatpush1.bf16.msra.mxu0 0
  %11126 = vmatprep.subr.bf16.mxu0 0
  %11127 = vmatpush1.bf16.msra.mxu0 0
  %11128 = vmatprep.subr.bf16.mxu0 0
  %11129 = vmatpush1.bf16.msra.mxu0 0
  %11130 = vmatprep.subr.bf16.mxu0 0
  %11131 = vmatpush1.bf16.msra.mxu0 0
  %11132 = vmatprep.subr.bf16.mxu0 0
  %11133 = vmatpush1.bf16.msra.mxu0 0
  %11134 = vmatprep.mubr.bf16.mxu0 0
  %11135 = vmatmul.mubr.bf16.gmra.mrb[0].mxu0 %v9765
  %v11136 = vpop.f32.mrb[0].mxu0
  %v11137 = vadd.f32 %v10554, %v11136
  %v11138 = vpop.f32.mrb[0].mxu0
  %v11139 = vadd.f32 %v10558, %v11138
  %v11140 = vpop.f32.mrb[0].mxu0
  %v11141 = vpop.f32.mrb[0].mxu0
  %11142 = vdwg.mxu0
  %11143 = vmatprep.subr.bf16.mxu0 %v10768
  %11144 = vmatpush1.bf16.msra.mxu0 %v10767
  %11145 = vmatprep.subr.bf16.mxu0 0
  %11146 = vmatpush1.bf16.msra.mxu0 0
  %11147 = vmatprep.subr.bf16.mxu0 0
  %11148 = vmatpush1.bf16.msra.mxu0 0
  %11149 = vmatprep.subr.bf16.mxu0 0
  %11150 = vmatpush1.bf16.msra.mxu0 0
  %11151 = vmatprep.subr.bf16.mxu0 0
  %11152 = vmatpush1.bf16.msra.mxu0 0
  %11153 = vmatprep.subr.bf16.mxu0 0
  %11154 = vmatpush1.bf16.msra.mxu0 0
  %11155 = vmatprep.subr.bf16.mxu0 0
  %11156 = vmatpush1.bf16.msra.mxu0 0
  %11157 = vmatprep.subr.bf16.mxu0 0
  %11158 = vmatpush1.bf16.msra.mxu0 0
  %11159 = vmatprep.subr.bf16.mxu0 0
  %11160 = vmatpush1.bf16.msra.mxu0 0
  %11161 = vmatprep.subr.bf16.mxu0 0
  %11162 = vmatpush1.bf16.msra.mxu0 0
  %11163 = vmatprep.subr.bf16.mxu0 0
  %11164 = vmatpush1.bf16.msra.mxu0 0
  %11165 = vmatprep.subr.bf16.mxu0 0
  %11166 = vmatpush1.bf16.msra.mxu0 0
  %11167 = vmatprep.subr.bf16.mxu0 0
  %11168 = vmatpush1.bf16.msra.mxu0 0
  %11169 = vmatprep.subr.bf16.mxu0 0
  %11170 = vmatpush1.bf16.msra.mxu0 0
  %11171 = vmatprep.subr.bf16.mxu0 0
  %11172 = vmatpush1.bf16.msra.mxu0 0
  %11173 = vmatprep.subr.bf16.mxu0 0
  %11174 = vmatpush1.bf16.msra.mxu0 0
  %11175 = vmatprep.mubr.bf16.mxu0 0
  %11176 = vmatmul.mubr.bf16.gmra.mrb[0].mxu0 %v9765
  %v11177 = vpop.f32.mrb[0].mxu0
  %v11178 = vadd.f32 %v10562, %v11177
  %v11179 = vpop.f32.mrb[0].mxu0
  %v11180 = vadd.f32 %v10566, %v11179
  %v11181 = vpop.f32.mrb[0].mxu0
  %v11182 = vpop.f32.mrb[0].mxu0
  %11183 = vdwg.mxu0
  %11184 = vmatprep.subr.bf16.mxu0 %v10770
  %11185 = vmatpush1.bf16.msra.mxu0 %v10769
  %11186 = vmatprep.subr.bf16.mxu0 0
  %11187 = vmatpush1.bf16.msra.mxu0 0
  %11188 = vmatprep.subr.bf16.mxu0 0
  %11189 = vmatpush1.bf16.msra.mxu0 0
  %11190 = vmatprep.subr.bf16.mxu0 0
  %11191 = vmatpush1.bf16.msra.mxu0 0
  %11192 = vmatprep.subr.bf16.mxu0 0
  %11193 = vmatpush1.bf16.msra.mxu0 0
  %11194 = vmatprep.subr.bf16.mxu0 0
  %11195 = vmatpush1.bf16.msra.mxu0 0
  %11196 = vmatprep.subr.bf16.mxu0 0
  %11197 = vmatpush1.bf16.msra.mxu0 0
  %11198 = vmatprep.subr.bf16.mxu0 0
  %11199 = vmatpush1.bf16.msra.mxu0 0
  %11200 = vmatprep.subr.bf16.mxu0 0
  %11201 = vmatpush1.bf16.msra.mxu0 0
  %11202 = vmatprep.subr.bf16.mxu0 0
  %11203 = vmatpush1.bf16.msra.mxu0 0
  %11204 = vmatprep.subr.bf16.mxu0 0
  %11205 = vmatpush1.bf16.msra.mxu0 0
  %11206 = vmatprep.subr.bf16.mxu0 0
  %11207 = vmatpush1.bf16.msra.mxu0 0
  %11208 = vmatprep.subr.bf16.mxu0 0
  %11209 = vmatpush1.bf16.msra.mxu0 0
  %11210 = vmatprep.subr.bf16.mxu0 0
  %11211 = vmatpush1.bf16.msra.mxu0 0
  %11212 = vmatprep.subr.bf16.mxu0 0
  %11213 = vmatpush1.bf16.msra.mxu0 0
  %11214 = vmatprep.subr.bf16.mxu0 0
  %11215 = vmatpush1.bf16.msra.mxu0 0
  %11216 = vmatprep.mubr.bf16.mxu0 0
  %11217 = vmatmul.mubr.bf16.gmra.mrb[0].mxu0 %v9765
  %v11218 = vpop.f32.mrb[0].mxu0
  %v11219 = vadd.f32 %v10570, %v11218
  %v11220 = vpop.f32.mrb[0].mxu0
  %v11221 = vadd.f32 %v10574, %v11220
  %v11222 = vpop.f32.mrb[0].mxu0
  %v11223 = vpop.f32.mrb[0].mxu0
  %11224 = vdwg.mxu0
  %11225 = vmatprep.subr.bf16.mxu0 %v10772
  %11226 = vmatpush1.bf16.msra.mxu0 %v10771
  %11227 = vmatprep.subr.bf16.mxu0 0
  %11228 = vmatpush1.bf16.msra.mxu0 0
  %11229 = vmatprep.subr.bf16.mxu0 0
  %11230 = vmatpush1.bf16.msra.mxu0 0
  %11231 = vmatprep.subr.bf16.mxu0 0
  %11232 = vmatpush1.bf16.msra.mxu0 0
  %11233 = vmatprep.subr.bf16.mxu0 0
  %11234 = vmatpush1.bf16.msra.mxu0 0
  %11235 = vmatprep.subr.bf16.mxu0 0
  %11236 = vmatpush1.bf16.msra.mxu0 0
  %11237 = vmatprep.subr.bf16.mxu0 0
  %11238 = vmatpush1.bf16.msra.mxu0 0
  %11239 = vmatprep.subr.bf16.mxu0 0
  %11240 = vmatpush1.bf16.msra.mxu0 0
  %11241 = vmatprep.subr.bf16.mxu0 0
  %11242 = vmatpush1.bf16.msra.mxu0 0
  %11243 = vmatprep.subr.bf16.mxu0 0
  %11244 = vmatpush1.bf16.msra.mxu0 0
  %11245 = vmatprep.subr.bf16.mxu0 0
  %11246 = vmatpush1.bf16.msra.mxu0 0
  %11247 = vmatprep.subr.bf16.mxu0 0
  %11248 = vmatpush1.bf16.msra.mxu0 0
  %11249 = vmatprep.subr.bf16.mxu0 0
  %11250 = vmatpush1.bf16.msra.mxu0 0
  %11251 = vmatprep.subr.bf16.mxu0 0
  %11252 = vmatpush1.bf16.msra.mxu0 0
  %11253 = vmatprep.subr.bf16.mxu0 0
  %11254 = vmatpush1.bf16.msra.mxu0 0
  %11255 = vmatprep.subr.bf16.mxu0 0
  %11256 = vmatpush1.bf16.msra.mxu0 0
  %11257 = vmatprep.mubr.bf16.mxu0 0
  %11258 = vmatmul.mubr.bf16.gmra.mrb[0].mxu0 %v9765
  %v11259 = vpop.f32.mrb[0].mxu0
  %v11260 = vadd.f32 %v10578, %v11259
  %v11261 = vpop.f32.mrb[0].mxu0
  %v11262 = vadd.f32 %v10582, %v11261
  %v11263 = vpop.f32.mrb[0].mxu0
  %v11264 = vpop.f32.mrb[0].mxu0
  %11265 = vdwg.mxu0
  %11266 = vmatprep.subr.bf16.mxu0 %v10774
  %11267 = vmatpush1.bf16.msra.mxu0 %v10773
  %11268 = vmatprep.subr.bf16.mxu0 0
  %11269 = vmatpush1.bf16.msra.mxu0 0
  %11270 = vmatprep.subr.bf16.mxu0 0
  %11271 = vmatpush1.bf16.msra.mxu0 0
  %11272 = vmatprep.subr.bf16.mxu0 0
  %11273 = vmatpush1.bf16.msra.mxu0 0
  %11274 = vmatprep.subr.bf16.mxu0 0
  %11275 = vmatpush1.bf16.msra.mxu0 0
  %11276 = vmatprep.subr.bf16.mxu0 0
  %11277 = vmatpush1.bf16.msra.mxu0 0
  %11278 = vmatprep.subr.bf16.mxu0 0
  %11279 = vmatpush1.bf16.msra.mxu0 0
  %11280 = vmatprep.subr.bf16.mxu0 0
  %11281 = vmatpush1.bf16.msra.mxu0 0
  %11282 = vmatprep.subr.bf16.mxu0 0
  %11283 = vmatpush1.bf16.msra.mxu0 0
  %11284 = vmatprep.subr.bf16.mxu0 0
  %11285 = vmatpush1.bf16.msra.mxu0 0
  %11286 = vmatprep.subr.bf16.mxu0 0
  %11287 = vmatpush1.bf16.msra.mxu0 0
  %11288 = vmatprep.subr.bf16.mxu0 0
  %11289 = vmatpush1.bf16.msra.mxu0 0
  %11290 = vmatprep.subr.bf16.mxu0 0
  %11291 = vmatpush1.bf16.msra.mxu0 0
  %11292 = vmatprep.subr.bf16.mxu0 0
  %11293 = vmatpush1.bf16.msra.mxu0 0
  %11294 = vmatprep.subr.bf16.mxu0 0
  %11295 = vmatpush1.bf16.msra.mxu0 0
  %11296 = vmatprep.subr.bf16.mxu0 0
  %11297 = vmatpush1.bf16.msra.mxu0 0
  %11298 = vmatprep.mubr.bf16.mxu0 0
  %11299 = vmatmul.mubr.bf16.gmra.mrb[0].mxu0 %v9765
  %v11300 = vpop.f32.mrb[0].mxu0
  %v11301 = vadd.f32 %v10586, %v11300
  %v11302 = vpop.f32.mrb[0].mxu0
  %v11303 = vadd.f32 %v10590, %v11302
  %v11304 = vpop.f32.mrb[0].mxu0
  %v11305 = vpop.f32.mrb[0].mxu0
  %11306 = vdwg.mxu0
  %11307 = vmatprep.subr.bf16.mxu0 %v10776
  %11308 = vmatpush1.bf16.msra.mxu0 %v10775
  %11309 = vmatprep.subr.bf16.mxu0 0
  %11310 = vmatpush1.bf16.msra.mxu0 0
  %11311 = vmatprep.subr.bf16.mxu0 0
  %11312 = vmatpush1.bf16.msra.mxu0 0
  %11313 = vmatprep.subr.bf16.mxu0 0
  %11314 = vmatpush1.bf16.msra.mxu0 0
  %11315 = vmatprep.subr.bf16.mxu0 0
  %11316 = vmatpush1.bf16.msra.mxu0 0
  %11317 = vmatprep.subr.bf16.mxu0 0
  %11318 = vmatpush1.bf16.msra.mxu0 0
  %11319 = vmatprep.subr.bf16.mxu0 0
  %11320 = vmatpush1.bf16.msra.mxu0 0
  %11321 = vmatprep.subr.bf16.mxu0 0
  %11322 = vmatpush1.bf16.msra.mxu0 0
  %11323 = vmatprep.subr.bf16.mxu0 0
  %11324 = vmatpush1.bf16.msra.mxu0 0
  %11325 = vmatprep.subr.bf16.mxu0 0
  %11326 = vmatpush1.bf16.msra.mxu0 0
  %11327 = vmatprep.subr.bf16.mxu0 0
  %11328 = vmatpush1.bf16.msra.mxu0 0
  %11329 = vmatprep.subr.bf16.mxu0 0
  %11330 = vmatpush1.bf16.msra.mxu0 0
  %11331 = vmatprep.subr.bf16.mxu0 0
  %11332 = vmatpush1.bf16.msra.mxu0 0
  %11333 = vmatprep.subr.bf16.mxu0 0
  %11334 = vmatpush1.bf16.msra.mxu0 0
  %11335 = vmatprep.subr.bf16.mxu0 0
  %11336 = vmatpush1.bf16.msra.mxu0 0
  %11337 = vmatprep.subr.bf16.mxu0 0
  %11338 = vmatpush1.bf16.msra.mxu0 0
  %11339 = vmatprep.mubr.bf16.mxu0 0
  %11340 = vmatmul.mubr.bf16.gmra.mrb[0].mxu0 %v9765
  %v11341 = vpop.f32.mrb[0].mxu0
  %v11342 = vadd.f32 %v10594, %v11341
  %v11343 = vpop.f32.mrb[0].mxu0
  %v11344 = vadd.f32 %v10598, %v11343
  %v11345 = vpop.f32.mrb[0].mxu0
  %v11346 = vpop.f32.mrb[0].mxu0
  %11347 = vdwg.mxu0
  %11348 = vmatprep.subr.bf16.mxu0 %v10778
  %11349 = vmatpush1.bf16.msra.mxu0 %v10777
  %11350 = vmatprep.subr.bf16.mxu0 0
  %11351 = vmatpush1.bf16.msra.mxu0 0
  %11352 = vmatprep.subr.bf16.mxu0 0
  %11353 = vmatpush1.bf16.msra.mxu0 0
  %11354 = vmatprep.subr.bf16.mxu0 0
  %11355 = vmatpush1.bf16.msra.mxu0 0
  %11356 = vmatprep.subr.bf16.mxu0 0
  %11357 = vmatpush1.bf16.msra.mxu0 0
  %11358 = vmatprep.subr.bf16.mxu0 0
  %11359 = vmatpush1.bf16.msra.mxu0 0
  %11360 = vmatprep.subr.bf16.mxu0 0
  %11361 = vmatpush1.bf16.msra.mxu0 0
  %11362 = vmatprep.subr.bf16.mxu0 0
  %11363 = vmatpush1.bf16.msra.mxu0 0
  %11364 = vmatprep.subr.bf16.mxu0 0
  %11365 = vmatpush1.bf16.msra.mxu0 0
  %11366 = vmatprep.subr.bf16.mxu0 0
  %11367 = vmatpush1.bf16.msra.mxu0 0
  %11368 = vmatprep.subr.bf16.mxu0 0
  %11369 = vmatpush1.bf16.msra.mxu0 0
  %11370 = vmatprep.subr.bf16.mxu0 0
  %11371 = vmatpush1.bf16.msra.mxu0 0
  %11372 = vmatprep.subr.bf16.mxu0 0
  %11373 = vmatpush1.bf16.msra.mxu0 0
  %11374 = vmatprep.subr.bf16.mxu0 0
  %11375 = vmatpush1.bf16.msra.mxu0 0
  %11376 = vmatprep.subr.bf16.mxu0 0
  %11377 = vmatpush1.bf16.msra.mxu0 0
  %11378 = vmatprep.subr.bf16.mxu0 0
  %11379 = vmatpush1.bf16.msra.mxu0 0
  %11380 = vmatprep.mubr.bf16.mxu0 0
  %11381 = vmatmul.mubr.bf16.gmra.mrb[0].mxu0 %v9765
  %v11382 = vpop.f32.mrb[0].mxu0
  %v11383 = vadd.f32 %v10602, %v11382
  %v11384 = vpop.f32.mrb[0].mxu0
  %v11385 = vadd.f32 %v10606, %v11384
  %v11386 = vpop.f32.mrb[0].mxu0
  %v11387 = vpop.f32.mrb[0].mxu0
  %11388 = vdwg.mxu0
  %11389 = vmatprep.subr.bf16.mxu0 %v10780
  %11390 = vmatpush1.bf16.msra.mxu0 %v10779
  %11391 = vmatprep.subr.bf16.mxu0 0
  %11392 = vmatpush1.bf16.msra.mxu0 0
  %11393 = vmatprep.subr.bf16.mxu0 0
  %11394 = vmatpush1.bf16.msra.mxu0 0
  %11395 = vmatprep.subr.bf16.mxu0 0
  %11396 = vmatpush1.bf16.msra.mxu0 0
  %11397 = vmatprep.subr.bf16.mxu0 0
  %11398 = vmatpush1.bf16.msra.mxu0 0
  %11399 = vmatprep.subr.bf16.mxu0 0
  %11400 = vmatpush1.bf16.msra.mxu0 0
  %11401 = vmatprep.subr.bf16.mxu0 0
  %11402 = vmatpush1.bf16.msra.mxu0 0
  %11403 = vmatprep.subr.bf16.mxu0 0
  %11404 = vmatpush1.bf16.msra.mxu0 0
  %11405 = vmatprep.subr.bf16.mxu0 0
  %11406 = vmatpush1.bf16.msra.mxu0 0
  %11407 = vmatprep.subr.bf16.mxu0 0
  %11408 = vmatpush1.bf16.msra.mxu0 0
  %11409 = vmatprep.subr.bf16.mxu0 0
  %11410 = vmatpush1.bf16.msra.mxu0 0
  %11411 = vmatprep.subr.bf16.mxu0 0
  %11412 = vmatpush1.bf16.msra.mxu0 0
  %11413 = vmatprep.subr.bf16.mxu0 0
  %11414 = vmatpush1.bf16.msra.mxu0 0
  %11415 = vmatprep.subr.bf16.mxu0 0
  %11416 = vmatpush1.bf16.msra.mxu0 0
  %11417 = vmatprep.subr.bf16.mxu0 0
  %11418 = vmatpush1.bf16.msra.mxu0 0
  %11419 = vmatprep.subr.bf16.mxu0 0
  %11420 = vmatpush1.bf16.msra.mxu0 0
  %11421 = vmatprep.mubr.bf16.mxu0 0
  %11422 = vmatmul.mubr.bf16.gmra.mrb[0].mxu0 %v9765
  %v11423 = vpop.f32.mrb[0].mxu0
  %v11424 = vadd.f32 %v10610, %v11423
  %v11425 = vpop.f32.mrb[0].mxu0
  %v11426 = vadd.f32 %v10614, %v11425
  %v11427 = vpop.f32.mrb[0].mxu0
  %v11428 = vpop.f32.mrb[0].mxu0
  %11429 = vdwg.mxu0
  %11430 = vmatprep.subr.bf16.mxu0 %v10782
  %11431 = vmatpush1.bf16.msra.mxu0 %v10781
  %11432 = vmatprep.subr.bf16.mxu0 0
  %11433 = vmatpush1.bf16.msra.mxu0 0
  %11434 = vmatprep.subr.bf16.mxu0 0
  %11435 = vmatpush1.bf16.msra.mxu0 0
  %11436 = vmatprep.subr.bf16.mxu0 0
  %11437 = vmatpush1.bf16.msra.mxu0 0
  %11438 = vmatprep.subr.bf16.mxu0 0
  %11439 = vmatpush1.bf16.msra.mxu0 0
  %11440 = vmatprep.subr.bf16.mxu0 0
  %11441 = vmatpush1.bf16.msra.mxu0 0
  %11442 = vmatprep.subr.bf16.mxu0 0
  %11443 = vmatpush1.bf16.msra.mxu0 0
  %11444 = vmatprep.subr.bf16.mxu0 0
  %11445 = vmatpush1.bf16.msra.mxu0 0
  %11446 = vmatprep.subr.bf16.mxu0 0
  %11447 = vmatpush1.bf16.msra.mxu0 0
  %11448 = vmatprep.subr.bf16.mxu0 0
  %11449 = vmatpush1.bf16.msra.mxu0 0
  %11450 = vmatprep.subr.bf16.mxu0 0
  %11451 = vmatpush1.bf16.msra.mxu0 0
  %11452 = vmatprep.subr.bf16.mxu0 0
  %11453 = vmatpush1.bf16.msra.mxu0 0
  %11454 = vmatprep.subr.bf16.mxu0 0
  %11455 = vmatpush1.bf16.msra.mxu0 0
  %11456 = vmatprep.subr.bf16.mxu0 0
  %11457 = vmatpush1.bf16.msra.mxu0 0
  %11458 = vmatprep.subr.bf16.mxu0 0
  %11459 = vmatpush1.bf16.msra.mxu0 0
  %11460 = vmatprep.subr.bf16.mxu0 0
  %11461 = vmatpush1.bf16.msra.mxu0 0
  %11462 = vmatprep.mubr.bf16.mxu0 0
  %11463 = vmatmul.mubr.bf16.gmra.mrb[0].mxu0 %v9765
  %v11464 = vpop.f32.mrb[0].mxu0
  %v11465 = vadd.f32 %v10618, %v11464
  %v11466 = vpop.f32.mrb[0].mxu0
  %v11467 = vadd.f32 %v10622, %v11466
  %v11468 = vpop.f32.mrb[0].mxu0
  %v11469 = vpop.f32.mrb[0].mxu0
  %11470 = vdwg.mxu0
  %v11471 = vmax.f32 %v10850, 0.0
  %v11472 = vmax.f32 %v10852, 0.0
  %v11473 = vmax.f32 %v10891, 0.0
  %v11474 = vmax.f32 %v10893, 0.0
  %v11475 = vmax.f32 %v10932, 0.0
  %v11476 = vmax.f32 %v10934, 0.0
  %v11477 = vmax.f32 %v10973, 0.0
  %v11478 = vmax.f32 %v10975, 0.0
  %v11479 = vmax.f32 %v11014, 0.0
  %v11480 = vmax.f32 %v11016, 0.0
  %v11481 = vmax.f32 %v11055, 0.0
  %v11482 = vmax.f32 %v11057, 0.0
  %v11483 = vmax.f32 %v11096, 0.0
  %v11484 = vmax.f32 %v11098, 0.0
  %v11485 = vmax.f32 %v11137, 0.0
  %v11486 = vmax.f32 %v11139, 0.0
  %v11487 = vmax.f32 %v11178, 0.0
  %v11488 = vmax.f32 %v11180, 0.0
  %v11489 = vmax.f32 %v11219, 0.0
  %v11490 = vmax.f32 %v11221, 0.0
  %v11491 = vmax.f32 %v11260, 0.0
  %v11492 = vmax.f32 %v11262, 0.0
  %v11493 = vmax.f32 %v11301, 0.0
  %v11494 = vmax.f32 %v11303, 0.0
  %v11495 = vmax.f32 %v11342, 0.0
  %v11496 = vmax.f32 %v11344, 0.0
  %v11497 = vmax.f32 %v11383, 0.0
  %v11498 = vmax.f32 %v11385, 0.0
  %v11499 = vmax.f32 %v11424, 0.0
  %v11500 = vmax.f32 %v11426, 0.0
  %v11501 = vmax.f32 %v11465, 0.0
  %v11502 = vmax.f32 %v11467, 0.0
  %v11535 = vrot.slane %v11471, 6
  %v11536 = vrot.slane %v11472, 6
  %v11537 = vrot.slane %v11473, 6
  %v11538 = vrot.slane %v11474, 6
  %v11539 = vrot.slane %v11475, 6
  %v11540 = vrot.slane %v11476, 6
  %v11541 = vrot.slane %v11477, 6
  %v11542 = vrot.slane %v11478, 6
  %v11543 = vrot.slane %v11479, 6
  %v11544 = vrot.slane %v11480, 6
  %v11545 = vrot.slane %v11481, 6
  %v11546 = vrot.slane %v11482, 6
  %v11547 = vrot.slane %v11483, 6
  %v11548 = vrot.slane %v11484, 6
  %v11549 = vrot.slane %v11485, 6
  %v11550 = vrot.slane %v11486, 6
  %v11551 = vrot.slane %v11487, 6
  %v11552 = vrot.slane %v11488, 6
  %v11553 = vrot.slane %v11489, 6
  %v11554 = vrot.slane %v11490, 6
  %v11555 = vrot.slane %v11491, 6
  %v11556 = vrot.slane %v11492, 6
  %v11557 = vrot.slane %v11493, 6
  %v11558 = vrot.slane %v11494, 6
  %v11559 = vrot.slane %v11495, 6
  %v11560 = vrot.slane %v11496, 6
  %v11561 = vrot.slane %v11497, 6
  %v11562 = vrot.slane %v11498, 6
  %v11563 = vrot.slane %v11499, 6
  %v11564 = vrot.slane %v11500, 6
  %v11565 = vrot.slane %v11501, 6
  %v11566 = vrot.slane %v11502, 6
  %v11599 = vsel %vm138, %v10423, %v11535
  %v11600 = vsel %vm138, %v10424, %v11536
  %v11601 = vsel %vm138, %v10425, %v11537
  %v11602 = vsel %vm138, %v10426, %v11538
  %v11603 = vsel %vm138, %v10427, %v11539
  %v11604 = vsel %vm138, %v10428, %v11540
  %v11605 = vsel %vm138, %v10429, %v11541
  %v11606 = vsel %vm138, %v10430, %v11542
  %v11607 = vsel %vm138, %v10431, %v11543
  %v11608 = vsel %vm138, %v10432, %v11544
  %v11609 = vsel %vm138, %v10433, %v11545
  %v11610 = vsel %vm138, %v10434, %v11546
  %v11611 = vsel %vm138, %v10435, %v11547
  %v11612 = vsel %vm138, %v10436, %v11548
  %v11613 = vsel %vm138, %v10437, %v11549
  %v11614 = vsel %vm138, %v10438, %v11550
  %v11615 = vsel %vm138, %v10439, %v11551
  %v11616 = vsel %vm138, %v10440, %v11552
  %v11617 = vsel %vm138, %v10441, %v11553
  %v11618 = vsel %vm138, %v10442, %v11554
  %v11619 = vsel %vm138, %v10443, %v11555
  %v11620 = vsel %vm138, %v10444, %v11556
  %v11621 = vsel %vm138, %v10445, %v11557
  %v11622 = vsel %vm138, %v10446, %v11558
  %v11623 = vsel %vm138, %v10447, %v11559
  %v11624 = vsel %vm138, %v10448, %v11560
  %v11625 = vsel %vm138, %v10449, %v11561
  %v11626 = vsel %vm138, %v10450, %v11562
  %v11627 = vsel %vm138, %v10451, %v11563
  %v11628 = vsel %vm138, %v10452, %v11564
  %v11629 = vsel %vm138, %v10453, %v11565
  %v11630 = vsel %vm138, %v10454, %v11566
  %v11632 = vrot.slane %v11600, 4
  %v11634 = vsel %vm140, %v11599, %v11632
  %11635 = vst [vmem:[#allocation2] sm:$0xff] %v11634
  %v11637 = vrot.slane %v11602, 4
  %v11639 = vsel %vm140, %v11601, %v11637
  %11640 = vst [vmem:[#allocation2 + $0x8] sm:$0xff] %v11639
  %v11642 = vrot.slane %v11604, 4
  %v11644 = vsel %vm140, %v11603, %v11642
  %11645 = vst [vmem:[#allocation2 + $0x10] sm:$0xff] %v11644
  %v11647 = vrot.slane %v11606, 4
  %v11649 = vsel %vm140, %v11605, %v11647
  %11650 = vst [vmem:[#allocation2 + $0x18] sm:$0xff] %v11649
  %v11652 = vrot.slane %v11608, 4
  %v11654 = vsel %vm140, %v11607, %v11652
  %11655 = vst [vmem:[#allocation2 + $0x20] sm:$0xff] %v11654
  %v11657 = vrot.slane %v11610, 4
  %v11659 = vsel %vm140, %v11609, %v11657
  %11660 = vst [vmem:[#allocation2 + $0x28] sm:$0xff] %v11659
  %v11662 = vrot.slane %v11612, 4
  %v11664 = vsel %vm140, %v11611, %v11662
  %11665 = vst [vmem:[#allocation2 + $0x30] sm:$0xff] %v11664
  %v11667 = vrot.slane %v11614, 4
  %v11669 = vsel %vm140, %v11613, %v11667
  %11670 = vst [vmem:[#allocation2 + $0x38] sm:$0xff] %v11669
  %v11672 = vrot.slane %v11616, 4
  %v11674 = vsel %vm140, %v11615, %v11672
  %11675 = vst [vmem:[#allocation2 + $0x40] sm:$0xff] %v11674
  %v11677 = vrot.slane %v11618, 4
  %v11679 = vsel %vm140, %v11617, %v11677
  %11680 = vst [vmem:[#allocation2 + $0x48] sm:$0xff] %v11679
  %v11682 = vrot.slane %v11620, 4
  %v11684 = vsel %vm140, %v11619, %v11682
  %11685 = vst [vmem:[#allocation2 + $0x50] sm:$0xff] %v11684
  %v11687 = vrot.slane %v11622, 4
  %v11689 = vsel %vm140, %v11621, %v11687
  %11690 = vst [vmem:[#allocation2 + $0x58] sm:$0xff] %v11689
  %v11692 = vrot.slane %v11624, 4
  %v11694 = vsel %vm140, %v11623, %v11692
  %11695 = vst [vmem:[#allocation2 + $0x60] sm:$0xff] %v11694
  %v11697 = vrot.slane %v11626, 4
  %v11699 = vsel %vm140, %v11625, %v11697
  %11700 = vst [vmem:[#allocation2 + $0x68] sm:$0xff] %v11699
  %v11702 = vrot.slane %v11628, 4
  %v11704 = vsel %vm140, %v11627, %v11702
  %11705 = vst [vmem:[#allocation2 + $0x70] sm:$0xff] %v11704
  %v11707 = vrot.slane %v11630, 4
  %v11709 = vsel %vm140, %v11629, %v11707
  %11710 = vst [vmem:[#allocation2 + $0x78] sm:$0xff] %v11709
  %v11711 = vld [vmem:[#allocation2] sm:$0xff]
  %v11712 = vld [vmem:[#allocation2 + $0x8] sm:$0xff]
  %v11713 = vld [vmem:[#allocation2 + $0x10] sm:$0xff]
  %v11714 = vld [vmem:[#allocation2 + $0x18] sm:$0xff]
  %v11715 = vld [vmem:[#allocation2 + $0x20] sm:$0xff]
  %v11716 = vld [vmem:[#allocation2 + $0x28] sm:$0xff]
  %v11717 = vld [vmem:[#allocation2 + $0x30] sm:$0xff]
  %v11718 = vld [vmem:[#allocation2 + $0x38] sm:$0xff]
  %v11719 = vld [vmem:[#allocation2 + $0x40] sm:$0xff]
  %v11720 = vld [vmem:[#allocation2 + $0x48] sm:$0xff]
  %v11721 = vld [vmem:[#allocation2 + $0x50] sm:$0xff]
  %v11722 = vld [vmem:[#allocation2 + $0x58] sm:$0xff]
  %v11723 = vld [vmem:[#allocation2 + $0x60] sm:$0xff]
  %v11724 = vld [vmem:[#allocation2 + $0x68] sm:$0xff]
  %v11725 = vld [vmem:[#allocation2 + $0x70] sm:$0xff]
  %v11726 = vld [vmem:[#allocation2 + $0x78] sm:$0xff]
  %v11727 = vpack.c.bf16 %v11712, %v11711
  %v11728 = vpack.c.bf16 %v11714, %v11713
  %v11729 = vpack.c.bf16 %v11716, %v11715
  %v11730 = vpack.c.bf16 %v11718, %v11717
  %v11731 = vpack.c.bf16 %v11720, %v11719
  %v11732 = vpack.c.bf16 %v11722, %v11721
  %v11733 = vpack.c.bf16 %v11724, %v11723
  %v11734 = vpack.c.bf16 %v11726, %v11725
  %v11735 = vld [vmem:[%s41] sm:$0xf]
  %v11736 = vld [vmem:[%s41 + $0x4] sm:$0xf]
  %v11737 = vld [vmem:[%s41 + $0x8] sm:$0xf]
  %v11738 = vld [vmem:[%s41 + $0xc] sm:$0xf]
  %v11739 = vld [vmem:[%s41 + $0x10] sm:$0xf]
  %v11740 = vld [vmem:[%s41 + $0x14] sm:$0xf]
  %v11741 = vld [vmem:[%s41 + $0x18] sm:$0xf]
  %v11742 = vld [vmem:[%s41 + $0x1c] sm:$0xf]
  %v11743 = vld [vmem:[%s41 + $0x20] sm:$0xf]
  %v11744 = vld [vmem:[%s41 + $0x24] sm:$0xf]
  %v11745 = vld [vmem:[%s41 + $0x28] sm:$0xf]
  %v11746 = vld [vmem:[%s41 + $0x2c] sm:$0xf]
  %v11747 = vld [vmem:[%s41 + $0x30] sm:$0xf]
  %v11748 = vld [vmem:[%s41 + $0x34] sm:$0xf]
  %v11749 = vld [vmem:[%s41 + $0x38] sm:$0xf]
  %v11750 = vld [vmem:[%s41 + $0x3c] sm:$0xf]
  %v11751 = vld [vmem:[%s41 + $0x40] sm:$0xf]
  %v11752 = vld [vmem:[%s41 + $0x44] sm:$0xf]
  %v11753 = vld [vmem:[%s41 + $0x48] sm:$0xf]
  %v11754 = vld [vmem:[%s41 + $0x4c] sm:$0xf]
  %v11755 = vld [vmem:[%s41 + $0x50] sm:$0xf]
  %v11756 = vld [vmem:[%s41 + $0x54] sm:$0xf]
  %v11757 = vld [vmem:[%s41 + $0x58] sm:$0xf]
  %v11758 = vld [vmem:[%s41 + $0x5c] sm:$0xf]
  %v11759 = vld [vmem:[%s41 + $0x60] sm:$0xf]
  %v11760 = vld [vmem:[%s41 + $0x64] sm:$0xf]
  %v11761 = vld [vmem:[%s41 + $0x68] sm:$0xf]
  %v11762 = vld [vmem:[%s41 + $0x6c] sm:$0xf]
  %v11763 = vld [vmem:[%s41 + $0x70] sm:$0xf]
  %v11764 = vld [vmem:[%s41 + $0x74] sm:$0xf]
  %v11765 = vld [vmem:[%s41 + $0x78] sm:$0xf]
  %v11766 = vld [vmem:[%s41 + $0x7c] sm:$0xf]
  %v11767 = vld [vmem:[%s43] sm:$0xf]
  %v11768 = vld [vmem:[%s43 + $0x4] sm:$0xf]
  %v11769 = vld [vmem:[%s43 + $0x8] sm:$0xf]
  %v11770 = vld [vmem:[%s43 + $0xc] sm:$0xf]
  %v11771 = vld [vmem:[%s43 + $0x10] sm:$0xf]
  %v11772 = vld [vmem:[%s43 + $0x14] sm:$0xf]
  %v11773 = vld [vmem:[%s43 + $0x18] sm:$0xf]
  %v11774 = vld [vmem:[%s43 + $0x1c] sm:$0xf]
  %v11775 = vld [vmem:[%s43 + $0x20] sm:$0xf]
  %v11776 = vld [vmem:[%s43 + $0x24] sm:$0xf]
  %v11777 = vld [vmem:[%s43 + $0x28] sm:$0xf]
  %v11778 = vld [vmem:[%s43 + $0x2c] sm:$0xf]
  %v11779 = vld [vmem:[%s43 + $0x30] sm:$0xf]
  %v11780 = vld [vmem:[%s43 + $0x34] sm:$0xf]
  %v11781 = vld [vmem:[%s43 + $0x38] sm:$0xf]
  %v11782 = vld [vmem:[%s43 + $0x3c] sm:$0xf]
  %v11783 = vld [vmem:[%s43 + $0x40] sm:$0xf]
  %v11784 = vld [vmem:[%s43 + $0x44] sm:$0xf]
  %v11785 = vld [vmem:[%s43 + $0x48] sm:$0xf]
  %v11786 = vld [vmem:[%s43 + $0x4c] sm:$0xf]
  %v11787 = vld [vmem:[%s43 + $0x50] sm:$0xf]
  %v11788 = vld [vmem:[%s43 + $0x54] sm:$0xf]
  %v11789 = vld [vmem:[%s43 + $0x58] sm:$0xf]
  %v11790 = vld [vmem:[%s43 + $0x5c] sm:$0xf]
  %v11791 = vld [vmem:[%s43 + $0x60] sm:$0xf]
  %v11792 = vld [vmem:[%s43 + $0x64] sm:$0xf]
  %v11793 = vld [vmem:[%s43 + $0x68] sm:$0xf]
  %v11794 = vld [vmem:[%s43 + $0x6c] sm:$0xf]
  %v11795 = vld [vmem:[%s43 + $0x70] sm:$0xf]
  %v11796 = vld [vmem:[%s43 + $0x74] sm:$0xf]
  %v11797 = vld [vmem:[%s43 + $0x78] sm:$0xf]
  %v11798 = vld [vmem:[%s43 + $0x7c] sm:$0xf]
  %v11831 = vunpack.c.l.b16 %v11767
  %v11832 = vunpack.c.l.b16 %v11768
  %v11833 = vunpack.c.l.b16 %v11769
  %v11834 = vunpack.c.l.b16 %v11770
  %v11835 = vunpack.c.l.b16 %v11771
  %v11836 = vunpack.c.l.b16 %v11772
  %v11837 = vunpack.c.l.b16 %v11773
  %v11838 = vunpack.c.l.b16 %v11774
  %v11839 = vunpack.c.l.b16 %v11775
  %v11840 = vunpack.c.l.b16 %v11776
  %v11841 = vunpack.c.l.b16 %v11777
  %v11842 = vunpack.c.l.b16 %v11778
  %v11843 = vunpack.c.l.b16 %v11779
  %v11844 = vunpack.c.l.b16 %v11780
  %v11845 = vunpack.c.l.b16 %v11781
  %v11846 = vunpack.c.l.b16 %v11782
  %v11847 = vunpack.c.l.b16 %v11783
  %v11848 = vunpack.c.l.b16 %v11784
  %v11849 = vunpack.c.l.b16 %v11785
  %v11850 = vunpack.c.l.b16 %v11786
  %v11851 = vunpack.c.l.b16 %v11787
  %v11852 = vunpack.c.l.b16 %v11788
  %v11853 = vunpack.c.l.b16 %v11789
  %v11854 = vunpack.c.l.b16 %v11790
  %v11855 = vunpack.c.l.b16 %v11791
  %v11856 = vunpack.c.l.b16 %v11792
  %v11857 = vunpack.c.l.b16 %v11793
  %v11858 = vunpack.c.l.b16 %v11794
  %v11859 = vunpack.c.l.b16 %v11795
  %v11860 = vunpack.c.l.b16 %v11796
  %v11861 = vunpack.c.l.b16 %v11797
  %v11862 = vunpack.c.l.b16 %v11798
  %v11863 = vpack.c.b16 %v11832, %v11831
  %v11864 = vpack.c.b16 %v11834, %v11833
  %v11865 = vpack.c.b16 %v11836, %v11835
  %v11866 = vpack.c.b16 %v11838, %v11837
  %v11867 = vpack.c.b16 %v11840, %v11839
  %v11868 = vpack.c.b16 %v11842, %v11841
  %v11869 = vpack.c.b16 %v11844, %v11843
  %v11870 = vpack.c.b16 %v11846, %v11845
  %v11871 = vpack.c.b16 %v11848, %v11847
  %v11872 = vpack.c.b16 %v11850, %v11849
  %v11873 = vpack.c.b16 %v11852, %v11851
  %v11874 = vpack.c.b16 %v11854, %v11853
  %v11875 = vpack.c.b16 %v11856, %v11855
  %v11876 = vpack.c.b16 %v11858, %v11857
  %v11877 = vpack.c.b16 %v11860, %v11859
  %v11878 = vpack.c.b16 %v11862, %v11861
  %11895 = vmatprep.subr.bf16.mxu0 0
  %11896 = vmatpush1.bf16.msra.mxu0 %v11727
  %11897 = vmatprep.subr.bf16.mxu0 0
  %11898 = vmatpush1.bf16.msra.mxu0 %v11728
  %11899 = vmatprep.subr.bf16.mxu0 0
  %11900 = vmatpush1.bf16.msra.mxu0 %v11729
  %11901 = vmatprep.subr.bf16.mxu0 0
  %11902 = vmatpush1.bf16.msra.mxu0 %v11730
  %11903 = vmatprep.subr.bf16.mxu0 0
  %11904 = vmatpush1.bf16.msra.mxu0 %v11731
  %11905 = vmatprep.subr.bf16.mxu0 0
  %11906 = vmatpush1.bf16.msra.mxu0 %v11732
  %11907 = vmatprep.subr.bf16.mxu0 0
  %11908 = vmatpush1.bf16.msra.mxu0 %v11733
  %11909 = vmatprep.subr.bf16.mxu0 0
  %11910 = vmatpush1.bf16.msra.mxu0 %v11734
  %11911 = vmatprep.subr.bf16.mxu0 0
  %11912 = vmatpush1.bf16.msra.mxu0 0
  %11913 = vmatprep.subr.bf16.mxu0 0
  %11914 = vmatpush1.bf16.msra.mxu0 0
  %11915 = vmatprep.subr.bf16.mxu0 0
  %11916 = vmatpush1.bf16.msra.mxu0 0
  %11917 = vmatprep.subr.bf16.mxu0 0
  %11918 = vmatpush1.bf16.msra.mxu0 0
  %11919 = vmatprep.subr.bf16.mxu0 0
  %11920 = vmatpush1.bf16.msra.mxu0 0
  %11921 = vmatprep.subr.bf16.mxu0 0
  %11922 = vmatpush1.bf16.msra.mxu0 0
  %11923 = vmatprep.subr.bf16.mxu0 0
  %11924 = vmatpush1.bf16.msra.mxu0 0
  %11925 = vmatprep.subr.bf16.mxu0 0
  %11926 = vmatpush1.bf16.msra.mxu0 0
  %11927 = vmatprep.mubr.bf16.mxu0 0
  %11928 = vmatmul.mubr.bf16.gmra.mrb[0].mxu0 %v11863
  %v11929 = vpop.f32.mrb[0].mxu0
  %v11930 = vadd.f32 0.0, %v11929
  %v11931 = vpop.f32.mrb[0].mxu0
  %v11932 = vpop.f32.mrb[0].mxu0
  %v11933 = vadd.f32 0.0, %v11932
  %v11934 = vpop.f32.mrb[0].mxu0
  %11935 = vmatprep.mubr.bf16.mxu0 0
  %11936 = vmatmul.mubr.bf16.gmra.mrb[0].mxu0 %v11864
  %v11937 = vpop.f32.mrb[0].mxu0
  %v11938 = vadd.f32 0.0, %v11937
  %v11939 = vpop.f32.mrb[0].mxu0
  %v11940 = vpop.f32.mrb[0].mxu0
  %v11941 = vadd.f32 0.0, %v11940
  %v11942 = vpop.f32.mrb[0].mxu0
  %11943 = vmatprep.mubr.bf16.mxu0 0
  %11944 = vmatmul.mubr.bf16.gmra.mrb[0].mxu0 %v11865
  %v11945 = vpop.f32.mrb[0].mxu0
  %v11946 = vadd.f32 0.0, %v11945
  %v11947 = vpop.f32.mrb[0].mxu0
  %v11948 = vpop.f32.mrb[0].mxu0
  %v11949 = vadd.f32 0.0, %v11948
  %v11950 = vpop.f32.mrb[0].mxu0
  %11951 = vmatprep.mubr.bf16.mxu0 0
  %11952 = vmatmul.mubr.bf16.gmra.mrb[0].mxu0 %v11866
  %v11953 = vpop.f32.mrb[0].mxu0
  %v11954 = vadd.f32 0.0, %v11953
  %v11955 = vpop.f32.mrb[0].mxu0
  %v11956 = vpop.f32.mrb[0].mxu0
  %v11957 = vadd.f32 0.0, %v11956
  %v11958 = vpop.f32.mrb[0].mxu0
  %11959 = vmatprep.mubr.bf16.mxu0 0
  %11960 = vmatmul.mubr.bf16.gmra.mrb[0].mxu0 %v11867
  %v11961 = vpop.f32.mrb[0].mxu0
  %v11962 = vadd.f32 0.0, %v11961
  %v11963 = vpop.f32.mrb[0].mxu0
  %v11964 = vpop.f32.mrb[0].mxu0
  %v11965 = vadd.f32 0.0, %v11964
  %v11966 = vpop.f32.mrb[0].mxu0
  %11967 = vmatprep.mubr.bf16.mxu0 0
  %11968 = vmatmul.mubr.bf16.gmra.mrb[0].mxu0 %v11868
  %v11969 = vpop.f32.mrb[0].mxu0
  %v11970 = vadd.f32 0.0, %v11969
  %v11971 = vpop.f32.mrb[0].mxu0
  %v11972 = vpop.f32.mrb[0].mxu0
  %v11973 = vadd.f32 0.0, %v11972
  %v11974 = vpop.f32.mrb[0].mxu0
  %11975 = vmatprep.mubr.bf16.mxu0 0
  %11976 = vmatmul.mubr.bf16.gmra.mrb[0].mxu0 %v11869
  %v11977 = vpop.f32.mrb[0].mxu0
  %v11978 = vadd.f32 0.0, %v11977
  %v11979 = vpop.f32.mrb[0].mxu0
  %v11980 = vpop.f32.mrb[0].mxu0
  %v11981 = vadd.f32 0.0, %v11980
  %v11982 = vpop.f32.mrb[0].mxu0
  %11983 = vmatprep.mubr.bf16.mxu0 0
  %11984 = vmatmul.mubr.bf16.gmra.mrb[0].mxu0 %v11870
  %v11985 = vpop.f32.mrb[0].mxu0
  %v11986 = vadd.f32 0.0, %v11985
  %v11987 = vpop.f32.mrb[0].mxu0
  %v11988 = vpop.f32.mrb[0].mxu0
  %v11989 = vadd.f32 0.0, %v11988
  %v11990 = vpop.f32.mrb[0].mxu0
  %11991 = vmatprep.mubr.bf16.mxu0 0
  %11992 = vmatmul.mubr.bf16.gmra.mrb[0].mxu0 %v11871
  %v11993 = vpop.f32.mrb[0].mxu0
  %v11994 = vadd.f32 0.0, %v11993
  %v11995 = vpop.f32.mrb[0].mxu0
  %v11996 = vpop.f32.mrb[0].mxu0
  %v11997 = vadd.f32 0.0, %v11996
  %v11998 = vpop.f32.mrb[0].mxu0
  %11999 = vmatprep.mubr.bf16.mxu0 0
  %12000 = vmatmul.mubr.bf16.gmra.mrb[0].mxu0 %v11872
  %v12001 = vpop.f32.mrb[0].mxu0
  %v12002 = vadd.f32 0.0, %v12001
  %v12003 = vpop.f32.mrb[0].mxu0
  %v12004 = vpop.f32.mrb[0].mxu0
  %v12005 = vadd.f32 0.0, %v12004
  %v12006 = vpop.f32.mrb[0].mxu0
  %12007 = vmatprep.mubr.bf16.mxu0 0
  %12008 = vmatmul.mubr.bf16.gmra.mrb[0].mxu0 %v11873
  %v12009 = vpop.f32.mrb[0].mxu0
  %v12010 = vadd.f32 0.0, %v12009
  %v12011 = vpop.f32.mrb[0].mxu0
  %v12012 = vpop.f32.mrb[0].mxu0
  %v12013 = vadd.f32 0.0, %v12012
  %v12014 = vpop.f32.mrb[0].mxu0
  %12015 = vmatprep.mubr.bf16.mxu0 0
  %12016 = vmatmul.mubr.bf16.gmra.mrb[0].mxu0 %v11874
  %v12017 = vpop.f32.mrb[0].mxu0
  %v12018 = vadd.f32 0.0, %v12017
  %v12019 = vpop.f32.mrb[0].mxu0
  %v12020 = vpop.f32.mrb[0].mxu0
  %v12021 = vadd.f32 0.0, %v12020
  %v12022 = vpop.f32.mrb[0].mxu0
  %12023 = vmatprep.mubr.bf16.mxu0 0
  %12024 = vmatmul.mubr.bf16.gmra.mrb[0].mxu0 %v11875
  %v12025 = vpop.f32.mrb[0].mxu0
  %v12026 = vadd.f32 0.0, %v12025
  %v12027 = vpop.f32.mrb[0].mxu0
  %v12028 = vpop.f32.mrb[0].mxu0
  %v12029 = vadd.f32 0.0, %v12028
  %v12030 = vpop.f32.mrb[0].mxu0
  %12031 = vmatprep.mubr.bf16.mxu0 0
  %12032 = vmatmul.mubr.bf16.gmra.mrb[0].mxu0 %v11876
  %v12033 = vpop.f32.mrb[0].mxu0
  %v12034 = vadd.f32 0.0, %v12033
  %v12035 = vpop.f32.mrb[0].mxu0
  %v12036 = vpop.f32.mrb[0].mxu0
  %v12037 = vadd.f32 0.0, %v12036
  %v12038 = vpop.f32.mrb[0].mxu0
  %12039 = vmatprep.mubr.bf16.mxu0 0
  %12040 = vmatmul.mubr.bf16.gmra.mrb[0].mxu0 %v11877
  %v12041 = vpop.f32.mrb[0].mxu0
  %v12042 = vadd.f32 0.0, %v12041
  %v12043 = vpop.f32.mrb[0].mxu0
  %v12044 = vpop.f32.mrb[0].mxu0
  %v12045 = vadd.f32 0.0, %v12044
  %v12046 = vpop.f32.mrb[0].mxu0
  %12047 = vmatprep.mubr.bf16.mxu0 0
  %12048 = vmatmul.mubr.bf16.gmra.mrb[0].mxu0 %v11878
  %v12049 = vpop.f32.mrb[0].mxu0
  %v12050 = vadd.f32 0.0, %v12049
  %v12051 = vpop.f32.mrb[0].mxu0
  %v12052 = vpop.f32.mrb[0].mxu0
  %v12053 = vadd.f32 0.0, %v12052
  %v12054 = vpop.f32.mrb[0].mxu0
  %12055 = vdwg.mxu0
  %12056 = vrot.lane.b32.xlu0 %v11930, 1
  %v12057 = vpop.permute.xlu0 %12056
  %12058 = vrot.lane.b32.xlu0 %v11933, 1
  %v12059 = vpop.permute.xlu0 %12058
  %12060 = vrot.lane.b32.xlu0 %v11938, 1
  %v12061 = vpop.permute.xlu0 %12060
  %12062 = vrot.lane.b32.xlu0 %v11941, 1
  %v12063 = vpop.permute.xlu0 %12062
  %12064 = vrot.lane.b32.xlu0 %v11946, 1
  %v12065 = vpop.permute.xlu0 %12064
  %12066 = vrot.lane.b32.xlu0 %v11949, 1
  %v12067 = vpop.permute.xlu0 %12066
  %12068 = vrot.lane.b32.xlu0 %v11954, 1
  %v12069 = vpop.permute.xlu0 %12068
  %12070 = vrot.lane.b32.xlu0 %v11957, 1
  %v12071 = vpop.permute.xlu0 %12070
  %12072 = vrot.lane.b32.xlu0 %v11962, 1
  %v12073 = vpop.permute.xlu0 %12072
  %12074 = vrot.lane.b32.xlu0 %v11965, 1
  %v12075 = vpop.permute.xlu0 %12074
  %12076 = vrot.lane.b32.xlu0 %v11970, 1
  %v12077 = vpop.permute.xlu0 %12076
  %12078 = vrot.lane.b32.xlu0 %v11973, 1
  %v12079 = vpop.permute.xlu0 %12078
  %12080 = vrot.lane.b32.xlu0 %v11978, 1
  %v12081 = vpop.permute.xlu0 %12080
  %12082 = vrot.lane.b32.xlu0 %v11981, 1
  %v12083 = vpop.permute.xlu0 %12082
  %12084 = vrot.lane.b32.xlu0 %v11986, 1
  %v12085 = vpop.permute.xlu0 %12084
  %12086 = vrot.lane.b32.xlu0 %v11989, 1
  %v12087 = vpop.permute.xlu0 %12086
  %12088 = vrot.lane.b32.xlu0 %v11994, 1
  %v12089 = vpop.permute.xlu0 %12088
  %12090 = vrot.lane.b32.xlu0 %v11997, 1
  %v12091 = vpop.permute.xlu0 %12090
  %12092 = vrot.lane.b32.xlu0 %v12002, 1
  %v12093 = vpop.permute.xlu0 %12092
  %12094 = vrot.lane.b32.xlu0 %v12005, 1
  %v12095 = vpop.permute.xlu0 %12094
  %12096 = vrot.lane.b32.xlu0 %v12010, 1
  %v12097 = vpop.permute.xlu0 %12096
  %12098 = vrot.lane.b32.xlu0 %v12013, 1
  %v12099 = vpop.permute.xlu0 %12098
  %12100 = vrot.lane.b32.xlu0 %v12018, 1
  %v12101 = vpop.permute.xlu0 %12100
  %12102 = vrot.lane.b32.xlu0 %v12021, 1
  %v12103 = vpop.permute.xlu0 %12102
  %12104 = vrot.lane.b32.xlu0 %v12026, 1
  %v12105 = vpop.permute.xlu0 %12104
  %12106 = vrot.lane.b32.xlu0 %v12029, 1
  %v12107 = vpop.permute.xlu0 %12106
  %12108 = vrot.lane.b32.xlu0 %v12034, 1
  %v12109 = vpop.permute.xlu0 %12108
  %12110 = vrot.lane.b32.xlu0 %v12037, 1
  %v12111 = vpop.permute.xlu0 %12110
  %12112 = vrot.lane.b32.xlu0 %v12042, 1
  %v12113 = vpop.permute.xlu0 %12112
  %12114 = vrot.lane.b32.xlu0 %v12045, 1
  %v12115 = vpop.permute.xlu0 %12114
  %12116 = vrot.lane.b32.xlu0 %v12050, 1
  %v12117 = vpop.permute.xlu0 %12116
  %12118 = vrot.lane.b32.xlu0 %v12053, 1
  %v12119 = vpop.permute.xlu0 %12118
  %v12152 = vunpack.c.l.b16 %v11735
  %v12153 = vunpack.c.l.b16 %v11736
  %v12154 = vunpack.c.l.b16 %v11737
  %v12155 = vunpack.c.l.b16 %v11738
  %v12156 = vunpack.c.l.b16 %v11739
  %v12157 = vunpack.c.l.b16 %v11740
  %v12158 = vunpack.c.l.b16 %v11741
  %v12159 = vunpack.c.l.b16 %v11742
  %v12160 = vunpack.c.l.b16 %v11743
  %v12161 = vunpack.c.l.b16 %v11744
  %v12162 = vunpack.c.l.b16 %v11745
  %v12163 = vunpack.c.l.b16 %v11746
  %v12164 = vunpack.c.l.b16 %v11747
  %v12165 = vunpack.c.l.b16 %v11748
  %v12166 = vunpack.c.l.b16 %v11749
  %v12167 = vunpack.c.l.b16 %v11750
  %v12168 = vunpack.c.l.b16 %v11751
  %v12169 = vunpack.c.l.b16 %v11752
  %v12170 = vunpack.c.l.b16 %v11753
  %v12171 = vunpack.c.l.b16 %v11754
  %v12172 = vunpack.c.l.b16 %v11755
  %v12173 = vunpack.c.l.b16 %v11756
  %v12174 = vunpack.c.l.b16 %v11757
  %v12175 = vunpack.c.l.b16 %v11758
  %v12176 = vunpack.c.l.b16 %v11759
  %v12177 = vunpack.c.l.b16 %v11760
  %v12178 = vunpack.c.l.b16 %v11761
  %v12179 = vunpack.c.l.b16 %v11762
  %v12180 = vunpack.c.l.b16 %v11763
  %v12181 = vunpack.c.l.b16 %v11764
  %v12182 = vunpack.c.l.b16 %v11765
  %v12183 = vunpack.c.l.b16 %v11766
  %v12184 = vpack.c.b16 %v12153, %v12152
  %v12185 = vpack.c.b16 %v12155, %v12154
  %v12186 = vpack.c.b16 %v12157, %v12156
  %v12187 = vpack.c.b16 %v12159, %v12158
  %v12188 = vpack.c.b16 %v12161, %v12160
  %v12189 = vpack.c.b16 %v12163, %v12162
  %v12190 = vpack.c.b16 %v12165, %v12164
  %v12191 = vpack.c.b16 %v12167, %v12166
  %v12192 = vpack.c.b16 %v12169, %v12168
  %v12193 = vpack.c.b16 %v12171, %v12170
  %v12194 = vpack.c.b16 %v12173, %v12172
  %v12195 = vpack.c.b16 %v12175, %v12174
  %v12196 = vpack.c.b16 %v12177, %v12176
  %v12197 = vpack.c.b16 %v12179, %v12178
  %v12198 = vpack.c.b16 %v12181, %v12180
  %v12199 = vpack.c.b16 %v12183, %v12182
  %12216 = vmatprep.subr.bf16.mxu0 0
  %12217 = vmatpush1.bf16.msra.mxu0 %v11727
  %12218 = vmatprep.subr.bf16.mxu0 0
  %12219 = vmatpush1.bf16.msra.mxu0 %v11728
  %12220 = vmatprep.subr.bf16.mxu0 0
  %12221 = vmatpush1.bf16.msra.mxu0 %v11729
  %12222 = vmatprep.subr.bf16.mxu0 0
  %12223 = vmatpush1.bf16.msra.mxu0 %v11730
  %12224 = vmatprep.subr.bf16.mxu0 0
  %12225 = vmatpush1.bf16.msra.mxu0 %v11731
  %12226 = vmatprep.subr.bf16.mxu0 0
  %12227 = vmatpush1.bf16.msra.mxu0 %v11732
  %12228 = vmatprep.subr.bf16.mxu0 0
  %12229 = vmatpush1.bf16.msra.mxu0 %v11733
  %12230 = vmatprep.subr.bf16.mxu0 0
  %12231 = vmatpush1.bf16.msra.mxu0 %v11734
  %12232 = vmatprep.subr.bf16.mxu0 0
  %12233 = vmatpush1.bf16.msra.mxu0 0
  %12234 = vmatprep.subr.bf16.mxu0 0
  %12235 = vmatpush1.bf16.msra.mxu0 0
  %12236 = vmatprep.subr.bf16.mxu0 0
  %12237 = vmatpush1.bf16.msra.mxu0 0
  %12238 = vmatprep.subr.bf16.mxu0 0
  %12239 = vmatpush1.bf16.msra.mxu0 0
  %12240 = vmatprep.subr.bf16.mxu0 0
  %12241 = vmatpush1.bf16.msra.mxu0 0
  %12242 = vmatprep.subr.bf16.mxu0 0
  %12243 = vmatpush1.bf16.msra.mxu0 0
  %12244 = vmatprep.subr.bf16.mxu0 0
  %12245 = vmatpush1.bf16.msra.mxu0 0
  %12246 = vmatprep.subr.bf16.mxu0 0
  %12247 = vmatpush1.bf16.msra.mxu0 0
  %12248 = vmatprep.mubr.bf16.mxu0 0
  %12249 = vmatmul.mubr.bf16.gmra.mrb[0].mxu0 %v12184
  %v12250 = vpop.f32.mrb[0].mxu0
  %v12251 = vadd.f32 %v12057, %v12250
  %v12252 = vpop.f32.mrb[0].mxu0
  %v12253 = vpop.f32.mrb[0].mxu0
  %v12254 = vadd.f32 %v12059, %v12253
  %v12255 = vpop.f32.mrb[0].mxu0
  %12256 = vmatprep.mubr.bf16.mxu0 0
  %12257 = vmatmul.mubr.bf16.gmra.mrb[0].mxu0 %v12185
  %v12258 = vpop.f32.mrb[0].mxu0
  %v12259 = vadd.f32 %v12061, %v12258
  %v12260 = vpop.f32.mrb[0].mxu0
  %v12261 = vpop.f32.mrb[0].mxu0
  %v12262 = vadd.f32 %v12063, %v12261
  %v12263 = vpop.f32.mrb[0].mxu0
  %12264 = vmatprep.mubr.bf16.mxu0 0
  %12265 = vmatmul.mubr.bf16.gmra.mrb[0].mxu0 %v12186
  %v12266 = vpop.f32.mrb[0].mxu0
  %v12267 = vadd.f32 %v12065, %v12266
  %v12268 = vpop.f32.mrb[0].mxu0
  %v12269 = vpop.f32.mrb[0].mxu0
  %v12270 = vadd.f32 %v12067, %v12269
  %v12271 = vpop.f32.mrb[0].mxu0
  %12272 = vmatprep.mubr.bf16.mxu0 0
  %12273 = vmatmul.mubr.bf16.gmra.mrb[0].mxu0 %v12187
  %v12274 = vpop.f32.mrb[0].mxu0
  %v12275 = vadd.f32 %v12069, %v12274
  %v12276 = vpop.f32.mrb[0].mxu0
  %v12277 = vpop.f32.mrb[0].mxu0
  %v12278 = vadd.f32 %v12071, %v12277
  %v12279 = vpop.f32.mrb[0].mxu0
  %12280 = vmatprep.mubr.bf16.mxu0 0
  %12281 = vmatmul.mubr.bf16.gmra.mrb[0].mxu0 %v12188
  %v12282 = vpop.f32.mrb[0].mxu0
  %v12283 = vadd.f32 %v12073, %v12282
  %v12284 = vpop.f32.mrb[0].mxu0
  %v12285 = vpop.f32.mrb[0].mxu0
  %v12286 = vadd.f32 %v12075, %v12285
  %v12287 = vpop.f32.mrb[0].mxu0
  %12288 = vmatprep.mubr.bf16.mxu0 0
  %12289 = vmatmul.mubr.bf16.gmra.mrb[0].mxu0 %v12189
  %v12290 = vpop.f32.mrb[0].mxu0
  %v12291 = vadd.f32 %v12077, %v12290
  %v12292 = vpop.f32.mrb[0].mxu0
  %v12293 = vpop.f32.mrb[0].mxu0
  %v12294 = vadd.f32 %v12079, %v12293
  %v12295 = vpop.f32.mrb[0].mxu0
  %12296 = vmatprep.mubr.bf16.mxu0 0
  %12297 = vmatmul.mubr.bf16.gmra.mrb[0].mxu0 %v12190
  %v12298 = vpop.f32.mrb[0].mxu0
  %v12299 = vadd.f32 %v12081, %v12298
  %v12300 = vpop.f32.mrb[0].mxu0
  %v12301 = vpop.f32.mrb[0].mxu0
  %v12302 = vadd.f32 %v12083, %v12301
  %v12303 = vpop.f32.mrb[0].mxu0
  %12304 = vmatprep.mubr.bf16.mxu0 0
  %12305 = vmatmul.mubr.bf16.gmra.mrb[0].mxu0 %v12191
  %v12306 = vpop.f32.mrb[0].mxu0
  %v12307 = vadd.f32 %v12085, %v12306
  %v12308 = vpop.f32.mrb[0].mxu0
  %v12309 = vpop.f32.mrb[0].mxu0
  %v12310 = vadd.f32 %v12087, %v12309
  %v12311 = vpop.f32.mrb[0].mxu0
  %12312 = vmatprep.mubr.bf16.mxu0 0
  %12313 = vmatmul.mubr.bf16.gmra.mrb[0].mxu0 %v12192
  %v12314 = vpop.f32.mrb[0].mxu0
  %v12315 = vadd.f32 %v12089, %v12314
  %v12316 = vpop.f32.mrb[0].mxu0
  %v12317 = vpop.f32.mrb[0].mxu0
  %v12318 = vadd.f32 %v12091, %v12317
  %v12319 = vpop.f32.mrb[0].mxu0
  %12320 = vmatprep.mubr.bf16.mxu0 0
  %12321 = vmatmul.mubr.bf16.gmra.mrb[0].mxu0 %v12193
  %v12322 = vpop.f32.mrb[0].mxu0
  %v12323 = vadd.f32 %v12093, %v12322
  %v12324 = vpop.f32.mrb[0].mxu0
  %v12325 = vpop.f32.mrb[0].mxu0
  %v12326 = vadd.f32 %v12095, %v12325
  %v12327 = vpop.f32.mrb[0].mxu0
  %12328 = vmatprep.mubr.bf16.mxu0 0
  %12329 = vmatmul.mubr.bf16.gmra.mrb[0].mxu0 %v12194
  %v12330 = vpop.f32.mrb[0].mxu0
  %v12331 = vadd.f32 %v12097, %v12330
  %v12332 = vpop.f32.mrb[0].mxu0
  %v12333 = vpop.f32.mrb[0].mxu0
  %v12334 = vadd.f32 %v12099, %v12333
  %v12335 = vpop.f32.mrb[0].mxu0
  %12336 = vmatprep.mubr.bf16.mxu0 0
  %12337 = vmatmul.mubr.bf16.gmra.mrb[0].mxu0 %v12195
  %v12338 = vpop.f32.mrb[0].mxu0
  %v12339 = vadd.f32 %v12101, %v12338
  %v12340 = vpop.f32.mrb[0].mxu0
  %v12341 = vpop.f32.mrb[0].mxu0
  %v12342 = vadd.f32 %v12103, %v12341
  %v12343 = vpop.f32.mrb[0].mxu0
  %12344 = vmatprep.mubr.bf16.mxu0 0
  %12345 = vmatmul.mubr.bf16.gmra.mrb[0].mxu0 %v12196
  %v12346 = vpop.f32.mrb[0].mxu0
  %v12347 = vadd.f32 %v12105, %v12346
  %v12348 = vpop.f32.mrb[0].mxu0
  %v12349 = vpop.f32.mrb[0].mxu0
  %v12350 = vadd.f32 %v12107, %v12349
  %v12351 = vpop.f32.mrb[0].mxu0
  %12352 = vmatprep.mubr.bf16.mxu0 0
  %12353 = vmatmul.mubr.bf16.gmra.mrb[0].mxu0 %v12197
  %v12354 = vpop.f32.mrb[0].mxu0
  %v12355 = vadd.f32 %v12109, %v12354
  %v12356 = vpop.f32.mrb[0].mxu0
  %v12357 = vpop.f32.mrb[0].mxu0
  %v12358 = vadd.f32 %v12111, %v12357
  %v12359 = vpop.f32.mrb[0].mxu0
  %12360 = vmatprep.mubr.bf16.mxu0 0
  %12361 = vmatmul.mubr.bf16.gmra.mrb[0].mxu0 %v12198
  %v12362 = vpop.f32.mrb[0].mxu0
  %v12363 = vadd.f32 %v12113, %v12362
  %v12364 = vpop.f32.mrb[0].mxu0
  %v12365 = vpop.f32.mrb[0].mxu0
  %v12366 = vadd.f32 %v12115, %v12365
  %v12367 = vpop.f32.mrb[0].mxu0
  %12368 = vmatprep.mubr.bf16.mxu0 0
  %12369 = vmatmul.mubr.bf16.gmra.mrb[0].mxu0 %v12199
  %v12370 = vpop.f32.mrb[0].mxu0
  %v12371 = vadd.f32 %v12117, %v12370
  %v12372 = vpop.f32.mrb[0].mxu0
  %v12373 = vpop.f32.mrb[0].mxu0
  %v12374 = vadd.f32 %v12119, %v12373
  %v12375 = vpop.f32.mrb[0].mxu0
  %12376 = vdwg.mxu0
  %v12377 = vld [vmem:[%s45] sm:$0xf]
  %v12378 = vld [vmem:[%s45 + $0x4] sm:$0xf]
  %v12379 = vld [vmem:[%s45 + $0x8] sm:$0xf]
  %v12380 = vld [vmem:[%s45 + $0xc] sm:$0xf]
  %v12381 = vld [vmem:[%s45 + $0x10] sm:$0xf]
  %v12382 = vld [vmem:[%s45 + $0x14] sm:$0xf]
  %v12383 = vld [vmem:[%s45 + $0x18] sm:$0xf]
  %v12384 = vld [vmem:[%s45 + $0x1c] sm:$0xf]
  %v12385 = vld [vmem:[%s45 + $0x20] sm:$0xf]
  %v12386 = vld [vmem:[%s45 + $0x24] sm:$0xf]
  %v12387 = vld [vmem:[%s45 + $0x28] sm:$0xf]
  %v12388 = vld [vmem:[%s45 + $0x2c] sm:$0xf]
  %v12389 = vld [vmem:[%s45 + $0x30] sm:$0xf]
  %v12390 = vld [vmem:[%s45 + $0x34] sm:$0xf]
  %v12391 = vld [vmem:[%s45 + $0x38] sm:$0xf]
  %v12392 = vld [vmem:[%s45 + $0x3c] sm:$0xf]
  %v12393 = vld [vmem:[%s45 + $0x40] sm:$0xf]
  %v12394 = vld [vmem:[%s45 + $0x44] sm:$0xf]
  %v12395 = vld [vmem:[%s45 + $0x48] sm:$0xf]
  %v12396 = vld [vmem:[%s45 + $0x4c] sm:$0xf]
  %v12397 = vld [vmem:[%s45 + $0x50] sm:$0xf]
  %v12398 = vld [vmem:[%s45 + $0x54] sm:$0xf]
  %v12399 = vld [vmem:[%s45 + $0x58] sm:$0xf]
  %v12400 = vld [vmem:[%s45 + $0x5c] sm:$0xf]
  %v12401 = vld [vmem:[%s45 + $0x60] sm:$0xf]
  %v12402 = vld [vmem:[%s45 + $0x64] sm:$0xf]
  %v12403 = vld [vmem:[%s45 + $0x68] sm:$0xf]
  %v12404 = vld [vmem:[%s45 + $0x6c] sm:$0xf]
  %v12405 = vld [vmem:[%s45 + $0x70] sm:$0xf]
  %v12406 = vld [vmem:[%s45 + $0x74] sm:$0xf]
  %v12407 = vld [vmem:[%s45 + $0x78] sm:$0xf]
  %v12408 = vld [vmem:[%s45 + $0x7c] sm:$0xf]
  %v12441 = vunpack.c.l.b16 %v12377
  %v12442 = vunpack.c.l.b16 %v12378
  %v12443 = vunpack.c.l.b16 %v12379
  %v12444 = vunpack.c.l.b16 %v12380
  %v12445 = vunpack.c.l.b16 %v12381
  %v12446 = vunpack.c.l.b16 %v12382
  %v12447 = vunpack.c.l.b16 %v12383
  %v12448 = vunpack.c.l.b16 %v12384
  %v12449 = vunpack.c.l.b16 %v12385
  %v12450 = vunpack.c.l.b16 %v12386
  %v12451 = vunpack.c.l.b16 %v12387
  %v12452 = vunpack.c.l.b16 %v12388
  %v12453 = vunpack.c.l.b16 %v12389
  %v12454 = vunpack.c.l.b16 %v12390
  %v12455 = vunpack.c.l.b16 %v12391
  %v12456 = vunpack.c.l.b16 %v12392
  %v12457 = vunpack.c.l.b16 %v12393
  %v12458 = vunpack.c.l.b16 %v12394
  %v12459 = vunpack.c.l.b16 %v12395
  %v12460 = vunpack.c.l.b16 %v12396
  %v12461 = vunpack.c.l.b16 %v12397
  %v12462 = vunpack.c.l.b16 %v12398
  %v12463 = vunpack.c.l.b16 %v12399
  %v12464 = vunpack.c.l.b16 %v12400
  %v12465 = vunpack.c.l.b16 %v12401
  %v12466 = vunpack.c.l.b16 %v12402
  %v12467 = vunpack.c.l.b16 %v12403
  %v12468 = vunpack.c.l.b16 %v12404
  %v12469 = vunpack.c.l.b16 %v12405
  %v12470 = vunpack.c.l.b16 %v12406
  %v12471 = vunpack.c.l.b16 %v12407
  %v12472 = vunpack.c.l.b16 %v12408
  %v12473 = vpack.c.b16 %v12442, %v12441
  %v12474 = vpack.c.b16 %v12444, %v12443
  %v12475 = vpack.c.b16 %v12446, %v12445
  %v12476 = vpack.c.b16 %v12448, %v12447
  %v12477 = vpack.c.b16 %v12450, %v12449
  %v12478 = vpack.c.b16 %v12452, %v12451
  %v12479 = vpack.c.b16 %v12454, %v12453
  %v12480 = vpack.c.b16 %v12456, %v12455
  %v12481 = vpack.c.b16 %v12458, %v12457
  %v12482 = vpack.c.b16 %v12460, %v12459
  %v12483 = vpack.c.b16 %v12462, %v12461
  %v12484 = vpack.c.b16 %v12464, %v12463
  %v12485 = vpack.c.b16 %v12466, %v12465
  %v12486 = vpack.c.b16 %v12468, %v12467
  %v12487 = vpack.c.b16 %v12470, %v12469
  %v12488 = vpack.c.b16 %v12472, %v12471
  %12505 = vmatprep.subr.bf16.mxu0 0
  %12506 = vmatpush1.bf16.msra.mxu0 %v11727
  %12507 = vmatprep.subr.bf16.mxu0 0
  %12508 = vmatpush1.bf16.msra.mxu0 %v11728
  %12509 = vmatprep.subr.bf16.mxu0 0
  %12510 = vmatpush1.bf16.msra.mxu0 %v11729
  %12511 = vmatprep.subr.bf16.mxu0 0
  %12512 = vmatpush1.bf16.msra.mxu0 %v11730
  %12513 = vmatprep.subr.bf16.mxu0 0
  %12514 = vmatpush1.bf16.msra.mxu0 %v11731
  %12515 = vmatprep.subr.bf16.mxu0 0
  %12516 = vmatpush1.bf16.msra.mxu0 %v11732
  %12517 = vmatprep.subr.bf16.mxu0 0
  %12518 = vmatpush1.bf16.msra.mxu0 %v11733
  %12519 = vmatprep.subr.bf16.mxu0 0
  %12520 = vmatpush1.bf16.msra.mxu0 %v11734
  %12521 = vmatprep.subr.bf16.mxu0 0
  %12522 = vmatpush1.bf16.msra.mxu0 0
  %12523 = vmatprep.subr.bf16.mxu0 0
  %12524 = vmatpush1.bf16.msra.mxu0 0
  %12525 = vmatprep.subr.bf16.mxu0 0
  %12526 = vmatpush1.bf16.msra.mxu0 0
  %12527 = vmatprep.subr.bf16.mxu0 0
  %12528 = vmatpush1.bf16.msra.mxu0 0
  %12529 = vmatprep.subr.bf16.mxu0 0
  %12530 = vmatpush1.bf16.msra.mxu0 0
  %12531 = vmatprep.subr.bf16.mxu0 0
  %12532 = vmatpush1.bf16.msra.mxu0 0
  %12533 = vmatprep.subr.bf16.mxu0 0
  %12534 = vmatpush1.bf16.msra.mxu0 0
  %12535 = vmatprep.subr.bf16.mxu0 0
  %12536 = vmatpush1.bf16.msra.mxu0 0
  %12537 = vmatprep.mubr.bf16.mxu0 0
  %12538 = vmatmul.mubr.bf16.gmra.mrb[0].mxu0 %v12473
  %v12539 = vpop.f32.mrb[0].mxu0
  %v12540 = vadd.f32 0.0, %v12539
  %v12541 = vpop.f32.mrb[0].mxu0
  %v12542 = vpop.f32.mrb[0].mxu0
  %v12543 = vadd.f32 0.0, %v12542
  %v12544 = vpop.f32.mrb[0].mxu0
  %12545 = vmatprep.mubr.bf16.mxu0 0
  %12546 = vmatmul.mubr.bf16.gmra.mrb[0].mxu0 %v12474
  %v12547 = vpop.f32.mrb[0].mxu0
  %v12548 = vadd.f32 0.0, %v12547
  %v12549 = vpop.f32.mrb[0].mxu0
  %v12550 = vpop.f32.mrb[0].mxu0
  %v12551 = vadd.f32 0.0, %v12550
  %v12552 = vpop.f32.mrb[0].mxu0
  %12553 = vmatprep.mubr.bf16.mxu0 0
  %12554 = vmatmul.mubr.bf16.gmra.mrb[0].mxu0 %v12475
  %v12555 = vpop.f32.mrb[0].mxu0
  %v12556 = vadd.f32 0.0, %v12555
  %v12557 = vpop.f32.mrb[0].mxu0
  %v12558 = vpop.f32.mrb[0].mxu0
  %v12559 = vadd.f32 0.0, %v12558
  %v12560 = vpop.f32.mrb[0].mxu0
  %12561 = vmatprep.mubr.bf16.mxu0 0
  %12562 = vmatmul.mubr.bf16.gmra.mrb[0].mxu0 %v12476
  %v12563 = vpop.f32.mrb[0].mxu0
  %v12564 = vadd.f32 0.0, %v12563
  %v12565 = vpop.f32.mrb[0].mxu0
  %v12566 = vpop.f32.mrb[0].mxu0
  %v12567 = vadd.f32 0.0, %v12566
  %v12568 = vpop.f32.mrb[0].mxu0
  %12569 = vmatprep.mubr.bf16.mxu0 0
  %12570 = vmatmul.mubr.bf16.gmra.mrb[0].mxu0 %v12477
  %v12571 = vpop.f32.mrb[0].mxu0
  %v12572 = vadd.f32 0.0, %v12571
  %v12573 = vpop.f32.mrb[0].mxu0
  %v12574 = vpop.f32.mrb[0].mxu0
  %v12575 = vadd.f32 0.0, %v12574
  %v12576 = vpop.f32.mrb[0].mxu0
  %12577 = vmatprep.mubr.bf16.mxu0 0
  %12578 = vmatmul.mubr.bf16.gmra.mrb[0].mxu0 %v12478
  %v12579 = vpop.f32.mrb[0].mxu0
  %v12580 = vadd.f32 0.0, %v12579
  %v12581 = vpop.f32.mrb[0].mxu0
  %v12582 = vpop.f32.mrb[0].mxu0
  %v12583 = vadd.f32 0.0, %v12582
  %v12584 = vpop.f32.mrb[0].mxu0
  %12585 = vmatprep.mubr.bf16.mxu0 0
  %12586 = vmatmul.mubr.bf16.gmra.mrb[0].mxu0 %v12479
  %v12587 = vpop.f32.mrb[0].mxu0
  %v12588 = vadd.f32 0.0, %v12587
  %v12589 = vpop.f32.mrb[0].mxu0
  %v12590 = vpop.f32.mrb[0].mxu0
  %v12591 = vadd.f32 0.0, %v12590
  %v12592 = vpop.f32.mrb[0].mxu0
  %12593 = vmatprep.mubr.bf16.mxu0 0
  %12594 = vmatmul.mubr.bf16.gmra.mrb[0].mxu0 %v12480
  %v12595 = vpop.f32.mrb[0].mxu0
  %v12596 = vadd.f32 0.0, %v12595
  %v12597 = vpop.f32.mrb[0].mxu0
  %v12598 = vpop.f32.mrb[0].mxu0
  %v12599 = vadd.f32 0.0, %v12598
  %v12600 = vpop.f32.mrb[0].mxu0
  %12601 = vmatprep.mubr.bf16.mxu0 0
  %12602 = vmatmul.mubr.bf16.gmra.mrb[0].mxu0 %v12481
  %v12603 = vpop.f32.mrb[0].mxu0
  %v12604 = vadd.f32 0.0, %v12603
  %v12605 = vpop.f32.mrb[0].mxu0
  %v12606 = vpop.f32.mrb[0].mxu0
  %v12607 = vadd.f32 0.0, %v12606
  %v12608 = vpop.f32.mrb[0].mxu0
  %12609 = vmatprep.mubr.bf16.mxu0 0
  %12610 = vmatmul.mubr.bf16.gmra.mrb[0].mxu0 %v12482
  %v12611 = vpop.f32.mrb[0].mxu0
  %v12612 = vadd.f32 0.0, %v12611
  %v12613 = vpop.f32.mrb[0].mxu0
  %v12614 = vpop.f32.mrb[0].mxu0
  %v12615 = vadd.f32 0.0, %v12614
  %v12616 = vpop.f32.mrb[0].mxu0
  %12617 = vmatprep.mubr.bf16.mxu0 0
  %12618 = vmatmul.mubr.bf16.gmra.mrb[0].mxu0 %v12483
  %v12619 = vpop.f32.mrb[0].mxu0
  %v12620 = vadd.f32 0.0, %v12619
  %v12621 = vpop.f32.mrb[0].mxu0
  %v12622 = vpop.f32.mrb[0].mxu0
  %v12623 = vadd.f32 0.0, %v12622
  %v12624 = vpop.f32.mrb[0].mxu0
  %12625 = vmatprep.mubr.bf16.mxu0 0
  %12626 = vmatmul.mubr.bf16.gmra.mrb[0].mxu0 %v12484
  %v12627 = vpop.f32.mrb[0].mxu0
  %v12628 = vadd.f32 0.0, %v12627
  %v12629 = vpop.f32.mrb[0].mxu0
  %v12630 = vpop.f32.mrb[0].mxu0
  %v12631 = vadd.f32 0.0, %v12630
  %v12632 = vpop.f32.mrb[0].mxu0
  %12633 = vmatprep.mubr.bf16.mxu0 0
  %12634 = vmatmul.mubr.bf16.gmra.mrb[0].mxu0 %v12485
  %v12635 = vpop.f32.mrb[0].mxu0
  %v12636 = vadd.f32 0.0, %v12635
  %v12637 = vpop.f32.mrb[0].mxu0
  %v12638 = vpop.f32.mrb[0].mxu0
  %v12639 = vadd.f32 0.0, %v12638
  %v12640 = vpop.f32.mrb[0].mxu0
  %12641 = vmatprep.mubr.bf16.mxu0 0
  %12642 = vmatmul.mubr.bf16.gmra.mrb[0].mxu0 %v12486
  %v12643 = vpop.f32.mrb[0].mxu0
  %v12644 = vadd.f32 0.0, %v12643
  %v12645 = vpop.f32.mrb[0].mxu0
  %v12646 = vpop.f32.mrb[0].mxu0
  %v12647 = vadd.f32 0.0, %v12646
  %v12648 = vpop.f32.mrb[0].mxu0
  %12649 = vmatprep.mubr.bf16.mxu0 0
  %12650 = vmatmul.mubr.bf16.gmra.mrb[0].mxu0 %v12487
  %v12651 = vpop.f32.mrb[0].mxu0
  %v12652 = vadd.f32 0.0, %v12651
  %v12653 = vpop.f32.mrb[0].mxu0
  %v12654 = vpop.f32.mrb[0].mxu0
  %v12655 = vadd.f32 0.0, %v12654
  %v12656 = vpop.f32.mrb[0].mxu0
  %12657 = vmatprep.mubr.bf16.mxu0 0
  %12658 = vmatmul.mubr.bf16.gmra.mrb[0].mxu0 %v12488
  %v12659 = vpop.f32.mrb[0].mxu0
  %v12660 = vadd.f32 0.0, %v12659
  %v12661 = vpop.f32.mrb[0].mxu0
  %v12662 = vpop.f32.mrb[0].mxu0
  %v12663 = vadd.f32 0.0, %v12662
  %v12664 = vpop.f32.mrb[0].mxu0
  %12665 = vdwg.mxu0
  %12666 = vrot.lane.b32.xlu0 %v12540, 2
  %v12667 = vpop.permute.xlu0 %12666
  %12668 = vrot.lane.b32.xlu0 %v12543, 2
  %v12669 = vpop.permute.xlu0 %12668
  %12670 = vrot.lane.b32.xlu0 %v12548, 2
  %v12671 = vpop.permute.xlu0 %12670
  %12672 = vrot.lane.b32.xlu0 %v12551, 2
  %v12673 = vpop.permute.xlu0 %12672
  %12674 = vrot.lane.b32.xlu0 %v12556, 2
  %v12675 = vpop.permute.xlu0 %12674
  %12676 = vrot.lane.b32.xlu0 %v12559, 2
  %v12677 = vpop.permute.xlu0 %12676
  %12678 = vrot.lane.b32.xlu0 %v12564, 2
  %v12679 = vpop.permute.xlu0 %12678
  %12680 = vrot.lane.b32.xlu0 %v12567, 2
  %v12681 = vpop.permute.xlu0 %12680
  %12682 = vrot.lane.b32.xlu0 %v12572, 2
  %v12683 = vpop.permute.xlu0 %12682
  %12684 = vrot.lane.b32.xlu0 %v12575, 2
  %v12685 = vpop.permute.xlu0 %12684
  %12686 = vrot.lane.b32.xlu0 %v12580, 2
  %v12687 = vpop.permute.xlu0 %12686
  %12688 = vrot.lane.b32.xlu0 %v12583, 2
  %v12689 = vpop.permute.xlu0 %12688
  %12690 = vrot.lane.b32.xlu0 %v12588, 2
  %v12691 = vpop.permute.xlu0 %12690
  %12692 = vrot.lane.b32.xlu0 %v12591, 2
  %v12693 = vpop.permute.xlu0 %12692
  %12694 = vrot.lane.b32.xlu0 %v12596, 2
  %v12695 = vpop.permute.xlu0 %12694
  %12696 = vrot.lane.b32.xlu0 %v12599, 2
  %v12697 = vpop.permute.xlu0 %12696
  %12698 = vrot.lane.b32.xlu0 %v12604, 2
  %v12699 = vpop.permute.xlu0 %12698
  %12700 = vrot.lane.b32.xlu0 %v12607, 2
  %v12701 = vpop.permute.xlu0 %12700
  %12702 = vrot.lane.b32.xlu0 %v12612, 2
  %v12703 = vpop.permute.xlu0 %12702
  %12704 = vrot.lane.b32.xlu0 %v12615, 2
  %v12705 = vpop.permute.xlu0 %12704
  %12706 = vrot.lane.b32.xlu0 %v12620, 2
  %v12707 = vpop.permute.xlu0 %12706
  %12708 = vrot.lane.b32.xlu0 %v12623, 2
  %v12709 = vpop.permute.xlu0 %12708
  %12710 = vrot.lane.b32.xlu0 %v12628, 2
  %v12711 = vpop.permute.xlu0 %12710
  %12712 = vrot.lane.b32.xlu0 %v12631, 2
  %v12713 = vpop.permute.xlu0 %12712
  %12714 = vrot.lane.b32.xlu0 %v12636, 2
  %v12715 = vpop.permute.xlu0 %12714
  %12716 = vrot.lane.b32.xlu0 %v12639, 2
  %v12717 = vpop.permute.xlu0 %12716
  %12718 = vrot.lane.b32.xlu0 %v12644, 2
  %v12719 = vpop.permute.xlu0 %12718
  %12720 = vrot.lane.b32.xlu0 %v12647, 2
  %v12721 = vpop.permute.xlu0 %12720
  %12722 = vrot.lane.b32.xlu0 %v12652, 2
  %v12723 = vpop.permute.xlu0 %12722
  %12724 = vrot.lane.b32.xlu0 %v12655, 2
  %v12725 = vpop.permute.xlu0 %12724
  %12726 = vrot.lane.b32.xlu0 %v12660, 2
  %v12727 = vpop.permute.xlu0 %12726
  %12728 = vrot.lane.b32.xlu0 %v12663, 2
  %v12729 = vpop.permute.xlu0 %12728
  %v12730 = vadd.f32 %v12251, %v12667
  %v12731 = vadd.f32 %v12254, %v12669
  %v12732 = vadd.f32 %v12259, %v12671
  %v12733 = vadd.f32 %v12262, %v12673
  %v12734 = vadd.f32 %v12267, %v12675
  %v12735 = vadd.f32 %v12270, %v12677
  %v12736 = vadd.f32 %v12275, %v12679
  %v12737 = vadd.f32 %v12278, %v12681
  %v12738 = vadd.f32 %v12283, %v12683
  %v12739 = vadd.f32 %v12286, %v12685
  %v12740 = vadd.f32 %v12291, %v12687
  %v12741 = vadd.f32 %v12294, %v12689
  %v12742 = vadd.f32 %v12299, %v12691
  %v12743 = vadd.f32 %v12302, %v12693
  %v12744 = vadd.f32 %v12307, %v12695
  %v12745 = vadd.f32 %v12310, %v12697
  %v12746 = vadd.f32 %v12315, %v12699
  %v12747 = vadd.f32 %v12318, %v12701
  %v12748 = vadd.f32 %v12323, %v12703
  %v12749 = vadd.f32 %v12326, %v12705
  %v12750 = vadd.f32 %v12331, %v12707
  %v12751 = vadd.f32 %v12334, %v12709
  %v12752 = vadd.f32 %v12339, %v12711
  %v12753 = vadd.f32 %v12342, %v12713
  %v12754 = vadd.f32 %v12347, %v12715
  %v12755 = vadd.f32 %v12350, %v12717
  %v12756 = vadd.f32 %v12355, %v12719
  %v12757 = vadd.f32 %v12358, %v12721
  %v12758 = vadd.f32 %v12363, %v12723
  %v12759 = vadd.f32 %v12366, %v12725
  %v12760 = vadd.f32 %v12371, %v12727
  %v12761 = vadd.f32 %v12374, %v12729
  %v12762 = vld [vmem:[%s47] sm:$0xff]
  %v12763 = vld [vmem:[%s47 + $0x8] sm:$0xff]
  %v12764 = vld [vmem:[%s47 + $0x10] sm:$0xff]
  %v12765 = vld [vmem:[%s47 + $0x18] sm:$0xff]
  %v12766 = vld [vmem:[%s47 + $0x20] sm:$0xff]
  %v12767 = vld [vmem:[%s47 + $0x28] sm:$0xff]
  %v12768 = vld [vmem:[%s47 + $0x30] sm:$0xff]
  %v12769 = vld [vmem:[%s47 + $0x38] sm:$0xff]
  %v12770 = vld [vmem:[%s47 + $0x40] sm:$0xff]
  %v12771 = vld [vmem:[%s47 + $0x48] sm:$0xff]
  %v12772 = vld [vmem:[%s47 + $0x50] sm:$0xff]
  %v12773 = vld [vmem:[%s47 + $0x58] sm:$0xff]
  %v12774 = vld [vmem:[%s47 + $0x60] sm:$0xff]
  %v12775 = vld [vmem:[%s47 + $0x68] sm:$0xff]
  %v12776 = vld [vmem:[%s47 + $0x70] sm:$0xff]
  %v12777 = vld [vmem:[%s47 + $0x78] sm:$0xff]
  %v12778 = vld [vmem:[%s47 + $0x80] sm:$0xff]
  %v12779 = vld [vmem:[%s47 + $0x88] sm:$0xff]
  %v12780 = vld [vmem:[%s47 + $0x90] sm:$0xff]
  %v12781 = vld [vmem:[%s47 + $0x98] sm:$0xff]
  %v12782 = vld [vmem:[%s47 + $0xa0] sm:$0xff]
  %v12783 = vld [vmem:[%s47 + $0xa8] sm:$0xff]
  %v12784 = vld [vmem:[%s47 + $0xb0] sm:$0xff]
  %v12785 = vld [vmem:[%s47 + $0xb8] sm:$0xff]
  %v12786 = vld [vmem:[%s47 + $0xc0] sm:$0xff]
  %v12787 = vld [vmem:[%s47 + $0xc8] sm:$0xff]
  %v12788 = vld [vmem:[%s47 + $0xd0] sm:$0xff]
  %v12789 = vld [vmem:[%s47 + $0xd8] sm:$0xff]
  %v12790 = vld [vmem:[%s47 + $0xe0] sm:$0xff]
  %v12791 = vld [vmem:[%s47 + $0xe8] sm:$0xff]
  %v12792 = vld [vmem:[%s47 + $0xf0] sm:$0xff]
  %v12793 = vld [vmem:[%s47 + $0xf8] sm:$0xff]
  %v12794 = vadd.f32 %v12730, %v12762
  %v12795 = vadd.f32 %v12731, %v12763
  %v12796 = vadd.f32 %v12732, %v12764
  %v12797 = vadd.f32 %v12733, %v12765
  %v12798 = vadd.f32 %v12734, %v12766
  %v12799 = vadd.f32 %v12735, %v12767
  %v12800 = vadd.f32 %v12736, %v12768
  %v12801 = vadd.f32 %v12737, %v12769
  %v12802 = vadd.f32 %v12738, %v12770
  %v12803 = vadd.f32 %v12739, %v12771
  %v12804 = vadd.f32 %v12740, %v12772
  %v12805 = vadd.f32 %v12741, %v12773
  %v12806 = vadd.f32 %v12742, %v12774
  %v12807 = vadd.f32 %v12743, %v12775
  %v12808 = vadd.f32 %v12744, %v12776
  %v12809 = vadd.f32 %v12745, %v12777
  %v12810 = vadd.f32 %v12746, %v12778
  %v12811 = vadd.f32 %v12747, %v12779
  %v12812 = vadd.f32 %v12748, %v12780
  %v12813 = vadd.f32 %v12749, %v12781
  %v12814 = vadd.f32 %v12750, %v12782
  %v12815 = vadd.f32 %v12751, %v12783
  %v12816 = vadd.f32 %v12752, %v12784
  %v12817 = vadd.f32 %v12753, %v12785
  %v12818 = vadd.f32 %v12754, %v12786
  %v12819 = vadd.f32 %v12755, %v12787
  %v12820 = vadd.f32 %v12756, %v12788
  %v12821 = vadd.f32 %v12757, %v12789
  %v12822 = vadd.f32 %v12758, %v12790
  %v12823 = vadd.f32 %v12759, %v12791
  %v12824 = vadd.f32 %v12760, %v12792
  %v12825 = vadd.f32 %v12761, %v12793
  %v12826 = vmax.f32 %v12794, 0.0
  %v12827 = vmax.f32 %v12795, 0.0
  %v12828 = vmax.f32 %v12796, 0.0
  %v12829 = vmax.f32 %v12797, 0.0
  %v12830 = vmax.f32 %v12798, 0.0
  %v12831 = vmax.f32 %v12799, 0.0
  %v12832 = vmax.f32 %v12800, 0.0
  %v12833 = vmax.f32 %v12801, 0.0
  %v12834 = vmax.f32 %v12802, 0.0
  %v12835 = vmax.f32 %v12803, 0.0
  %v12836 = vmax.f32 %v12804, 0.0
  %v12837 = vmax.f32 %v12805, 0.0
  %v12838 = vmax.f32 %v12806, 0.0
  %v12839 = vmax.f32 %v12807, 0.0
  %v12840 = vmax.f32 %v12808, 0.0
  %v12841 = vmax.f32 %v12809, 0.0
  %v12842 = vmax.f32 %v12810, 0.0
  %v12843 = vmax.f32 %v12811, 0.0
  %v12844 = vmax.f32 %v12812, 0.0
  %v12845 = vmax.f32 %v12813, 0.0
  %v12846 = vmax.f32 %v12814, 0.0
  %v12847 = vmax.f32 %v12815, 0.0
  %v12848 = vmax.f32 %v12816, 0.0
  %v12849 = vmax.f32 %v12817, 0.0
  %v12850 = vmax.f32 %v12818, 0.0
  %v12851 = vmax.f32 %v12819, 0.0
  %v12852 = vmax.f32 %v12820, 0.0
  %v12853 = vmax.f32 %v12821, 0.0
  %v12854 = vmax.f32 %v12822, 0.0
  %v12855 = vmax.f32 %v12823, 0.0
  %v12856 = vmax.f32 %v12824, 0.0
  %v12857 = vmax.f32 %v12825, 0.0
  %v12858 = vpack.c.bf16 %v12827, %v12826
  %v12859 = vpack.c.bf16 %v12829, %v12828
  %v12860 = vpack.c.bf16 %v12831, %v12830
  %v12861 = vpack.c.bf16 %v12833, %v12832
  %v12862 = vpack.c.bf16 %v12835, %v12834
  %v12863 = vpack.c.bf16 %v12837, %v12836
  %v12864 = vpack.c.bf16 %v12839, %v12838
  %v12865 = vpack.c.bf16 %v12841, %v12840
  %v12866 = vpack.c.bf16 %v12843, %v12842
  %v12867 = vpack.c.bf16 %v12845, %v12844
  %v12868 = vpack.c.bf16 %v12847, %v12846
  %v12869 = vpack.c.bf16 %v12849, %v12848
  %v12870 = vpack.c.bf16 %v12851, %v12850
  %v12871 = vpack.c.bf16 %v12853, %v12852
  %v12872 = vpack.c.bf16 %v12855, %v12854
  %v12873 = vpack.c.bf16 %v12857, %v12856
  %v12874 = vld [vmem:[%s49] sm:$0xf]
  %v12875 = vld [vmem:[%s51] sm:$0xf]
  %v12878 = vunpack.c.l.s4 1983009808
  %v12879 = vunpack.c.0.s8 %v12878
  %v12880 = vlaneseq
  %v12881 = vshrl.u32 %v12880, 7
  %v12882 = vsub.s32 %v12879, %v12881
  %v12883 = vrot.slane %v12875, %v12882
  %v12884 = vcombine.high %v12883, %v12883
  %12887 = vmatprep.subr.bf16.mxu0 0
  %12888 = vmatpush1.bf16.msra.mxu0 %v12858
  %12889 = vmatprep.subr.bf16.mxu0 0
  %12890 = vmatpush1.bf16.msra.mxu0 %v12859
  %12891 = vmatprep.subr.bf16.mxu0 0
  %12892 = vmatpush1.bf16.msra.mxu0 %v12860
  %12893 = vmatprep.subr.bf16.mxu0 0
  %12894 = vmatpush1.bf16.msra.mxu0 %v12861
  %12895 = vmatprep.subr.bf16.mxu0 0
  %12896 = vmatpush1.bf16.msra.mxu0 %v12862
  %12897 = vmatprep.subr.bf16.mxu0 0
  %12898 = vmatpush1.bf16.msra.mxu0 %v12863
  %12899 = vmatprep.subr.bf16.mxu0 0
  %12900 = vmatpush1.bf16.msra.mxu0 %v12864
  %12901 = vmatprep.subr.bf16.mxu0 0
  %12902 = vmatpush1.bf16.msra.mxu0 %v12865
  %12903 = vmatprep.subr.bf16.mxu0 0
  %12904 = vmatpush1.bf16.msra.mxu0 %v12866
  %12905 = vmatprep.subr.bf16.mxu0 0
  %12906 = vmatpush1.bf16.msra.mxu0 %v12867
  %12907 = vmatprep.subr.bf16.mxu0 0
  %12908 = vmatpush1.bf16.msra.mxu0 %v12868
  %12909 = vmatprep.subr.bf16.mxu0 0
  %12910 = vmatpush1.bf16.msra.mxu0 %v12869
  %12911 = vmatprep.subr.bf16.mxu0 0
  %12912 = vmatpush1.bf16.msra.mxu0 %v12870
  %12913 = vmatprep.subr.bf16.mxu0 0
  %12914 = vmatpush1.bf16.msra.mxu0 %v12871
  %12915 = vmatprep.subr.bf16.mxu0 0
  %12916 = vmatpush1.bf16.msra.mxu0 %v12872
  %12917 = vmatprep.subr.bf16.mxu0 0
  %12918 = vmatpush1.bf16.msra.mxu0 %v12873
  %12919 = vmatprep.mubr.bf16.mxu0 %v12884
  %12920 = vmatmul.mubr.bf16.gmra.mrb[0].mxu0 %v12883
  %v12921 = vpop.f32.mrb[0].mxu0
  %v12922 = vadd.f32 0.0, %v12921
  %v12923 = vpop.f32.mrb[0].mxu0
  %v12924 = vpop.f32.mrb[0].mxu0
  %v12925 = vpop.f32.mrb[0].mxu0
  %12926 = vdwg.mxu0
  %12927 = vrot.lane.b32.xlu0 %v12922, 1
  %v12928 = vpop.permute.xlu0 %12927
  %v12931 = vunpack.c.l.s4 1983009808
  %v12932 = vunpack.c.0.s8 %v12931
  %v12933 = vlaneseq
  %v12934 = vshrl.u32 %v12933, 7
  %v12935 = vsub.s32 %v12932, %v12934
  %v12936 = vrot.slane %v12874, %v12935
  %v12937 = vcombine.high %v12936, %v12936
  %12940 = vmatprep.subr.bf16.mxu0 0
  %12941 = vmatpush1.bf16.msra.mxu0 %v12858
  %12942 = vmatprep.subr.bf16.mxu0 0
  %12943 = vmatpush1.bf16.msra.mxu0 %v12859
  %12944 = vmatprep.subr.bf16.mxu0 0
  %12945 = vmatpush1.bf16.msra.mxu0 %v12860
  %12946 = vmatprep.subr.bf16.mxu0 0
  %12947 = vmatpush1.bf16.msra.mxu0 %v12861
  %12948 = vmatprep.subr.bf16.mxu0 0
  %12949 = vmatpush1.bf16.msra.mxu0 %v12862
  %12950 = vmatprep.subr.bf16.mxu0 0
  %12951 = vmatpush1.bf16.msra.mxu0 %v12863
  %12952 = vmatprep.subr.bf16.mxu0 0
  %12953 = vmatpush1.bf16.msra.mxu0 %v12864
  %12954 = vmatprep.subr.bf16.mxu0 0
  %12955 = vmatpush1.bf16.msra.mxu0 %v12865
  %12956 = vmatprep.subr.bf16.mxu0 0
  %12957 = vmatpush1.bf16.msra.mxu0 %v12866
  %12958 = vmatprep.subr.bf16.mxu0 0
  %12959 = vmatpush1.bf16.msra.mxu0 %v12867
  %12960 = vmatprep.subr.bf16.mxu0 0
  %12961 = vmatpush1.bf16.msra.mxu0 %v12868
  %12962 = vmatprep.subr.bf16.mxu0 0
  %12963 = vmatpush1.bf16.msra.mxu0 %v12869
  %12964 = vmatprep.subr.bf16.mxu0 0
  %12965 = vmatpush1.bf16.msra.mxu0 %v12870
  %12966 = vmatprep.subr.bf16.mxu0 0
  %12967 = vmatpush1.bf16.msra.mxu0 %v12871
  %12968 = vmatprep.subr.bf16.mxu0 0
  %12969 = vmatpush1.bf16.msra.mxu0 %v12872
  %12970 = vmatprep.subr.bf16.mxu0 0
  %12971 = vmatpush1.bf16.msra.mxu0 %v12873
  %12972 = vmatprep.mubr.bf16.mxu0 %v12937
  %12973 = vmatmul.mubr.bf16.gmra.mrb[0].mxu0 %v12936
  %v12974 = vpop.f32.mrb[0].mxu0
  %v12975 = vadd.f32 %v12928, %v12974
  %v12976 = vpop.f32.mrb[0].mxu0
  %v12977 = vpop.f32.mrb[0].mxu0
  %v12978 = vpop.f32.mrb[0].mxu0
  %12979 = vdwg.mxu0
  %v12980 = vld [vmem:[%s53] sm:$0xf]
  %v12983 = vunpack.c.l.s4 1983009808
  %v12984 = vunpack.c.0.s8 %v12983
  %v12985 = vlaneseq
  %v12986 = vshrl.u32 %v12985, 7
  %v12987 = vsub.s32 %v12984, %v12986
  %v12988 = vrot.slane %v12980, %v12987
  %v12989 = vcombine.high %v12988, %v12988
  %12992 = vmatprep.subr.bf16.mxu0 0
  %12993 = vmatpush1.bf16.msra.mxu0 %v12858
  %12994 = vmatprep.subr.bf16.mxu0 0
  %12995 = vmatpush1.bf16.msra.mxu0 %v12859
  %12996 = vmatprep.subr.bf16.mxu0 0
  %12997 = vmatpush1.bf16.msra.mxu0 %v12860
  %12998 = vmatprep.subr.bf16.mxu0 0
  %12999 = vmatpush1.bf16.msra.mxu0 %v12861
  %13000 = vmatprep.subr.bf16.mxu0 0
  %13001 = vmatpush1.bf16.msra.mxu0 %v12862
  %13002 = vmatprep.subr.bf16.mxu0 0
  %13003 = vmatpush1.bf16.msra.mxu0 %v12863
  %13004 = vmatprep.subr.bf16.mxu0 0
  %13005 = vmatpush1.bf16.msra.mxu0 %v12864
  %13006 = vmatprep.subr.bf16.mxu0 0
  %13007 = vmatpush1.bf16.msra.mxu0 %v12865
  %13008 = vmatprep.subr.bf16.mxu0 0
  %13009 = vmatpush1.bf16.msra.mxu0 %v12866
  %13010 = vmatprep.subr.bf16.mxu0 0
  %13011 = vmatpush1.bf16.msra.mxu0 %v12867
  %13012 = vmatprep.subr.bf16.mxu0 0
  %13013 = vmatpush1.bf16.msra.mxu0 %v12868
  %13014 = vmatprep.subr.bf16.mxu0 0
  %13015 = vmatpush1.bf16.msra.mxu0 %v12869
  %13016 = vmatprep.subr.bf16.mxu0 0
  %13017 = vmatpush1.bf16.msra.mxu0 %v12870
  %13018 = vmatprep.subr.bf16.mxu0 0
  %13019 = vmatpush1.bf16.msra.mxu0 %v12871
  %13020 = vmatprep.subr.bf16.mxu0 0
  %13021 = vmatpush1.bf16.msra.mxu0 %v12872
  %13022 = vmatprep.subr.bf16.mxu0 0
  %13023 = vmatpush1.bf16.msra.mxu0 %v12873
  %13024 = vmatprep.mubr.bf16.mxu0 %v12989
  %13025 = vmatmul.mubr.bf16.gmra.mrb[0].mxu0 %v12988
  %v13026 = vpop.f32.mrb[0].mxu0
  %v13027 = vadd.f32 0.0, %v13026
  %v13028 = vpop.f32.mrb[0].mxu0
  %v13029 = vpop.f32.mrb[0].mxu0
  %v13030 = vpop.f32.mrb[0].mxu0
  %13031 = vdwg.mxu0
  %13032 = vrot.lane.b32.xlu0 %v13027, 2
  %v13033 = vpop.permute.xlu0 %13032
  %v13034 = vadd.f32 %v12975, %v13033
  %v13035 = vld [vmem:[%s55] sm:$0x1]
  %v13037 = vlaneseq
  %v13038 = vshrl.u32 %v13037, 7
  %v13039 = vsub.s32 0, %v13038
  %v13040 = vrot.slane %v13035, %v13039
  %v13042 = vadd.f32 %v13034, %v13040
  %13043 = vst [vmem:[%s59] sm:$0xf] %v13042
  // Predicated region
  $region114: #{forward.1} parent=0 // pred_check
    _
  $region115: #{forward.1} parent=0 // pred_check_branch
    %13045 = sbr.rel (0) target = $region117
  $region116: #{forward.1} parent=0 // pred_region
    _
  $region117: #{forward.1} parent=0 // pred_fallthru
    _
  // Predicated region
  $region118: #{forward.1} parent=0 // pred_check
    _
  $region119: #{forward.1} parent=0 // pred_check_branch
    %13047 = sbr.rel (0) target = $region121
  $region120: #{forward.1} parent=0 // pred_region
    _
  $region121: #{forward.1} parent=0 // pred_fallthru
    _
  // Predicated region
  $region122: #{forward.1} parent=0 // pred_check
    _
  $region123: #{forward.1} parent=0 // pred_check_branch
    %13049 = sbr.rel (0) target = $region125
  $region124: #{forward.1} parent=0 // pred_region
    _
  $region125: #{forward.1} parent=0 // pred_fallthru
    _
  // Predicated region
  $region126: #{forward.1} parent=0 // pred_check
    _
  $region127: #{forward.1} parent=0 // pred_check_branch
    %13051 = sbr.rel (0) target = $region129
  $region128: #{forward.1} parent=0 // pred_region
    _
  $region129: #{forward.1} parent=0 // pred_fallthru
    _

</llo_original>
